<compile_context>
chip_gen: v5e
topology: v5e:2x2
jax: 0.10.0
libtpu: 0.0.40
codegen_flags: <defaults>
</compile_context>

<pallas_src>
import functools

import jax
import jax.numpy as jnp
import numpy as np
from jax.experimental import pallas as pl
from jax.experimental.pallas import tpu as pltpu

IN_FEATURES = 2176
EPS = 1e-5


def _autoencoder_kernel(x_ref, w1_hbm, w2_hbm, w3_hbm, w4_hbm, w5_hbm, w6_hbm,
                        gb_ref, alpha_ref,
                        enc_ref, dec_ref,
                        w1b, w2b, w3b, w4b, w5b, w6ab, w6bb, sems,
                        *, eps, col_offs, split):
    """Fused 6x(Linear(no bias) + BatchNorm1d(batch stats) + activation).

    Weights live in HBM and are streamed into per-layer VMEM scratch; all DMAs
    are issued up-front (the DMA engine drains them in order) and each layer
    waits only on its own weights, hiding compute under the weight stream.
    """
    copies = (
        pltpu.make_async_copy(w1_hbm, w1b, sems.at[0]),
        pltpu.make_async_copy(w2_hbm, w2b, sems.at[1]),
        pltpu.make_async_copy(w3_hbm, w3b, sems.at[2]),
        pltpu.make_async_copy(w4_hbm, w4b, sems.at[3]),
        pltpu.make_async_copy(w5_hbm, w5b, sems.at[4]),
        # Final layer split into two lane-aligned column chunks.
        pltpu.make_async_copy(w6_hbm.at[:, 0:split], w6ab, sems.at[5]),
        pltpu.make_async_copy(w6_hbm.at[:, split:], w6bb, sems.at[6]),
    )
    for cp in copies:
        cp.start()

    def bn_act(y, layer, act, a_idx=None, col0=0):
        n = y.shape[-1]
        off = col_offs[layer] + col0
        g = gb_ref[0:1, off:off + n]
        t = gb_ref[1:2, off:off + n]
        # BatchNorm1d training mode: biased variance over the batch axis.
        # (The Linear bias cancels exactly under the mean subtraction, so it
        # is never loaded.)
        mean = jnp.mean(y, axis=0, keepdims=True)
        var = jnp.mean((y - mean) ** 2, axis=0, keepdims=True)
        z = (y - mean) * jax.lax.rsqrt(var + eps) * g + t
        if act == "sigmoid":
            return jax.nn.sigmoid(z)
        # PReLU, single shared parameter (PyTorch default), read from SMEM.
        return jnp.where(z >= 0.0, z, alpha_ref[a_idx] * z)

    def matmul(h, w_buf, cp):
        cp.wait()   # block only on this layer's own weight stream
        # bf16 x bf16 MXU matmul, f32 accumulation.
        return jnp.dot(h, w_buf[...], preferred_element_type=jnp.float32)

    h = x_ref[...]                                                   # bf16
    h = bn_act(matmul(h, w1b, copies[0]), 0, "sigmoid").astype(jnp.bfloat16)
    h = bn_act(matmul(h, w2b, copies[1]), 1, "sigmoid").astype(jnp.bfloat16)
    enc = bn_act(matmul(h, w3b, copies[2]), 2, "sigmoid")
    enc_ref[...] = enc
    h = enc.astype(jnp.bfloat16)
    h = bn_act(matmul(h, w4b, copies[3]), 3, "prelu", 0).astype(jnp.bfloat16)
    h = bn_act(matmul(h, w5b, copies[4]), 4, "prelu", 1).astype(jnp.bfloat16)

    # 512 -> 2176 tail in two column chunks; BN is per-feature so this is
    # numerically exact, and chunk 0's compute overlaps chunk 1's DMA.
    dec_ref[:, 0:split] = bn_act(matmul(h, w6ab, copies[5]), 5, "prelu", 2,
                                 col0=0)
    dec_ref[:, split:] = bn_act(matmul(h, w6bb, copies[6]), 5, "prelu", 2,
                                col0=split)


@jax.jit
def autoencoder_forward(x, weights, gb, alphas):
    """x: (B, 2176) f32. weights: 6 pre-transposed bf16 (K, N) arrays.
    gb: (2, sum_N) f32 packed [gamma; beta]. alphas: (3,) f32 PReLU params."""
    B = x.shape[0]
    n_out = tuple(int(w.shape[1]) for w in weights)
    enc_dim, out_dim = n_out[2], n_out[5]
    col_offs = tuple(int(v) for v in np.cumsum((0,) + n_out[:-1]))
    # Lane-aligned split point for the final layer's column chunking.
    split = int(-(-(out_dim // 2) // 128) * 128)      # 2176 -> 1152 + 1024

    x_bf16 = x.astype(jnp.bfloat16)                   # cast once at the boundary

    kernel = functools.partial(_autoencoder_kernel, eps=EPS,
                               col_offs=col_offs, split=split)

    vmem = pl.BlockSpec(memory_space=pltpu.MemorySpace.VMEM)
    hbm = pl.BlockSpec(memory_space=pl.ANY)
    smem = pl.BlockSpec(memory_space=pltpu.MemorySpace.SMEM)

    enc, dec = pl.pallas_call(
        kernel,
        out_shape=(jax.ShapeDtypeStruct((B, enc_dim), jnp.float32),
                   jax.ShapeDtypeStruct((B, out_dim), jnp.float32)),
        in_specs=[vmem] + [hbm] * 6 + [vmem, smem],
        out_specs=(vmem, vmem),
        scratch_shapes=[
            pltpu.VMEM(weights[0].shape, jnp.bfloat16),
            pltpu.VMEM(weights[1].shape, jnp.bfloat16),
            pltpu.VMEM(weights[2].shape, jnp.bfloat16),
            pltpu.VMEM(weights[3].shape, jnp.bfloat16),
            pltpu.VMEM(weights[4].shape, jnp.bfloat16),
            pltpu.VMEM((weights[5].shape[0], split), jnp.bfloat16),
            pltpu.VMEM((weights[5].shape[0], out_dim - split), jnp.bfloat16),
            pltpu.SemaphoreType.DMA((7,)),
        ],
        compiler_params=pltpu.CompilerParams(
            vmem_limit_bytes=16 * 1024 * 1024),
    )(x_bf16, *weights, gb, alphas)
    return enc, dec


def init_params(key, dims):
    """PyTorch defaults: Linear W,b ~ U(-1/sqrt(fan_in), 1/sqrt(fan_in));
    BN gamma=1, beta=0. Weights pre-transposed to (K, N) and stored bf16 once
    (outside the hot path). The bias b is kept only for the reference — it
    cancels exactly under training-mode BatchNorm, so the kernel never loads it."""
    params = []
    for fan_in, fan_out in zip(dims[:-1], dims[1:]):
        key, kw, kb = jax.random.split(key, 3)
        bound = 1.0 / np.sqrt(fan_in)
        W = jax.random.uniform(kw, (fan_out, fan_in), jnp.float32, -bound, bound)
        b = jax.random.uniform(kb, (fan_out,), jnp.float32, -bound, bound)
        params.append(dict(
            Wt=W.T.astype(jnp.bfloat16),              # (K, N) bf16
            b=b.reshape(1, fan_out),                  # reference only
            gamma=jnp.ones((fan_out,), jnp.float32),
            beta=jnp.zeros((fan_out,), jnp.float32),
        ))
    return params


def pack_gamma_beta(params):
    gamma = jnp.concatenate([p["gamma"] for p in params])
    beta = jnp.concatenate([p["beta"] for p in params])
    return jnp.stack([gamma, beta], axis=0)           # (2, sum_N) f32


def _ref_forward(x, params, alphas, eps=EPS):
    """Pure-JAX reference: same bf16 quantization of the matmul inputs, but it
    keeps the PyTorch Linear bias (which must cancel through training-mode BN)."""
    def layer(h, p, act, alpha=None):
        hq = h.astype(jnp.bfloat16).astype(jnp.float32)
        wq = p["Wt"].astype(jnp.float32)
        y = hq @ wq + p["b"]
        mean = jnp.mean(y, axis=0, keepdims=True)
        var = jnp.mean((y - mean) ** 2, axis=0, keepdims=True)
        z = (y - mean) / jnp.sqrt(var + eps) * p["gamma"] + p["beta"]
        if act == "sigmoid":
            return jax.nn.sigmoid(z)
        return jnp.where(z >= 0.0, z, alpha * z)

    h = x
    for p in params[:3]:
        h = layer(h, p, "sigmoid")
    enc = h
    for i, p in enumerate(params[3:]):
        h = layer(h, p, "prelu", alphas[i])
    return enc, h


if __name__ == "__main__":
    DIM = 128          # latent "dimension" argument (lane-aligned)
    BATCH = 8          # one sublane group; BN needs batch > 1

    key = jax.random.PRNGKey(0)
    kx, kp = jax.random.split(key)

    x = jax.random.normal(kx, (BATCH, IN_FEATURES), jnp.float32)
    params = init_params(kp, [IN_FEATURES, 512, 256, DIM, 256, 512, IN_FEATURES])
    weights = tuple(p["Wt"] for p in params)
    gb = pack_gamma_beta(params)
    alphas = jnp.full((3,), 0.25, jnp.float32)   # PReLU default init

    encoded, decoded = jax.block_until_ready(
        autoencoder_forward(x, weights, gb, alphas))

    enc_ref, dec_ref = _ref_forward(x, params, alphas)
    # bf16 matmul inputs + six BatchNorm renormalizations cascade small
    # rounding differences; 1e-2 still catches any structural/layer bug.
    np.testing.assert_allclose(np.asarray(encoded), np.asarray(enc_ref),
                               rtol=1e-2, atol=1e-2)
    np.testing.assert_allclose(np.asarray(decoded), np.asarray(dec_ref),
                               rtol=1e-2, atol=1e-2)

    assert encoded.shape == (BATCH, DIM) and decoded.shape == (BATCH, IN_FEATURES)
    print("KERNEL_OK")
</pallas_src>

<mosaic_0001>
module attributes {stable_mosaic.version = 11 : i64} {
  func.func @_autoencoder_kernel(%arg0: memref<8x2176xbf16, #tpu.memory_space<vmem>>, %arg1: memref<2176x512xbf16, #tpu.memory_space<any>>, %arg2: memref<512x256xbf16, #tpu.memory_space<any>>, %arg3: memref<256x128xbf16, #tpu.memory_space<any>>, %arg4: memref<128x256xbf16, #tpu.memory_space<any>>, %arg5: memref<256x512xbf16, #tpu.memory_space<any>>, %arg6: memref<512x2176xbf16, #tpu.memory_space<any>>, %arg7: memref<2x3840xf32, #tpu.memory_space<vmem>>, %arg8: memref<3xf32, #tpu.memory_space<smem>>, %arg9: memref<8x128xf32, #tpu.memory_space<vmem>>, %arg10: memref<8x2176xf32, #tpu.memory_space<vmem>>, %arg11: memref<2176x512xbf16, #tpu.memory_space<vmem>>, %arg12: memref<512x256xbf16, #tpu.memory_space<vmem>>, %arg13: memref<256x128xbf16, #tpu.memory_space<vmem>>, %arg14: memref<128x256xbf16, #tpu.memory_space<vmem>>, %arg15: memref<256x512xbf16, #tpu.memory_space<vmem>>, %arg16: memref<512x1152xbf16, #tpu.memory_space<vmem>>, %arg17: memref<512x1024xbf16, #tpu.memory_space<vmem>>, %arg18: memref<7x!tpu.dma_semaphore, #tpu.memory_space<semaphore_mem>>) attributes {dimension_semantics = [], scalar_prefetch = 0 : i64, scratch_operands = 8 : i64, tpu.core_type = #tpu.core_type<tc>} {
    %c0_i32 = arith.constant 0 : i32
    %0 = tpu.memref_slice %arg18[%c0_i32] : memref<7x!tpu.dma_semaphore, #tpu.memory_space<semaphore_mem>> -> memref<1x!tpu.dma_semaphore, #tpu.memory_space<semaphore_mem>>
    %1 = tpu.memref_squeeze %0 : memref<1x!tpu.dma_semaphore, #tpu.memory_space<semaphore_mem>> -> memref<!tpu.dma_semaphore, #tpu.memory_space<semaphore_mem>>
    tpu.enqueue_dma source(%arg1 : memref<2176x512xbf16, #tpu.memory_space<any>>) target(%arg11 : memref<2176x512xbf16, #tpu.memory_space<vmem>>) target_semaphore(%1 : memref<!tpu.dma_semaphore, #tpu.memory_space<semaphore_mem>>)
    %c1_i32 = arith.constant 1 : i32
    %2 = tpu.memref_slice %arg18[%c1_i32] : memref<7x!tpu.dma_semaphore, #tpu.memory_space<semaphore_mem>> -> memref<1x!tpu.dma_semaphore, #tpu.memory_space<semaphore_mem>>
    %3 = tpu.memref_squeeze %2 : memref<1x!tpu.dma_semaphore, #tpu.memory_space<semaphore_mem>> -> memref<!tpu.dma_semaphore, #tpu.memory_space<semaphore_mem>>
    tpu.enqueue_dma source(%arg2 : memref<512x256xbf16, #tpu.memory_space<any>>) target(%arg12 : memref<512x256xbf16, #tpu.memory_space<vmem>>) target_semaphore(%3 : memref<!tpu.dma_semaphore, #tpu.memory_space<semaphore_mem>>)
    %c2_i32 = arith.constant 2 : i32
    %4 = tpu.memref_slice %arg18[%c2_i32] : memref<7x!tpu.dma_semaphore, #tpu.memory_space<semaphore_mem>> -> memref<1x!tpu.dma_semaphore, #tpu.memory_space<semaphore_mem>>
    %5 = tpu.memref_squeeze %4 : memref<1x!tpu.dma_semaphore, #tpu.memory_space<semaphore_mem>> -> memref<!tpu.dma_semaphore, #tpu.memory_space<semaphore_mem>>
    tpu.enqueue_dma source(%arg3 : memref<256x128xbf16, #tpu.memory_space<any>>) target(%arg13 : memref<256x128xbf16, #tpu.memory_space<vmem>>) target_semaphore(%5 : memref<!tpu.dma_semaphore, #tpu.memory_space<semaphore_mem>>)
    %c3_i32 = arith.constant 3 : i32
    %6 = tpu.memref_slice %arg18[%c3_i32] : memref<7x!tpu.dma_semaphore, #tpu.memory_space<semaphore_mem>> -> memref<1x!tpu.dma_semaphore, #tpu.memory_space<semaphore_mem>>
    %7 = tpu.memref_squeeze %6 : memref<1x!tpu.dma_semaphore, #tpu.memory_space<semaphore_mem>> -> memref<!tpu.dma_semaphore, #tpu.memory_space<semaphore_mem>>
    tpu.enqueue_dma source(%arg4 : memref<128x256xbf16, #tpu.memory_space<any>>) target(%arg14 : memref<128x256xbf16, #tpu.memory_space<vmem>>) target_semaphore(%7 : memref<!tpu.dma_semaphore, #tpu.memory_space<semaphore_mem>>)
    %c4_i32 = arith.constant 4 : i32
    %8 = tpu.memref_slice %arg18[%c4_i32] : memref<7x!tpu.dma_semaphore, #tpu.memory_space<semaphore_mem>> -> memref<1x!tpu.dma_semaphore, #tpu.memory_space<semaphore_mem>>
    %9 = tpu.memref_squeeze %8 : memref<1x!tpu.dma_semaphore, #tpu.memory_space<semaphore_mem>> -> memref<!tpu.dma_semaphore, #tpu.memory_space<semaphore_mem>>
    tpu.enqueue_dma source(%arg5 : memref<256x512xbf16, #tpu.memory_space<any>>) target(%arg15 : memref<256x512xbf16, #tpu.memory_space<vmem>>) target_semaphore(%9 : memref<!tpu.dma_semaphore, #tpu.memory_space<semaphore_mem>>)
    %c5_i32 = arith.constant 5 : i32
    %c0_i32_0 = arith.constant 0 : i32
    %c0_i32_1 = arith.constant 0 : i32
    %10 = tpu.memref_slice %arg6[%c0_i32_0, %c0_i32_1] : memref<512x2176xbf16, #tpu.memory_space<any>> -> memref<512x1152xbf16, #tpu.memory_space<any>>
    %11 = tpu.memref_slice %arg18[%c5_i32] : memref<7x!tpu.dma_semaphore, #tpu.memory_space<semaphore_mem>> -> memref<1x!tpu.dma_semaphore, #tpu.memory_space<semaphore_mem>>
    %12 = tpu.memref_squeeze %11 : memref<1x!tpu.dma_semaphore, #tpu.memory_space<semaphore_mem>> -> memref<!tpu.dma_semaphore, #tpu.memory_space<semaphore_mem>>
    tpu.enqueue_dma source(%10 : memref<512x1152xbf16, #tpu.memory_space<any>>) target(%arg16 : memref<512x1152xbf16, #tpu.memory_space<vmem>>) target_semaphore(%12 : memref<!tpu.dma_semaphore, #tpu.memory_space<semaphore_mem>>)
    %c6_i32 = arith.constant 6 : i32
    %c0_i32_2 = arith.constant 0 : i32
    %c1152_i32 = arith.constant 1152 : i32
    %13 = tpu.memref_slice %arg6[%c0_i32_2, %c1152_i32] : memref<512x2176xbf16, #tpu.memory_space<any>> -> memref<512x1024xbf16, #tpu.memory_space<any>>
    %14 = tpu.memref_slice %arg18[%c6_i32] : memref<7x!tpu.dma_semaphore, #tpu.memory_space<semaphore_mem>> -> memref<1x!tpu.dma_semaphore, #tpu.memory_space<semaphore_mem>>
    %15 = tpu.memref_squeeze %14 : memref<1x!tpu.dma_semaphore, #tpu.memory_space<semaphore_mem>> -> memref<!tpu.dma_semaphore, #tpu.memory_space<semaphore_mem>>
    tpu.enqueue_dma source(%13 : memref<512x1024xbf16, #tpu.memory_space<any>>) target(%arg17 : memref<512x1024xbf16, #tpu.memory_space<vmem>>) target_semaphore(%15 : memref<!tpu.dma_semaphore, #tpu.memory_space<semaphore_mem>>)
    %c0 = arith.constant 0 : index
    %c0_3 = arith.constant 0 : index
    %16 = vector.load %arg0[%c0, %c0_3] : memref<8x2176xbf16, #tpu.memory_space<vmem>>, vector<8x2176xbf16>
    %c0_i32_4 = arith.constant 0 : i32
    %17 = tpu.memref_slice %arg18[%c0_i32_4] : memref<7x!tpu.dma_semaphore, #tpu.memory_space<semaphore_mem>> -> memref<1x!tpu.dma_semaphore, #tpu.memory_space<semaphore_mem>>
    %18 = tpu.memref_squeeze %17 : memref<1x!tpu.dma_semaphore, #tpu.memory_space<semaphore_mem>> -> memref<!tpu.dma_semaphore, #tpu.memory_space<semaphore_mem>>
    tpu.wait_dma2 semaphore(%18 : memref<!tpu.dma_semaphore, #tpu.memory_space<semaphore_mem>>) src(%arg1 : memref<2176x512xbf16, #tpu.memory_space<any>>) dst(%arg11 : memref<2176x512xbf16, #tpu.memory_space<vmem>>)
    %c0_5 = arith.constant 0 : index
    %c0_6 = arith.constant 0 : index
    %19 = vector.load %arg11[%c0_5, %c0_6] : memref<2176x512xbf16, #tpu.memory_space<vmem>>, vector<2176x512xbf16>
    %cst = arith.constant dense<0.000000e+00> : vector<8x512xf32>
    %20 = tpu.matmul %16, %19, %cst {dimension_numbers = #tpu.dot_dimension_numbers<[1], [0], [0], [1], [0, 0, 1, 1], [], []>} : vector<8x2176xbf16>, vector<2176x512xbf16>, vector<8x512xf32> -> vector<8x512xf32>
    %c0_7 = arith.constant 0 : index
    %c0_8 = arith.constant 0 : index
    %21 = vector.load %arg7[%c0_7, %c0_8] : memref<2x3840xf32, #tpu.memory_space<vmem>>, vector<1x512xf32>
    %c1 = arith.constant 1 : index
    %c0_9 = arith.constant 0 : index
    %22 = vector.load %arg7[%c1, %c0_9] : memref<2x3840xf32, #tpu.memory_space<vmem>>, vector<1x512xf32>
    %cst_10 = arith.constant dense<0.000000e+00> : vector<512xf32>
    %23 = vector.multi_reduction <add>, %20, %cst_10 [0] : vector<8x512xf32> to vector<512xf32>
    %24 = vector.shape_cast %23 : vector<512xf32> to vector<1x512xf32>
    %cst_11 = arith.constant 8.000000e+00 : f32
    %25 = vector.broadcast %cst_11 : f32 to vector<1x512xf32>
    %26 = arith.divf %24, %25 : vector<1x512xf32>
    %27 = vector.broadcast %26 : vector<1x512xf32> to vector<8x512xf32>
    %28 = arith.subf %20, %27 : vector<8x512xf32>
    %29 = arith.mulf %28, %28 : vector<8x512xf32>
    %cst_12 = arith.constant dense<0.000000e+00> : vector<512xf32>
    %30 = vector.multi_reduction <add>, %29, %cst_12 [0] : vector<8x512xf32> to vector<512xf32>
    %31 = vector.shape_cast %30 : vector<512xf32> to vector<1x512xf32>
    %cst_13 = arith.constant 8.000000e+00 : f32
    %32 = vector.broadcast %cst_13 : f32 to vector<1x512xf32>
    %33 = arith.divf %31, %32 : vector<1x512xf32>
    %34 = vector.broadcast %26 : vector<1x512xf32> to vector<8x512xf32>
    %35 = arith.subf %20, %34 : vector<8x512xf32>
    %cst_14 = arith.constant 9.99999974E-6 : f32
    %36 = vector.broadcast %cst_14 : f32 to vector<1x512xf32>
    %37 = arith.addf %33, %36 : vector<1x512xf32>
    %38 = math.rsqrt %37 : vector<1x512xf32>
    %39 = vector.broadcast %38 : vector<1x512xf32> to vector<8x512xf32>
    %40 = arith.mulf %35, %39 : vector<8x512xf32>
    %41 = vector.broadcast %21 : vector<1x512xf32> to vector<8x512xf32>
    %42 = arith.mulf %40, %41 : vector<8x512xf32>
    %43 = vector.broadcast %22 : vector<1x512xf32> to vector<8x512xf32>
    %44 = arith.addf %42, %43 : vector<8x512xf32>
    %45 = arith.negf %44 : vector<8x512xf32>
    %46 = math.exp %45 : vector<8x512xf32>
    %cst_15 = arith.constant 1.000000e+00 : f32
    %47 = vector.broadcast %cst_15 : f32 to vector<8x512xf32>
    %48 = arith.addf %47, %46 : vector<8x512xf32>
    %49 = arith.divf %47, %48 : vector<8x512xf32>
    %50 = arith.truncf %49 : vector<8x512xf32> to vector<8x512xbf16>
    %c1_i32_16 = arith.constant 1 : i32
    %51 = tpu.memref_slice %arg18[%c1_i32_16] : memref<7x!tpu.dma_semaphore, #tpu.memory_space<semaphore_mem>> -> memref<1x!tpu.dma_semaphore, #tpu.memory_space<semaphore_mem>>
    %52 = tpu.memref_squeeze %51 : memref<1x!tpu.dma_semaphore, #tpu.memory_space<semaphore_mem>> -> memref<!tpu.dma_semaphore, #tpu.memory_space<semaphore_mem>>
    tpu.wait_dma2 semaphore(%52 : memref<!tpu.dma_semaphore, #tpu.memory_space<semaphore_mem>>) src(%arg2 : memref<512x256xbf16, #tpu.memory_space<any>>) dst(%arg12 : memref<512x256xbf16, #tpu.memory_space<vmem>>)
    %c0_17 = arith.constant 0 : index
    %c0_18 = arith.constant 0 : index
    %53 = vector.load %arg12[%c0_17, %c0_18] : memref<512x256xbf16, #tpu.memory_space<vmem>>, vector<512x256xbf16>
    %cst_19 = arith.constant dense<0.000000e+00> : vector<8x256xf32>
    %54 = tpu.matmul %50, %53, %cst_19 {dimension_numbers = #tpu.dot_dimension_numbers<[1], [0], [0], [1], [0, 0, 1, 1], [], []>} : vector<8x512xbf16>, vector<512x256xbf16>, vector<8x256xf32> -> vector<8x256xf32>
    %c0_20 = arith.constant 0 : index
    %c512 = arith.constant 512 : index
    %55 = vector.load %arg7[%c0_20, %c512] : memref<2x3840xf32, #tpu.memory_space<vmem>>, vector<1x256xf32>
    %c1_21 = arith.constant 1 : index
    %c512_22 = arith.constant 512 : index
    %56 = vector.load %arg7[%c1_21, %c512_22] : memref<2x3840xf32, #tpu.memory_space<vmem>>, vector<1x256xf32>
    %cst_23 = arith.constant dense<0.000000e+00> : vector<256xf32>
    %57 = vector.multi_reduction <add>, %54, %cst_23 [0] : vector<8x256xf32> to vector<256xf32>
    %58 = vector.shape_cast %57 : vector<256xf32> to vector<1x256xf32>
    %cst_24 = arith.constant 8.000000e+00 : f32
    %59 = vector.broadcast %cst_24 : f32 to vector<1x256xf32>
    %60 = arith.divf %58, %59 : vector<1x256xf32>
    %61 = vector.broadcast %60 : vector<1x256xf32> to vector<8x256xf32>
    %62 = arith.subf %54, %61 : vector<8x256xf32>
    %63 = arith.mulf %62, %62 : vector<8x256xf32>
    %cst_25 = arith.constant dense<0.000000e+00> : vector<256xf32>
    %64 = vector.multi_reduction <add>, %63, %cst_25 [0] : vector<8x256xf32> to vector<256xf32>
    %65 = vector.shape_cast %64 : vector<256xf32> to vector<1x256xf32>
    %cst_26 = arith.constant 8.000000e+00 : f32
    %66 = vector.broadcast %cst_26 : f32 to vector<1x256xf32>
    %67 = arith.divf %65, %66 : vector<1x256xf32>
    %68 = vector.broadcast %60 : vector<1x256xf32> to vector<8x256xf32>
    %69 = arith.subf %54, %68 : vector<8x256xf32>
    %cst_27 = arith.constant 9.99999974E-6 : f32
    %70 = vector.broadcast %cst_27 : f32 to vector<1x256xf32>
    %71 = arith.addf %67, %70 : vector<1x256xf32>
    %72 = math.rsqrt %71 : vector<1x256xf32>
    %73 = vector.broadcast %72 : vector<1x256xf32> to vector<8x256xf32>
    %74 = arith.mulf %69, %73 : vector<8x256xf32>
    %75 = vector.broadcast %55 : vector<1x256xf32> to vector<8x256xf32>
    %76 = arith.mulf %74, %75 : vector<8x256xf32>
    %77 = vector.broadcast %56 : vector<1x256xf32> to vector<8x256xf32>
    %78 = arith.addf %76, %77 : vector<8x256xf32>
    %79 = arith.negf %78 : vector<8x256xf32>
    %80 = math.exp %79 : vector<8x256xf32>
    %cst_28 = arith.constant 1.000000e+00 : f32
    %81 = vector.broadcast %cst_28 : f32 to vector<8x256xf32>
    %82 = arith.addf %81, %80 : vector<8x256xf32>
    %83 = arith.divf %81, %82 : vector<8x256xf32>
    %84 = arith.truncf %83 : vector<8x256xf32> to vector<8x256xbf16>
    %c2_i32_29 = arith.constant 2 : i32
    %85 = tpu.memref_slice %arg18[%c2_i32_29] : memref<7x!tpu.dma_semaphore, #tpu.memory_space<semaphore_mem>> -> memref<1x!tpu.dma_semaphore, #tpu.memory_space<semaphore_mem>>
    %86 = tpu.memref_squeeze %85 : memref<1x!tpu.dma_semaphore, #tpu.memory_space<semaphore_mem>> -> memref<!tpu.dma_semaphore, #tpu.memory_space<semaphore_mem>>
    tpu.wait_dma2 semaphore(%86 : memref<!tpu.dma_semaphore, #tpu.memory_space<semaphore_mem>>) src(%arg3 : memref<256x128xbf16, #tpu.memory_space<any>>) dst(%arg13 : memref<256x128xbf16, #tpu.memory_space<vmem>>)
    %c0_30 = arith.constant 0 : index
    %c0_31 = arith.constant 0 : index
    %87 = vector.load %arg13[%c0_30, %c0_31] : memref<256x128xbf16, #tpu.memory_space<vmem>>, vector<256x128xbf16>
    %cst_32 = arith.constant dense<0.000000e+00> : vector<8x128xf32>
    %88 = tpu.matmul %84, %87, %cst_32 {dimension_numbers = #tpu.dot_dimension_numbers<[1], [0], [0], [1], [0, 0, 1, 1], [], []>} : vector<8x256xbf16>, vector<256x128xbf16>, vector<8x128xf32> -> vector<8x128xf32>
    %c0_33 = arith.constant 0 : index
    %c768 = arith.constant 768 : index
    %89 = vector.load %arg7[%c0_33, %c768] : memref<2x3840xf32, #tpu.memory_space<vmem>>, vector<1x128xf32>
    %c1_34 = arith.constant 1 : index
    %c768_35 = arith.constant 768 : index
    %90 = vector.load %arg7[%c1_34, %c768_35] : memref<2x3840xf32, #tpu.memory_space<vmem>>, vector<1x128xf32>
    %cst_36 = arith.constant dense<0.000000e+00> : vector<128xf32>
    %91 = vector.multi_reduction <add>, %88, %cst_36 [0] : vector<8x128xf32> to vector<128xf32>
    %92 = vector.shape_cast %91 : vector<128xf32> to vector<1x128xf32>
    %cst_37 = arith.constant 8.000000e+00 : f32
    %93 = vector.broadcast %cst_37 : f32 to vector<1x128xf32>
    %94 = arith.divf %92, %93 : vector<1x128xf32>
    %95 = vector.broadcast %94 : vector<1x128xf32> to vector<8x128xf32>
    %96 = arith.subf %88, %95 : vector<8x128xf32>
    %97 = arith.mulf %96, %96 : vector<8x128xf32>
    %cst_38 = arith.constant dense<0.000000e+00> : vector<128xf32>
    %98 = vector.multi_reduction <add>, %97, %cst_38 [0] : vector<8x128xf32> to vector<128xf32>
    %99 = vector.shape_cast %98 : vector<128xf32> to vector<1x128xf32>
    %cst_39 = arith.constant 8.000000e+00 : f32
    %100 = vector.broadcast %cst_39 : f32 to vector<1x128xf32>
    %101 = arith.divf %99, %100 : vector<1x128xf32>
    %102 = vector.broadcast %94 : vector<1x128xf32> to vector<8x128xf32>
    %103 = arith.subf %88, %102 : vector<8x128xf32>
    %cst_40 = arith.constant 9.99999974E-6 : f32
    %104 = vector.broadcast %cst_40 : f32 to vector<1x128xf32>
    %105 = arith.addf %101, %104 : vector<1x128xf32>
    %106 = math.rsqrt %105 : vector<1x128xf32>
    %107 = vector.broadcast %106 : vector<1x128xf32> to vector<8x128xf32>
    %108 = arith.mulf %103, %107 : vector<8x128xf32>
    %109 = vector.broadcast %89 : vector<1x128xf32> to vector<8x128xf32>
    %110 = arith.mulf %108, %109 : vector<8x128xf32>
    %111 = vector.broadcast %90 : vector<1x128xf32> to vector<8x128xf32>
    %112 = arith.addf %110, %111 : vector<8x128xf32>
    %113 = arith.negf %112 : vector<8x128xf32>
    %114 = math.exp %113 : vector<8x128xf32>
    %cst_41 = arith.constant 1.000000e+00 : f32
    %115 = vector.broadcast %cst_41 : f32 to vector<8x128xf32>
    %116 = arith.addf %115, %114 : vector<8x128xf32>
    %117 = arith.divf %115, %116 : vector<8x128xf32>
    %c0_42 = arith.constant 0 : index
    %c0_43 = arith.constant 0 : index
    %118 = vector.load %arg9[%c0_42, %c0_43] : memref<8x128xf32, #tpu.memory_space<vmem>>, vector<8x128xf32>
    tpu.vector_store %arg9[%c0_42, %c0_43], %117 {strides = array<i32>} : memref<8x128xf32, #tpu.memory_space<vmem>>, vector<8x128xf32>,
    %119 = arith.truncf %117 : vector<8x128xf32> to vector<8x128xbf16>
    %c3_i32_44 = arith.constant 3 : i32
    %120 = tpu.memref_slice %arg18[%c3_i32_44] : memref<7x!tpu.dma_semaphore, #tpu.memory_space<semaphore_mem>> -> memref<1x!tpu.dma_semaphore, #tpu.memory_space<semaphore_mem>>
    %121 = tpu.memref_squeeze %120 : memref<1x!tpu.dma_semaphore, #tpu.memory_space<semaphore_mem>> -> memref<!tpu.dma_semaphore, #tpu.memory_space<semaphore_mem>>
    tpu.wait_dma2 semaphore(%121 : memref<!tpu.dma_semaphore, #tpu.memory_space<semaphore_mem>>) src(%arg4 : memref<128x256xbf16, #tpu.memory_space<any>>) dst(%arg14 : memref<128x256xbf16, #tpu.memory_space<vmem>>)
    %c0_45 = arith.constant 0 : index
    %c0_46 = arith.constant 0 : index
    %122 = vector.load %arg14[%c0_45, %c0_46] : memref<128x256xbf16, #tpu.memory_space<vmem>>, vector<128x256xbf16>
    %cst_47 = arith.constant dense<0.000000e+00> : vector<8x256xf32>
    %123 = tpu.matmul %119, %122, %cst_47 {dimension_numbers = #tpu.dot_dimension_numbers<[1], [0], [0], [1], [0, 0, 1, 1], [], []>} : vector<8x128xbf16>, vector<128x256xbf16>, vector<8x256xf32> -> vector<8x256xf32>
    %c0_48 = arith.constant 0 : index
    %c896 = arith.constant 896 : index
    %124 = vector.load %arg7[%c0_48, %c896] : memref<2x3840xf32, #tpu.memory_space<vmem>>, vector<1x256xf32>
    %c1_49 = arith.constant 1 : index
    %c896_50 = arith.constant 896 : index
    %125 = vector.load %arg7[%c1_49, %c896_50] : memref<2x3840xf32, #tpu.memory_space<vmem>>, vector<1x256xf32>
    %cst_51 = arith.constant dense<0.000000e+00> : vector<256xf32>
    %126 = vector.multi_reduction <add>, %123, %cst_51 [0] : vector<8x256xf32> to vector<256xf32>
    %127 = vector.shape_cast %126 : vector<256xf32> to vector<1x256xf32>
    %cst_52 = arith.constant 8.000000e+00 : f32
    %128 = vector.broadcast %cst_52 : f32 to vector<1x256xf32>
    %129 = arith.divf %127, %128 : vector<1x256xf32>
    %130 = vector.broadcast %129 : vector<1x256xf32> to vector<8x256xf32>
    %131 = arith.subf %123, %130 : vector<8x256xf32>
    %132 = arith.mulf %131, %131 : vector<8x256xf32>
    %cst_53 = arith.constant dense<0.000000e+00> : vector<256xf32>
    %133 = vector.multi_reduction <add>, %132, %cst_53 [0] : vector<8x256xf32> to vector<256xf32>
    %134 = vector.shape_cast %133 : vector<256xf32> to vector<1x256xf32>
    %cst_54 = arith.constant 8.000000e+00 : f32
    %135 = vector.broadcast %cst_54 : f32 to vector<1x256xf32>
    %136 = arith.divf %134, %135 : vector<1x256xf32>
    %137 = vector.broadcast %129 : vector<1x256xf32> to vector<8x256xf32>
    %138 = arith.subf %123, %137 : vector<8x256xf32>
    %cst_55 = arith.constant 9.99999974E-6 : f32
    %139 = vector.broadcast %cst_55 : f32 to vector<1x256xf32>
    %140 = arith.addf %136, %139 : vector<1x256xf32>
    %141 = math.rsqrt %140 : vector<1x256xf32>
    %142 = vector.broadcast %141 : vector<1x256xf32> to vector<8x256xf32>
    %143 = arith.mulf %138, %142 : vector<8x256xf32>
    %144 = vector.broadcast %124 : vector<1x256xf32> to vector<8x256xf32>
    %145 = arith.mulf %143, %144 : vector<8x256xf32>
    %146 = vector.broadcast %125 : vector<1x256xf32> to vector<8x256xf32>
    %147 = arith.addf %145, %146 : vector<8x256xf32>
    %cst_56 = arith.constant 0.000000e+00 : f32
    %148 = vector.broadcast %cst_56 : f32 to vector<8x256xf32>
    %149 = arith.cmpf oge, %147, %148 : vector<8x256xf32>
    %c0_57 = arith.constant 0 : index
    %150 = memref.load %arg8[%c0_57] : memref<3xf32, #tpu.memory_space<smem>>
    %151 = vector.broadcast %150 : f32 to vector<8x256xf32>
    %152 = arith.mulf %151, %147 : vector<8x256xf32>
    %153 = arith.select %149, %147, %152 : vector<8x256xi1>, vector<8x256xf32>
    %154 = arith.truncf %153 : vector<8x256xf32> to vector<8x256xbf16>
    %c4_i32_58 = arith.constant 4 : i32
    %155 = tpu.memref_slice %arg18[%c4_i32_58] : memref<7x!tpu.dma_semaphore, #tpu.memory_space<semaphore_mem>> -> memref<1x!tpu.dma_semaphore, #tpu.memory_space<semaphore_mem>>
    %156 = tpu.memref_squeeze %155 : memref<1x!tpu.dma_semaphore, #tpu.memory_space<semaphore_mem>> -> memref<!tpu.dma_semaphore, #tpu.memory_space<semaphore_mem>>
    tpu.wait_dma2 semaphore(%156 : memref<!tpu.dma_semaphore, #tpu.memory_space<semaphore_mem>>) src(%arg5 : memref<256x512xbf16, #tpu.memory_space<any>>) dst(%arg15 : memref<256x512xbf16, #tpu.memory_space<vmem>>)
    %c0_59 = arith.constant 0 : index
    %c0_60 = arith.constant 0 : index
    %157 = vector.load %arg15[%c0_59, %c0_60] : memref<256x512xbf16, #tpu.memory_space<vmem>>, vector<256x512xbf16>
    %cst_61 = arith.constant dense<0.000000e+00> : vector<8x512xf32>
    %158 = tpu.matmul %154, %157, %cst_61 {dimension_numbers = #tpu.dot_dimension_numbers<[1], [0], [0], [1], [0, 0, 1, 1], [], []>} : vector<8x256xbf16>, vector<256x512xbf16>, vector<8x512xf32> -> vector<8x512xf32>
    %c0_62 = arith.constant 0 : index
    %c1152 = arith.constant 1152 : index
    %159 = vector.load %arg7[%c0_62, %c1152] : memref<2x3840xf32, #tpu.memory_space<vmem>>, vector<1x512xf32>
    %c1_63 = arith.constant 1 : index
    %c1152_64 = arith.constant 1152 : index
    %160 = vector.load %arg7[%c1_63, %c1152_64] : memref<2x3840xf32, #tpu.memory_space<vmem>>, vector<1x512xf32>
    %cst_65 = arith.constant dense<0.000000e+00> : vector<512xf32>
    %161 = vector.multi_reduction <add>, %158, %cst_65 [0] : vector<8x512xf32> to vector<512xf32>
    %162 = vector.shape_cast %161 : vector<512xf32> to vector<1x512xf32>
    %cst_66 = arith.constant 8.000000e+00 : f32
    %163 = vector.broadcast %cst_66 : f32 to vector<1x512xf32>
    %164 = arith.divf %162, %163 : vector<1x512xf32>
    %165 = vector.broadcast %164 : vector<1x512xf32> to vector<8x512xf32>
    %166 = arith.subf %158, %165 : vector<8x512xf32>
    %167 = arith.mulf %166, %166 : vector<8x512xf32>
    %cst_67 = arith.constant dense<0.000000e+00> : vector<512xf32>
    %168 = vector.multi_reduction <add>, %167, %cst_67 [0] : vector<8x512xf32> to vector<512xf32>
    %169 = vector.shape_cast %168 : vector<512xf32> to vector<1x512xf32>
    %cst_68 = arith.constant 8.000000e+00 : f32
    %170 = vector.broadcast %cst_68 : f32 to vector<1x512xf32>
    %171 = arith.divf %169, %170 : vector<1x512xf32>
    %172 = vector.broadcast %164 : vector<1x512xf32> to vector<8x512xf32>
    %173 = arith.subf %158, %172 : vector<8x512xf32>
    %cst_69 = arith.constant 9.99999974E-6 : f32
    %174 = vector.broadcast %cst_69 : f32 to vector<1x512xf32>
    %175 = arith.addf %171, %174 : vector<1x512xf32>
    %176 = math.rsqrt %175 : vector<1x512xf32>
    %177 = vector.broadcast %176 : vector<1x512xf32> to vector<8x512xf32>
    %178 = arith.mulf %173, %177 : vector<8x512xf32>
    %179 = vector.broadcast %159 : vector<1x512xf32> to vector<8x512xf32>
    %180 = arith.mulf %178, %179 : vector<8x512xf32>
    %181 = vector.broadcast %160 : vector<1x512xf32> to vector<8x512xf32>
    %182 = arith.addf %180, %181 : vector<8x512xf32>
    %cst_70 = arith.constant 0.000000e+00 : f32
    %183 = vector.broadcast %cst_70 : f32 to vector<8x512xf32>
    %184 = arith.cmpf oge, %182, %183 : vector<8x512xf32>
    %c1_71 = arith.constant 1 : index
    %185 = memref.load %arg8[%c1_71] : memref<3xf32, #tpu.memory_space<smem>>
    %186 = vector.broadcast %185 : f32 to vector<8x512xf32>
    %187 = arith.mulf %186, %182 : vector<8x512xf32>
    %188 = arith.select %184, %182, %187 : vector<8x512xi1>, vector<8x512xf32>
    %189 = arith.truncf %188 : vector<8x512xf32> to vector<8x512xbf16>
    %c5_i32_72 = arith.constant 5 : i32
    %c0_i32_73 = arith.constant 0 : i32
    %c0_i32_74 = arith.constant 0 : i32
    %190 = tpu.memref_slice %arg6[%c0_i32_73, %c0_i32_74] : memref<512x2176xbf16, #tpu.memory_space<any>> -> memref<512x1152xbf16, #tpu.memory_space<any>>
    %191 = tpu.memref_slice %arg18[%c5_i32_72] : memref<7x!tpu.dma_semaphore, #tpu.memory_space<semaphore_mem>> -> memref<1x!tpu.dma_semaphore, #tpu.memory_space<semaphore_mem>>
    %192 = tpu.memref_squeeze %191 : memref<1x!tpu.dma_semaphore, #tpu.memory_space<semaphore_mem>> -> memref<!tpu.dma_semaphore, #tpu.memory_space<semaphore_mem>>
    tpu.wait_dma2 semaphore(%192 : memref<!tpu.dma_semaphore, #tpu.memory_space<semaphore_mem>>) src(%190 : memref<512x1152xbf16, #tpu.memory_space<any>>) dst(%arg16 : memref<512x1152xbf16, #tpu.memory_space<vmem>>)
    %c0_75 = arith.constant 0 : index
    %c0_76 = arith.constant 0 : index
    %193 = vector.load %arg16[%c0_75, %c0_76] : memref<512x1152xbf16, #tpu.memory_space<vmem>>, vector<512x1152xbf16>
    %cst_77 = arith.constant dense<0.000000e+00> : vector<8x1152xf32>
    %194 = tpu.matmul %189, %193, %cst_77 {dimension_numbers = #tpu.dot_dimension_numbers<[1], [0], [0], [1], [0, 0, 1, 1], [], []>} : vector<8x512xbf16>, vector<512x1152xbf16>, vector<8x1152xf32> -> vector<8x1152xf32>
    %c0_78 = arith.constant 0 : index
    %c1664 = arith.constant 1664 : index
    %195 = vector.load %arg7[%c0_78, %c1664] : memref<2x3840xf32, #tpu.memory_space<vmem>>, vector<1x1152xf32>
    %c1_79 = arith.constant 1 : index
    %c1664_80 = arith.constant 1664 : index
    %196 = vector.load %arg7[%c1_79, %c1664_80] : memref<2x3840xf32, #tpu.memory_space<vmem>>, vector<1x1152xf32>
    %cst_81 = arith.constant dense<0.000000e+00> : vector<1152xf32>
    %197 = vector.multi_reduction <add>, %194, %cst_81 [0] : vector<8x1152xf32> to vector<1152xf32>
    %198 = vector.shape_cast %197 : vector<1152xf32> to vector<1x1152xf32>
    %cst_82 = arith.constant 8.000000e+00 : f32
    %199 = vector.broadcast %cst_82 : f32 to vector<1x1152xf32>
    %200 = arith.divf %198, %199 : vector<1x1152xf32>
    %201 = vector.broadcast %200 : vector<1x1152xf32> to vector<8x1152xf32>
    %202 = arith.subf %194, %201 : vector<8x1152xf32>
    %203 = arith.mulf %202, %202 : vector<8x1152xf32>
    %cst_83 = arith.constant dense<0.000000e+00> : vector<1152xf32>
    %204 = vector.multi_reduction <add>, %203, %cst_83 [0] : vector<8x1152xf32> to vector<1152xf32>
    %205 = vector.shape_cast %204 : vector<1152xf32> to vector<1x1152xf32>
    %cst_84 = arith.constant 8.000000e+00 : f32
    %206 = vector.broadcast %cst_84 : f32 to vector<1x1152xf32>
    %207 = arith.divf %205, %206 : vector<1x1152xf32>
    %208 = vector.broadcast %200 : vector<1x1152xf32> to vector<8x1152xf32>
    %209 = arith.subf %194, %208 : vector<8x1152xf32>
    %cst_85 = arith.constant 9.99999974E-6 : f32
    %210 = vector.broadcast %cst_85 : f32 to vector<1x1152xf32>
    %211 = arith.addf %207, %210 : vector<1x1152xf32>
    %212 = math.rsqrt %211 : vector<1x1152xf32>
    %213 = vector.broadcast %212 : vector<1x1152xf32> to vector<8x1152xf32>
    %214 = arith.mulf %209, %213 : vector<8x1152xf32>
    %215 = vector.broadcast %195 : vector<1x1152xf32> to vector<8x1152xf32>
    %216 = arith.mulf %214, %215 : vector<8x1152xf32>
    %217 = vector.broadcast %196 : vector<1x1152xf32> to vector<8x1152xf32>
    %218 = arith.addf %216, %217 : vector<8x1152xf32>
    %cst_86 = arith.constant 0.000000e+00 : f32
    %219 = vector.broadcast %cst_86 : f32 to vector<8x1152xf32>
    %220 = arith.cmpf oge, %218, %219 : vector<8x1152xf32>
    %c2 = arith.constant 2 : index
    %221 = memref.load %arg8[%c2] : memref<3xf32, #tpu.memory_space<smem>>
    %222 = vector.broadcast %221 : f32 to vector<8x1152xf32>
    %223 = arith.mulf %222, %218 : vector<8x1152xf32>
    %224 = arith.select %220, %218, %223 : vector<8x1152xi1>, vector<8x1152xf32>
    %c0_87 = arith.constant 0 : index
    %c0_88 = arith.constant 0 : index
    %225 = vector.load %arg10[%c0_87, %c0_88] : memref<8x2176xf32, #tpu.memory_space<vmem>>, vector<8x1152xf32>
    tpu.vector_store %arg10[%c0_87, %c0_88], %224 {strides = array<i32>} : memref<8x2176xf32, #tpu.memory_space<vmem>>, vector<8x1152xf32>,
    %c6_i32_89 = arith.constant 6 : i32
    %c0_i32_90 = arith.constant 0 : i32
    %c1152_i32_91 = arith.constant 1152 : i32
    %226 = tpu.memref_slice %arg6[%c0_i32_90, %c1152_i32_91] : memref<512x2176xbf16, #tpu.memory_space<any>> -> memref<512x1024xbf16, #tpu.memory_space<any>>
    %227 = tpu.memref_slice %arg18[%c6_i32_89] : memref<7x!tpu.dma_semaphore, #tpu.memory_space<semaphore_mem>> -> memref<1x!tpu.dma_semaphore, #tpu.memory_space<semaphore_mem>>
    %228 = tpu.memref_squeeze %227 : memref<1x!tpu.dma_semaphore, #tpu.memory_space<semaphore_mem>> -> memref<!tpu.dma_semaphore, #tpu.memory_space<semaphore_mem>>
    tpu.wait_dma2 semaphore(%228 : memref<!tpu.dma_semaphore, #tpu.memory_space<semaphore_mem>>) src(%226 : memref<512x1024xbf16, #tpu.memory_space<any>>) dst(%arg17 : memref<512x1024xbf16, #tpu.memory_space<vmem>>)
    %c0_92 = arith.constant 0 : index
    %c0_93 = arith.constant 0 : index
    %229 = vector.load %arg17[%c0_92, %c0_93] : memref<512x1024xbf16, #tpu.memory_space<vmem>>, vector<512x1024xbf16>
    %cst_94 = arith.constant dense<0.000000e+00> : vector<8x1024xf32>
    %230 = tpu.matmul %189, %229, %cst_94 {dimension_numbers = #tpu.dot_dimension_numbers<[1], [0], [0], [1], [0, 0, 1, 1], [], []>} : vector<8x512xbf16>, vector<512x1024xbf16>, vector<8x1024xf32> -> vector<8x1024xf32>
    %c0_95 = arith.constant 0 : index
    %c2816 = arith.constant 2816 : index
    %231 = vector.load %arg7[%c0_95, %c2816] : memref<2x3840xf32, #tpu.memory_space<vmem>>, vector<1x1024xf32>
    %c1_96 = arith.constant 1 : index
    %c2816_97 = arith.constant 2816 : index
    %232 = vector.load %arg7[%c1_96, %c2816_97] : memref<2x3840xf32, #tpu.memory_space<vmem>>, vector<1x1024xf32>
    %cst_98 = arith.constant dense<0.000000e+00> : vector<1024xf32>
    %233 = vector.multi_reduction <add>, %230, %cst_98 [0] : vector<8x1024xf32> to vector<1024xf32>
    %234 = vector.shape_cast %233 : vector<1024xf32> to vector<1x1024xf32>
    %cst_99 = arith.constant 8.000000e+00 : f32
    %235 = vector.broadcast %cst_99 : f32 to vector<1x1024xf32>
    %236 = arith.divf %234, %235 : vector<1x1024xf32>
    %237 = vector.broadcast %236 : vector<1x1024xf32> to vector<8x1024xf32>
    %238 = arith.subf %230, %237 : vector<8x1024xf32>
    %239 = arith.mulf %238, %238 : vector<8x1024xf32>
    %cst_100 = arith.constant dense<0.000000e+00> : vector<1024xf32>
    %240 = vector.multi_reduction <add>, %239, %cst_100 [0] : vector<8x1024xf32> to vector<1024xf32>
    %241 = vector.shape_cast %240 : vector<1024xf32> to vector<1x1024xf32>
    %cst_101 = arith.constant 8.000000e+00 : f32
    %242 = vector.broadcast %cst_101 : f32 to vector<1x1024xf32>
    %243 = arith.divf %241, %242 : vector<1x1024xf32>
    %244 = vector.broadcast %236 : vector<1x1024xf32> to vector<8x1024xf32>
    %245 = arith.subf %230, %244 : vector<8x1024xf32>
    %cst_102 = arith.constant 9.99999974E-6 : f32
    %246 = vector.broadcast %cst_102 : f32 to vector<1x1024xf32>
    %247 = arith.addf %243, %246 : vector<1x1024xf32>
    %248 = math.rsqrt %247 : vector<1x1024xf32>
    %249 = vector.broadcast %248 : vector<1x1024xf32> to vector<8x1024xf32>
    %250 = arith.mulf %245, %249 : vector<8x1024xf32>
    %251 = vector.broadcast %231 : vector<1x1024xf32> to vector<8x1024xf32>
    %252 = arith.mulf %250, %251 : vector<8x1024xf32>
    %253 = vector.broadcast %232 : vector<1x1024xf32> to vector<8x1024xf32>
    %254 = arith.addf %252, %253 : vector<8x1024xf32>
    %cst_103 = arith.constant 0.000000e+00 : f32
    %255 = vector.broadcast %cst_103 : f32 to vector<8x1024xf32>
    %256 = arith.cmpf oge, %254, %255 : vector<8x1024xf32>
    %c2_104 = arith.constant 2 : index
    %257 = memref.load %arg8[%c2_104] : memref<3xf32, #tpu.memory_space<smem>>
    %258 = vector.broadcast %257 : f32 to vector<8x1024xf32>
    %259 = arith.mulf %258, %254 : vector<8x1024xf32>
    %260 = arith.select %256, %254, %259 : vector<8x1024xi1>, vector<8x1024xf32>
    %c0_105 = arith.constant 0 : index
    %c1152_106 = arith.constant 1152 : index
    %261 = vector.load %arg10[%c0_105, %c1152_106] : memref<8x2176xf32, #tpu.memory_space<vmem>>, vector<8x1024xf32>
    tpu.vector_store %arg10[%c0_105, %c1152_106], %260 {strides = array<i32>} : memref<8x2176xf32, #tpu.memory_space<vmem>>, vector<8x1024xf32>,
    return
  }
}

</mosaic_0001>

<llo_original>
// kernel: autoencoder_forward.1
$region0: #{autoencoder_forward.1}
  #allocation0 [shape = 'u32[]', space=smem, size = 0x4, offset = 0x4, fixed_abs, tag = 'smem constant byte address 0x4 - core index']
  #allocation1 [shape = 'u32[72,128]{1,0:T(1,128)}', space=vmem, size = 0x9000, scoped, tag = 'internal scratch']
  #allocation2 [shape = 'bf16[2176,512]{1,0:T(8,128)(2,1)}', space=vmem, size = 0x220000, scoped, tag = 'scratch operand']
  #allocation3 [shape = 'bf16[512,256]{1,0:T(8,128)(2,1)}', space=vmem, size = 0x40000, scoped, tag = 'scratch operand']
  #allocation4 [shape = 'bf16[256,128]{1,0:T(8,128)(2,1)}', space=vmem, size = 0x10000, scoped, tag = 'scratch operand']
  #allocation5 [shape = 'bf16[128,256]{1,0:T(8,128)(2,1)}', space=vmem, size = 0x10000, scoped, tag = 'scratch operand']
  #allocation6 [shape = 'bf16[256,512]{1,0:T(8,128)(2,1)}', space=vmem, size = 0x40000, scoped, tag = 'scratch operand']
  #allocation7 [shape = 'bf16[512,1152]{1,0:T(8,128)(2,1)}', space=vmem, size = 0x120000, scoped, tag = 'scratch operand']
  #allocation8 [shape = 'bf16[512,1024]{1,0:T(8,128)(2,1)}', space=vmem, size = 0x100000, scoped, tag = 'scratch operand']
  #allocation9 [shape = 's32[7]{0}', space=sflag, size = 0x1c, scoped, tag = 'scratch operand']
  #allocation18 [shape = 's32[]', space=sflag, size = 0x4, offset = 0, fixed_abs, tag = 'sflag constant byte address 0x0 - dummy sync flag']
  #allocation19 [shape = 's32[]', space=sflag, size = 0x4, offset = 0, fixed_abs, tag = 'sflag constant byte address 0x0 - dummy sync flag']
  #allocation20 [shape = 'u32[]', space=smem, size = 0x4, offset = 0x44, fixed_abs, tag = 'smem constant byte address 0x44 - assertion arg 0']
  #allocation21 [shape = 'u32[]', space=smem, size = 0x4, offset = 0x48, fixed_abs, tag = 'smem constant byte address 0x48 - assertion arg 1']
  #allocation22 [shape = 's32[]', space=sflag, size = 0x4, offset = 0, fixed_abs, tag = 'sflag constant byte address 0x0 - dummy sync flag']
  #allocation23 [shape = 's32[]', space=sflag, size = 0x4, offset = 0, fixed_abs, tag = 'sflag constant byte address 0x0 - dummy sync flag']
  #allocation24 [shape = 's32[]', space=sflag, size = 0x4, offset = 0, fixed_abs, tag = 'sflag constant byte address 0x0 - dummy sync flag']
  #allocation25 [shape = 's32[]', space=sflag, size = 0x4, offset = 0, fixed_abs, tag = 'sflag constant byte address 0x0 - dummy sync flag']
  #allocation26 [shape = 's32[]', space=sflag, size = 0x4, offset = 0, fixed_abs, tag = 'sflag constant byte address 0x0 - dummy sync flag']
  #allocation27 [shape = 's32[]', space=sflag, size = 0x4, offset = 0, fixed_abs, tag = 'sflag constant byte address 0x0 - dummy sync flag']
  #allocation28 [shape = 's32[]', space=sflag, size = 0x4, offset = 0, fixed_abs, tag = 'sflag constant byte address 0x0 - dummy sync flag']
  #allocation29 [shape = 's32[]', space=sflag, size = 0x4, offset = 0, fixed_abs, tag = 'sflag constant byte address 0x0 - dummy sync flag']
  #allocation30 [shape = 's32[]', space=sflag, size = 0x4, offset = 0, fixed_abs, tag = 'sflag constant byte address 0x0 - dummy sync flag']
  #allocation31 [shape = 's32[]', space=sflag, size = 0x4, offset = 0, fixed_abs, tag = 'sflag constant byte address 0x0 - dummy sync flag']
  %s0 = inlined_call_operand.vmem [shape: bf16[8,2176], index: 0, kind: input, shape index: {}]
  %s1 = inlined_call_operand.hbm [shape: bf16[2176,512], index: 1, kind: input, shape index: {}]
  %s2 = inlined_call_operand.hbm [shape: bf16[512,256], index: 2, kind: input, shape index: {}]
  %s3 = inlined_call_operand.hbm [shape: bf16[256,128], index: 3, kind: input, shape index: {}]
  %s4 = inlined_call_operand.hbm [shape: bf16[128,256], index: 4, kind: input, shape index: {}]
  %s5 = inlined_call_operand.hbm [shape: bf16[256,512], index: 5, kind: input, shape index: {}]
  %s6 = inlined_call_operand.hbm [shape: bf16[512,2176], index: 6, kind: input, shape index: {}]
  %s7 = inlined_call_operand.hbm [shape: f32[2,3840], index: 7, kind: input, shape index: {}]
  %s8 = inlined_call_operand.hbm [shape: f32[3], index: 8, kind: input, shape index: {}]
  %s9 = inlined_call_operand.hbm [shape: f32[8,128], index: 9, kind: output, shape index: {0}]
  %s10 = inlined_call_operand.hbm [shape: f32[8,2176], index: 10, kind: output, shape index: {1}]
  %11 = xla_tuple %s9, %s10
  %s12 = sld [smem:[#allocation0]]
  $region58: #{autoencoder_forward.1} parent=0
    _
  %s14 = ssub.s32 1, %s12
  %s15 = scalar_select 0, %s14, %s12
  $region1: #{autoencoder_forward.1} parent=0
    #allocation10 [shape = 'u8[30720]{0}', space=vmem, size = 0x7800, scoped, tag = 'input window, operand 7, single buffered']
    #allocation11 [shape = 's32[1]{0}', space=sflag, size = 0x4, scoped, tag = 'scoped memory for autoencoder_forward.1']
    #allocation12 [shape = 's32[1]{0}', space=sflag, size = 0x4, scoped, tag = 'scoped memory for autoencoder_forward.1']
    #allocation13 [shape = 's32[1]{0}', space=sflag, size = 0x4, scoped, tag = 'scoped memory for autoencoder_forward.1']
    #allocation14 [shape = 'u8[512]{0}', space=smem, size = 0x200, scoped, tag = 'input window, operand 8, single buffered']
    #allocation15 [shape = 'u8[4096]{0}', space=vmem, size = 0x1000, scoped, tag = 'output window, operand 0, single buffered']
    #allocation16 [shape = 'u8[69632]{0}', space=vmem, size = 0x11000, scoped, tag = 'output window, operand 1, single buffered']
    #allocation17 [shape = 's32[1]{0}', space=sflag, size = 0x4, scoped, tag = 'scoped memory for autoencoder_forward.1']
    %16 = vsyncpa [#allocation11], 0
    %17 = vsyncpa [#allocation13], 0
    %18 = vsyncpa [#allocation12], 0
    %19 = vsyncpa [#allocation17], 0
    // Predicated region
    $region2: #{autoencoder_forward.1} parent=1 // pred_check
      _
    $region3: #{autoencoder_forward.1} parent=1 // pred_check_branch
      %21 = sbr.rel (0) target = $region5
    $region4: #{autoencoder_forward.1} parent=1 // pred_region
      _
    $region5: #{autoencoder_forward.1} parent=1 // pred_fallthru
      _
    // Predicated region
    $region6: #{autoencoder_forward.1} parent=1 // pred_check
      _
    $region7: #{autoencoder_forward.1} parent=1 // pred_check_branch
      %23 = sbr.rel (0) target = $region9
    $region8: #{autoencoder_forward.1} parent=1 // pred_region
      %25 = vsyncadd [#allocation11], 0
      %s27 = sshll.u32 %s7, 4
      %s28 = int_to_ptr.hbm [resolvable:$true] %s27
      %s29 = sshll.u32 [#allocation10], 4
      %s30 = int_to_ptr.vmem [resolvable:$true] %s29
      %32 = dma.hbm_to_vmem [thread:$0]  %s28, 960, %s30, [#allocation11]
    $region9: #{autoencoder_forward.1} parent=1 // pred_fallthru
      _
    // Predicated region
    $region10: #{autoencoder_forward.1} parent=1 // pred_check
      _
    $region11: #{autoencoder_forward.1} parent=1 // pred_check_branch
      %34 = sbr.rel (0) target = $region13
    $region12: #{autoencoder_forward.1} parent=1 // pred_region
      %36 = vsyncadd [#allocation13], 0
      %s38 = sshll.u32 %s8, 4
      %s39 = int_to_ptr.hbm [resolvable:$true] %s38
      %41 = dma.hbm_to_smem %s39, 16, [#allocation14], [#allocation13]
    $region13: #{autoencoder_forward.1} parent=1 // pred_fallthru
      _
    // Predicated region
    $region14: #{autoencoder_forward.1} parent=1 // pred_check
      _
    $region15: #{autoencoder_forward.1} parent=1 // pred_check_branch
      %43 = sbr.rel (0) target = $region17
    $region16: #{autoencoder_forward.1} parent=1 // pred_region
      %45 = dma.done [#allocation11], 960
    $region17: #{autoencoder_forward.1} parent=1 // pred_fallthru
      _
    // Predicated region
    $region18: #{autoencoder_forward.1} parent=1 // pred_check
      _
    $region19: #{autoencoder_forward.1} parent=1 // pred_check_branch
      %47 = sbr.rel (0) target = $region21
    $region20: #{autoencoder_forward.1} parent=1 // pred_region
      %49 = dma.done [#allocation13], 16
    $region21: #{autoencoder_forward.1} parent=1 // pred_fallthru
      _
    %50 = sfence
    // Predicated region
    $region22: #{autoencoder_forward.1} parent=1 // pred_check
      _
    $region23: #{autoencoder_forward.1} parent=1 // pred_check_branch
      %52 = sbr.rel target = $region25
    $region24: #{autoencoder_forward.1} parent=1 // pred_region
      %53 = sst [smem:[#allocation20]] [#allocation19]
      %54 = sst [smem:[#allocation21]] [#allocation18]
    $region25: #{autoencoder_forward.1} parent=1 // pred_fallthru
      _
    %56 = shalt.err (0)
    %s58 = sshll.u32 %s1, 4
    %s59 = int_to_ptr.hbm [resolvable:$true] %s58
    %s60 = sshll.u32 [#allocation2], 4
    %s61 = int_to_ptr.vmem [resolvable:$true] %s60
    %63 = dma.hbm_to_vmem [thread:$0]  %s59, 69632, %s61, [#allocation9]
    %s64 = scalar_lea.sflag [#allocation9], 1
    // Predicated region
    $region26: #{autoencoder_forward.1} parent=1 // pred_check
      _
    $region27: #{autoencoder_forward.1} parent=1 // pred_check_branch
      %66 = sbr.rel target = $region29
    $region28: #{autoencoder_forward.1} parent=1 // pred_region
      %67 = sst [smem:[#allocation20]] [#allocation23]
      %68 = sst [smem:[#allocation21]] [#allocation22]
    $region29: #{autoencoder_forward.1} parent=1 // pred_fallthru
      _
    %70 = shalt.err (0)
    %s72 = sshll.u32 %s2, 4
    %s73 = int_to_ptr.hbm [resolvable:$true] %s72
    %s74 = sshll.u32 [#allocation3], 4
    %s75 = int_to_ptr.vmem [resolvable:$true] %s74
    %77 = dma.hbm_to_vmem [thread:$0]  %s73, 8192, %s75, %s64
    %s78 = scalar_lea.sflag [#allocation9], 2
    // Predicated region
    $region30: #{autoencoder_forward.1} parent=1 // pred_check
      _
    $region31: #{autoencoder_forward.1} parent=1 // pred_check_branch
      %80 = sbr.rel target = $region33
    $region32: #{autoencoder_forward.1} parent=1 // pred_region
      %81 = sst [smem:[#allocation20]] [#allocation25]
      %82 = sst [smem:[#allocation21]] [#allocation24]
    $region33: #{autoencoder_forward.1} parent=1 // pred_fallthru
      _
    %84 = shalt.err (0)
    %s86 = sshll.u32 %s3, 4
    %s87 = int_to_ptr.hbm [resolvable:$true] %s86
    %s88 = sshll.u32 [#allocation4], 4
    %s89 = int_to_ptr.vmem [resolvable:$true] %s88
    %91 = dma.hbm_to_vmem [thread:$0]  %s87, 2048, %s89, %s78
    %s92 = scalar_lea.sflag [#allocation9], 3
    // Predicated region
    $region34: #{autoencoder_forward.1} parent=1 // pred_check
      _
    $region35: #{autoencoder_forward.1} parent=1 // pred_check_branch
      %94 = sbr.rel target = $region37
    $region36: #{autoencoder_forward.1} parent=1 // pred_region
      %95 = sst [smem:[#allocation20]] [#allocation27]
      %96 = sst [smem:[#allocation21]] [#allocation26]
    $region37: #{autoencoder_forward.1} parent=1 // pred_fallthru
      _
    %98 = shalt.err (0)
    %s100 = sshll.u32 %s4, 4
    %s101 = int_to_ptr.hbm [resolvable:$true] %s100
    %s102 = sshll.u32 [#allocation5], 4
    %s103 = int_to_ptr.vmem [resolvable:$true] %s102
    %105 = dma.hbm_to_vmem [thread:$0]  %s101, 2048, %s103, %s92
    %s106 = scalar_lea.sflag [#allocation9], 4
    // Predicated region
    $region38: #{autoencoder_forward.1} parent=1 // pred_check
      _
    $region39: #{autoencoder_forward.1} parent=1 // pred_check_branch
      %108 = sbr.rel target = $region41
    $region40: #{autoencoder_forward.1} parent=1 // pred_region
      %109 = sst [smem:[#allocation20]] [#allocation29]
      %110 = sst [smem:[#allocation21]] [#allocation28]
    $region41: #{autoencoder_forward.1} parent=1 // pred_fallthru
      _
    %112 = shalt.err (0)
    %s114 = sshll.u32 %s5, 4
    %s115 = int_to_ptr.hbm [resolvable:$true] %s114
    %s116 = sshll.u32 [#allocation6], 4
    %s117 = int_to_ptr.vmem [resolvable:$true] %s116
    %119 = dma.hbm_to_vmem [thread:$0]  %s115, 8192, %s117, %s106
    %s120 = scalar_lea.sflag [#allocation9], 5
    %s121 = sshll.u32 %s6, 4
    %s122 = int_to_ptr.hbm [resolvable:$true] %s121
    %s123 = sshll.u32 [#allocation7], 4
    %s124 = int_to_ptr.vmem [resolvable:$true] %s123
    %128 = dma.hbm_to_vmem [thread:$0]  %s122, 36864, %s124, %s120, 1088, 576, 36
    %s129 = scalar_lea.hbm %s6, 36
    %s130 = scalar_lea.sflag [#allocation9], 6
    %s131 = sshll.u32 %s129, 4
    %s132 = int_to_ptr.hbm [resolvable:$true] %s131
    %s133 = sshll.u32 [#allocation8], 4
    %s134 = int_to_ptr.vmem [resolvable:$true] %s133
    %138 = dma.hbm_to_vmem [thread:$0]  %s132, 32768, %s134, %s130, 1088, 512, 32
    %v139 = vld [vmem:[%s0] sm:$0xff]
    %v140 = vld [vmem:[%s0 + $0x8] sm:$0xff]
    %v141 = vld [vmem:[%s0 + $0x10] sm:$0xff]
    %v142 = vld [vmem:[%s0 + $0x18] sm:$0xff]
    %v143 = vld [vmem:[%s0 + $0x20] sm:$0xff]
    %v144 = vld [vmem:[%s0 + $0x28] sm:$0xff]
    %v145 = vld [vmem:[%s0 + $0x30] sm:$0xff]
    %v146 = vld [vmem:[%s0 + $0x38] sm:$0xff]
    %v147 = vld [vmem:[%s0 + $0x40] sm:$0xf]
    %s148 = smul.u32 4, 272
    %s149 = smul.u32 %s148, 4
    %s150 = sshll.u32 %s149, 4
    %151 = dma.done [#allocation9], %s150
    %v152 = vld [vmem:[#allocation2] sm:$0xff]
    %v153 = vld [vmem:[#allocation2 + $0x8] sm:$0xff]
    %v154 = vld [vmem:[#allocation2 + $0x10] sm:$0xff]
    %v155 = vld [vmem:[#allocation2 + $0x18] sm:$0xff]
    %v156 = vld [vmem:[#allocation2 + $0x20] sm:$0xff]
    %v157 = vld [vmem:[#allocation2 + $0x28] sm:$0xff]
    %v158 = vld [vmem:[#allocation2 + $0x30] sm:$0xff]
    %v159 = vld [vmem:[#allocation2 + $0x38] sm:$0xff]
    %v160 = vld [vmem:[#allocation2 + $0x40] sm:$0xff]
    %v161 = vld [vmem:[#allocation2 + $0x48] sm:$0xff]
    %v162 = vld [vmem:[#allocation2 + $0x50] sm:$0xff]
    %v163 = vld [vmem:[#allocation2 + $0x58] sm:$0xff]
    %v164 = vld [vmem:[#allocation2 + $0x60] sm:$0xff]
    %v165 = vld [vmem:[#allocation2 + $0x68] sm:$0xff]
    %v166 = vld [vmem:[#allocation2 + $0x70] sm:$0xff]
    %v167 = vld [vmem:[#allocation2 + $0x78] sm:$0xff]
    %v168 = vld [vmem:[#allocation2 + $0x80] sm:$0xff]
    %v169 = vld [vmem:[#allocation2 + $0x88] sm:$0xff]
    %v170 = vld [vmem:[#allocation2 + $0x90] sm:$0xff]
    %v171 = vld [vmem:[#allocation2 + $0x98] sm:$0xff]
    %v172 = vld [vmem:[#allocation2 + $0xa0] sm:$0xff]
    %v173 = vld [vmem:[#allocation2 + $0xa8] sm:$0xff]
    %v174 = vld [vmem:[#allocation2 + $0xb0] sm:$0xff]
    %v175 = vld [vmem:[#allocation2 + $0xb8] sm:$0xff]
    %v176 = vld [vmem:[#allocation2 + $0xc0] sm:$0xff]
    %v177 = vld [vmem:[#allocation2 + $0xc8] sm:$0xff]
    %v178 = vld [vmem:[#allocation2 + $0xd0] sm:$0xff]
    %v179 = vld [vmem:[#allocation2 + $0xd8] sm:$0xff]
    %v180 = vld [vmem:[#allocation2 + $0xe0] sm:$0xff]
    %v181 = vld [vmem:[#allocation2 + $0xe8] sm:$0xff]
    %v182 = vld [vmem:[#allocation2 + $0xf0] sm:$0xff]
    %v183 = vld [vmem:[#allocation2 + $0xf8] sm:$0xff]
    %v184 = vld [vmem:[#allocation2 + $0x100] sm:$0xff]
    %v185 = vld [vmem:[#allocation2 + $0x108] sm:$0xff]
    %v186 = vld [vmem:[#allocation2 + $0x110] sm:$0xff]
    %v187 = vld [vmem:[#allocation2 + $0x118] sm:$0xff]
    %v188 = vld [vmem:[#allocation2 + $0x120] sm:$0xff]
    %v189 = vld [vmem:[#allocation2 + $0x128] sm:$0xff]
    %v190 = vld [vmem:[#allocation2 + $0x130] sm:$0xff]
    %v191 = vld [vmem:[#allocation2 + $0x138] sm:$0xff]
    %v192 = vld [vmem:[#allocation2 + $0x140] sm:$0xff]
    %v193 = vld [vmem:[#allocation2 + $0x148] sm:$0xff]
    %v194 = vld [vmem:[#allocation2 + $0x150] sm:$0xff]
    %v195 = vld [vmem:[#allocation2 + $0x158] sm:$0xff]
    %v196 = vld [vmem:[#allocation2 + $0x160] sm:$0xff]
    %v197 = vld [vmem:[#allocation2 + $0x168] sm:$0xff]
    %v198 = vld [vmem:[#allocation2 + $0x170] sm:$0xff]
    %v199 = vld [vmem:[#allocation2 + $0x178] sm:$0xff]
    %v200 = vld [vmem:[#allocation2 + $0x180] sm:$0xff]
    %v201 = vld [vmem:[#allocation2 + $0x188] sm:$0xff]
    %v202 = vld [vmem:[#allocation2 + $0x190] sm:$0xff]
    %v203 = vld [vmem:[#allocation2 + $0x198] sm:$0xff]
    %v204 = vld [vmem:[#allocation2 + $0x1a0] sm:$0xff]
    %v205 = vld [vmem:[#allocation2 + $0x1a8] sm:$0xff]
    %v206 = vld [vmem:[#allocation2 + $0x1b0] sm:$0xff]
    %v207 = vld [vmem:[#allocation2 + $0x1b8] sm:$0xff]
    %v208 = vld [vmem:[#allocation2 + $0x1c0] sm:$0xff]
    %v209 = vld [vmem:[#allocation2 + $0x1c8] sm:$0xff]
    %v210 = vld [vmem:[#allocation2 + $0x1d0] sm:$0xff]
    %v211 = vld [vmem:[#allocation2 + $0x1d8] sm:$0xff]
    %v212 = vld [vmem:[#allocation2 + $0x1e0] sm:$0xff]
    %v213 = vld [vmem:[#allocation2 + $0x1e8] sm:$0xff]
    %v214 = vld [vmem:[#allocation2 + $0x1f0] sm:$0xff]
    %v215 = vld [vmem:[#allocation2 + $0x1f8] sm:$0xff]
    %v216 = vld [vmem:[#allocation2 + $0x200] sm:$0xff]
    %v217 = vld [vmem:[#allocation2 + $0x208] sm:$0xff]
    %v218 = vld [vmem:[#allocation2 + $0x210] sm:$0xff]
    %v219 = vld [vmem:[#allocation2 + $0x218] sm:$0xff]
    %v220 = vld [vmem:[#allocation2 + $0x220] sm:$0xff]
    %v221 = vld [vmem:[#allocation2 + $0x228] sm:$0xff]
    %v222 = vld [vmem:[#allocation2 + $0x230] sm:$0xff]
    %v223 = vld [vmem:[#allocation2 + $0x238] sm:$0xff]
    %v224 = vld [vmem:[#allocation2 + $0x240] sm:$0xff]
    %v225 = vld [vmem:[#allocation2 + $0x248] sm:$0xff]
    %v226 = vld [vmem:[#allocation2 + $0x250] sm:$0xff]
    %v227 = vld [vmem:[#allocation2 + $0x258] sm:$0xff]
    %v228 = vld [vmem:[#allocation2 + $0x260] sm:$0xff]
    %v229 = vld [vmem:[#allocation2 + $0x268] sm:$0xff]
    %v230 = vld [vmem:[#allocation2 + $0x270] sm:$0xff]
    %v231 = vld [vmem:[#allocation2 + $0x278] sm:$0xff]
    %v232 = vld [vmem:[#allocation2 + $0x280] sm:$0xff]
    %v233 = vld [vmem:[#allocation2 + $0x288] sm:$0xff]
    %v234 = vld [vmem:[#allocation2 + $0x290] sm:$0xff]
    %v235 = vld [vmem:[#allocation2 + $0x298] sm:$0xff]
    %v236 = vld [vmem:[#allocation2 + $0x2a0] sm:$0xff]
    %v237 = vld [vmem:[#allocation2 + $0x2a8] sm:$0xff]
    %v238 = vld [vmem:[#allocation2 + $0x2b0] sm:$0xff]
    %v239 = vld [vmem:[#allocation2 + $0x2b8] sm:$0xff]
    %v240 = vld [vmem:[#allocation2 + $0x2c0] sm:$0xff]
    %v241 = vld [vmem:[#allocation2 + $0x2c8] sm:$0xff]
    %v242 = vld [vmem:[#allocation2 + $0x2d0] sm:$0xff]
    %v243 = vld [vmem:[#allocation2 + $0x2d8] sm:$0xff]
    %v244 = vld [vmem:[#allocation2 + $0x2e0] sm:$0xff]
    %v245 = vld [vmem:[#allocation2 + $0x2e8] sm:$0xff]
    %v246 = vld [vmem:[#allocation2 + $0x2f0] sm:$0xff]
    %v247 = vld [vmem:[#allocation2 + $0x2f8] sm:$0xff]
    %v248 = vld [vmem:[#allocation2 + $0x300] sm:$0xff]
    %v249 = vld [vmem:[#allocation2 + $0x308] sm:$0xff]
    %v250 = vld [vmem:[#allocation2 + $0x310] sm:$0xff]
    %v251 = vld [vmem:[#allocation2 + $0x318] sm:$0xff]
    %v252 = vld [vmem:[#allocation2 + $0x320] sm:$0xff]
    %v253 = vld [vmem:[#allocation2 + $0x328] sm:$0xff]
    %v254 = vld [vmem:[#allocation2 + $0x330] sm:$0xff]
    %v255 = vld [vmem:[#allocation2 + $0x338] sm:$0xff]
    %v256 = vld [vmem:[#allocation2 + $0x340] sm:$0xff]
    %v257 = vld [vmem:[#allocation2 + $0x348] sm:$0xff]
    %v258 = vld [vmem:[#allocation2 + $0x350] sm:$0xff]
    %v259 = vld [vmem:[#allocation2 + $0x358] sm:$0xff]
    %v260 = vld [vmem:[#allocation2 + $0x360] sm:$0xff]
    %v261 = vld [vmem:[#allocation2 + $0x368] sm:$0xff]
    %v262 = vld [vmem:[#allocation2 + $0x370] sm:$0xff]
    %v263 = vld [vmem:[#allocation2 + $0x378] sm:$0xff]
    %v264 = vld [vmem:[#allocation2 + $0x380] sm:$0xff]
    %v265 = vld [vmem:[#allocation2 + $0x388] sm:$0xff]
    %v266 = vld [vmem:[#allocation2 + $0x390] sm:$0xff]
    %v267 = vld [vmem:[#allocation2 + $0x398] sm:$0xff]
    %v268 = vld [vmem:[#allocation2 + $0x3a0] sm:$0xff]
    %v269 = vld [vmem:[#allocation2 + $0x3a8] sm:$0xff]
    %v270 = vld [vmem:[#allocation2 + $0x3b0] sm:$0xff]
    %v271 = vld [vmem:[#allocation2 + $0x3b8] sm:$0xff]
    %v272 = vld [vmem:[#allocation2 + $0x3c0] sm:$0xff]
    %v273 = vld [vmem:[#allocation2 + $0x3c8] sm:$0xff]
    %v274 = vld [vmem:[#allocation2 + $0x3d0] sm:$0xff]
    %v275 = vld [vmem:[#allocation2 + $0x3d8] sm:$0xff]
    %v276 = vld [vmem:[#allocation2 + $0x3e0] sm:$0xff]
    %v277 = vld [vmem:[#allocation2 + $0x3e8] sm:$0xff]
    %v278 = vld [vmem:[#allocation2 + $0x3f0] sm:$0xff]
    %v279 = vld [vmem:[#allocation2 + $0x3f8] sm:$0xff]
    %v280 = vld [vmem:[#allocation2 + $0x400] sm:$0xff]
    %v281 = vld [vmem:[#allocation2 + $0x408] sm:$0xff]
    %v282 = vld [vmem:[#allocation2 + $0x410] sm:$0xff]
    %v283 = vld [vmem:[#allocation2 + $0x418] sm:$0xff]
    %v284 = vld [vmem:[#allocation2 + $0x420] sm:$0xff]
    %v285 = vld [vmem:[#allocation2 + $0x428] sm:$0xff]
    %v286 = vld [vmem:[#allocation2 + $0x430] sm:$0xff]
    %v287 = vld [vmem:[#allocation2 + $0x438] sm:$0xff]
    %v288 = vld [vmem:[#allocation2 + $0x440] sm:$0xff]
    %v289 = vld [vmem:[#allocation2 + $0x448] sm:$0xff]
    %v290 = vld [vmem:[#allocation2 + $0x450] sm:$0xff]
    %v291 = vld [vmem:[#allocation2 + $0x458] sm:$0xff]
    %v292 = vld [vmem:[#allocation2 + $0x460] sm:$0xff]
    %v293 = vld [vmem:[#allocation2 + $0x468] sm:$0xff]
    %v294 = vld [vmem:[#allocation2 + $0x470] sm:$0xff]
    %v295 = vld [vmem:[#allocation2 + $0x478] sm:$0xff]
    %v296 = vld [vmem:[#allocation2 + $0x480] sm:$0xff]
    %v297 = vld [vmem:[#allocation2 + $0x488] sm:$0xff]
    %v298 = vld [vmem:[#allocation2 + $0x490] sm:$0xff]
    %v299 = vld [vmem:[#allocation2 + $0x498] sm:$0xff]
    %v300 = vld [vmem:[#allocation2 + $0x4a0] sm:$0xff]
    %v301 = vld [vmem:[#allocation2 + $0x4a8] sm:$0xff]
    %v302 = vld [vmem:[#allocation2 + $0x4b0] sm:$0xff]
    %v303 = vld [vmem:[#allocation2 + $0x4b8] sm:$0xff]
    %v304 = vld [vmem:[#allocation2 + $0x4c0] sm:$0xff]
    %v305 = vld [vmem:[#allocation2 + $0x4c8] sm:$0xff]
    %v306 = vld [vmem:[#allocation2 + $0x4d0] sm:$0xff]
    %v307 = vld [vmem:[#allocation2 + $0x4d8] sm:$0xff]
    %v308 = vld [vmem:[#allocation2 + $0x4e0] sm:$0xff]
    %v309 = vld [vmem:[#allocation2 + $0x4e8] sm:$0xff]
    %v310 = vld [vmem:[#allocation2 + $0x4f0] sm:$0xff]
    %v311 = vld [vmem:[#allocation2 + $0x4f8] sm:$0xff]
    %v312 = vld [vmem:[#allocation2 + $0x500] sm:$0xff]
    %v313 = vld [vmem:[#allocation2 + $0x508] sm:$0xff]
    %v314 = vld [vmem:[#allocation2 + $0x510] sm:$0xff]
    %v315 = vld [vmem:[#allocation2 + $0x518] sm:$0xff]
    %v316 = vld [vmem:[#allocation2 + $0x520] sm:$0xff]
    %v317 = vld [vmem:[#allocation2 + $0x528] sm:$0xff]
    %v318 = vld [vmem:[#allocation2 + $0x530] sm:$0xff]
    %v319 = vld [vmem:[#allocation2 + $0x538] sm:$0xff]
    %v320 = vld [vmem:[#allocation2 + $0x540] sm:$0xff]
    %v321 = vld [vmem:[#allocation2 + $0x548] sm:$0xff]
    %v322 = vld [vmem:[#allocation2 + $0x550] sm:$0xff]
    %v323 = vld [vmem:[#allocation2 + $0x558] sm:$0xff]
    %v324 = vld [vmem:[#allocation2 + $0x560] sm:$0xff]
    %v325 = vld [vmem:[#allocation2 + $0x568] sm:$0xff]
    %v326 = vld [vmem:[#allocation2 + $0x570] sm:$0xff]
    %v327 = vld [vmem:[#allocation2 + $0x578] sm:$0xff]
    %v328 = vld [vmem:[#allocation2 + $0x580] sm:$0xff]
    %v329 = vld [vmem:[#allocation2 + $0x588] sm:$0xff]
    %v330 = vld [vmem:[#allocation2 + $0x590] sm:$0xff]
    %v331 = vld [vmem:[#allocation2 + $0x598] sm:$0xff]
    %v332 = vld [vmem:[#allocation2 + $0x5a0] sm:$0xff]
    %v333 = vld [vmem:[#allocation2 + $0x5a8] sm:$0xff]
    %v334 = vld [vmem:[#allocation2 + $0x5b0] sm:$0xff]
    %v335 = vld [vmem:[#allocation2 + $0x5b8] sm:$0xff]
    %v336 = vld [vmem:[#allocation2 + $0x5c0] sm:$0xff]
    %v337 = vld [vmem:[#allocation2 + $0x5c8] sm:$0xff]
    %v338 = vld [vmem:[#allocation2 + $0x5d0] sm:$0xff]
    %v339 = vld [vmem:[#allocation2 + $0x5d8] sm:$0xff]
    %v340 = vld [vmem:[#allocation2 + $0x5e0] sm:$0xff]
    %v341 = vld [vmem:[#allocation2 + $0x5e8] sm:$0xff]
    %v342 = vld [vmem:[#allocation2 + $0x5f0] sm:$0xff]
    %v343 = vld [vmem:[#allocation2 + $0x5f8] sm:$0xff]
    %v344 = vld [vmem:[#allocation2 + $0x600] sm:$0xff]
    %v345 = vld [vmem:[#allocation2 + $0x608] sm:$0xff]
    %v346 = vld [vmem:[#allocation2 + $0x610] sm:$0xff]
    %v347 = vld [vmem:[#allocation2 + $0x618] sm:$0xff]
    %v348 = vld [vmem:[#allocation2 + $0x620] sm:$0xff]
    %v349 = vld [vmem:[#allocation2 + $0x628] sm:$0xff]
    %v350 = vld [vmem:[#allocation2 + $0x630] sm:$0xff]
    %v351 = vld [vmem:[#allocation2 + $0x638] sm:$0xff]
    %v352 = vld [vmem:[#allocation2 + $0x640] sm:$0xff]
    %v353 = vld [vmem:[#allocation2 + $0x648] sm:$0xff]
    %v354 = vld [vmem:[#allocation2 + $0x650] sm:$0xff]
    %v355 = vld [vmem:[#allocation2 + $0x658] sm:$0xff]
    %v356 = vld [vmem:[#allocation2 + $0x660] sm:$0xff]
    %v357 = vld [vmem:[#allocation2 + $0x668] sm:$0xff]
    %v358 = vld [vmem:[#allocation2 + $0x670] sm:$0xff]
    %v359 = vld [vmem:[#allocation2 + $0x678] sm:$0xff]
    %v360 = vld [vmem:[#allocation2 + $0x680] sm:$0xff]
    %v361 = vld [vmem:[#allocation2 + $0x688] sm:$0xff]
    %v362 = vld [vmem:[#allocation2 + $0x690] sm:$0xff]
    %v363 = vld [vmem:[#allocation2 + $0x698] sm:$0xff]
    %v364 = vld [vmem:[#allocation2 + $0x6a0] sm:$0xff]
    %v365 = vld [vmem:[#allocation2 + $0x6a8] sm:$0xff]
    %v366 = vld [vmem:[#allocation2 + $0x6b0] sm:$0xff]
    %v367 = vld [vmem:[#allocation2 + $0x6b8] sm:$0xff]
    %v368 = vld [vmem:[#allocation2 + $0x6c0] sm:$0xff]
    %v369 = vld [vmem:[#allocation2 + $0x6c8] sm:$0xff]
    %v370 = vld [vmem:[#allocation2 + $0x6d0] sm:$0xff]
    %v371 = vld [vmem:[#allocation2 + $0x6d8] sm:$0xff]
    %v372 = vld [vmem:[#allocation2 + $0x6e0] sm:$0xff]
    %v373 = vld [vmem:[#allocation2 + $0x6e8] sm:$0xff]
    %v374 = vld [vmem:[#allocation2 + $0x6f0] sm:$0xff]
    %v375 = vld [vmem:[#allocation2 + $0x6f8] sm:$0xff]
    %v376 = vld [vmem:[#allocation2 + $0x700] sm:$0xff]
    %v377 = vld [vmem:[#allocation2 + $0x708] sm:$0xff]
    %v378 = vld [vmem:[#allocation2 + $0x710] sm:$0xff]
    %v379 = vld [vmem:[#allocation2 + $0x718] sm:$0xff]
    %v380 = vld [vmem:[#allocation2 + $0x720] sm:$0xff]
    %v381 = vld [vmem:[#allocation2 + $0x728] sm:$0xff]
    %v382 = vld [vmem:[#allocation2 + $0x730] sm:$0xff]
    %v383 = vld [vmem:[#allocation2 + $0x738] sm:$0xff]
    %v384 = vld [vmem:[#allocation2 + $0x740] sm:$0xff]
    %v385 = vld [vmem:[#allocation2 + $0x748] sm:$0xff]
    %v386 = vld [vmem:[#allocation2 + $0x750] sm:$0xff]
    %v387 = vld [vmem:[#allocation2 + $0x758] sm:$0xff]
    %v388 = vld [vmem:[#allocation2 + $0x760] sm:$0xff]
    %v389 = vld [vmem:[#allocation2 + $0x768] sm:$0xff]
    %v390 = vld [vmem:[#allocation2 + $0x770] sm:$0xff]
    %v391 = vld [vmem:[#allocation2 + $0x778] sm:$0xff]
    %v392 = vld [vmem:[#allocation2 + $0x780] sm:$0xff]
    %v393 = vld [vmem:[#allocation2 + $0x788] sm:$0xff]
    %v394 = vld [vmem:[#allocation2 + $0x790] sm:$0xff]
    %v395 = vld [vmem:[#allocation2 + $0x798] sm:$0xff]
    %v396 = vld [vmem:[#allocation2 + $0x7a0] sm:$0xff]
    %v397 = vld [vmem:[#allocation2 + $0x7a8] sm:$0xff]
    %v398 = vld [vmem:[#allocation2 + $0x7b0] sm:$0xff]
    %v399 = vld [vmem:[#allocation2 + $0x7b8] sm:$0xff]
    %v400 = vld [vmem:[#allocation2 + $0x7c0] sm:$0xff]
    %v401 = vld [vmem:[#allocation2 + $0x7c8] sm:$0xff]
    %v402 = vld [vmem:[#allocation2 + $0x7d0] sm:$0xff]
    %v403 = vld [vmem:[#allocation2 + $0x7d8] sm:$0xff]
    %v404 = vld [vmem:[#allocation2 + $0x7e0] sm:$0xff]
    %v405 = vld [vmem:[#allocation2 + $0x7e8] sm:$0xff]
    %v406 = vld [vmem:[#allocation2 + $0x7f0] sm:$0xff]
    %v407 = vld [vmem:[#allocation2 + $0x7f8] sm:$0xff]
    %v408 = vld [vmem:[#allocation2 + $0x800] sm:$0xff]
    %v409 = vld [vmem:[#allocation2 + $0x808] sm:$0xff]
    %v410 = vld [vmem:[#allocation2 + $0x810] sm:$0xff]
    %v411 = vld [vmem:[#allocation2 + $0x818] sm:$0xff]
    %v412 = vld [vmem:[#allocation2 + $0x820] sm:$0xff]
    %v413 = vld [vmem:[#allocation2 + $0x828] sm:$0xff]
    %v414 = vld [vmem:[#allocation2 + $0x830] sm:$0xff]
    %v415 = vld [vmem:[#allocation2 + $0x838] sm:$0xff]
    %v416 = vld [vmem:[#allocation2 + $0x840] sm:$0xff]
    %v417 = vld [vmem:[#allocation2 + $0x848] sm:$0xff]
    %v418 = vld [vmem:[#allocation2 + $0x850] sm:$0xff]
    %v419 = vld [vmem:[#allocation2 + $0x858] sm:$0xff]
    %v420 = vld [vmem:[#allocation2 + $0x860] sm:$0xff]
    %v421 = vld [vmem:[#allocation2 + $0x868] sm:$0xff]
    %v422 = vld [vmem:[#allocation2 + $0x870] sm:$0xff]
    %v423 = vld [vmem:[#allocation2 + $0x878] sm:$0xff]
    %v424 = vld [vmem:[#allocation2 + $0x880] sm:$0xff]
    %v425 = vld [vmem:[#allocation2 + $0x888] sm:$0xff]
    %v426 = vld [vmem:[#allocation2 + $0x890] sm:$0xff]
    %v427 = vld [vmem:[#allocation2 + $0x898] sm:$0xff]
    %v428 = vld [vmem:[#allocation2 + $0x8a0] sm:$0xff]
    %v429 = vld [vmem:[#allocation2 + $0x8a8] sm:$0xff]
    %v430 = vld [vmem:[#allocation2 + $0x8b0] sm:$0xff]
    %v431 = vld [vmem:[#allocation2 + $0x8b8] sm:$0xff]
    %v432 = vld [vmem:[#allocation2 + $0x8c0] sm:$0xff]
    %v433 = vld [vmem:[#allocation2 + $0x8c8] sm:$0xff]
    %v434 = vld [vmem:[#allocation2 + $0x8d0] sm:$0xff]
    %v435 = vld [vmem:[#allocation2 + $0x8d8] sm:$0xff]
    %v436 = vld [vmem:[#allocation2 + $0x8e0] sm:$0xff]
    %v437 = vld [vmem:[#allocation2 + $0x8e8] sm:$0xff]
    %v438 = vld [vmem:[#allocation2 + $0x8f0] sm:$0xff]
    %v439 = vld [vmem:[#allocation2 + $0x8f8] sm:$0xff]
    %v440 = vld [vmem:[#allocation2 + $0x900] sm:$0xff]
    %v441 = vld [vmem:[#allocation2 + $0x908] sm:$0xff]
    %v442 = vld [vmem:[#allocation2 + $0x910] sm:$0xff]
    %v443 = vld [vmem:[#allocation2 + $0x918] sm:$0xff]
    %v444 = vld [vmem:[#allocation2 + $0x920] sm:$0xff]
    %v445 = vld [vmem:[#allocation2 + $0x928] sm:$0xff]
    %v446 = vld [vmem:[#allocation2 + $0x930] sm:$0xff]
    %v447 = vld [vmem:[#allocation2 + $0x938] sm:$0xff]
    %v448 = vld [vmem:[#allocation2 + $0x940] sm:$0xff]
    %v449 = vld [vmem:[#allocation2 + $0x948] sm:$0xff]
    %v450 = vld [vmem:[#allocation2 + $0x950] sm:$0xff]
    %v451 = vld [vmem:[#allocation2 + $0x958] sm:$0xff]
    %v452 = vld [vmem:[#allocation2 + $0x960] sm:$0xff]
    %v453 = vld [vmem:[#allocation2 + $0x968] sm:$0xff]
    %v454 = vld [vmem:[#allocation2 + $0x970] sm:$0xff]
    %v455 = vld [vmem:[#allocation2 + $0x978] sm:$0xff]
    %v456 = vld [vmem:[#allocation2 + $0x980] sm:$0xff]
    %v457 = vld [vmem:[#allocation2 + $0x988] sm:$0xff]
    %v458 = vld [vmem:[#allocation2 + $0x990] sm:$0xff]
    %v459 = vld [vmem:[#allocation2 + $0x998] sm:$0xff]
    %v460 = vld [vmem:[#allocation2 + $0x9a0] sm:$0xff]
    %v461 = vld [vmem:[#allocation2 + $0x9a8] sm:$0xff]
    %v462 = vld [vmem:[#allocation2 + $0x9b0] sm:$0xff]
    %v463 = vld [vmem:[#allocation2 + $0x9b8] sm:$0xff]
    %v464 = vld [vmem:[#allocation2 + $0x9c0] sm:$0xff]
    %v465 = vld [vmem:[#allocation2 + $0x9c8] sm:$0xff]
    %v466 = vld [vmem:[#allocation2 + $0x9d0] sm:$0xff]
    %v467 = vld [vmem:[#allocation2 + $0x9d8] sm:$0xff]
    %v468 = vld [vmem:[#allocation2 + $0x9e0] sm:$0xff]
    %v469 = vld [vmem:[#allocation2 + $0x9e8] sm:$0xff]
    %v470 = vld [vmem:[#allocation2 + $0x9f0] sm:$0xff]
    %v471 = vld [vmem:[#allocation2 + $0x9f8] sm:$0xff]
    %v472 = vld [vmem:[#allocation2 + $0xa00] sm:$0xff]
    %v473 = vld [vmem:[#allocation2 + $0xa08] sm:$0xff]
    %v474 = vld [vmem:[#allocation2 + $0xa10] sm:$0xff]
    %v475 = vld [vmem:[#allocation2 + $0xa18] sm:$0xff]
    %v476 = vld [vmem:[#allocation2 + $0xa20] sm:$0xff]
    %v477 = vld [vmem:[#allocation2 + $0xa28] sm:$0xff]
    %v478 = vld [vmem:[#allocation2 + $0xa30] sm:$0xff]
    %v479 = vld [vmem:[#allocation2 + $0xa38] sm:$0xff]
    %v480 = vld [vmem:[#allocation2 + $0xa40] sm:$0xff]
    %v481 = vld [vmem:[#allocation2 + $0xa48] sm:$0xff]
    %v482 = vld [vmem:[#allocation2 + $0xa50] sm:$0xff]
    %v483 = vld [vmem:[#allocation2 + $0xa58] sm:$0xff]
    %v484 = vld [vmem:[#allocation2 + $0xa60] sm:$0xff]
    %v485 = vld [vmem:[#allocation2 + $0xa68] sm:$0xff]
    %v486 = vld [vmem:[#allocation2 + $0xa70] sm:$0xff]
    %v487 = vld [vmem:[#allocation2 + $0xa78] sm:$0xff]
    %v488 = vld [vmem:[#allocation2 + $0xa80] sm:$0xff]
    %v489 = vld [vmem:[#allocation2 + $0xa88] sm:$0xff]
    %v490 = vld [vmem:[#allocation2 + $0xa90] sm:$0xff]
    %v491 = vld [vmem:[#allocation2 + $0xa98] sm:$0xff]
    %v492 = vld [vmem:[#allocation2 + $0xaa0] sm:$0xff]
    %v493 = vld [vmem:[#allocation2 + $0xaa8] sm:$0xff]
    %v494 = vld [vmem:[#allocation2 + $0xab0] sm:$0xff]
    %v495 = vld [vmem:[#allocation2 + $0xab8] sm:$0xff]
    %v496 = vld [vmem:[#allocation2 + $0xac0] sm:$0xff]
    %v497 = vld [vmem:[#allocation2 + $0xac8] sm:$0xff]
    %v498 = vld [vmem:[#allocation2 + $0xad0] sm:$0xff]
    %v499 = vld [vmem:[#allocation2 + $0xad8] sm:$0xff]
    %v500 = vld [vmem:[#allocation2 + $0xae0] sm:$0xff]
    %v501 = vld [vmem:[#allocation2 + $0xae8] sm:$0xff]
    %v502 = vld [vmem:[#allocation2 + $0xaf0] sm:$0xff]
    %v503 = vld [vmem:[#allocation2 + $0xaf8] sm:$0xff]
    %v504 = vld [vmem:[#allocation2 + $0xb00] sm:$0xff]
    %v505 = vld [vmem:[#allocation2 + $0xb08] sm:$0xff]
    %v506 = vld [vmem:[#allocation2 + $0xb10] sm:$0xff]
    %v507 = vld [vmem:[#allocation2 + $0xb18] sm:$0xff]
    %v508 = vld [vmem:[#allocation2 + $0xb20] sm:$0xff]
    %v509 = vld [vmem:[#allocation2 + $0xb28] sm:$0xff]
    %v510 = vld [vmem:[#allocation2 + $0xb30] sm:$0xff]
    %v511 = vld [vmem:[#allocation2 + $0xb38] sm:$0xff]
    %v512 = vld [vmem:[#allocation2 + $0xb40] sm:$0xff]
    %v513 = vld [vmem:[#allocation2 + $0xb48] sm:$0xff]
    %v514 = vld [vmem:[#allocation2 + $0xb50] sm:$0xff]
    %v515 = vld [vmem:[#allocation2 + $0xb58] sm:$0xff]
    %v516 = vld [vmem:[#allocation2 + $0xb60] sm:$0xff]
    %v517 = vld [vmem:[#allocation2 + $0xb68] sm:$0xff]
    %v518 = vld [vmem:[#allocation2 + $0xb70] sm:$0xff]
    %v519 = vld [vmem:[#allocation2 + $0xb78] sm:$0xff]
    %v520 = vld [vmem:[#allocation2 + $0xb80] sm:$0xff]
    %v521 = vld [vmem:[#allocation2 + $0xb88] sm:$0xff]
    %v522 = vld [vmem:[#allocation2 + $0xb90] sm:$0xff]
    %v523 = vld [vmem:[#allocation2 + $0xb98] sm:$0xff]
    %v524 = vld [vmem:[#allocation2 + $0xba0] sm:$0xff]
    %v525 = vld [vmem:[#allocation2 + $0xba8] sm:$0xff]
    %v526 = vld [vmem:[#allocation2 + $0xbb0] sm:$0xff]
    %v527 = vld [vmem:[#allocation2 + $0xbb8] sm:$0xff]
    %v528 = vld [vmem:[#allocation2 + $0xbc0] sm:$0xff]
    %v529 = vld [vmem:[#allocation2 + $0xbc8] sm:$0xff]
    %v530 = vld [vmem:[#allocation2 + $0xbd0] sm:$0xff]
    %v531 = vld [vmem:[#allocation2 + $0xbd8] sm:$0xff]
    %v532 = vld [vmem:[#allocation2 + $0xbe0] sm:$0xff]
    %v533 = vld [vmem:[#allocation2 + $0xbe8] sm:$0xff]
    %v534 = vld [vmem:[#allocation2 + $0xbf0] sm:$0xff]
    %v535 = vld [vmem:[#allocation2 + $0xbf8] sm:$0xff]
    %v536 = vld [vmem:[#allocation2 + $0xc00] sm:$0xff]
    %v537 = vld [vmem:[#allocation2 + $0xc08] sm:$0xff]
    %v538 = vld [vmem:[#allocation2 + $0xc10] sm:$0xff]
    %v539 = vld [vmem:[#allocation2 + $0xc18] sm:$0xff]
    %v540 = vld [vmem:[#allocation2 + $0xc20] sm:$0xff]
    %v541 = vld [vmem:[#allocation2 + $0xc28] sm:$0xff]
    %v542 = vld [vmem:[#allocation2 + $0xc30] sm:$0xff]
    %v543 = vld [vmem:[#allocation2 + $0xc38] sm:$0xff]
    %v544 = vld [vmem:[#allocation2 + $0xc40] sm:$0xff]
    %v545 = vld [vmem:[#allocation2 + $0xc48] sm:$0xff]
    %v546 = vld [vmem:[#allocation2 + $0xc50] sm:$0xff]
    %v547 = vld [vmem:[#allocation2 + $0xc58] sm:$0xff]
    %v548 = vld [vmem:[#allocation2 + $0xc60] sm:$0xff]
    %v549 = vld [vmem:[#allocation2 + $0xc68] sm:$0xff]
    %v550 = vld [vmem:[#allocation2 + $0xc70] sm:$0xff]
    %v551 = vld [vmem:[#allocation2 + $0xc78] sm:$0xff]
    %v552 = vld [vmem:[#allocation2 + $0xc80] sm:$0xff]
    %v553 = vld [vmem:[#allocation2 + $0xc88] sm:$0xff]
    %v554 = vld [vmem:[#allocation2 + $0xc90] sm:$0xff]
    %v555 = vld [vmem:[#allocation2 + $0xc98] sm:$0xff]
    %v556 = vld [vmem:[#allocation2 + $0xca0] sm:$0xff]
    %v557 = vld [vmem:[#allocation2 + $0xca8] sm:$0xff]
    %v558 = vld [vmem:[#allocation2 + $0xcb0] sm:$0xff]
    %v559 = vld [vmem:[#allocation2 + $0xcb8] sm:$0xff]
    %v560 = vld [vmem:[#allocation2 + $0xcc0] sm:$0xff]
    %v561 = vld [vmem:[#allocation2 + $0xcc8] sm:$0xff]
    %v562 = vld [vmem:[#allocation2 + $0xcd0] sm:$0xff]
    %v563 = vld [vmem:[#allocation2 + $0xcd8] sm:$0xff]
    %v564 = vld [vmem:[#allocation2 + $0xce0] sm:$0xff]
    %v565 = vld [vmem:[#allocation2 + $0xce8] sm:$0xff]
    %v566 = vld [vmem:[#allocation2 + $0xcf0] sm:$0xff]
    %v567 = vld [vmem:[#allocation2 + $0xcf8] sm:$0xff]
    %v568 = vld [vmem:[#allocation2 + $0xd00] sm:$0xff]
    %v569 = vld [vmem:[#allocation2 + $0xd08] sm:$0xff]
    %v570 = vld [vmem:[#allocation2 + $0xd10] sm:$0xff]
    %v571 = vld [vmem:[#allocation2 + $0xd18] sm:$0xff]
    %v572 = vld [vmem:[#allocation2 + $0xd20] sm:$0xff]
    %v573 = vld [vmem:[#allocation2 + $0xd28] sm:$0xff]
    %v574 = vld [vmem:[#allocation2 + $0xd30] sm:$0xff]
    %v575 = vld [vmem:[#allocation2 + $0xd38] sm:$0xff]
    %v576 = vld [vmem:[#allocation2 + $0xd40] sm:$0xff]
    %v577 = vld [vmem:[#allocation2 + $0xd48] sm:$0xff]
    %v578 = vld [vmem:[#allocation2 + $0xd50] sm:$0xff]
    %v579 = vld [vmem:[#allocation2 + $0xd58] sm:$0xff]
    %v580 = vld [vmem:[#allocation2 + $0xd60] sm:$0xff]
    %v581 = vld [vmem:[#allocation2 + $0xd68] sm:$0xff]
    %v582 = vld [vmem:[#allocation2 + $0xd70] sm:$0xff]
    %v583 = vld [vmem:[#allocation2 + $0xd78] sm:$0xff]
    %v584 = vld [vmem:[#allocation2 + $0xd80] sm:$0xff]
    %v585 = vld [vmem:[#allocation2 + $0xd88] sm:$0xff]
    %v586 = vld [vmem:[#allocation2 + $0xd90] sm:$0xff]
    %v587 = vld [vmem:[#allocation2 + $0xd98] sm:$0xff]
    %v588 = vld [vmem:[#allocation2 + $0xda0] sm:$0xff]
    %v589 = vld [vmem:[#allocation2 + $0xda8] sm:$0xff]
    %v590 = vld [vmem:[#allocation2 + $0xdb0] sm:$0xff]
    %v591 = vld [vmem:[#allocation2 + $0xdb8] sm:$0xff]
    %v592 = vld [vmem:[#allocation2 + $0xdc0] sm:$0xff]
    %v593 = vld [vmem:[#allocation2 + $0xdc8] sm:$0xff]
    %v594 = vld [vmem:[#allocation2 + $0xdd0] sm:$0xff]
    %v595 = vld [vmem:[#allocation2 + $0xdd8] sm:$0xff]
    %v596 = vld [vmem:[#allocation2 + $0xde0] sm:$0xff]
    %v597 = vld [vmem:[#allocation2 + $0xde8] sm:$0xff]
    %v598 = vld [vmem:[#allocation2 + $0xdf0] sm:$0xff]
    %v599 = vld [vmem:[#allocation2 + $0xdf8] sm:$0xff]
    %v600 = vld [vmem:[#allocation2 + $0xe00] sm:$0xff]
    %v601 = vld [vmem:[#allocation2 + $0xe08] sm:$0xff]
    %v602 = vld [vmem:[#allocation2 + $0xe10] sm:$0xff]
    %v603 = vld [vmem:[#allocation2 + $0xe18] sm:$0xff]
    %v604 = vld [vmem:[#allocation2 + $0xe20] sm:$0xff]
    %v605 = vld [vmem:[#allocation2 + $0xe28] sm:$0xff]
    %v606 = vld [vmem:[#allocation2 + $0xe30] sm:$0xff]
    %v607 = vld [vmem:[#allocation2 + $0xe38] sm:$0xff]
    %v608 = vld [vmem:[#allocation2 + $0xe40] sm:$0xff]
    %v609 = vld [vmem:[#allocation2 + $0xe48] sm:$0xff]
    %v610 = vld [vmem:[#allocation2 + $0xe50] sm:$0xff]
    %v611 = vld [vmem:[#allocation2 + $0xe58] sm:$0xff]
    %v612 = vld [vmem:[#allocation2 + $0xe60] sm:$0xff]
    %v613 = vld [vmem:[#allocation2 + $0xe68] sm:$0xff]
    %v614 = vld [vmem:[#allocation2 + $0xe70] sm:$0xff]
    %v615 = vld [vmem:[#allocation2 + $0xe78] sm:$0xff]
    %v616 = vld [vmem:[#allocation2 + $0xe80] sm:$0xff]
    %v617 = vld [vmem:[#allocation2 + $0xe88] sm:$0xff]
    %v618 = vld [vmem:[#allocation2 + $0xe90] sm:$0xff]
    %v619 = vld [vmem:[#allocation2 + $0xe98] sm:$0xff]
    %v620 = vld [vmem:[#allocation2 + $0xea0] sm:$0xff]
    %v621 = vld [vmem:[#allocation2 + $0xea8] sm:$0xff]
    %v622 = vld [vmem:[#allocation2 + $0xeb0] sm:$0xff]
    %v623 = vld [vmem:[#allocation2 + $0xeb8] sm:$0xff]
    %v624 = vld [vmem:[#allocation2 + $0xec0] sm:$0xff]
    %v625 = vld [vmem:[#allocation2 + $0xec8] sm:$0xff]
    %v626 = vld [vmem:[#allocation2 + $0xed0] sm:$0xff]
    %v627 = vld [vmem:[#allocation2 + $0xed8] sm:$0xff]
    %v628 = vld [vmem:[#allocation2 + $0xee0] sm:$0xff]
    %v629 = vld [vmem:[#allocation2 + $0xee8] sm:$0xff]
    %v630 = vld [vmem:[#allocation2 + $0xef0] sm:$0xff]
    %v631 = vld [vmem:[#allocation2 + $0xef8] sm:$0xff]
    %v632 = vld [vmem:[#allocation2 + $0xf00] sm:$0xff]
    %v633 = vld [vmem:[#allocation2 + $0xf08] sm:$0xff]
    %v634 = vld [vmem:[#allocation2 + $0xf10] sm:$0xff]
    %v635 = vld [vmem:[#allocation2 + $0xf18] sm:$0xff]
    %v636 = vld [vmem:[#allocation2 + $0xf20] sm:$0xff]
    %v637 = vld [vmem:[#allocation2 + $0xf28] sm:$0xff]
    %v638 = vld [vmem:[#allocation2 + $0xf30] sm:$0xff]
    %v639 = vld [vmem:[#allocation2 + $0xf38] sm:$0xff]
    %v640 = vld [vmem:[#allocation2 + $0xf40] sm:$0xff]
    %v641 = vld [vmem:[#allocation2 + $0xf48] sm:$0xff]
    %v642 = vld [vmem:[#allocation2 + $0xf50] sm:$0xff]
    %v643 = vld [vmem:[#allocation2 + $0xf58] sm:$0xff]
    %v644 = vld [vmem:[#allocation2 + $0xf60] sm:$0xff]
    %v645 = vld [vmem:[#allocation2 + $0xf68] sm:$0xff]
    %v646 = vld [vmem:[#allocation2 + $0xf70] sm:$0xff]
    %v647 = vld [vmem:[#allocation2 + $0xf78] sm:$0xff]
    %v648 = vld [vmem:[#allocation2 + $0xf80] sm:$0xff]
    %v649 = vld [vmem:[#allocation2 + $0xf88] sm:$0xff]
    %v650 = vld [vmem:[#allocation2 + $0xf90] sm:$0xff]
    %v651 = vld [vmem:[#allocation2 + $0xf98] sm:$0xff]
    %v652 = vld [vmem:[#allocation2 + $0xfa0] sm:$0xff]
    %v653 = vld [vmem:[#allocation2 + $0xfa8] sm:$0xff]
    %v654 = vld [vmem:[#allocation2 + $0xfb0] sm:$0xff]
    %v655 = vld [vmem:[#allocation2 + $0xfb8] sm:$0xff]
    %v656 = vld [vmem:[#allocation2 + $0xfc0] sm:$0xff]
    %v657 = vld [vmem:[#allocation2 + $0xfc8] sm:$0xff]
    %v658 = vld [vmem:[#allocation2 + $0xfd0] sm:$0xff]
    %v659 = vld [vmem:[#allocation2 + $0xfd8] sm:$0xff]
    %v660 = vld [vmem:[#allocation2 + $0xfe0] sm:$0xff]
    %v661 = vld [vmem:[#allocation2 + $0xfe8] sm:$0xff]
    %v662 = vld [vmem:[#allocation2 + $0xff0] sm:$0xff]
    %v663 = vld [vmem:[#allocation2 + $0xff8] sm:$0xff]
    %v664 = vld [vmem:[#allocation2 + $0x1000] sm:$0xff]
    %v665 = vld [vmem:[#allocation2 + $0x1008] sm:$0xff]
    %v666 = vld [vmem:[#allocation2 + $0x1010] sm:$0xff]
    %v667 = vld [vmem:[#allocation2 + $0x1018] sm:$0xff]
    %v668 = vld [vmem:[#allocation2 + $0x1020] sm:$0xff]
    %v669 = vld [vmem:[#allocation2 + $0x1028] sm:$0xff]
    %v670 = vld [vmem:[#allocation2 + $0x1030] sm:$0xff]
    %v671 = vld [vmem:[#allocation2 + $0x1038] sm:$0xff]
    %v672 = vld [vmem:[#allocation2 + $0x1040] sm:$0xff]
    %v673 = vld [vmem:[#allocation2 + $0x1048] sm:$0xff]
    %v674 = vld [vmem:[#allocation2 + $0x1050] sm:$0xff]
    %v675 = vld [vmem:[#allocation2 + $0x1058] sm:$0xff]
    %v676 = vld [vmem:[#allocation2 + $0x1060] sm:$0xff]
    %v677 = vld [vmem:[#allocation2 + $0x1068] sm:$0xff]
    %v678 = vld [vmem:[#allocation2 + $0x1070] sm:$0xff]
    %v679 = vld [vmem:[#allocation2 + $0x1078] sm:$0xff]
    %v680 = vld [vmem:[#allocation2 + $0x1080] sm:$0xff]
    %v681 = vld [vmem:[#allocation2 + $0x1088] sm:$0xff]
    %v682 = vld [vmem:[#allocation2 + $0x1090] sm:$0xff]
    %v683 = vld [vmem:[#allocation2 + $0x1098] sm:$0xff]
    %v684 = vld [vmem:[#allocation2 + $0x10a0] sm:$0xff]
    %v685 = vld [vmem:[#allocation2 + $0x10a8] sm:$0xff]
    %v686 = vld [vmem:[#allocation2 + $0x10b0] sm:$0xff]
    %v687 = vld [vmem:[#allocation2 + $0x10b8] sm:$0xff]
    %v688 = vld [vmem:[#allocation2 + $0x10c0] sm:$0xff]
    %v689 = vld [vmem:[#allocation2 + $0x10c8] sm:$0xff]
    %v690 = vld [vmem:[#allocation2 + $0x10d0] sm:$0xff]
    %v691 = vld [vmem:[#allocation2 + $0x10d8] sm:$0xff]
    %v692 = vld [vmem:[#allocation2 + $0x10e0] sm:$0xff]
    %v693 = vld [vmem:[#allocation2 + $0x10e8] sm:$0xff]
    %v694 = vld [vmem:[#allocation2 + $0x10f0] sm:$0xff]
    %v695 = vld [vmem:[#allocation2 + $0x10f8] sm:$0xff]
    %v705 = vunpack.c.l.b16 %v139
    %v706 = vunpack.c.h.b16 %v139
    %v707 = vunpack.c.l.b16 %v140
    %v708 = vunpack.c.h.b16 %v140
    %v709 = vunpack.c.l.b16 %v141
    %v710 = vunpack.c.h.b16 %v141
    %v711 = vunpack.c.l.b16 %v142
    %v712 = vunpack.c.h.b16 %v142
    %v713 = vunpack.c.l.b16 %v143
    %v714 = vunpack.c.h.b16 %v143
    %v715 = vunpack.c.l.b16 %v144
    %v716 = vunpack.c.h.b16 %v144
    %v717 = vunpack.c.l.b16 %v145
    %v718 = vunpack.c.h.b16 %v145
    %v719 = vunpack.c.l.b16 %v146
    %v720 = vunpack.c.h.b16 %v146
    %v721 = vunpack.c.l.b16 %v147
    %v722 = vpack.c.b16 %v705, %v705
    %v723 = vpack.c.b16 %v706, %v706
    %v724 = vpack.c.b16 %v707, %v707
    %v725 = vpack.c.b16 %v708, %v708
    %v726 = vpack.c.b16 %v709, %v709
    %v727 = vpack.c.b16 %v710, %v710
    %v728 = vpack.c.b16 %v711, %v711
    %v729 = vpack.c.b16 %v712, %v712
    %v730 = vpack.c.b16 %v713, %v713
    %v731 = vpack.c.b16 %v714, %v714
    %v732 = vpack.c.b16 %v715, %v715
    %v733 = vpack.c.b16 %v716, %v716
    %v734 = vpack.c.b16 %v717, %v717
    %v735 = vpack.c.b16 %v718, %v718
    %v736 = vpack.c.b16 %v719, %v719
    %v737 = vpack.c.b16 %v720, %v720
    %v738 = vpack.c.b16 %v721, %v721
    %v1300 = vunpack.c.l.b16 %v152
    %v1301 = vunpack.c.h.b16 %v152
    %v1302 = vunpack.c.l.b16 %v153
    %v1303 = vunpack.c.h.b16 %v153
    %v1304 = vunpack.c.l.b16 %v154
    %v1305 = vunpack.c.h.b16 %v154
    %v1306 = vunpack.c.l.b16 %v155
    %v1307 = vunpack.c.h.b16 %v155
    %v1308 = vunpack.c.l.b16 %v156
    %v1309 = vunpack.c.h.b16 %v156
    %v1310 = vunpack.c.l.b16 %v157
    %v1311 = vunpack.c.h.b16 %v157
    %v1312 = vunpack.c.l.b16 %v158
    %v1313 = vunpack.c.h.b16 %v158
    %v1314 = vunpack.c.l.b16 %v159
    %v1315 = vunpack.c.h.b16 %v159
    %v1316 = vunpack.c.l.b16 %v160
    %v1317 = vunpack.c.h.b16 %v160
    %v1318 = vunpack.c.l.b16 %v161
    %v1319 = vunpack.c.h.b16 %v161
    %v1320 = vunpack.c.l.b16 %v162
    %v1321 = vunpack.c.h.b16 %v162
    %v1322 = vunpack.c.l.b16 %v163
    %v1323 = vunpack.c.h.b16 %v163
    %v1324 = vunpack.c.l.b16 %v164
    %v1325 = vunpack.c.h.b16 %v164
    %v1326 = vunpack.c.l.b16 %v165
    %v1327 = vunpack.c.h.b16 %v165
    %v1328 = vunpack.c.l.b16 %v166
    %v1329 = vunpack.c.h.b16 %v166
    %v1330 = vunpack.c.l.b16 %v167
    %v1331 = vunpack.c.h.b16 %v167
    %v1332 = vunpack.c.l.b16 %v168
    %v1333 = vunpack.c.h.b16 %v168
    %v1334 = vunpack.c.l.b16 %v169
    %v1335 = vunpack.c.h.b16 %v169
    %v1336 = vunpack.c.l.b16 %v170
    %v1337 = vunpack.c.h.b16 %v170
    %v1338 = vunpack.c.l.b16 %v171
    %v1339 = vunpack.c.h.b16 %v171
    %v1340 = vunpack.c.l.b16 %v172
    %v1341 = vunpack.c.h.b16 %v172
    %v1342 = vunpack.c.l.b16 %v173
    %v1343 = vunpack.c.h.b16 %v173
    %v1344 = vunpack.c.l.b16 %v174
    %v1345 = vunpack.c.h.b16 %v174
    %v1346 = vunpack.c.l.b16 %v175
    %v1347 = vunpack.c.h.b16 %v175
    %v1348 = vunpack.c.l.b16 %v176
    %v1349 = vunpack.c.h.b16 %v176
    %v1350 = vunpack.c.l.b16 %v177
    %v1351 = vunpack.c.h.b16 %v177
    %v1352 = vunpack.c.l.b16 %v178
    %v1353 = vunpack.c.h.b16 %v178
    %v1354 = vunpack.c.l.b16 %v179
    %v1355 = vunpack.c.h.b16 %v179
    %v1356 = vunpack.c.l.b16 %v180
    %v1357 = vunpack.c.h.b16 %v180
    %v1358 = vunpack.c.l.b16 %v181
    %v1359 = vunpack.c.h.b16 %v181
    %v1360 = vunpack.c.l.b16 %v182
    %v1361 = vunpack.c.h.b16 %v182
    %v1362 = vunpack.c.l.b16 %v183
    %v1363 = vunpack.c.h.b16 %v183
    %v1364 = vunpack.c.l.b16 %v184
    %v1365 = vunpack.c.h.b16 %v184
    %v1366 = vunpack.c.l.b16 %v185
    %v1367 = vunpack.c.h.b16 %v185
    %v1368 = vunpack.c.l.b16 %v186
    %v1369 = vunpack.c.h.b16 %v186
    %v1370 = vunpack.c.l.b16 %v187
    %v1371 = vunpack.c.h.b16 %v187
    %v1372 = vunpack.c.l.b16 %v188
    %v1373 = vunpack.c.h.b16 %v188
    %v1374 = vunpack.c.l.b16 %v189
    %v1375 = vunpack.c.h.b16 %v189
    %v1376 = vunpack.c.l.b16 %v190
    %v1377 = vunpack.c.h.b16 %v190
    %v1378 = vunpack.c.l.b16 %v191
    %v1379 = vunpack.c.h.b16 %v191
    %v1380 = vunpack.c.l.b16 %v192
    %v1381 = vunpack.c.h.b16 %v192
    %v1382 = vunpack.c.l.b16 %v193
    %v1383 = vunpack.c.h.b16 %v193
    %v1384 = vunpack.c.l.b16 %v194
    %v1385 = vunpack.c.h.b16 %v194
    %v1386 = vunpack.c.l.b16 %v195
    %v1387 = vunpack.c.h.b16 %v195
    %v1388 = vunpack.c.l.b16 %v196
    %v1389 = vunpack.c.h.b16 %v196
    %v1390 = vunpack.c.l.b16 %v197
    %v1391 = vunpack.c.h.b16 %v197
    %v1392 = vunpack.c.l.b16 %v198
    %v1393 = vunpack.c.h.b16 %v198
    %v1394 = vunpack.c.l.b16 %v199
    %v1395 = vunpack.c.h.b16 %v199
    %v1396 = vunpack.c.l.b16 %v200
    %v1397 = vunpack.c.h.b16 %v200
    %v1398 = vunpack.c.l.b16 %v201
    %v1399 = vunpack.c.h.b16 %v201
    %v1400 = vunpack.c.l.b16 %v202
    %v1401 = vunpack.c.h.b16 %v202
    %v1402 = vunpack.c.l.b16 %v203
    %v1403 = vunpack.c.h.b16 %v203
    %v1404 = vunpack.c.l.b16 %v204
    %v1405 = vunpack.c.h.b16 %v204
    %v1406 = vunpack.c.l.b16 %v205
    %v1407 = vunpack.c.h.b16 %v205
    %v1408 = vunpack.c.l.b16 %v206
    %v1409 = vunpack.c.h.b16 %v206
    %v1410 = vunpack.c.l.b16 %v207
    %v1411 = vunpack.c.h.b16 %v207
    %v1412 = vunpack.c.l.b16 %v208
    %v1413 = vunpack.c.h.b16 %v208
    %v1414 = vunpack.c.l.b16 %v209
    %v1415 = vunpack.c.h.b16 %v209
    %v1416 = vunpack.c.l.b16 %v210
    %v1417 = vunpack.c.h.b16 %v210
    %v1418 = vunpack.c.l.b16 %v211
    %v1419 = vunpack.c.h.b16 %v211
    %v1420 = vunpack.c.l.b16 %v212
    %v1421 = vunpack.c.h.b16 %v212
    %v1422 = vunpack.c.l.b16 %v213
    %v1423 = vunpack.c.h.b16 %v213
    %v1424 = vunpack.c.l.b16 %v214
    %v1425 = vunpack.c.h.b16 %v214
    %v1426 = vunpack.c.l.b16 %v215
    %v1427 = vunpack.c.h.b16 %v215
    %v1428 = vunpack.c.l.b16 %v216
    %v1429 = vunpack.c.h.b16 %v216
    %v1430 = vunpack.c.l.b16 %v217
    %v1431 = vunpack.c.h.b16 %v217
    %v1432 = vunpack.c.l.b16 %v218
    %v1433 = vunpack.c.h.b16 %v218
    %v1434 = vunpack.c.l.b16 %v219
    %v1435 = vunpack.c.h.b16 %v219
    %v1436 = vunpack.c.l.b16 %v220
    %v1437 = vunpack.c.h.b16 %v220
    %v1438 = vunpack.c.l.b16 %v221
    %v1439 = vunpack.c.h.b16 %v221
    %v1440 = vunpack.c.l.b16 %v222
    %v1441 = vunpack.c.h.b16 %v222
    %v1442 = vunpack.c.l.b16 %v223
    %v1443 = vunpack.c.h.b16 %v223
    %v1444 = vunpack.c.l.b16 %v224
    %v1445 = vunpack.c.h.b16 %v224
    %v1446 = vunpack.c.l.b16 %v225
    %v1447 = vunpack.c.h.b16 %v225
    %v1448 = vunpack.c.l.b16 %v226
    %v1449 = vunpack.c.h.b16 %v226
    %v1450 = vunpack.c.l.b16 %v227
    %v1451 = vunpack.c.h.b16 %v227
    %v1452 = vunpack.c.l.b16 %v228
    %v1453 = vunpack.c.h.b16 %v228
    %v1454 = vunpack.c.l.b16 %v229
    %v1455 = vunpack.c.h.b16 %v229
    %v1456 = vunpack.c.l.b16 %v230
    %v1457 = vunpack.c.h.b16 %v230
    %v1458 = vunpack.c.l.b16 %v231
    %v1459 = vunpack.c.h.b16 %v231
    %v1460 = vunpack.c.l.b16 %v232
    %v1461 = vunpack.c.h.b16 %v232
    %v1462 = vunpack.c.l.b16 %v233
    %v1463 = vunpack.c.h.b16 %v233
    %v1464 = vunpack.c.l.b16 %v234
    %v1465 = vunpack.c.h.b16 %v234
    %v1466 = vunpack.c.l.b16 %v235
    %v1467 = vunpack.c.h.b16 %v235
    %v1468 = vunpack.c.l.b16 %v236
    %v1469 = vunpack.c.h.b16 %v236
    %v1470 = vunpack.c.l.b16 %v237
    %v1471 = vunpack.c.h.b16 %v237
    %v1472 = vunpack.c.l.b16 %v238
    %v1473 = vunpack.c.h.b16 %v238
    %v1474 = vunpack.c.l.b16 %v239
    %v1475 = vunpack.c.h.b16 %v239
    %v1476 = vunpack.c.l.b16 %v240
    %v1477 = vunpack.c.h.b16 %v240
    %v1478 = vunpack.c.l.b16 %v241
    %v1479 = vunpack.c.h.b16 %v241
    %v1480 = vunpack.c.l.b16 %v242
    %v1481 = vunpack.c.h.b16 %v242
    %v1482 = vunpack.c.l.b16 %v243
    %v1483 = vunpack.c.h.b16 %v243
    %v1484 = vunpack.c.l.b16 %v244
    %v1485 = vunpack.c.h.b16 %v244
    %v1486 = vunpack.c.l.b16 %v245
    %v1487 = vunpack.c.h.b16 %v245
    %v1488 = vunpack.c.l.b16 %v246
    %v1489 = vunpack.c.h.b16 %v246
    %v1490 = vunpack.c.l.b16 %v247
    %v1491 = vunpack.c.h.b16 %v247
    %v1492 = vunpack.c.l.b16 %v248
    %v1493 = vunpack.c.h.b16 %v248
    %v1494 = vunpack.c.l.b16 %v249
    %v1495 = vunpack.c.h.b16 %v249
    %v1496 = vunpack.c.l.b16 %v250
    %v1497 = vunpack.c.h.b16 %v250
    %v1498 = vunpack.c.l.b16 %v251
    %v1499 = vunpack.c.h.b16 %v251
    %v1500 = vunpack.c.l.b16 %v252
    %v1501 = vunpack.c.h.b16 %v252
    %v1502 = vunpack.c.l.b16 %v253
    %v1503 = vunpack.c.h.b16 %v253
    %v1504 = vunpack.c.l.b16 %v254
    %v1505 = vunpack.c.h.b16 %v254
    %v1506 = vunpack.c.l.b16 %v255
    %v1507 = vunpack.c.h.b16 %v255
    %v1508 = vunpack.c.l.b16 %v256
    %v1509 = vunpack.c.h.b16 %v256
    %v1510 = vunpack.c.l.b16 %v257
    %v1511 = vunpack.c.h.b16 %v257
    %v1512 = vunpack.c.l.b16 %v258
    %v1513 = vunpack.c.h.b16 %v258
    %v1514 = vunpack.c.l.b16 %v259
    %v1515 = vunpack.c.h.b16 %v259
    %v1516 = vunpack.c.l.b16 %v260
    %v1517 = vunpack.c.h.b16 %v260
    %v1518 = vunpack.c.l.b16 %v261
    %v1519 = vunpack.c.h.b16 %v261
    %v1520 = vunpack.c.l.b16 %v262
    %v1521 = vunpack.c.h.b16 %v262
    %v1522 = vunpack.c.l.b16 %v263
    %v1523 = vunpack.c.h.b16 %v263
    %v1524 = vunpack.c.l.b16 %v264
    %v1525 = vunpack.c.h.b16 %v264
    %v1526 = vunpack.c.l.b16 %v265
    %v1527 = vunpack.c.h.b16 %v265
    %v1528 = vunpack.c.l.b16 %v266
    %v1529 = vunpack.c.h.b16 %v266
    %v1530 = vunpack.c.l.b16 %v267
    %v1531 = vunpack.c.h.b16 %v267
    %v1532 = vunpack.c.l.b16 %v268
    %v1533 = vunpack.c.h.b16 %v268
    %v1534 = vunpack.c.l.b16 %v269
    %v1535 = vunpack.c.h.b16 %v269
    %v1536 = vunpack.c.l.b16 %v270
    %v1537 = vunpack.c.h.b16 %v270
    %v1538 = vunpack.c.l.b16 %v271
    %v1539 = vunpack.c.h.b16 %v271
    %v1540 = vunpack.c.l.b16 %v272
    %v1541 = vunpack.c.h.b16 %v272
    %v1542 = vunpack.c.l.b16 %v273
    %v1543 = vunpack.c.h.b16 %v273
    %v1544 = vunpack.c.l.b16 %v274
    %v1545 = vunpack.c.h.b16 %v274
    %v1546 = vunpack.c.l.b16 %v275
    %v1547 = vunpack.c.h.b16 %v275
    %v1548 = vunpack.c.l.b16 %v276
    %v1549 = vunpack.c.h.b16 %v276
    %v1550 = vunpack.c.l.b16 %v277
    %v1551 = vunpack.c.h.b16 %v277
    %v1552 = vunpack.c.l.b16 %v278
    %v1553 = vunpack.c.h.b16 %v278
    %v1554 = vunpack.c.l.b16 %v279
    %v1555 = vunpack.c.h.b16 %v279
    %v1556 = vunpack.c.l.b16 %v280
    %v1557 = vunpack.c.h.b16 %v280
    %v1558 = vunpack.c.l.b16 %v281
    %v1559 = vunpack.c.h.b16 %v281
    %v1560 = vunpack.c.l.b16 %v282
    %v1561 = vunpack.c.h.b16 %v282
    %v1562 = vunpack.c.l.b16 %v283
    %v1563 = vunpack.c.h.b16 %v283
    %v1564 = vunpack.c.l.b16 %v284
    %v1565 = vunpack.c.h.b16 %v284
    %v1566 = vunpack.c.l.b16 %v285
    %v1567 = vunpack.c.h.b16 %v285
    %v1568 = vunpack.c.l.b16 %v286
    %v1569 = vunpack.c.h.b16 %v286
    %v1570 = vunpack.c.l.b16 %v287
    %v1571 = vunpack.c.h.b16 %v287
    %v1572 = vunpack.c.l.b16 %v288
    %v1573 = vunpack.c.h.b16 %v288
    %v1574 = vunpack.c.l.b16 %v289
    %v1575 = vunpack.c.h.b16 %v289
    %v1576 = vunpack.c.l.b16 %v290
    %v1577 = vunpack.c.h.b16 %v290
    %v1578 = vunpack.c.l.b16 %v291
    %v1579 = vunpack.c.h.b16 %v291
    %v1580 = vunpack.c.l.b16 %v292
    %v1581 = vunpack.c.h.b16 %v292
    %v1582 = vunpack.c.l.b16 %v293
    %v1583 = vunpack.c.h.b16 %v293
    %v1584 = vunpack.c.l.b16 %v294
    %v1585 = vunpack.c.h.b16 %v294
    %v1586 = vunpack.c.l.b16 %v295
    %v1587 = vunpack.c.h.b16 %v295
    %v1588 = vunpack.c.l.b16 %v296
    %v1589 = vunpack.c.h.b16 %v296
    %v1590 = vunpack.c.l.b16 %v297
    %v1591 = vunpack.c.h.b16 %v297
    %v1592 = vunpack.c.l.b16 %v298
    %v1593 = vunpack.c.h.b16 %v298
    %v1594 = vunpack.c.l.b16 %v299
    %v1595 = vunpack.c.h.b16 %v299
    %v1596 = vunpack.c.l.b16 %v300
    %v1597 = vunpack.c.h.b16 %v300
    %v1598 = vunpack.c.l.b16 %v301
    %v1599 = vunpack.c.h.b16 %v301
    %v1600 = vunpack.c.l.b16 %v302
    %v1601 = vunpack.c.h.b16 %v302
    %v1602 = vunpack.c.l.b16 %v303
    %v1603 = vunpack.c.h.b16 %v303
    %v1604 = vunpack.c.l.b16 %v304
    %v1605 = vunpack.c.h.b16 %v304
    %v1606 = vunpack.c.l.b16 %v305
    %v1607 = vunpack.c.h.b16 %v305
    %v1608 = vunpack.c.l.b16 %v306
    %v1609 = vunpack.c.h.b16 %v306
    %v1610 = vunpack.c.l.b16 %v307
    %v1611 = vunpack.c.h.b16 %v307
    %v1612 = vunpack.c.l.b16 %v308
    %v1613 = vunpack.c.h.b16 %v308
    %v1614 = vunpack.c.l.b16 %v309
    %v1615 = vunpack.c.h.b16 %v309
    %v1616 = vunpack.c.l.b16 %v310
    %v1617 = vunpack.c.h.b16 %v310
    %v1618 = vunpack.c.l.b16 %v311
    %v1619 = vunpack.c.h.b16 %v311
    %v1620 = vunpack.c.l.b16 %v312
    %v1621 = vunpack.c.h.b16 %v312
    %v1622 = vunpack.c.l.b16 %v313
    %v1623 = vunpack.c.h.b16 %v313
    %v1624 = vunpack.c.l.b16 %v314
    %v1625 = vunpack.c.h.b16 %v314
    %v1626 = vunpack.c.l.b16 %v315
    %v1627 = vunpack.c.h.b16 %v315
    %v1628 = vunpack.c.l.b16 %v316
    %v1629 = vunpack.c.h.b16 %v316
    %v1630 = vunpack.c.l.b16 %v317
    %v1631 = vunpack.c.h.b16 %v317
    %v1632 = vunpack.c.l.b16 %v318
    %v1633 = vunpack.c.h.b16 %v318
    %v1634 = vunpack.c.l.b16 %v319
    %v1635 = vunpack.c.h.b16 %v319
    %v1636 = vunpack.c.l.b16 %v320
    %v1637 = vunpack.c.h.b16 %v320
    %v1638 = vunpack.c.l.b16 %v321
    %v1639 = vunpack.c.h.b16 %v321
    %v1640 = vunpack.c.l.b16 %v322
    %v1641 = vunpack.c.h.b16 %v322
    %v1642 = vunpack.c.l.b16 %v323
    %v1643 = vunpack.c.h.b16 %v323
    %v1644 = vunpack.c.l.b16 %v324
    %v1645 = vunpack.c.h.b16 %v324
    %v1646 = vunpack.c.l.b16 %v325
    %v1647 = vunpack.c.h.b16 %v325
    %v1648 = vunpack.c.l.b16 %v326
    %v1649 = vunpack.c.h.b16 %v326
    %v1650 = vunpack.c.l.b16 %v327
    %v1651 = vunpack.c.h.b16 %v327
    %v1652 = vunpack.c.l.b16 %v328
    %v1653 = vunpack.c.h.b16 %v328
    %v1654 = vunpack.c.l.b16 %v329
    %v1655 = vunpack.c.h.b16 %v329
    %v1656 = vunpack.c.l.b16 %v330
    %v1657 = vunpack.c.h.b16 %v330
    %v1658 = vunpack.c.l.b16 %v331
    %v1659 = vunpack.c.h.b16 %v331
    %v1660 = vunpack.c.l.b16 %v332
    %v1661 = vunpack.c.h.b16 %v332
    %v1662 = vunpack.c.l.b16 %v333
    %v1663 = vunpack.c.h.b16 %v333
    %v1664 = vunpack.c.l.b16 %v334
    %v1665 = vunpack.c.h.b16 %v334
    %v1666 = vunpack.c.l.b16 %v335
    %v1667 = vunpack.c.h.b16 %v335
    %v1668 = vunpack.c.l.b16 %v336
    %v1669 = vunpack.c.h.b16 %v336
    %v1670 = vunpack.c.l.b16 %v337
    %v1671 = vunpack.c.h.b16 %v337
    %v1672 = vunpack.c.l.b16 %v338
    %v1673 = vunpack.c.h.b16 %v338
    %v1674 = vunpack.c.l.b16 %v339
    %v1675 = vunpack.c.h.b16 %v339
    %v1676 = vunpack.c.l.b16 %v340
    %v1677 = vunpack.c.h.b16 %v340
    %v1678 = vunpack.c.l.b16 %v341
    %v1679 = vunpack.c.h.b16 %v341
    %v1680 = vunpack.c.l.b16 %v342
    %v1681 = vunpack.c.h.b16 %v342
    %v1682 = vunpack.c.l.b16 %v343
    %v1683 = vunpack.c.h.b16 %v343
    %v1684 = vunpack.c.l.b16 %v344
    %v1685 = vunpack.c.h.b16 %v344
    %v1686 = vunpack.c.l.b16 %v345
    %v1687 = vunpack.c.h.b16 %v345
    %v1688 = vunpack.c.l.b16 %v346
    %v1689 = vunpack.c.h.b16 %v346
    %v1690 = vunpack.c.l.b16 %v347
    %v1691 = vunpack.c.h.b16 %v347
    %v1692 = vunpack.c.l.b16 %v348
    %v1693 = vunpack.c.h.b16 %v348
    %v1694 = vunpack.c.l.b16 %v349
    %v1695 = vunpack.c.h.b16 %v349
    %v1696 = vunpack.c.l.b16 %v350
    %v1697 = vunpack.c.h.b16 %v350
    %v1698 = vunpack.c.l.b16 %v351
    %v1699 = vunpack.c.h.b16 %v351
    %v1700 = vunpack.c.l.b16 %v352
    %v1701 = vunpack.c.h.b16 %v352
    %v1702 = vunpack.c.l.b16 %v353
    %v1703 = vunpack.c.h.b16 %v353
    %v1704 = vunpack.c.l.b16 %v354
    %v1705 = vunpack.c.h.b16 %v354
    %v1706 = vunpack.c.l.b16 %v355
    %v1707 = vunpack.c.h.b16 %v355
    %v1708 = vunpack.c.l.b16 %v356
    %v1709 = vunpack.c.h.b16 %v356
    %v1710 = vunpack.c.l.b16 %v357
    %v1711 = vunpack.c.h.b16 %v357
    %v1712 = vunpack.c.l.b16 %v358
    %v1713 = vunpack.c.h.b16 %v358
    %v1714 = vunpack.c.l.b16 %v359
    %v1715 = vunpack.c.h.b16 %v359
    %v1716 = vunpack.c.l.b16 %v360
    %v1717 = vunpack.c.h.b16 %v360
    %v1718 = vunpack.c.l.b16 %v361
    %v1719 = vunpack.c.h.b16 %v361
    %v1720 = vunpack.c.l.b16 %v362
    %v1721 = vunpack.c.h.b16 %v362
    %v1722 = vunpack.c.l.b16 %v363
    %v1723 = vunpack.c.h.b16 %v363
    %v1724 = vunpack.c.l.b16 %v364
    %v1725 = vunpack.c.h.b16 %v364
    %v1726 = vunpack.c.l.b16 %v365
    %v1727 = vunpack.c.h.b16 %v365
    %v1728 = vunpack.c.l.b16 %v366
    %v1729 = vunpack.c.h.b16 %v366
    %v1730 = vunpack.c.l.b16 %v367
    %v1731 = vunpack.c.h.b16 %v367
    %v1732 = vunpack.c.l.b16 %v368
    %v1733 = vunpack.c.h.b16 %v368
    %v1734 = vunpack.c.l.b16 %v369
    %v1735 = vunpack.c.h.b16 %v369
    %v1736 = vunpack.c.l.b16 %v370
    %v1737 = vunpack.c.h.b16 %v370
    %v1738 = vunpack.c.l.b16 %v371
    %v1739 = vunpack.c.h.b16 %v371
    %v1740 = vunpack.c.l.b16 %v372
    %v1741 = vunpack.c.h.b16 %v372
    %v1742 = vunpack.c.l.b16 %v373
    %v1743 = vunpack.c.h.b16 %v373
    %v1744 = vunpack.c.l.b16 %v374
    %v1745 = vunpack.c.h.b16 %v374
    %v1746 = vunpack.c.l.b16 %v375
    %v1747 = vunpack.c.h.b16 %v375
    %v1748 = vunpack.c.l.b16 %v376
    %v1749 = vunpack.c.h.b16 %v376
    %v1750 = vunpack.c.l.b16 %v377
    %v1751 = vunpack.c.h.b16 %v377
    %v1752 = vunpack.c.l.b16 %v378
    %v1753 = vunpack.c.h.b16 %v378
    %v1754 = vunpack.c.l.b16 %v379
    %v1755 = vunpack.c.h.b16 %v379
    %v1756 = vunpack.c.l.b16 %v380
    %v1757 = vunpack.c.h.b16 %v380
    %v1758 = vunpack.c.l.b16 %v381
    %v1759 = vunpack.c.h.b16 %v381
    %v1760 = vunpack.c.l.b16 %v382
    %v1761 = vunpack.c.h.b16 %v382
    %v1762 = vunpack.c.l.b16 %v383
    %v1763 = vunpack.c.h.b16 %v383
    %v1764 = vunpack.c.l.b16 %v384
    %v1765 = vunpack.c.h.b16 %v384
    %v1766 = vunpack.c.l.b16 %v385
    %v1767 = vunpack.c.h.b16 %v385
    %v1768 = vunpack.c.l.b16 %v386
    %v1769 = vunpack.c.h.b16 %v386
    %v1770 = vunpack.c.l.b16 %v387
    %v1771 = vunpack.c.h.b16 %v387
    %v1772 = vunpack.c.l.b16 %v388
    %v1773 = vunpack.c.h.b16 %v388
    %v1774 = vunpack.c.l.b16 %v389
    %v1775 = vunpack.c.h.b16 %v389
    %v1776 = vunpack.c.l.b16 %v390
    %v1777 = vunpack.c.h.b16 %v390
    %v1778 = vunpack.c.l.b16 %v391
    %v1779 = vunpack.c.h.b16 %v391
    %v1780 = vunpack.c.l.b16 %v392
    %v1781 = vunpack.c.h.b16 %v392
    %v1782 = vunpack.c.l.b16 %v393
    %v1783 = vunpack.c.h.b16 %v393
    %v1784 = vunpack.c.l.b16 %v394
    %v1785 = vunpack.c.h.b16 %v394
    %v1786 = vunpack.c.l.b16 %v395
    %v1787 = vunpack.c.h.b16 %v395
    %v1788 = vunpack.c.l.b16 %v396
    %v1789 = vunpack.c.h.b16 %v396
    %v1790 = vunpack.c.l.b16 %v397
    %v1791 = vunpack.c.h.b16 %v397
    %v1792 = vunpack.c.l.b16 %v398
    %v1793 = vunpack.c.h.b16 %v398
    %v1794 = vunpack.c.l.b16 %v399
    %v1795 = vunpack.c.h.b16 %v399
    %v1796 = vunpack.c.l.b16 %v400
    %v1797 = vunpack.c.h.b16 %v400
    %v1798 = vunpack.c.l.b16 %v401
    %v1799 = vunpack.c.h.b16 %v401
    %v1800 = vunpack.c.l.b16 %v402
    %v1801 = vunpack.c.h.b16 %v402
    %v1802 = vunpack.c.l.b16 %v403
    %v1803 = vunpack.c.h.b16 %v403
    %v1804 = vunpack.c.l.b16 %v404
    %v1805 = vunpack.c.h.b16 %v404
    %v1806 = vunpack.c.l.b16 %v405
    %v1807 = vunpack.c.h.b16 %v405
    %v1808 = vunpack.c.l.b16 %v406
    %v1809 = vunpack.c.h.b16 %v406
    %v1810 = vunpack.c.l.b16 %v407
    %v1811 = vunpack.c.h.b16 %v407
    %v1812 = vunpack.c.l.b16 %v408
    %v1813 = vunpack.c.h.b16 %v408
    %v1814 = vunpack.c.l.b16 %v409
    %v1815 = vunpack.c.h.b16 %v409
    %v1816 = vunpack.c.l.b16 %v410
    %v1817 = vunpack.c.h.b16 %v410
    %v1818 = vunpack.c.l.b16 %v411
    %v1819 = vunpack.c.h.b16 %v411
    %v1820 = vunpack.c.l.b16 %v412
    %v1821 = vunpack.c.h.b16 %v412
    %v1822 = vunpack.c.l.b16 %v413
    %v1823 = vunpack.c.h.b16 %v413
    %v1824 = vunpack.c.l.b16 %v414
    %v1825 = vunpack.c.h.b16 %v414
    %v1826 = vunpack.c.l.b16 %v415
    %v1827 = vunpack.c.h.b16 %v415
    %v1828 = vunpack.c.l.b16 %v416
    %v1829 = vunpack.c.h.b16 %v416
    %v1830 = vunpack.c.l.b16 %v417
    %v1831 = vunpack.c.h.b16 %v417
    %v1832 = vunpack.c.l.b16 %v418
    %v1833 = vunpack.c.h.b16 %v418
    %v1834 = vunpack.c.l.b16 %v419
    %v1835 = vunpack.c.h.b16 %v419
    %v1836 = vunpack.c.l.b16 %v420
    %v1837 = vunpack.c.h.b16 %v420
    %v1838 = vunpack.c.l.b16 %v421
    %v1839 = vunpack.c.h.b16 %v421
    %v1840 = vunpack.c.l.b16 %v422
    %v1841 = vunpack.c.h.b16 %v422
    %v1842 = vunpack.c.l.b16 %v423
    %v1843 = vunpack.c.h.b16 %v423
    %v1844 = vunpack.c.l.b16 %v424
    %v1845 = vunpack.c.h.b16 %v424
    %v1846 = vunpack.c.l.b16 %v425
    %v1847 = vunpack.c.h.b16 %v425
    %v1848 = vunpack.c.l.b16 %v426
    %v1849 = vunpack.c.h.b16 %v426
    %v1850 = vunpack.c.l.b16 %v427
    %v1851 = vunpack.c.h.b16 %v427
    %v1852 = vunpack.c.l.b16 %v428
    %v1853 = vunpack.c.h.b16 %v428
    %v1854 = vunpack.c.l.b16 %v429
    %v1855 = vunpack.c.h.b16 %v429
    %v1856 = vunpack.c.l.b16 %v430
    %v1857 = vunpack.c.h.b16 %v430
    %v1858 = vunpack.c.l.b16 %v431
    %v1859 = vunpack.c.h.b16 %v431
    %v1860 = vunpack.c.l.b16 %v432
    %v1861 = vunpack.c.h.b16 %v432
    %v1862 = vunpack.c.l.b16 %v433
    %v1863 = vunpack.c.h.b16 %v433
    %v1864 = vunpack.c.l.b16 %v434
    %v1865 = vunpack.c.h.b16 %v434
    %v1866 = vunpack.c.l.b16 %v435
    %v1867 = vunpack.c.h.b16 %v435
    %v1868 = vunpack.c.l.b16 %v436
    %v1869 = vunpack.c.h.b16 %v436
    %v1870 = vunpack.c.l.b16 %v437
    %v1871 = vunpack.c.h.b16 %v437
    %v1872 = vunpack.c.l.b16 %v438
    %v1873 = vunpack.c.h.b16 %v438
    %v1874 = vunpack.c.l.b16 %v439
    %v1875 = vunpack.c.h.b16 %v439
    %v1876 = vunpack.c.l.b16 %v440
    %v1877 = vunpack.c.h.b16 %v440
    %v1878 = vunpack.c.l.b16 %v441
    %v1879 = vunpack.c.h.b16 %v441
    %v1880 = vunpack.c.l.b16 %v442
    %v1881 = vunpack.c.h.b16 %v442
    %v1882 = vunpack.c.l.b16 %v443
    %v1883 = vunpack.c.h.b16 %v443
    %v1884 = vunpack.c.l.b16 %v444
    %v1885 = vunpack.c.h.b16 %v444
    %v1886 = vunpack.c.l.b16 %v445
    %v1887 = vunpack.c.h.b16 %v445
    %v1888 = vunpack.c.l.b16 %v446
    %v1889 = vunpack.c.h.b16 %v446
    %v1890 = vunpack.c.l.b16 %v447
    %v1891 = vunpack.c.h.b16 %v447
    %v1892 = vunpack.c.l.b16 %v448
    %v1893 = vunpack.c.h.b16 %v448
    %v1894 = vunpack.c.l.b16 %v449
    %v1895 = vunpack.c.h.b16 %v449
    %v1896 = vunpack.c.l.b16 %v450
    %v1897 = vunpack.c.h.b16 %v450
    %v1898 = vunpack.c.l.b16 %v451
    %v1899 = vunpack.c.h.b16 %v451
    %v1900 = vunpack.c.l.b16 %v452
    %v1901 = vunpack.c.h.b16 %v452
    %v1902 = vunpack.c.l.b16 %v453
    %v1903 = vunpack.c.h.b16 %v453
    %v1904 = vunpack.c.l.b16 %v454
    %v1905 = vunpack.c.h.b16 %v454
    %v1906 = vunpack.c.l.b16 %v455
    %v1907 = vunpack.c.h.b16 %v455
    %v1908 = vunpack.c.l.b16 %v456
    %v1909 = vunpack.c.h.b16 %v456
    %v1910 = vunpack.c.l.b16 %v457
    %v1911 = vunpack.c.h.b16 %v457
    %v1912 = vunpack.c.l.b16 %v458
    %v1913 = vunpack.c.h.b16 %v458
    %v1914 = vunpack.c.l.b16 %v459
    %v1915 = vunpack.c.h.b16 %v459
    %v1916 = vunpack.c.l.b16 %v460
    %v1917 = vunpack.c.h.b16 %v460
    %v1918 = vunpack.c.l.b16 %v461
    %v1919 = vunpack.c.h.b16 %v461
    %v1920 = vunpack.c.l.b16 %v462
    %v1921 = vunpack.c.h.b16 %v462
    %v1922 = vunpack.c.l.b16 %v463
    %v1923 = vunpack.c.h.b16 %v463
    %v1924 = vunpack.c.l.b16 %v464
    %v1925 = vunpack.c.h.b16 %v464
    %v1926 = vunpack.c.l.b16 %v465
    %v1927 = vunpack.c.h.b16 %v465
    %v1928 = vunpack.c.l.b16 %v466
    %v1929 = vunpack.c.h.b16 %v466
    %v1930 = vunpack.c.l.b16 %v467
    %v1931 = vunpack.c.h.b16 %v467
    %v1932 = vunpack.c.l.b16 %v468
    %v1933 = vunpack.c.h.b16 %v468
    %v1934 = vunpack.c.l.b16 %v469
    %v1935 = vunpack.c.h.b16 %v469
    %v1936 = vunpack.c.l.b16 %v470
    %v1937 = vunpack.c.h.b16 %v470
    %v1938 = vunpack.c.l.b16 %v471
    %v1939 = vunpack.c.h.b16 %v471
    %v1940 = vunpack.c.l.b16 %v472
    %v1941 = vunpack.c.h.b16 %v472
    %v1942 = vunpack.c.l.b16 %v473
    %v1943 = vunpack.c.h.b16 %v473
    %v1944 = vunpack.c.l.b16 %v474
    %v1945 = vunpack.c.h.b16 %v474
    %v1946 = vunpack.c.l.b16 %v475
    %v1947 = vunpack.c.h.b16 %v475
    %v1948 = vunpack.c.l.b16 %v476
    %v1949 = vunpack.c.h.b16 %v476
    %v1950 = vunpack.c.l.b16 %v477
    %v1951 = vunpack.c.h.b16 %v477
    %v1952 = vunpack.c.l.b16 %v478
    %v1953 = vunpack.c.h.b16 %v478
    %v1954 = vunpack.c.l.b16 %v479
    %v1955 = vunpack.c.h.b16 %v479
    %v1956 = vunpack.c.l.b16 %v480
    %v1957 = vunpack.c.h.b16 %v480
    %v1958 = vunpack.c.l.b16 %v481
    %v1959 = vunpack.c.h.b16 %v481
    %v1960 = vunpack.c.l.b16 %v482
    %v1961 = vunpack.c.h.b16 %v482
    %v1962 = vunpack.c.l.b16 %v483
    %v1963 = vunpack.c.h.b16 %v483
    %v1964 = vunpack.c.l.b16 %v484
    %v1965 = vunpack.c.h.b16 %v484
    %v1966 = vunpack.c.l.b16 %v485
    %v1967 = vunpack.c.h.b16 %v485
    %v1968 = vunpack.c.l.b16 %v486
    %v1969 = vunpack.c.h.b16 %v486
    %v1970 = vunpack.c.l.b16 %v487
    %v1971 = vunpack.c.h.b16 %v487
    %v1972 = vunpack.c.l.b16 %v488
    %v1973 = vunpack.c.h.b16 %v488
    %v1974 = vunpack.c.l.b16 %v489
    %v1975 = vunpack.c.h.b16 %v489
    %v1976 = vunpack.c.l.b16 %v490
    %v1977 = vunpack.c.h.b16 %v490
    %v1978 = vunpack.c.l.b16 %v491
    %v1979 = vunpack.c.h.b16 %v491
    %v1980 = vunpack.c.l.b16 %v492
    %v1981 = vunpack.c.h.b16 %v492
    %v1982 = vunpack.c.l.b16 %v493
    %v1983 = vunpack.c.h.b16 %v493
    %v1984 = vunpack.c.l.b16 %v494
    %v1985 = vunpack.c.h.b16 %v494
    %v1986 = vunpack.c.l.b16 %v495
    %v1987 = vunpack.c.h.b16 %v495
    %v1988 = vunpack.c.l.b16 %v496
    %v1989 = vunpack.c.h.b16 %v496
    %v1990 = vunpack.c.l.b16 %v497
    %v1991 = vunpack.c.h.b16 %v497
    %v1992 = vunpack.c.l.b16 %v498
    %v1993 = vunpack.c.h.b16 %v498
    %v1994 = vunpack.c.l.b16 %v499
    %v1995 = vunpack.c.h.b16 %v499
    %v1996 = vunpack.c.l.b16 %v500
    %v1997 = vunpack.c.h.b16 %v500
    %v1998 = vunpack.c.l.b16 %v501
    %v1999 = vunpack.c.h.b16 %v501
    %v2000 = vunpack.c.l.b16 %v502
    %v2001 = vunpack.c.h.b16 %v502
    %v2002 = vunpack.c.l.b16 %v503
    %v2003 = vunpack.c.h.b16 %v503
    %v2004 = vunpack.c.l.b16 %v504
    %v2005 = vunpack.c.h.b16 %v504
    %v2006 = vunpack.c.l.b16 %v505
    %v2007 = vunpack.c.h.b16 %v505
    %v2008 = vunpack.c.l.b16 %v506
    %v2009 = vunpack.c.h.b16 %v506
    %v2010 = vunpack.c.l.b16 %v507
    %v2011 = vunpack.c.h.b16 %v507
    %v2012 = vunpack.c.l.b16 %v508
    %v2013 = vunpack.c.h.b16 %v508
    %v2014 = vunpack.c.l.b16 %v509
    %v2015 = vunpack.c.h.b16 %v509
    %v2016 = vunpack.c.l.b16 %v510
    %v2017 = vunpack.c.h.b16 %v510
    %v2018 = vunpack.c.l.b16 %v511
    %v2019 = vunpack.c.h.b16 %v511
    %v2020 = vunpack.c.l.b16 %v512
    %v2021 = vunpack.c.h.b16 %v512
    %v2022 = vunpack.c.l.b16 %v513
    %v2023 = vunpack.c.h.b16 %v513
    %v2024 = vunpack.c.l.b16 %v514
    %v2025 = vunpack.c.h.b16 %v514
    %v2026 = vunpack.c.l.b16 %v515
    %v2027 = vunpack.c.h.b16 %v515
    %v2028 = vunpack.c.l.b16 %v516
    %v2029 = vunpack.c.h.b16 %v516
    %v2030 = vunpack.c.l.b16 %v517
    %v2031 = vunpack.c.h.b16 %v517
    %v2032 = vunpack.c.l.b16 %v518
    %v2033 = vunpack.c.h.b16 %v518
    %v2034 = vunpack.c.l.b16 %v519
    %v2035 = vunpack.c.h.b16 %v519
    %v2036 = vunpack.c.l.b16 %v520
    %v2037 = vunpack.c.h.b16 %v520
    %v2038 = vunpack.c.l.b16 %v521
    %v2039 = vunpack.c.h.b16 %v521
    %v2040 = vunpack.c.l.b16 %v522
    %v2041 = vunpack.c.h.b16 %v522
    %v2042 = vunpack.c.l.b16 %v523
    %v2043 = vunpack.c.h.b16 %v523
    %v2044 = vunpack.c.l.b16 %v524
    %v2045 = vunpack.c.h.b16 %v524
    %v2046 = vunpack.c.l.b16 %v525
    %v2047 = vunpack.c.h.b16 %v525
    %v2048 = vunpack.c.l.b16 %v526
    %v2049 = vunpack.c.h.b16 %v526
    %v2050 = vunpack.c.l.b16 %v527
    %v2051 = vunpack.c.h.b16 %v527
    %v2052 = vunpack.c.l.b16 %v528
    %v2053 = vunpack.c.h.b16 %v528
    %v2054 = vunpack.c.l.b16 %v529
    %v2055 = vunpack.c.h.b16 %v529
    %v2056 = vunpack.c.l.b16 %v530
    %v2057 = vunpack.c.h.b16 %v530
    %v2058 = vunpack.c.l.b16 %v531
    %v2059 = vunpack.c.h.b16 %v531
    %v2060 = vunpack.c.l.b16 %v532
    %v2061 = vunpack.c.h.b16 %v532
    %v2062 = vunpack.c.l.b16 %v533
    %v2063 = vunpack.c.h.b16 %v533
    %v2064 = vunpack.c.l.b16 %v534
    %v2065 = vunpack.c.h.b16 %v534
    %v2066 = vunpack.c.l.b16 %v535
    %v2067 = vunpack.c.h.b16 %v535
    %v2068 = vunpack.c.l.b16 %v536
    %v2069 = vunpack.c.h.b16 %v536
    %v2070 = vunpack.c.l.b16 %v537
    %v2071 = vunpack.c.h.b16 %v537
    %v2072 = vunpack.c.l.b16 %v538
    %v2073 = vunpack.c.h.b16 %v538
    %v2074 = vunpack.c.l.b16 %v539
    %v2075 = vunpack.c.h.b16 %v539
    %v2076 = vunpack.c.l.b16 %v540
    %v2077 = vunpack.c.h.b16 %v540
    %v2078 = vunpack.c.l.b16 %v541
    %v2079 = vunpack.c.h.b16 %v541
    %v2080 = vunpack.c.l.b16 %v542
    %v2081 = vunpack.c.h.b16 %v542
    %v2082 = vunpack.c.l.b16 %v543
    %v2083 = vunpack.c.h.b16 %v543
    %v2084 = vunpack.c.l.b16 %v544
    %v2085 = vunpack.c.h.b16 %v544
    %v2086 = vunpack.c.l.b16 %v545
    %v2087 = vunpack.c.h.b16 %v545
    %v2088 = vunpack.c.l.b16 %v546
    %v2089 = vunpack.c.h.b16 %v546
    %v2090 = vunpack.c.l.b16 %v547
    %v2091 = vunpack.c.h.b16 %v547
    %v2092 = vunpack.c.l.b16 %v548
    %v2093 = vunpack.c.h.b16 %v548
    %v2094 = vunpack.c.l.b16 %v549
    %v2095 = vunpack.c.h.b16 %v549
    %v2096 = vunpack.c.l.b16 %v550
    %v2097 = vunpack.c.h.b16 %v550
    %v2098 = vunpack.c.l.b16 %v551
    %v2099 = vunpack.c.h.b16 %v551
    %v2100 = vunpack.c.l.b16 %v552
    %v2101 = vunpack.c.h.b16 %v552
    %v2102 = vunpack.c.l.b16 %v553
    %v2103 = vunpack.c.h.b16 %v553
    %v2104 = vunpack.c.l.b16 %v554
    %v2105 = vunpack.c.h.b16 %v554
    %v2106 = vunpack.c.l.b16 %v555
    %v2107 = vunpack.c.h.b16 %v555
    %v2108 = vunpack.c.l.b16 %v556
    %v2109 = vunpack.c.h.b16 %v556
    %v2110 = vunpack.c.l.b16 %v557
    %v2111 = vunpack.c.h.b16 %v557
    %v2112 = vunpack.c.l.b16 %v558
    %v2113 = vunpack.c.h.b16 %v558
    %v2114 = vunpack.c.l.b16 %v559
    %v2115 = vunpack.c.h.b16 %v559
    %v2116 = vunpack.c.l.b16 %v560
    %v2117 = vunpack.c.h.b16 %v560
    %v2118 = vunpack.c.l.b16 %v561
    %v2119 = vunpack.c.h.b16 %v561
    %v2120 = vunpack.c.l.b16 %v562
    %v2121 = vunpack.c.h.b16 %v562
    %v2122 = vunpack.c.l.b16 %v563
    %v2123 = vunpack.c.h.b16 %v563
    %v2124 = vunpack.c.l.b16 %v564
    %v2125 = vunpack.c.h.b16 %v564
    %v2126 = vunpack.c.l.b16 %v565
    %v2127 = vunpack.c.h.b16 %v565
    %v2128 = vunpack.c.l.b16 %v566
    %v2129 = vunpack.c.h.b16 %v566
    %v2130 = vunpack.c.l.b16 %v567
    %v2131 = vunpack.c.h.b16 %v567
    %v2132 = vunpack.c.l.b16 %v568
    %v2133 = vunpack.c.h.b16 %v568
    %v2134 = vunpack.c.l.b16 %v569
    %v2135 = vunpack.c.h.b16 %v569
    %v2136 = vunpack.c.l.b16 %v570
    %v2137 = vunpack.c.h.b16 %v570
    %v2138 = vunpack.c.l.b16 %v571
    %v2139 = vunpack.c.h.b16 %v571
    %v2140 = vunpack.c.l.b16 %v572
    %v2141 = vunpack.c.h.b16 %v572
    %v2142 = vunpack.c.l.b16 %v573
    %v2143 = vunpack.c.h.b16 %v573
    %v2144 = vunpack.c.l.b16 %v574
    %v2145 = vunpack.c.h.b16 %v574
    %v2146 = vunpack.c.l.b16 %v575
    %v2147 = vunpack.c.h.b16 %v575
    %v2148 = vunpack.c.l.b16 %v576
    %v2149 = vunpack.c.h.b16 %v576
    %v2150 = vunpack.c.l.b16 %v577
    %v2151 = vunpack.c.h.b16 %v577
    %v2152 = vunpack.c.l.b16 %v578
    %v2153 = vunpack.c.h.b16 %v578
    %v2154 = vunpack.c.l.b16 %v579
    %v2155 = vunpack.c.h.b16 %v579
    %v2156 = vunpack.c.l.b16 %v580
    %v2157 = vunpack.c.h.b16 %v580
    %v2158 = vunpack.c.l.b16 %v581
    %v2159 = vunpack.c.h.b16 %v581
    %v2160 = vunpack.c.l.b16 %v582
    %v2161 = vunpack.c.h.b16 %v582
    %v2162 = vunpack.c.l.b16 %v583
    %v2163 = vunpack.c.h.b16 %v583
    %v2164 = vunpack.c.l.b16 %v584
    %v2165 = vunpack.c.h.b16 %v584
    %v2166 = vunpack.c.l.b16 %v585
    %v2167 = vunpack.c.h.b16 %v585
    %v2168 = vunpack.c.l.b16 %v586
    %v2169 = vunpack.c.h.b16 %v586
    %v2170 = vunpack.c.l.b16 %v587
    %v2171 = vunpack.c.h.b16 %v587
    %v2172 = vunpack.c.l.b16 %v588
    %v2173 = vunpack.c.h.b16 %v588
    %v2174 = vunpack.c.l.b16 %v589
    %v2175 = vunpack.c.h.b16 %v589
    %v2176 = vunpack.c.l.b16 %v590
    %v2177 = vunpack.c.h.b16 %v590
    %v2178 = vunpack.c.l.b16 %v591
    %v2179 = vunpack.c.h.b16 %v591
    %v2180 = vunpack.c.l.b16 %v592
    %v2181 = vunpack.c.h.b16 %v592
    %v2182 = vunpack.c.l.b16 %v593
    %v2183 = vunpack.c.h.b16 %v593
    %v2184 = vunpack.c.l.b16 %v594
    %v2185 = vunpack.c.h.b16 %v594
    %v2186 = vunpack.c.l.b16 %v595
    %v2187 = vunpack.c.h.b16 %v595
    %v2188 = vunpack.c.l.b16 %v596
    %v2189 = vunpack.c.h.b16 %v596
    %v2190 = vunpack.c.l.b16 %v597
    %v2191 = vunpack.c.h.b16 %v597
    %v2192 = vunpack.c.l.b16 %v598
    %v2193 = vunpack.c.h.b16 %v598
    %v2194 = vunpack.c.l.b16 %v599
    %v2195 = vunpack.c.h.b16 %v599
    %v2196 = vunpack.c.l.b16 %v600
    %v2197 = vunpack.c.h.b16 %v600
    %v2198 = vunpack.c.l.b16 %v601
    %v2199 = vunpack.c.h.b16 %v601
    %v2200 = vunpack.c.l.b16 %v602
    %v2201 = vunpack.c.h.b16 %v602
    %v2202 = vunpack.c.l.b16 %v603
    %v2203 = vunpack.c.h.b16 %v603
    %v2204 = vunpack.c.l.b16 %v604
    %v2205 = vunpack.c.h.b16 %v604
    %v2206 = vunpack.c.l.b16 %v605
    %v2207 = vunpack.c.h.b16 %v605
    %v2208 = vunpack.c.l.b16 %v606
    %v2209 = vunpack.c.h.b16 %v606
    %v2210 = vunpack.c.l.b16 %v607
    %v2211 = vunpack.c.h.b16 %v607
    %v2212 = vunpack.c.l.b16 %v608
    %v2213 = vunpack.c.h.b16 %v608
    %v2214 = vunpack.c.l.b16 %v609
    %v2215 = vunpack.c.h.b16 %v609
    %v2216 = vunpack.c.l.b16 %v610
    %v2217 = vunpack.c.h.b16 %v610
    %v2218 = vunpack.c.l.b16 %v611
    %v2219 = vunpack.c.h.b16 %v611
    %v2220 = vunpack.c.l.b16 %v612
    %v2221 = vunpack.c.h.b16 %v612
    %v2222 = vunpack.c.l.b16 %v613
    %v2223 = vunpack.c.h.b16 %v613
    %v2224 = vunpack.c.l.b16 %v614
    %v2225 = vunpack.c.h.b16 %v614
    %v2226 = vunpack.c.l.b16 %v615
    %v2227 = vunpack.c.h.b16 %v615
    %v2228 = vunpack.c.l.b16 %v616
    %v2229 = vunpack.c.h.b16 %v616
    %v2230 = vunpack.c.l.b16 %v617
    %v2231 = vunpack.c.h.b16 %v617
    %v2232 = vunpack.c.l.b16 %v618
    %v2233 = vunpack.c.h.b16 %v618
    %v2234 = vunpack.c.l.b16 %v619
    %v2235 = vunpack.c.h.b16 %v619
    %v2236 = vunpack.c.l.b16 %v620
    %v2237 = vunpack.c.h.b16 %v620
    %v2238 = vunpack.c.l.b16 %v621
    %v2239 = vunpack.c.h.b16 %v621
    %v2240 = vunpack.c.l.b16 %v622
    %v2241 = vunpack.c.h.b16 %v622
    %v2242 = vunpack.c.l.b16 %v623
    %v2243 = vunpack.c.h.b16 %v623
    %v2244 = vunpack.c.l.b16 %v624
    %v2245 = vunpack.c.h.b16 %v624
    %v2246 = vunpack.c.l.b16 %v625
    %v2247 = vunpack.c.h.b16 %v625
    %v2248 = vunpack.c.l.b16 %v626
    %v2249 = vunpack.c.h.b16 %v626
    %v2250 = vunpack.c.l.b16 %v627
    %v2251 = vunpack.c.h.b16 %v627
    %v2252 = vunpack.c.l.b16 %v628
    %v2253 = vunpack.c.h.b16 %v628
    %v2254 = vunpack.c.l.b16 %v629
    %v2255 = vunpack.c.h.b16 %v629
    %v2256 = vunpack.c.l.b16 %v630
    %v2257 = vunpack.c.h.b16 %v630
    %v2258 = vunpack.c.l.b16 %v631
    %v2259 = vunpack.c.h.b16 %v631
    %v2260 = vunpack.c.l.b16 %v632
    %v2261 = vunpack.c.h.b16 %v632
    %v2262 = vunpack.c.l.b16 %v633
    %v2263 = vunpack.c.h.b16 %v633
    %v2264 = vunpack.c.l.b16 %v634
    %v2265 = vunpack.c.h.b16 %v634
    %v2266 = vunpack.c.l.b16 %v635
    %v2267 = vunpack.c.h.b16 %v635
    %v2268 = vunpack.c.l.b16 %v636
    %v2269 = vunpack.c.h.b16 %v636
    %v2270 = vunpack.c.l.b16 %v637
    %v2271 = vunpack.c.h.b16 %v637
    %v2272 = vunpack.c.l.b16 %v638
    %v2273 = vunpack.c.h.b16 %v638
    %v2274 = vunpack.c.l.b16 %v639
    %v2275 = vunpack.c.h.b16 %v639
    %v2276 = vunpack.c.l.b16 %v640
    %v2277 = vunpack.c.h.b16 %v640
    %v2278 = vunpack.c.l.b16 %v641
    %v2279 = vunpack.c.h.b16 %v641
    %v2280 = vunpack.c.l.b16 %v642
    %v2281 = vunpack.c.h.b16 %v642
    %v2282 = vunpack.c.l.b16 %v643
    %v2283 = vunpack.c.h.b16 %v643
    %v2284 = vunpack.c.l.b16 %v644
    %v2285 = vunpack.c.h.b16 %v644
    %v2286 = vunpack.c.l.b16 %v645
    %v2287 = vunpack.c.h.b16 %v645
    %v2288 = vunpack.c.l.b16 %v646
    %v2289 = vunpack.c.h.b16 %v646
    %v2290 = vunpack.c.l.b16 %v647
    %v2291 = vunpack.c.h.b16 %v647
    %v2292 = vunpack.c.l.b16 %v648
    %v2293 = vunpack.c.h.b16 %v648
    %v2294 = vunpack.c.l.b16 %v649
    %v2295 = vunpack.c.h.b16 %v649
    %v2296 = vunpack.c.l.b16 %v650
    %v2297 = vunpack.c.h.b16 %v650
    %v2298 = vunpack.c.l.b16 %v651
    %v2299 = vunpack.c.h.b16 %v651
    %v2300 = vunpack.c.l.b16 %v652
    %v2301 = vunpack.c.h.b16 %v652
    %v2302 = vunpack.c.l.b16 %v653
    %v2303 = vunpack.c.h.b16 %v653
    %v2304 = vunpack.c.l.b16 %v654
    %v2305 = vunpack.c.h.b16 %v654
    %v2306 = vunpack.c.l.b16 %v655
    %v2307 = vunpack.c.h.b16 %v655
    %v2308 = vunpack.c.l.b16 %v656
    %v2309 = vunpack.c.h.b16 %v656
    %v2310 = vunpack.c.l.b16 %v657
    %v2311 = vunpack.c.h.b16 %v657
    %v2312 = vunpack.c.l.b16 %v658
    %v2313 = vunpack.c.h.b16 %v658
    %v2314 = vunpack.c.l.b16 %v659
    %v2315 = vunpack.c.h.b16 %v659
    %v2316 = vunpack.c.l.b16 %v660
    %v2317 = vunpack.c.h.b16 %v660
    %v2318 = vunpack.c.l.b16 %v661
    %v2319 = vunpack.c.h.b16 %v661
    %v2320 = vunpack.c.l.b16 %v662
    %v2321 = vunpack.c.h.b16 %v662
    %v2322 = vunpack.c.l.b16 %v663
    %v2323 = vunpack.c.h.b16 %v663
    %v2324 = vunpack.c.l.b16 %v664
    %v2325 = vunpack.c.h.b16 %v664
    %v2326 = vunpack.c.l.b16 %v665
    %v2327 = vunpack.c.h.b16 %v665
    %v2328 = vunpack.c.l.b16 %v666
    %v2329 = vunpack.c.h.b16 %v666
    %v2330 = vunpack.c.l.b16 %v667
    %v2331 = vunpack.c.h.b16 %v667
    %v2332 = vunpack.c.l.b16 %v668
    %v2333 = vunpack.c.h.b16 %v668
    %v2334 = vunpack.c.l.b16 %v669
    %v2335 = vunpack.c.h.b16 %v669
    %v2336 = vunpack.c.l.b16 %v670
    %v2337 = vunpack.c.h.b16 %v670
    %v2338 = vunpack.c.l.b16 %v671
    %v2339 = vunpack.c.h.b16 %v671
    %v2340 = vunpack.c.l.b16 %v672
    %v2341 = vunpack.c.h.b16 %v672
    %v2342 = vunpack.c.l.b16 %v673
    %v2343 = vunpack.c.h.b16 %v673
    %v2344 = vunpack.c.l.b16 %v674
    %v2345 = vunpack.c.h.b16 %v674
    %v2346 = vunpack.c.l.b16 %v675
    %v2347 = vunpack.c.h.b16 %v675
    %v2348 = vunpack.c.l.b16 %v676
    %v2349 = vunpack.c.h.b16 %v676
    %v2350 = vunpack.c.l.b16 %v677
    %v2351 = vunpack.c.h.b16 %v677
    %v2352 = vunpack.c.l.b16 %v678
    %v2353 = vunpack.c.h.b16 %v678
    %v2354 = vunpack.c.l.b16 %v679
    %v2355 = vunpack.c.h.b16 %v679
    %v2356 = vunpack.c.l.b16 %v680
    %v2357 = vunpack.c.h.b16 %v680
    %v2358 = vunpack.c.l.b16 %v681
    %v2359 = vunpack.c.h.b16 %v681
    %v2360 = vunpack.c.l.b16 %v682
    %v2361 = vunpack.c.h.b16 %v682
    %v2362 = vunpack.c.l.b16 %v683
    %v2363 = vunpack.c.h.b16 %v683
    %v2364 = vunpack.c.l.b16 %v684
    %v2365 = vunpack.c.h.b16 %v684
    %v2366 = vunpack.c.l.b16 %v685
    %v2367 = vunpack.c.h.b16 %v685
    %v2368 = vunpack.c.l.b16 %v686
    %v2369 = vunpack.c.h.b16 %v686
    %v2370 = vunpack.c.l.b16 %v687
    %v2371 = vunpack.c.h.b16 %v687
    %v2372 = vunpack.c.l.b16 %v688
    %v2373 = vunpack.c.h.b16 %v688
    %v2374 = vunpack.c.l.b16 %v689
    %v2375 = vunpack.c.h.b16 %v689
    %v2376 = vunpack.c.l.b16 %v690
    %v2377 = vunpack.c.h.b16 %v690
    %v2378 = vunpack.c.l.b16 %v691
    %v2379 = vunpack.c.h.b16 %v691
    %v2380 = vunpack.c.l.b16 %v692
    %v2381 = vunpack.c.h.b16 %v692
    %v2382 = vunpack.c.l.b16 %v693
    %v2383 = vunpack.c.h.b16 %v693
    %v2384 = vunpack.c.l.b16 %v694
    %v2385 = vunpack.c.h.b16 %v694
    %v2386 = vunpack.c.l.b16 %v695
    %v2387 = vunpack.c.h.b16 %v695
    %v2388 = vpack.c.b16 %v1304, %v1300
    %v2389 = vpack.c.b16 %v1305, %v1301
    %v2390 = vpack.c.b16 %v1306, %v1302
    %v2391 = vpack.c.b16 %v1307, %v1303
    %v2392 = vpack.c.b16 %v1312, %v1308
    %v2393 = vpack.c.b16 %v1313, %v1309
    %v2394 = vpack.c.b16 %v1314, %v1310
    %v2395 = vpack.c.b16 %v1315, %v1311
    %v2396 = vpack.c.b16 %v1320, %v1316
    %v2397 = vpack.c.b16 %v1321, %v1317
    %v2398 = vpack.c.b16 %v1322, %v1318
    %v2399 = vpack.c.b16 %v1323, %v1319
    %v2400 = vpack.c.b16 %v1328, %v1324
    %v2401 = vpack.c.b16 %v1329, %v1325
    %v2402 = vpack.c.b16 %v1330, %v1326
    %v2403 = vpack.c.b16 %v1331, %v1327
    %v2404 = vpack.c.b16 %v1336, %v1332
    %v2405 = vpack.c.b16 %v1337, %v1333
    %v2406 = vpack.c.b16 %v1338, %v1334
    %v2407 = vpack.c.b16 %v1339, %v1335
    %v2408 = vpack.c.b16 %v1344, %v1340
    %v2409 = vpack.c.b16 %v1345, %v1341
    %v2410 = vpack.c.b16 %v1346, %v1342
    %v2411 = vpack.c.b16 %v1347, %v1343
    %v2412 = vpack.c.b16 %v1352, %v1348
    %v2413 = vpack.c.b16 %v1353, %v1349
    %v2414 = vpack.c.b16 %v1354, %v1350
    %v2415 = vpack.c.b16 %v1355, %v1351
    %v2416 = vpack.c.b16 %v1360, %v1356
    %v2417 = vpack.c.b16 %v1361, %v1357
    %v2418 = vpack.c.b16 %v1362, %v1358
    %v2419 = vpack.c.b16 %v1363, %v1359
    %v2420 = vpack.c.b16 %v1368, %v1364
    %v2421 = vpack.c.b16 %v1369, %v1365
    %v2422 = vpack.c.b16 %v1370, %v1366
    %v2423 = vpack.c.b16 %v1371, %v1367
    %v2424 = vpack.c.b16 %v1376, %v1372
    %v2425 = vpack.c.b16 %v1377, %v1373
    %v2426 = vpack.c.b16 %v1378, %v1374
    %v2427 = vpack.c.b16 %v1379, %v1375
    %v2428 = vpack.c.b16 %v1384, %v1380
    %v2429 = vpack.c.b16 %v1385, %v1381
    %v2430 = vpack.c.b16 %v1386, %v1382
    %v2431 = vpack.c.b16 %v1387, %v1383
    %v2432 = vpack.c.b16 %v1392, %v1388
    %v2433 = vpack.c.b16 %v1393, %v1389
    %v2434 = vpack.c.b16 %v1394, %v1390
    %v2435 = vpack.c.b16 %v1395, %v1391
    %v2436 = vpack.c.b16 %v1400, %v1396
    %v2437 = vpack.c.b16 %v1401, %v1397
    %v2438 = vpack.c.b16 %v1402, %v1398
    %v2439 = vpack.c.b16 %v1403, %v1399
    %v2440 = vpack.c.b16 %v1408, %v1404
    %v2441 = vpack.c.b16 %v1409, %v1405
    %v2442 = vpack.c.b16 %v1410, %v1406
    %v2443 = vpack.c.b16 %v1411, %v1407
    %v2444 = vpack.c.b16 %v1416, %v1412
    %v2445 = vpack.c.b16 %v1417, %v1413
    %v2446 = vpack.c.b16 %v1418, %v1414
    %v2447 = vpack.c.b16 %v1419, %v1415
    %v2448 = vpack.c.b16 %v1424, %v1420
    %v2449 = vpack.c.b16 %v1425, %v1421
    %v2450 = vpack.c.b16 %v1426, %v1422
    %v2451 = vpack.c.b16 %v1427, %v1423
    %v2452 = vpack.c.b16 %v1432, %v1428
    %v2453 = vpack.c.b16 %v1433, %v1429
    %v2454 = vpack.c.b16 %v1434, %v1430
    %v2455 = vpack.c.b16 %v1435, %v1431
    %v2456 = vpack.c.b16 %v1440, %v1436
    %v2457 = vpack.c.b16 %v1441, %v1437
    %v2458 = vpack.c.b16 %v1442, %v1438
    %v2459 = vpack.c.b16 %v1443, %v1439
    %v2460 = vpack.c.b16 %v1448, %v1444
    %v2461 = vpack.c.b16 %v1449, %v1445
    %v2462 = vpack.c.b16 %v1450, %v1446
    %v2463 = vpack.c.b16 %v1451, %v1447
    %v2464 = vpack.c.b16 %v1456, %v1452
    %v2465 = vpack.c.b16 %v1457, %v1453
    %v2466 = vpack.c.b16 %v1458, %v1454
    %v2467 = vpack.c.b16 %v1459, %v1455
    %v2468 = vpack.c.b16 %v1464, %v1460
    %v2469 = vpack.c.b16 %v1465, %v1461
    %v2470 = vpack.c.b16 %v1466, %v1462
    %v2471 = vpack.c.b16 %v1467, %v1463
    %v2472 = vpack.c.b16 %v1472, %v1468
    %v2473 = vpack.c.b16 %v1473, %v1469
    %v2474 = vpack.c.b16 %v1474, %v1470
    %v2475 = vpack.c.b16 %v1475, %v1471
    %v2476 = vpack.c.b16 %v1480, %v1476
    %v2477 = vpack.c.b16 %v1481, %v1477
    %v2478 = vpack.c.b16 %v1482, %v1478
    %v2479 = vpack.c.b16 %v1483, %v1479
    %v2480 = vpack.c.b16 %v1488, %v1484
    %v2481 = vpack.c.b16 %v1489, %v1485
    %v2482 = vpack.c.b16 %v1490, %v1486
    %v2483 = vpack.c.b16 %v1491, %v1487
    %v2484 = vpack.c.b16 %v1496, %v1492
    %v2485 = vpack.c.b16 %v1497, %v1493
    %v2486 = vpack.c.b16 %v1498, %v1494
    %v2487 = vpack.c.b16 %v1499, %v1495
    %v2488 = vpack.c.b16 %v1504, %v1500
    %v2489 = vpack.c.b16 %v1505, %v1501
    %v2490 = vpack.c.b16 %v1506, %v1502
    %v2491 = vpack.c.b16 %v1507, %v1503
    %v2492 = vpack.c.b16 %v1512, %v1508
    %v2493 = vpack.c.b16 %v1513, %v1509
    %v2494 = vpack.c.b16 %v1514, %v1510
    %v2495 = vpack.c.b16 %v1515, %v1511
    %v2496 = vpack.c.b16 %v1520, %v1516
    %v2497 = vpack.c.b16 %v1521, %v1517
    %v2498 = vpack.c.b16 %v1522, %v1518
    %v2499 = vpack.c.b16 %v1523, %v1519
    %v2500 = vpack.c.b16 %v1528, %v1524
    %v2501 = vpack.c.b16 %v1529, %v1525
    %v2502 = vpack.c.b16 %v1530, %v1526
    %v2503 = vpack.c.b16 %v1531, %v1527
    %v2504 = vpack.c.b16 %v1536, %v1532
    %v2505 = vpack.c.b16 %v1537, %v1533
    %v2506 = vpack.c.b16 %v1538, %v1534
    %v2507 = vpack.c.b16 %v1539, %v1535
    %v2508 = vpack.c.b16 %v1544, %v1540
    %v2509 = vpack.c.b16 %v1545, %v1541
    %v2510 = vpack.c.b16 %v1546, %v1542
    %v2511 = vpack.c.b16 %v1547, %v1543
    %v2512 = vpack.c.b16 %v1552, %v1548
    %v2513 = vpack.c.b16 %v1553, %v1549
    %v2514 = vpack.c.b16 %v1554, %v1550
    %v2515 = vpack.c.b16 %v1555, %v1551
    %v2516 = vpack.c.b16 %v1560, %v1556
    %v2517 = vpack.c.b16 %v1561, %v1557
    %v2518 = vpack.c.b16 %v1562, %v1558
    %v2519 = vpack.c.b16 %v1563, %v1559
    %v2520 = vpack.c.b16 %v1568, %v1564
    %v2521 = vpack.c.b16 %v1569, %v1565
    %v2522 = vpack.c.b16 %v1570, %v1566
    %v2523 = vpack.c.b16 %v1571, %v1567
    %v2524 = vpack.c.b16 %v1576, %v1572
    %v2525 = vpack.c.b16 %v1577, %v1573
    %v2526 = vpack.c.b16 %v1578, %v1574
    %v2527 = vpack.c.b16 %v1579, %v1575
    %v2528 = vpack.c.b16 %v1584, %v1580
    %v2529 = vpack.c.b16 %v1585, %v1581
    %v2530 = vpack.c.b16 %v1586, %v1582
    %v2531 = vpack.c.b16 %v1587, %v1583
    %v2532 = vpack.c.b16 %v1592, %v1588
    %v2533 = vpack.c.b16 %v1593, %v1589
    %v2534 = vpack.c.b16 %v1594, %v1590
    %v2535 = vpack.c.b16 %v1595, %v1591
    %v2536 = vpack.c.b16 %v1600, %v1596
    %v2537 = vpack.c.b16 %v1601, %v1597
    %v2538 = vpack.c.b16 %v1602, %v1598
    %v2539 = vpack.c.b16 %v1603, %v1599
    %v2540 = vpack.c.b16 %v1608, %v1604
    %v2541 = vpack.c.b16 %v1609, %v1605
    %v2542 = vpack.c.b16 %v1610, %v1606
    %v2543 = vpack.c.b16 %v1611, %v1607
    %v2544 = vpack.c.b16 %v1616, %v1612
    %v2545 = vpack.c.b16 %v1617, %v1613
    %v2546 = vpack.c.b16 %v1618, %v1614
    %v2547 = vpack.c.b16 %v1619, %v1615
    %v2548 = vpack.c.b16 %v1624, %v1620
    %v2549 = vpack.c.b16 %v1625, %v1621
    %v2550 = vpack.c.b16 %v1626, %v1622
    %v2551 = vpack.c.b16 %v1627, %v1623
    %v2552 = vpack.c.b16 %v1632, %v1628
    %v2553 = vpack.c.b16 %v1633, %v1629
    %v2554 = vpack.c.b16 %v1634, %v1630
    %v2555 = vpack.c.b16 %v1635, %v1631
    %v2556 = vpack.c.b16 %v1640, %v1636
    %v2557 = vpack.c.b16 %v1641, %v1637
    %v2558 = vpack.c.b16 %v1642, %v1638
    %v2559 = vpack.c.b16 %v1643, %v1639
    %v2560 = vpack.c.b16 %v1648, %v1644
    %v2561 = vpack.c.b16 %v1649, %v1645
    %v2562 = vpack.c.b16 %v1650, %v1646
    %v2563 = vpack.c.b16 %v1651, %v1647
    %v2564 = vpack.c.b16 %v1656, %v1652
    %v2565 = vpack.c.b16 %v1657, %v1653
    %v2566 = vpack.c.b16 %v1658, %v1654
    %v2567 = vpack.c.b16 %v1659, %v1655
    %v2568 = vpack.c.b16 %v1664, %v1660
    %v2569 = vpack.c.b16 %v1665, %v1661
    %v2570 = vpack.c.b16 %v1666, %v1662
    %v2571 = vpack.c.b16 %v1667, %v1663
    %v2572 = vpack.c.b16 %v1672, %v1668
    %v2573 = vpack.c.b16 %v1673, %v1669
    %v2574 = vpack.c.b16 %v1674, %v1670
    %v2575 = vpack.c.b16 %v1675, %v1671
    %v2576 = vpack.c.b16 %v1680, %v1676
    %v2577 = vpack.c.b16 %v1681, %v1677
    %v2578 = vpack.c.b16 %v1682, %v1678
    %v2579 = vpack.c.b16 %v1683, %v1679
    %v2580 = vpack.c.b16 %v1688, %v1684
    %v2581 = vpack.c.b16 %v1689, %v1685
    %v2582 = vpack.c.b16 %v1690, %v1686
    %v2583 = vpack.c.b16 %v1691, %v1687
    %v2584 = vpack.c.b16 %v1696, %v1692
    %v2585 = vpack.c.b16 %v1697, %v1693
    %v2586 = vpack.c.b16 %v1698, %v1694
    %v2587 = vpack.c.b16 %v1699, %v1695
    %v2588 = vpack.c.b16 %v1704, %v1700
    %v2589 = vpack.c.b16 %v1705, %v1701
    %v2590 = vpack.c.b16 %v1706, %v1702
    %v2591 = vpack.c.b16 %v1707, %v1703
    %v2592 = vpack.c.b16 %v1712, %v1708
    %v2593 = vpack.c.b16 %v1713, %v1709
    %v2594 = vpack.c.b16 %v1714, %v1710
    %v2595 = vpack.c.b16 %v1715, %v1711
    %v2596 = vpack.c.b16 %v1720, %v1716
    %v2597 = vpack.c.b16 %v1721, %v1717
    %v2598 = vpack.c.b16 %v1722, %v1718
    %v2599 = vpack.c.b16 %v1723, %v1719
    %v2600 = vpack.c.b16 %v1728, %v1724
    %v2601 = vpack.c.b16 %v1729, %v1725
    %v2602 = vpack.c.b16 %v1730, %v1726
    %v2603 = vpack.c.b16 %v1731, %v1727
    %v2604 = vpack.c.b16 %v1736, %v1732
    %v2605 = vpack.c.b16 %v1737, %v1733
    %v2606 = vpack.c.b16 %v1738, %v1734
    %v2607 = vpack.c.b16 %v1739, %v1735
    %v2608 = vpack.c.b16 %v1744, %v1740
    %v2609 = vpack.c.b16 %v1745, %v1741
    %v2610 = vpack.c.b16 %v1746, %v1742
    %v2611 = vpack.c.b16 %v1747, %v1743
    %v2612 = vpack.c.b16 %v1752, %v1748
    %v2613 = vpack.c.b16 %v1753, %v1749
    %v2614 = vpack.c.b16 %v1754, %v1750
    %v2615 = vpack.c.b16 %v1755, %v1751
    %v2616 = vpack.c.b16 %v1760, %v1756
    %v2617 = vpack.c.b16 %v1761, %v1757
    %v2618 = vpack.c.b16 %v1762, %v1758
    %v2619 = vpack.c.b16 %v1763, %v1759
    %v2620 = vpack.c.b16 %v1768, %v1764
    %v2621 = vpack.c.b16 %v1769, %v1765
    %v2622 = vpack.c.b16 %v1770, %v1766
    %v2623 = vpack.c.b16 %v1771, %v1767
    %v2624 = vpack.c.b16 %v1776, %v1772
    %v2625 = vpack.c.b16 %v1777, %v1773
    %v2626 = vpack.c.b16 %v1778, %v1774
    %v2627 = vpack.c.b16 %v1779, %v1775
    %v2628 = vpack.c.b16 %v1784, %v1780
    %v2629 = vpack.c.b16 %v1785, %v1781
    %v2630 = vpack.c.b16 %v1786, %v1782
    %v2631 = vpack.c.b16 %v1787, %v1783
    %v2632 = vpack.c.b16 %v1792, %v1788
    %v2633 = vpack.c.b16 %v1793, %v1789
    %v2634 = vpack.c.b16 %v1794, %v1790
    %v2635 = vpack.c.b16 %v1795, %v1791
    %v2636 = vpack.c.b16 %v1800, %v1796
    %v2637 = vpack.c.b16 %v1801, %v1797
    %v2638 = vpack.c.b16 %v1802, %v1798
    %v2639 = vpack.c.b16 %v1803, %v1799
    %v2640 = vpack.c.b16 %v1808, %v1804
    %v2641 = vpack.c.b16 %v1809, %v1805
    %v2642 = vpack.c.b16 %v1810, %v1806
    %v2643 = vpack.c.b16 %v1811, %v1807
    %v2644 = vpack.c.b16 %v1816, %v1812
    %v2645 = vpack.c.b16 %v1817, %v1813
    %v2646 = vpack.c.b16 %v1818, %v1814
    %v2647 = vpack.c.b16 %v1819, %v1815
    %v2648 = vpack.c.b16 %v1824, %v1820
    %v2649 = vpack.c.b16 %v1825, %v1821
    %v2650 = vpack.c.b16 %v1826, %v1822
    %v2651 = vpack.c.b16 %v1827, %v1823
    %v2652 = vpack.c.b16 %v1832, %v1828
    %v2653 = vpack.c.b16 %v1833, %v1829
    %v2654 = vpack.c.b16 %v1834, %v1830
    %v2655 = vpack.c.b16 %v1835, %v1831
    %v2656 = vpack.c.b16 %v1840, %v1836
    %v2657 = vpack.c.b16 %v1841, %v1837
    %v2658 = vpack.c.b16 %v1842, %v1838
    %v2659 = vpack.c.b16 %v1843, %v1839
    %v2660 = vpack.c.b16 %v1848, %v1844
    %v2661 = vpack.c.b16 %v1849, %v1845
    %v2662 = vpack.c.b16 %v1850, %v1846
    %v2663 = vpack.c.b16 %v1851, %v1847
    %v2664 = vpack.c.b16 %v1856, %v1852
    %v2665 = vpack.c.b16 %v1857, %v1853
    %v2666 = vpack.c.b16 %v1858, %v1854
    %v2667 = vpack.c.b16 %v1859, %v1855
    %v2668 = vpack.c.b16 %v1864, %v1860
    %v2669 = vpack.c.b16 %v1865, %v1861
    %v2670 = vpack.c.b16 %v1866, %v1862
    %v2671 = vpack.c.b16 %v1867, %v1863
    %v2672 = vpack.c.b16 %v1872, %v1868
    %v2673 = vpack.c.b16 %v1873, %v1869
    %v2674 = vpack.c.b16 %v1874, %v1870
    %v2675 = vpack.c.b16 %v1875, %v1871
    %v2676 = vpack.c.b16 %v1880, %v1876
    %v2677 = vpack.c.b16 %v1881, %v1877
    %v2678 = vpack.c.b16 %v1882, %v1878
    %v2679 = vpack.c.b16 %v1883, %v1879
    %v2680 = vpack.c.b16 %v1888, %v1884
    %v2681 = vpack.c.b16 %v1889, %v1885
    %v2682 = vpack.c.b16 %v1890, %v1886
    %v2683 = vpack.c.b16 %v1891, %v1887
    %v2684 = vpack.c.b16 %v1896, %v1892
    %v2685 = vpack.c.b16 %v1897, %v1893
    %v2686 = vpack.c.b16 %v1898, %v1894
    %v2687 = vpack.c.b16 %v1899, %v1895
    %v2688 = vpack.c.b16 %v1904, %v1900
    %v2689 = vpack.c.b16 %v1905, %v1901
    %v2690 = vpack.c.b16 %v1906, %v1902
    %v2691 = vpack.c.b16 %v1907, %v1903
    %v2692 = vpack.c.b16 %v1912, %v1908
    %v2693 = vpack.c.b16 %v1913, %v1909
    %v2694 = vpack.c.b16 %v1914, %v1910
    %v2695 = vpack.c.b16 %v1915, %v1911
    %v2696 = vpack.c.b16 %v1920, %v1916
    %v2697 = vpack.c.b16 %v1921, %v1917
    %v2698 = vpack.c.b16 %v1922, %v1918
    %v2699 = vpack.c.b16 %v1923, %v1919
    %v2700 = vpack.c.b16 %v1928, %v1924
    %v2701 = vpack.c.b16 %v1929, %v1925
    %v2702 = vpack.c.b16 %v1930, %v1926
    %v2703 = vpack.c.b16 %v1931, %v1927
    %v2704 = vpack.c.b16 %v1936, %v1932
    %v2705 = vpack.c.b16 %v1937, %v1933
    %v2706 = vpack.c.b16 %v1938, %v1934
    %v2707 = vpack.c.b16 %v1939, %v1935
    %v2708 = vpack.c.b16 %v1944, %v1940
    %v2709 = vpack.c.b16 %v1945, %v1941
    %v2710 = vpack.c.b16 %v1946, %v1942
    %v2711 = vpack.c.b16 %v1947, %v1943
    %v2712 = vpack.c.b16 %v1952, %v1948
    %v2713 = vpack.c.b16 %v1953, %v1949
    %v2714 = vpack.c.b16 %v1954, %v1950
    %v2715 = vpack.c.b16 %v1955, %v1951
    %v2716 = vpack.c.b16 %v1960, %v1956
    %v2717 = vpack.c.b16 %v1961, %v1957
    %v2718 = vpack.c.b16 %v1962, %v1958
    %v2719 = vpack.c.b16 %v1963, %v1959
    %v2720 = vpack.c.b16 %v1968, %v1964
    %v2721 = vpack.c.b16 %v1969, %v1965
    %v2722 = vpack.c.b16 %v1970, %v1966
    %v2723 = vpack.c.b16 %v1971, %v1967
    %v2724 = vpack.c.b16 %v1976, %v1972
    %v2725 = vpack.c.b16 %v1977, %v1973
    %v2726 = vpack.c.b16 %v1978, %v1974
    %v2727 = vpack.c.b16 %v1979, %v1975
    %v2728 = vpack.c.b16 %v1984, %v1980
    %v2729 = vpack.c.b16 %v1985, %v1981
    %v2730 = vpack.c.b16 %v1986, %v1982
    %v2731 = vpack.c.b16 %v1987, %v1983
    %v2732 = vpack.c.b16 %v1992, %v1988
    %v2733 = vpack.c.b16 %v1993, %v1989
    %v2734 = vpack.c.b16 %v1994, %v1990
    %v2735 = vpack.c.b16 %v1995, %v1991
    %v2736 = vpack.c.b16 %v2000, %v1996
    %v2737 = vpack.c.b16 %v2001, %v1997
    %v2738 = vpack.c.b16 %v2002, %v1998
    %v2739 = vpack.c.b16 %v2003, %v1999
    %v2740 = vpack.c.b16 %v2008, %v2004
    %v2741 = vpack.c.b16 %v2009, %v2005
    %v2742 = vpack.c.b16 %v2010, %v2006
    %v2743 = vpack.c.b16 %v2011, %v2007
    %v2744 = vpack.c.b16 %v2016, %v2012
    %v2745 = vpack.c.b16 %v2017, %v2013
    %v2746 = vpack.c.b16 %v2018, %v2014
    %v2747 = vpack.c.b16 %v2019, %v2015
    %v2748 = vpack.c.b16 %v2024, %v2020
    %v2749 = vpack.c.b16 %v2025, %v2021
    %v2750 = vpack.c.b16 %v2026, %v2022
    %v2751 = vpack.c.b16 %v2027, %v2023
    %v2752 = vpack.c.b16 %v2032, %v2028
    %v2753 = vpack.c.b16 %v2033, %v2029
    %v2754 = vpack.c.b16 %v2034, %v2030
    %v2755 = vpack.c.b16 %v2035, %v2031
    %v2756 = vpack.c.b16 %v2040, %v2036
    %v2757 = vpack.c.b16 %v2041, %v2037
    %v2758 = vpack.c.b16 %v2042, %v2038
    %v2759 = vpack.c.b16 %v2043, %v2039
    %v2760 = vpack.c.b16 %v2048, %v2044
    %v2761 = vpack.c.b16 %v2049, %v2045
    %v2762 = vpack.c.b16 %v2050, %v2046
    %v2763 = vpack.c.b16 %v2051, %v2047
    %v2764 = vpack.c.b16 %v2056, %v2052
    %v2765 = vpack.c.b16 %v2057, %v2053
    %v2766 = vpack.c.b16 %v2058, %v2054
    %v2767 = vpack.c.b16 %v2059, %v2055
    %v2768 = vpack.c.b16 %v2064, %v2060
    %v2769 = vpack.c.b16 %v2065, %v2061
    %v2770 = vpack.c.b16 %v2066, %v2062
    %v2771 = vpack.c.b16 %v2067, %v2063
    %v2772 = vpack.c.b16 %v2072, %v2068
    %v2773 = vpack.c.b16 %v2073, %v2069
    %v2774 = vpack.c.b16 %v2074, %v2070
    %v2775 = vpack.c.b16 %v2075, %v2071
    %v2776 = vpack.c.b16 %v2080, %v2076
    %v2777 = vpack.c.b16 %v2081, %v2077
    %v2778 = vpack.c.b16 %v2082, %v2078
    %v2779 = vpack.c.b16 %v2083, %v2079
    %v2780 = vpack.c.b16 %v2088, %v2084
    %v2781 = vpack.c.b16 %v2089, %v2085
    %v2782 = vpack.c.b16 %v2090, %v2086
    %v2783 = vpack.c.b16 %v2091, %v2087
    %v2784 = vpack.c.b16 %v2096, %v2092
    %v2785 = vpack.c.b16 %v2097, %v2093
    %v2786 = vpack.c.b16 %v2098, %v2094
    %v2787 = vpack.c.b16 %v2099, %v2095
    %v2788 = vpack.c.b16 %v2104, %v2100
    %v2789 = vpack.c.b16 %v2105, %v2101
    %v2790 = vpack.c.b16 %v2106, %v2102
    %v2791 = vpack.c.b16 %v2107, %v2103
    %v2792 = vpack.c.b16 %v2112, %v2108
    %v2793 = vpack.c.b16 %v2113, %v2109
    %v2794 = vpack.c.b16 %v2114, %v2110
    %v2795 = vpack.c.b16 %v2115, %v2111
    %v2796 = vpack.c.b16 %v2120, %v2116
    %v2797 = vpack.c.b16 %v2121, %v2117
    %v2798 = vpack.c.b16 %v2122, %v2118
    %v2799 = vpack.c.b16 %v2123, %v2119
    %v2800 = vpack.c.b16 %v2128, %v2124
    %v2801 = vpack.c.b16 %v2129, %v2125
    %v2802 = vpack.c.b16 %v2130, %v2126
    %v2803 = vpack.c.b16 %v2131, %v2127
    %v2804 = vpack.c.b16 %v2136, %v2132
    %v2805 = vpack.c.b16 %v2137, %v2133
    %v2806 = vpack.c.b16 %v2138, %v2134
    %v2807 = vpack.c.b16 %v2139, %v2135
    %v2808 = vpack.c.b16 %v2144, %v2140
    %v2809 = vpack.c.b16 %v2145, %v2141
    %v2810 = vpack.c.b16 %v2146, %v2142
    %v2811 = vpack.c.b16 %v2147, %v2143
    %v2812 = vpack.c.b16 %v2152, %v2148
    %v2813 = vpack.c.b16 %v2153, %v2149
    %v2814 = vpack.c.b16 %v2154, %v2150
    %v2815 = vpack.c.b16 %v2155, %v2151
    %v2816 = vpack.c.b16 %v2160, %v2156
    %v2817 = vpack.c.b16 %v2161, %v2157
    %v2818 = vpack.c.b16 %v2162, %v2158
    %v2819 = vpack.c.b16 %v2163, %v2159
    %v2820 = vpack.c.b16 %v2168, %v2164
    %v2821 = vpack.c.b16 %v2169, %v2165
    %v2822 = vpack.c.b16 %v2170, %v2166
    %v2823 = vpack.c.b16 %v2171, %v2167
    %v2824 = vpack.c.b16 %v2176, %v2172
    %v2825 = vpack.c.b16 %v2177, %v2173
    %v2826 = vpack.c.b16 %v2178, %v2174
    %v2827 = vpack.c.b16 %v2179, %v2175
    %v2828 = vpack.c.b16 %v2184, %v2180
    %v2829 = vpack.c.b16 %v2185, %v2181
    %v2830 = vpack.c.b16 %v2186, %v2182
    %v2831 = vpack.c.b16 %v2187, %v2183
    %v2832 = vpack.c.b16 %v2192, %v2188
    %v2833 = vpack.c.b16 %v2193, %v2189
    %v2834 = vpack.c.b16 %v2194, %v2190
    %v2835 = vpack.c.b16 %v2195, %v2191
    %v2836 = vpack.c.b16 %v2200, %v2196
    %v2837 = vpack.c.b16 %v2201, %v2197
    %v2838 = vpack.c.b16 %v2202, %v2198
    %v2839 = vpack.c.b16 %v2203, %v2199
    %v2840 = vpack.c.b16 %v2208, %v2204
    %v2841 = vpack.c.b16 %v2209, %v2205
    %v2842 = vpack.c.b16 %v2210, %v2206
    %v2843 = vpack.c.b16 %v2211, %v2207
    %v2844 = vpack.c.b16 %v2216, %v2212
    %v2845 = vpack.c.b16 %v2217, %v2213
    %v2846 = vpack.c.b16 %v2218, %v2214
    %v2847 = vpack.c.b16 %v2219, %v2215
    %v2848 = vpack.c.b16 %v2224, %v2220
    %v2849 = vpack.c.b16 %v2225, %v2221
    %v2850 = vpack.c.b16 %v2226, %v2222
    %v2851 = vpack.c.b16 %v2227, %v2223
    %v2852 = vpack.c.b16 %v2232, %v2228
    %v2853 = vpack.c.b16 %v2233, %v2229
    %v2854 = vpack.c.b16 %v2234, %v2230
    %v2855 = vpack.c.b16 %v2235, %v2231
    %v2856 = vpack.c.b16 %v2240, %v2236
    %v2857 = vpack.c.b16 %v2241, %v2237
    %v2858 = vpack.c.b16 %v2242, %v2238
    %v2859 = vpack.c.b16 %v2243, %v2239
    %v2860 = vpack.c.b16 %v2248, %v2244
    %v2861 = vpack.c.b16 %v2249, %v2245
    %v2862 = vpack.c.b16 %v2250, %v2246
    %v2863 = vpack.c.b16 %v2251, %v2247
    %v2864 = vpack.c.b16 %v2256, %v2252
    %v2865 = vpack.c.b16 %v2257, %v2253
    %v2866 = vpack.c.b16 %v2258, %v2254
    %v2867 = vpack.c.b16 %v2259, %v2255
    %v2868 = vpack.c.b16 %v2264, %v2260
    %v2869 = vpack.c.b16 %v2265, %v2261
    %v2870 = vpack.c.b16 %v2266, %v2262
    %v2871 = vpack.c.b16 %v2267, %v2263
    %v2872 = vpack.c.b16 %v2272, %v2268
    %v2873 = vpack.c.b16 %v2273, %v2269
    %v2874 = vpack.c.b16 %v2274, %v2270
    %v2875 = vpack.c.b16 %v2275, %v2271
    %v2876 = vpack.c.b16 %v2280, %v2276
    %v2877 = vpack.c.b16 %v2281, %v2277
    %v2878 = vpack.c.b16 %v2282, %v2278
    %v2879 = vpack.c.b16 %v2283, %v2279
    %v2880 = vpack.c.b16 %v2288, %v2284
    %v2881 = vpack.c.b16 %v2289, %v2285
    %v2882 = vpack.c.b16 %v2290, %v2286
    %v2883 = vpack.c.b16 %v2291, %v2287
    %v2884 = vpack.c.b16 %v2296, %v2292
    %v2885 = vpack.c.b16 %v2297, %v2293
    %v2886 = vpack.c.b16 %v2298, %v2294
    %v2887 = vpack.c.b16 %v2299, %v2295
    %v2888 = vpack.c.b16 %v2304, %v2300
    %v2889 = vpack.c.b16 %v2305, %v2301
    %v2890 = vpack.c.b16 %v2306, %v2302
    %v2891 = vpack.c.b16 %v2307, %v2303
    %v2892 = vpack.c.b16 %v2312, %v2308
    %v2893 = vpack.c.b16 %v2313, %v2309
    %v2894 = vpack.c.b16 %v2314, %v2310
    %v2895 = vpack.c.b16 %v2315, %v2311
    %v2896 = vpack.c.b16 %v2320, %v2316
    %v2897 = vpack.c.b16 %v2321, %v2317
    %v2898 = vpack.c.b16 %v2322, %v2318
    %v2899 = vpack.c.b16 %v2323, %v2319
    %v2900 = vpack.c.b16 %v2328, %v2324
    %v2901 = vpack.c.b16 %v2329, %v2325
    %v2902 = vpack.c.b16 %v2330, %v2326
    %v2903 = vpack.c.b16 %v2331, %v2327
    %v2904 = vpack.c.b16 %v2336, %v2332
    %v2905 = vpack.c.b16 %v2337, %v2333
    %v2906 = vpack.c.b16 %v2338, %v2334
    %v2907 = vpack.c.b16 %v2339, %v2335
    %v2908 = vpack.c.b16 %v2344, %v2340
    %v2909 = vpack.c.b16 %v2345, %v2341
    %v2910 = vpack.c.b16 %v2346, %v2342
    %v2911 = vpack.c.b16 %v2347, %v2343
    %v2912 = vpack.c.b16 %v2352, %v2348
    %v2913 = vpack.c.b16 %v2353, %v2349
    %v2914 = vpack.c.b16 %v2354, %v2350
    %v2915 = vpack.c.b16 %v2355, %v2351
    %v2916 = vpack.c.b16 %v2360, %v2356
    %v2917 = vpack.c.b16 %v2361, %v2357
    %v2918 = vpack.c.b16 %v2362, %v2358
    %v2919 = vpack.c.b16 %v2363, %v2359
    %v2920 = vpack.c.b16 %v2368, %v2364
    %v2921 = vpack.c.b16 %v2369, %v2365
    %v2922 = vpack.c.b16 %v2370, %v2366
    %v2923 = vpack.c.b16 %v2371, %v2367
    %v2924 = vpack.c.b16 %v2376, %v2372
    %v2925 = vpack.c.b16 %v2377, %v2373
    %v2926 = vpack.c.b16 %v2378, %v2374
    %v2927 = vpack.c.b16 %v2379, %v2375
    %v2928 = vpack.c.b16 %v2384, %v2380
    %v2929 = vpack.c.b16 %v2385, %v2381
    %v2930 = vpack.c.b16 %v2386, %v2382
    %v2931 = vpack.c.b16 %v2387, %v2383
    %3476 = vmatpush.bf16.msra.mxu0 %v2416
    %3477 = vmatpush.bf16.msra.mxu0 %v2412
    %3478 = vmatpush.bf16.msra.mxu0 %v2408
    %3479 = vmatpush.bf16.msra.mxu0 %v2404
    %3480 = vmatpush.bf16.msra.mxu0 %v2400
    %3481 = vmatpush.bf16.msra.mxu0 %v2396
    %3482 = vmatpush.bf16.msra.mxu0 %v2392
    %3483 = vmatpush.bf16.msra.mxu0 %v2388
    %3484 = vmatmul.bf16.gmra.mxu0 %v722
    %v3485 = vpop.f32.mrf.mxu0
    %v3486 = vadd.f32 0.0, %v3485
    %v3487 = vpop.f32.mrf.mxu0
    %3488 = vdwg.mxu0
    %3489 = vmatpush.bf16.msra.mxu0 %v2448
    %3490 = vmatpush.bf16.msra.mxu0 %v2444
    %3491 = vmatpush.bf16.msra.mxu0 %v2440
    %3492 = vmatpush.bf16.msra.mxu0 %v2436
    %3493 = vmatpush.bf16.msra.mxu0 %v2432
    %3494 = vmatpush.bf16.msra.mxu0 %v2428
    %3495 = vmatpush.bf16.msra.mxu0 %v2424
    %3496 = vmatpush.bf16.msra.mxu0 %v2420
    %3497 = vmatmul.bf16.gmra.mxu0 %v723
    %v3498 = vpop.f32.mrf.mxu0
    %v3499 = vadd.f32 %v3486, %v3498
    %v3500 = vpop.f32.mrf.mxu0
    %3501 = vdwg.mxu0
    %3502 = vmatpush.bf16.msra.mxu0 %v2480
    %3503 = vmatpush.bf16.msra.mxu0 %v2476
    %3504 = vmatpush.bf16.msra.mxu0 %v2472
    %3505 = vmatpush.bf16.msra.mxu0 %v2468
    %3506 = vmatpush.bf16.msra.mxu0 %v2464
    %3507 = vmatpush.bf16.msra.mxu0 %v2460
    %3508 = vmatpush.bf16.msra.mxu0 %v2456
    %3509 = vmatpush.bf16.msra.mxu0 %v2452
    %3510 = vmatmul.bf16.gmra.mxu0 %v724
    %v3511 = vpop.f32.mrf.mxu0
    %v3512 = vadd.f32 %v3499, %v3511
    %v3513 = vpop.f32.mrf.mxu0
    %3514 = vdwg.mxu0
    %3515 = vmatpush.bf16.msra.mxu0 %v2512
    %3516 = vmatpush.bf16.msra.mxu0 %v2508
    %3517 = vmatpush.bf16.msra.mxu0 %v2504
    %3518 = vmatpush.bf16.msra.mxu0 %v2500
    %3519 = vmatpush.bf16.msra.mxu0 %v2496
    %3520 = vmatpush.bf16.msra.mxu0 %v2492
    %3521 = vmatpush.bf16.msra.mxu0 %v2488
    %3522 = vmatpush.bf16.msra.mxu0 %v2484
    %3523 = vmatmul.bf16.gmra.mxu0 %v725
    %v3524 = vpop.f32.mrf.mxu0
    %v3525 = vadd.f32 %v3512, %v3524
    %v3526 = vpop.f32.mrf.mxu0
    %3527 = vdwg.mxu0
    %3528 = vmatpush.bf16.msra.mxu0 %v2544
    %3529 = vmatpush.bf16.msra.mxu0 %v2540
    %3530 = vmatpush.bf16.msra.mxu0 %v2536
    %3531 = vmatpush.bf16.msra.mxu0 %v2532
    %3532 = vmatpush.bf16.msra.mxu0 %v2528
    %3533 = vmatpush.bf16.msra.mxu0 %v2524
    %3534 = vmatpush.bf16.msra.mxu0 %v2520
    %3535 = vmatpush.bf16.msra.mxu0 %v2516
    %3536 = vmatmul.bf16.gmra.mxu0 %v726
    %v3537 = vpop.f32.mrf.mxu0
    %v3538 = vadd.f32 %v3525, %v3537
    %v3539 = vpop.f32.mrf.mxu0
    %3540 = vdwg.mxu0
    %3541 = vmatpush.bf16.msra.mxu0 %v2576
    %3542 = vmatpush.bf16.msra.mxu0 %v2572
    %3543 = vmatpush.bf16.msra.mxu0 %v2568
    %3544 = vmatpush.bf16.msra.mxu0 %v2564
    %3545 = vmatpush.bf16.msra.mxu0 %v2560
    %3546 = vmatpush.bf16.msra.mxu0 %v2556
    %3547 = vmatpush.bf16.msra.mxu0 %v2552
    %3548 = vmatpush.bf16.msra.mxu0 %v2548
    %3549 = vmatmul.bf16.gmra.mxu0 %v727
    %v3550 = vpop.f32.mrf.mxu0
    %v3551 = vadd.f32 %v3538, %v3550
    %v3552 = vpop.f32.mrf.mxu0
    %3553 = vdwg.mxu0
    %3554 = vmatpush.bf16.msra.mxu0 %v2608
    %3555 = vmatpush.bf16.msra.mxu0 %v2604
    %3556 = vmatpush.bf16.msra.mxu0 %v2600
    %3557 = vmatpush.bf16.msra.mxu0 %v2596
    %3558 = vmatpush.bf16.msra.mxu0 %v2592
    %3559 = vmatpush.bf16.msra.mxu0 %v2588
    %3560 = vmatpush.bf16.msra.mxu0 %v2584
    %3561 = vmatpush.bf16.msra.mxu0 %v2580
    %3562 = vmatmul.bf16.gmra.mxu0 %v728
    %v3563 = vpop.f32.mrf.mxu0
    %v3564 = vadd.f32 %v3551, %v3563
    %v3565 = vpop.f32.mrf.mxu0
    %3566 = vdwg.mxu0
    %3567 = vmatpush.bf16.msra.mxu0 %v2640
    %3568 = vmatpush.bf16.msra.mxu0 %v2636
    %3569 = vmatpush.bf16.msra.mxu0 %v2632
    %3570 = vmatpush.bf16.msra.mxu0 %v2628
    %3571 = vmatpush.bf16.msra.mxu0 %v2624
    %3572 = vmatpush.bf16.msra.mxu0 %v2620
    %3573 = vmatpush.bf16.msra.mxu0 %v2616
    %3574 = vmatpush.bf16.msra.mxu0 %v2612
    %3575 = vmatmul.bf16.gmra.mxu0 %v729
    %v3576 = vpop.f32.mrf.mxu0
    %v3577 = vadd.f32 %v3564, %v3576
    %v3578 = vpop.f32.mrf.mxu0
    %3579 = vdwg.mxu0
    %3580 = vmatpush.bf16.msra.mxu0 %v2672
    %3581 = vmatpush.bf16.msra.mxu0 %v2668
    %3582 = vmatpush.bf16.msra.mxu0 %v2664
    %3583 = vmatpush.bf16.msra.mxu0 %v2660
    %3584 = vmatpush.bf16.msra.mxu0 %v2656
    %3585 = vmatpush.bf16.msra.mxu0 %v2652
    %3586 = vmatpush.bf16.msra.mxu0 %v2648
    %3587 = vmatpush.bf16.msra.mxu0 %v2644
    %3588 = vmatmul.bf16.gmra.mxu0 %v730
    %v3589 = vpop.f32.mrf.mxu0
    %v3590 = vadd.f32 %v3577, %v3589
    %v3591 = vpop.f32.mrf.mxu0
    %3592 = vdwg.mxu0
    %3593 = vmatpush.bf16.msra.mxu0 %v2704
    %3594 = vmatpush.bf16.msra.mxu0 %v2700
    %3595 = vmatpush.bf16.msra.mxu0 %v2696
    %3596 = vmatpush.bf16.msra.mxu0 %v2692
    %3597 = vmatpush.bf16.msra.mxu0 %v2688
    %3598 = vmatpush.bf16.msra.mxu0 %v2684
    %3599 = vmatpush.bf16.msra.mxu0 %v2680
    %3600 = vmatpush.bf16.msra.mxu0 %v2676
    %3601 = vmatmul.bf16.gmra.mxu0 %v731
    %v3602 = vpop.f32.mrf.mxu0
    %v3603 = vadd.f32 %v3590, %v3602
    %v3604 = vpop.f32.mrf.mxu0
    %3605 = vdwg.mxu0
    %3606 = vmatpush.bf16.msra.mxu0 %v2736
    %3607 = vmatpush.bf16.msra.mxu0 %v2732
    %3608 = vmatpush.bf16.msra.mxu0 %v2728
    %3609 = vmatpush.bf16.msra.mxu0 %v2724
    %3610 = vmatpush.bf16.msra.mxu0 %v2720
    %3611 = vmatpush.bf16.msra.mxu0 %v2716
    %3612 = vmatpush.bf16.msra.mxu0 %v2712
    %3613 = vmatpush.bf16.msra.mxu0 %v2708
    %3614 = vmatmul.bf16.gmra.mxu0 %v732
    %v3615 = vpop.f32.mrf.mxu0
    %v3616 = vadd.f32 %v3603, %v3615
    %v3617 = vpop.f32.mrf.mxu0
    %3618 = vdwg.mxu0
    %3619 = vmatpush.bf16.msra.mxu0 %v2768
    %3620 = vmatpush.bf16.msra.mxu0 %v2764
    %3621 = vmatpush.bf16.msra.mxu0 %v2760
    %3622 = vmatpush.bf16.msra.mxu0 %v2756
    %3623 = vmatpush.bf16.msra.mxu0 %v2752
    %3624 = vmatpush.bf16.msra.mxu0 %v2748
    %3625 = vmatpush.bf16.msra.mxu0 %v2744
    %3626 = vmatpush.bf16.msra.mxu0 %v2740
    %3627 = vmatmul.bf16.gmra.mxu0 %v733
    %v3628 = vpop.f32.mrf.mxu0
    %v3629 = vadd.f32 %v3616, %v3628
    %v3630 = vpop.f32.mrf.mxu0
    %3631 = vdwg.mxu0
    %3632 = vmatpush.bf16.msra.mxu0 %v2800
    %3633 = vmatpush.bf16.msra.mxu0 %v2796
    %3634 = vmatpush.bf16.msra.mxu0 %v2792
    %3635 = vmatpush.bf16.msra.mxu0 %v2788
    %3636 = vmatpush.bf16.msra.mxu0 %v2784
    %3637 = vmatpush.bf16.msra.mxu0 %v2780
    %3638 = vmatpush.bf16.msra.mxu0 %v2776
    %3639 = vmatpush.bf16.msra.mxu0 %v2772
    %3640 = vmatmul.bf16.gmra.mxu0 %v734
    %v3641 = vpop.f32.mrf.mxu0
    %v3642 = vadd.f32 %v3629, %v3641
    %v3643 = vpop.f32.mrf.mxu0
    %3644 = vdwg.mxu0
    %3645 = vmatpush.bf16.msra.mxu0 %v2832
    %3646 = vmatpush.bf16.msra.mxu0 %v2828
    %3647 = vmatpush.bf16.msra.mxu0 %v2824
    %3648 = vmatpush.bf16.msra.mxu0 %v2820
    %3649 = vmatpush.bf16.msra.mxu0 %v2816
    %3650 = vmatpush.bf16.msra.mxu0 %v2812
    %3651 = vmatpush.bf16.msra.mxu0 %v2808
    %3652 = vmatpush.bf16.msra.mxu0 %v2804
    %3653 = vmatmul.bf16.gmra.mxu0 %v735
    %v3654 = vpop.f32.mrf.mxu0
    %v3655 = vadd.f32 %v3642, %v3654
    %v3656 = vpop.f32.mrf.mxu0
    %3657 = vdwg.mxu0
    %3658 = vmatpush.bf16.msra.mxu0 %v2864
    %3659 = vmatpush.bf16.msra.mxu0 %v2860
    %3660 = vmatpush.bf16.msra.mxu0 %v2856
    %3661 = vmatpush.bf16.msra.mxu0 %v2852
    %3662 = vmatpush.bf16.msra.mxu0 %v2848
    %3663 = vmatpush.bf16.msra.mxu0 %v2844
    %3664 = vmatpush.bf16.msra.mxu0 %v2840
    %3665 = vmatpush.bf16.msra.mxu0 %v2836
    %3666 = vmatmul.bf16.gmra.mxu0 %v736
    %v3667 = vpop.f32.mrf.mxu0
    %v3668 = vadd.f32 %v3655, %v3667
    %v3669 = vpop.f32.mrf.mxu0
    %3670 = vdwg.mxu0
    %3671 = vmatpush.bf16.msra.mxu0 %v2896
    %3672 = vmatpush.bf16.msra.mxu0 %v2892
    %3673 = vmatpush.bf16.msra.mxu0 %v2888
    %3674 = vmatpush.bf16.msra.mxu0 %v2884
    %3675 = vmatpush.bf16.msra.mxu0 %v2880
    %3676 = vmatpush.bf16.msra.mxu0 %v2876
    %3677 = vmatpush.bf16.msra.mxu0 %v2872
    %3678 = vmatpush.bf16.msra.mxu0 %v2868
    %3679 = vmatmul.bf16.gmra.mxu0 %v737
    %v3680 = vpop.f32.mrf.mxu0
    %v3681 = vadd.f32 %v3668, %v3680
    %v3682 = vpop.f32.mrf.mxu0
    %3683 = vdwg.mxu0
    %3684 = vmatpush.bf16.msra.mxu0 %v2928
    %3685 = vmatpush.bf16.msra.mxu0 %v2924
    %3686 = vmatpush.bf16.msra.mxu0 %v2920
    %3687 = vmatpush.bf16.msra.mxu0 %v2916
    %3688 = vmatpush.bf16.msra.mxu0 %v2912
    %3689 = vmatpush.bf16.msra.mxu0 %v2908
    %3690 = vmatpush.bf16.msra.mxu0 %v2904
    %3691 = vmatpush.bf16.msra.mxu0 %v2900
    %3692 = vmatmul.bf16.gmra.mxu0 %v738
    %v3693 = vpop.f32.mrf.mxu0
    %v3694 = vadd.f32 %v3681, %v3693
    %v3695 = vpop.f32.mrf.mxu0
    %3696 = vdwg.mxu0
    %3697 = vmatpush.bf16.msra.mxu0 %v2417
    %3698 = vmatpush.bf16.msra.mxu0 %v2413
    %3699 = vmatpush.bf16.msra.mxu0 %v2409
    %3700 = vmatpush.bf16.msra.mxu0 %v2405
    %3701 = vmatpush.bf16.msra.mxu0 %v2401
    %3702 = vmatpush.bf16.msra.mxu0 %v2397
    %3703 = vmatpush.bf16.msra.mxu0 %v2393
    %3704 = vmatpush.bf16.msra.mxu0 %v2389
    %3705 = vmatmul.bf16.gmra.mxu0 %v722
    %v3706 = vpop.f32.mrf.mxu0
    %v3707 = vadd.f32 0.0, %v3706
    %v3708 = vpop.f32.mrf.mxu0
    %3709 = vdwg.mxu0
    %3710 = vmatpush.bf16.msra.mxu0 %v2449
    %3711 = vmatpush.bf16.msra.mxu0 %v2445
    %3712 = vmatpush.bf16.msra.mxu0 %v2441
    %3713 = vmatpush.bf16.msra.mxu0 %v2437
    %3714 = vmatpush.bf16.msra.mxu0 %v2433
    %3715 = vmatpush.bf16.msra.mxu0 %v2429
    %3716 = vmatpush.bf16.msra.mxu0 %v2425
    %3717 = vmatpush.bf16.msra.mxu0 %v2421
    %3718 = vmatmul.bf16.gmra.mxu0 %v723
    %v3719 = vpop.f32.mrf.mxu0
    %v3720 = vadd.f32 %v3707, %v3719
    %v3721 = vpop.f32.mrf.mxu0
    %3722 = vdwg.mxu0
    %3723 = vmatpush.bf16.msra.mxu0 %v2481
    %3724 = vmatpush.bf16.msra.mxu0 %v2477
    %3725 = vmatpush.bf16.msra.mxu0 %v2473
    %3726 = vmatpush.bf16.msra.mxu0 %v2469
    %3727 = vmatpush.bf16.msra.mxu0 %v2465
    %3728 = vmatpush.bf16.msra.mxu0 %v2461
    %3729 = vmatpush.bf16.msra.mxu0 %v2457
    %3730 = vmatpush.bf16.msra.mxu0 %v2453
    %3731 = vmatmul.bf16.gmra.mxu0 %v724
    %v3732 = vpop.f32.mrf.mxu0
    %v3733 = vadd.f32 %v3720, %v3732
    %v3734 = vpop.f32.mrf.mxu0
    %3735 = vdwg.mxu0
    %3736 = vmatpush.bf16.msra.mxu0 %v2513
    %3737 = vmatpush.bf16.msra.mxu0 %v2509
    %3738 = vmatpush.bf16.msra.mxu0 %v2505
    %3739 = vmatpush.bf16.msra.mxu0 %v2501
    %3740 = vmatpush.bf16.msra.mxu0 %v2497
    %3741 = vmatpush.bf16.msra.mxu0 %v2493
    %3742 = vmatpush.bf16.msra.mxu0 %v2489
    %3743 = vmatpush.bf16.msra.mxu0 %v2485
    %3744 = vmatmul.bf16.gmra.mxu0 %v725
    %v3745 = vpop.f32.mrf.mxu0
    %v3746 = vadd.f32 %v3733, %v3745
    %v3747 = vpop.f32.mrf.mxu0
    %3748 = vdwg.mxu0
    %3749 = vmatpush.bf16.msra.mxu0 %v2545
    %3750 = vmatpush.bf16.msra.mxu0 %v2541
    %3751 = vmatpush.bf16.msra.mxu0 %v2537
    %3752 = vmatpush.bf16.msra.mxu0 %v2533
    %3753 = vmatpush.bf16.msra.mxu0 %v2529
    %3754 = vmatpush.bf16.msra.mxu0 %v2525
    %3755 = vmatpush.bf16.msra.mxu0 %v2521
    %3756 = vmatpush.bf16.msra.mxu0 %v2517
    %3757 = vmatmul.bf16.gmra.mxu0 %v726
    %v3758 = vpop.f32.mrf.mxu0
    %v3759 = vadd.f32 %v3746, %v3758
    %v3760 = vpop.f32.mrf.mxu0
    %3761 = vdwg.mxu0
    %3762 = vmatpush.bf16.msra.mxu0 %v2577
    %3763 = vmatpush.bf16.msra.mxu0 %v2573
    %3764 = vmatpush.bf16.msra.mxu0 %v2569
    %3765 = vmatpush.bf16.msra.mxu0 %v2565
    %3766 = vmatpush.bf16.msra.mxu0 %v2561
    %3767 = vmatpush.bf16.msra.mxu0 %v2557
    %3768 = vmatpush.bf16.msra.mxu0 %v2553
    %3769 = vmatpush.bf16.msra.mxu0 %v2549
    %3770 = vmatmul.bf16.gmra.mxu0 %v727
    %v3771 = vpop.f32.mrf.mxu0
    %v3772 = vadd.f32 %v3759, %v3771
    %v3773 = vpop.f32.mrf.mxu0
    %3774 = vdwg.mxu0
    %3775 = vmatpush.bf16.msra.mxu0 %v2609
    %3776 = vmatpush.bf16.msra.mxu0 %v2605
    %3777 = vmatpush.bf16.msra.mxu0 %v2601
    %3778 = vmatpush.bf16.msra.mxu0 %v2597
    %3779 = vmatpush.bf16.msra.mxu0 %v2593
    %3780 = vmatpush.bf16.msra.mxu0 %v2589
    %3781 = vmatpush.bf16.msra.mxu0 %v2585
    %3782 = vmatpush.bf16.msra.mxu0 %v2581
    %3783 = vmatmul.bf16.gmra.mxu0 %v728
    %v3784 = vpop.f32.mrf.mxu0
    %v3785 = vadd.f32 %v3772, %v3784
    %v3786 = vpop.f32.mrf.mxu0
    %3787 = vdwg.mxu0
    %3788 = vmatpush.bf16.msra.mxu0 %v2641
    %3789 = vmatpush.bf16.msra.mxu0 %v2637
    %3790 = vmatpush.bf16.msra.mxu0 %v2633
    %3791 = vmatpush.bf16.msra.mxu0 %v2629
    %3792 = vmatpush.bf16.msra.mxu0 %v2625
    %3793 = vmatpush.bf16.msra.mxu0 %v2621
    %3794 = vmatpush.bf16.msra.mxu0 %v2617
    %3795 = vmatpush.bf16.msra.mxu0 %v2613
    %3796 = vmatmul.bf16.gmra.mxu0 %v729
    %v3797 = vpop.f32.mrf.mxu0
    %v3798 = vadd.f32 %v3785, %v3797
    %v3799 = vpop.f32.mrf.mxu0
    %3800 = vdwg.mxu0
    %3801 = vmatpush.bf16.msra.mxu0 %v2673
    %3802 = vmatpush.bf16.msra.mxu0 %v2669
    %3803 = vmatpush.bf16.msra.mxu0 %v2665
    %3804 = vmatpush.bf16.msra.mxu0 %v2661
    %3805 = vmatpush.bf16.msra.mxu0 %v2657
    %3806 = vmatpush.bf16.msra.mxu0 %v2653
    %3807 = vmatpush.bf16.msra.mxu0 %v2649
    %3808 = vmatpush.bf16.msra.mxu0 %v2645
    %3809 = vmatmul.bf16.gmra.mxu0 %v730
    %v3810 = vpop.f32.mrf.mxu0
    %v3811 = vadd.f32 %v3798, %v3810
    %v3812 = vpop.f32.mrf.mxu0
    %3813 = vdwg.mxu0
    %3814 = vmatpush.bf16.msra.mxu0 %v2705
    %3815 = vmatpush.bf16.msra.mxu0 %v2701
    %3816 = vmatpush.bf16.msra.mxu0 %v2697
    %3817 = vmatpush.bf16.msra.mxu0 %v2693
    %3818 = vmatpush.bf16.msra.mxu0 %v2689
    %3819 = vmatpush.bf16.msra.mxu0 %v2685
    %3820 = vmatpush.bf16.msra.mxu0 %v2681
    %3821 = vmatpush.bf16.msra.mxu0 %v2677
    %3822 = vmatmul.bf16.gmra.mxu0 %v731
    %v3823 = vpop.f32.mrf.mxu0
    %v3824 = vadd.f32 %v3811, %v3823
    %v3825 = vpop.f32.mrf.mxu0
    %3826 = vdwg.mxu0
    %3827 = vmatpush.bf16.msra.mxu0 %v2737
    %3828 = vmatpush.bf16.msra.mxu0 %v2733
    %3829 = vmatpush.bf16.msra.mxu0 %v2729
    %3830 = vmatpush.bf16.msra.mxu0 %v2725
    %3831 = vmatpush.bf16.msra.mxu0 %v2721
    %3832 = vmatpush.bf16.msra.mxu0 %v2717
    %3833 = vmatpush.bf16.msra.mxu0 %v2713
    %3834 = vmatpush.bf16.msra.mxu0 %v2709
    %3835 = vmatmul.bf16.gmra.mxu0 %v732
    %v3836 = vpop.f32.mrf.mxu0
    %v3837 = vadd.f32 %v3824, %v3836
    %v3838 = vpop.f32.mrf.mxu0
    %3839 = vdwg.mxu0
    %3840 = vmatpush.bf16.msra.mxu0 %v2769
    %3841 = vmatpush.bf16.msra.mxu0 %v2765
    %3842 = vmatpush.bf16.msra.mxu0 %v2761
    %3843 = vmatpush.bf16.msra.mxu0 %v2757
    %3844 = vmatpush.bf16.msra.mxu0 %v2753
    %3845 = vmatpush.bf16.msra.mxu0 %v2749
    %3846 = vmatpush.bf16.msra.mxu0 %v2745
    %3847 = vmatpush.bf16.msra.mxu0 %v2741
    %3848 = vmatmul.bf16.gmra.mxu0 %v733
    %v3849 = vpop.f32.mrf.mxu0
    %v3850 = vadd.f32 %v3837, %v3849
    %v3851 = vpop.f32.mrf.mxu0
    %3852 = vdwg.mxu0
    %3853 = vmatpush.bf16.msra.mxu0 %v2801
    %3854 = vmatpush.bf16.msra.mxu0 %v2797
    %3855 = vmatpush.bf16.msra.mxu0 %v2793
    %3856 = vmatpush.bf16.msra.mxu0 %v2789
    %3857 = vmatpush.bf16.msra.mxu0 %v2785
    %3858 = vmatpush.bf16.msra.mxu0 %v2781
    %3859 = vmatpush.bf16.msra.mxu0 %v2777
    %3860 = vmatpush.bf16.msra.mxu0 %v2773
    %3861 = vmatmul.bf16.gmra.mxu0 %v734
    %v3862 = vpop.f32.mrf.mxu0
    %v3863 = vadd.f32 %v3850, %v3862
    %v3864 = vpop.f32.mrf.mxu0
    %3865 = vdwg.mxu0
    %3866 = vmatpush.bf16.msra.mxu0 %v2833
    %3867 = vmatpush.bf16.msra.mxu0 %v2829
    %3868 = vmatpush.bf16.msra.mxu0 %v2825
    %3869 = vmatpush.bf16.msra.mxu0 %v2821
    %3870 = vmatpush.bf16.msra.mxu0 %v2817
    %3871 = vmatpush.bf16.msra.mxu0 %v2813
    %3872 = vmatpush.bf16.msra.mxu0 %v2809
    %3873 = vmatpush.bf16.msra.mxu0 %v2805
    %3874 = vmatmul.bf16.gmra.mxu0 %v735
    %v3875 = vpop.f32.mrf.mxu0
    %v3876 = vadd.f32 %v3863, %v3875
    %v3877 = vpop.f32.mrf.mxu0
    %3878 = vdwg.mxu0
    %3879 = vmatpush.bf16.msra.mxu0 %v2865
    %3880 = vmatpush.bf16.msra.mxu0 %v2861
    %3881 = vmatpush.bf16.msra.mxu0 %v2857
    %3882 = vmatpush.bf16.msra.mxu0 %v2853
    %3883 = vmatpush.bf16.msra.mxu0 %v2849
    %3884 = vmatpush.bf16.msra.mxu0 %v2845
    %3885 = vmatpush.bf16.msra.mxu0 %v2841
    %3886 = vmatpush.bf16.msra.mxu0 %v2837
    %3887 = vmatmul.bf16.gmra.mxu0 %v736
    %v3888 = vpop.f32.mrf.mxu0
    %v3889 = vadd.f32 %v3876, %v3888
    %v3890 = vpop.f32.mrf.mxu0
    %3891 = vdwg.mxu0
    %3892 = vmatpush.bf16.msra.mxu0 %v2897
    %3893 = vmatpush.bf16.msra.mxu0 %v2893
    %3894 = vmatpush.bf16.msra.mxu0 %v2889
    %3895 = vmatpush.bf16.msra.mxu0 %v2885
    %3896 = vmatpush.bf16.msra.mxu0 %v2881
    %3897 = vmatpush.bf16.msra.mxu0 %v2877
    %3898 = vmatpush.bf16.msra.mxu0 %v2873
    %3899 = vmatpush.bf16.msra.mxu0 %v2869
    %3900 = vmatmul.bf16.gmra.mxu0 %v737
    %v3901 = vpop.f32.mrf.mxu0
    %v3902 = vadd.f32 %v3889, %v3901
    %v3903 = vpop.f32.mrf.mxu0
    %3904 = vdwg.mxu0
    %3905 = vmatpush.bf16.msra.mxu0 %v2929
    %3906 = vmatpush.bf16.msra.mxu0 %v2925
    %3907 = vmatpush.bf16.msra.mxu0 %v2921
    %3908 = vmatpush.bf16.msra.mxu0 %v2917
    %3909 = vmatpush.bf16.msra.mxu0 %v2913
    %3910 = vmatpush.bf16.msra.mxu0 %v2909
    %3911 = vmatpush.bf16.msra.mxu0 %v2905
    %3912 = vmatpush.bf16.msra.mxu0 %v2901
    %3913 = vmatmul.bf16.gmra.mxu0 %v738
    %v3914 = vpop.f32.mrf.mxu0
    %v3915 = vadd.f32 %v3902, %v3914
    %v3916 = vpop.f32.mrf.mxu0
    %3917 = vdwg.mxu0
    %3918 = vmatpush.bf16.msra.mxu0 %v2418
    %3919 = vmatpush.bf16.msra.mxu0 %v2414
    %3920 = vmatpush.bf16.msra.mxu0 %v2410
    %3921 = vmatpush.bf16.msra.mxu0 %v2406
    %3922 = vmatpush.bf16.msra.mxu0 %v2402
    %3923 = vmatpush.bf16.msra.mxu0 %v2398
    %3924 = vmatpush.bf16.msra.mxu0 %v2394
    %3925 = vmatpush.bf16.msra.mxu0 %v2390
    %3926 = vmatmul.bf16.gmra.mxu0 %v722
    %v3927 = vpop.f32.mrf.mxu0
    %v3928 = vadd.f32 0.0, %v3927
    %v3929 = vpop.f32.mrf.mxu0
    %3930 = vdwg.mxu0
    %3931 = vmatpush.bf16.msra.mxu0 %v2450
    %3932 = vmatpush.bf16.msra.mxu0 %v2446
    %3933 = vmatpush.bf16.msra.mxu0 %v2442
    %3934 = vmatpush.bf16.msra.mxu0 %v2438
    %3935 = vmatpush.bf16.msra.mxu0 %v2434
    %3936 = vmatpush.bf16.msra.mxu0 %v2430
    %3937 = vmatpush.bf16.msra.mxu0 %v2426
    %3938 = vmatpush.bf16.msra.mxu0 %v2422
    %3939 = vmatmul.bf16.gmra.mxu0 %v723
    %v3940 = vpop.f32.mrf.mxu0
    %v3941 = vadd.f32 %v3928, %v3940
    %v3942 = vpop.f32.mrf.mxu0
    %3943 = vdwg.mxu0
    %3944 = vmatpush.bf16.msra.mxu0 %v2482
    %3945 = vmatpush.bf16.msra.mxu0 %v2478
    %3946 = vmatpush.bf16.msra.mxu0 %v2474
    %3947 = vmatpush.bf16.msra.mxu0 %v2470
    %3948 = vmatpush.bf16.msra.mxu0 %v2466
    %3949 = vmatpush.bf16.msra.mxu0 %v2462
    %3950 = vmatpush.bf16.msra.mxu0 %v2458
    %3951 = vmatpush.bf16.msra.mxu0 %v2454
    %3952 = vmatmul.bf16.gmra.mxu0 %v724
    %v3953 = vpop.f32.mrf.mxu0
    %v3954 = vadd.f32 %v3941, %v3953
    %v3955 = vpop.f32.mrf.mxu0
    %3956 = vdwg.mxu0
    %3957 = vmatpush.bf16.msra.mxu0 %v2514
    %3958 = vmatpush.bf16.msra.mxu0 %v2510
    %3959 = vmatpush.bf16.msra.mxu0 %v2506
    %3960 = vmatpush.bf16.msra.mxu0 %v2502
    %3961 = vmatpush.bf16.msra.mxu0 %v2498
    %3962 = vmatpush.bf16.msra.mxu0 %v2494
    %3963 = vmatpush.bf16.msra.mxu0 %v2490
    %3964 = vmatpush.bf16.msra.mxu0 %v2486
    %3965 = vmatmul.bf16.gmra.mxu0 %v725
    %v3966 = vpop.f32.mrf.mxu0
    %v3967 = vadd.f32 %v3954, %v3966
    %v3968 = vpop.f32.mrf.mxu0
    %3969 = vdwg.mxu0
    %3970 = vmatpush.bf16.msra.mxu0 %v2546
    %3971 = vmatpush.bf16.msra.mxu0 %v2542
    %3972 = vmatpush.bf16.msra.mxu0 %v2538
    %3973 = vmatpush.bf16.msra.mxu0 %v2534
    %3974 = vmatpush.bf16.msra.mxu0 %v2530
    %3975 = vmatpush.bf16.msra.mxu0 %v2526
    %3976 = vmatpush.bf16.msra.mxu0 %v2522
    %3977 = vmatpush.bf16.msra.mxu0 %v2518
    %3978 = vmatmul.bf16.gmra.mxu0 %v726
    %v3979 = vpop.f32.mrf.mxu0
    %v3980 = vadd.f32 %v3967, %v3979
    %v3981 = vpop.f32.mrf.mxu0
    %3982 = vdwg.mxu0
    %3983 = vmatpush.bf16.msra.mxu0 %v2578
    %3984 = vmatpush.bf16.msra.mxu0 %v2574
    %3985 = vmatpush.bf16.msra.mxu0 %v2570
    %3986 = vmatpush.bf16.msra.mxu0 %v2566
    %3987 = vmatpush.bf16.msra.mxu0 %v2562
    %3988 = vmatpush.bf16.msra.mxu0 %v2558
    %3989 = vmatpush.bf16.msra.mxu0 %v2554
    %3990 = vmatpush.bf16.msra.mxu0 %v2550
    %3991 = vmatmul.bf16.gmra.mxu0 %v727
    %v3992 = vpop.f32.mrf.mxu0
    %v3993 = vadd.f32 %v3980, %v3992
    %v3994 = vpop.f32.mrf.mxu0
    %3995 = vdwg.mxu0
    %3996 = vmatpush.bf16.msra.mxu0 %v2610
    %3997 = vmatpush.bf16.msra.mxu0 %v2606
    %3998 = vmatpush.bf16.msra.mxu0 %v2602
    %3999 = vmatpush.bf16.msra.mxu0 %v2598
    %4000 = vmatpush.bf16.msra.mxu0 %v2594
    %4001 = vmatpush.bf16.msra.mxu0 %v2590
    %4002 = vmatpush.bf16.msra.mxu0 %v2586
    %4003 = vmatpush.bf16.msra.mxu0 %v2582
    %4004 = vmatmul.bf16.gmra.mxu0 %v728
    %v4005 = vpop.f32.mrf.mxu0
    %v4006 = vadd.f32 %v3993, %v4005
    %v4007 = vpop.f32.mrf.mxu0
    %4008 = vdwg.mxu0
    %4009 = vmatpush.bf16.msra.mxu0 %v2642
    %4010 = vmatpush.bf16.msra.mxu0 %v2638
    %4011 = vmatpush.bf16.msra.mxu0 %v2634
    %4012 = vmatpush.bf16.msra.mxu0 %v2630
    %4013 = vmatpush.bf16.msra.mxu0 %v2626
    %4014 = vmatpush.bf16.msra.mxu0 %v2622
    %4015 = vmatpush.bf16.msra.mxu0 %v2618
    %4016 = vmatpush.bf16.msra.mxu0 %v2614
    %4017 = vmatmul.bf16.gmra.mxu0 %v729
    %v4018 = vpop.f32.mrf.mxu0
    %v4019 = vadd.f32 %v4006, %v4018
    %v4020 = vpop.f32.mrf.mxu0
    %4021 = vdwg.mxu0
    %4022 = vmatpush.bf16.msra.mxu0 %v2674
    %4023 = vmatpush.bf16.msra.mxu0 %v2670
    %4024 = vmatpush.bf16.msra.mxu0 %v2666
    %4025 = vmatpush.bf16.msra.mxu0 %v2662
    %4026 = vmatpush.bf16.msra.mxu0 %v2658
    %4027 = vmatpush.bf16.msra.mxu0 %v2654
    %4028 = vmatpush.bf16.msra.mxu0 %v2650
    %4029 = vmatpush.bf16.msra.mxu0 %v2646
    %4030 = vmatmul.bf16.gmra.mxu0 %v730
    %v4031 = vpop.f32.mrf.mxu0
    %v4032 = vadd.f32 %v4019, %v4031
    %v4033 = vpop.f32.mrf.mxu0
    %4034 = vdwg.mxu0
    %4035 = vmatpush.bf16.msra.mxu0 %v2706
    %4036 = vmatpush.bf16.msra.mxu0 %v2702
    %4037 = vmatpush.bf16.msra.mxu0 %v2698
    %4038 = vmatpush.bf16.msra.mxu0 %v2694
    %4039 = vmatpush.bf16.msra.mxu0 %v2690
    %4040 = vmatpush.bf16.msra.mxu0 %v2686
    %4041 = vmatpush.bf16.msra.mxu0 %v2682
    %4042 = vmatpush.bf16.msra.mxu0 %v2678
    %4043 = vmatmul.bf16.gmra.mxu0 %v731
    %v4044 = vpop.f32.mrf.mxu0
    %v4045 = vadd.f32 %v4032, %v4044
    %v4046 = vpop.f32.mrf.mxu0
    %4047 = vdwg.mxu0
    %4048 = vmatpush.bf16.msra.mxu0 %v2738
    %4049 = vmatpush.bf16.msra.mxu0 %v2734
    %4050 = vmatpush.bf16.msra.mxu0 %v2730
    %4051 = vmatpush.bf16.msra.mxu0 %v2726
    %4052 = vmatpush.bf16.msra.mxu0 %v2722
    %4053 = vmatpush.bf16.msra.mxu0 %v2718
    %4054 = vmatpush.bf16.msra.mxu0 %v2714
    %4055 = vmatpush.bf16.msra.mxu0 %v2710
    %4056 = vmatmul.bf16.gmra.mxu0 %v732
    %v4057 = vpop.f32.mrf.mxu0
    %v4058 = vadd.f32 %v4045, %v4057
    %v4059 = vpop.f32.mrf.mxu0
    %4060 = vdwg.mxu0
    %4061 = vmatpush.bf16.msra.mxu0 %v2770
    %4062 = vmatpush.bf16.msra.mxu0 %v2766
    %4063 = vmatpush.bf16.msra.mxu0 %v2762
    %4064 = vmatpush.bf16.msra.mxu0 %v2758
    %4065 = vmatpush.bf16.msra.mxu0 %v2754
    %4066 = vmatpush.bf16.msra.mxu0 %v2750
    %4067 = vmatpush.bf16.msra.mxu0 %v2746
    %4068 = vmatpush.bf16.msra.mxu0 %v2742
    %4069 = vmatmul.bf16.gmra.mxu0 %v733
    %v4070 = vpop.f32.mrf.mxu0
    %v4071 = vadd.f32 %v4058, %v4070
    %v4072 = vpop.f32.mrf.mxu0
    %4073 = vdwg.mxu0
    %4074 = vmatpush.bf16.msra.mxu0 %v2802
    %4075 = vmatpush.bf16.msra.mxu0 %v2798
    %4076 = vmatpush.bf16.msra.mxu0 %v2794
    %4077 = vmatpush.bf16.msra.mxu0 %v2790
    %4078 = vmatpush.bf16.msra.mxu0 %v2786
    %4079 = vmatpush.bf16.msra.mxu0 %v2782
    %4080 = vmatpush.bf16.msra.mxu0 %v2778
    %4081 = vmatpush.bf16.msra.mxu0 %v2774
    %4082 = vmatmul.bf16.gmra.mxu0 %v734
    %v4083 = vpop.f32.mrf.mxu0
    %v4084 = vadd.f32 %v4071, %v4083
    %v4085 = vpop.f32.mrf.mxu0
    %4086 = vdwg.mxu0
    %4087 = vmatpush.bf16.msra.mxu0 %v2834
    %4088 = vmatpush.bf16.msra.mxu0 %v2830
    %4089 = vmatpush.bf16.msra.mxu0 %v2826
    %4090 = vmatpush.bf16.msra.mxu0 %v2822
    %4091 = vmatpush.bf16.msra.mxu0 %v2818
    %4092 = vmatpush.bf16.msra.mxu0 %v2814
    %4093 = vmatpush.bf16.msra.mxu0 %v2810
    %4094 = vmatpush.bf16.msra.mxu0 %v2806
    %4095 = vmatmul.bf16.gmra.mxu0 %v735
    %v4096 = vpop.f32.mrf.mxu0
    %v4097 = vadd.f32 %v4084, %v4096
    %v4098 = vpop.f32.mrf.mxu0
    %4099 = vdwg.mxu0
    %4100 = vmatpush.bf16.msra.mxu0 %v2866
    %4101 = vmatpush.bf16.msra.mxu0 %v2862
    %4102 = vmatpush.bf16.msra.mxu0 %v2858
    %4103 = vmatpush.bf16.msra.mxu0 %v2854
    %4104 = vmatpush.bf16.msra.mxu0 %v2850
    %4105 = vmatpush.bf16.msra.mxu0 %v2846
    %4106 = vmatpush.bf16.msra.mxu0 %v2842
    %4107 = vmatpush.bf16.msra.mxu0 %v2838
    %4108 = vmatmul.bf16.gmra.mxu0 %v736
    %v4109 = vpop.f32.mrf.mxu0
    %v4110 = vadd.f32 %v4097, %v4109
    %v4111 = vpop.f32.mrf.mxu0
    %4112 = vdwg.mxu0
    %4113 = vmatpush.bf16.msra.mxu0 %v2898
    %4114 = vmatpush.bf16.msra.mxu0 %v2894
    %4115 = vmatpush.bf16.msra.mxu0 %v2890
    %4116 = vmatpush.bf16.msra.mxu0 %v2886
    %4117 = vmatpush.bf16.msra.mxu0 %v2882
    %4118 = vmatpush.bf16.msra.mxu0 %v2878
    %4119 = vmatpush.bf16.msra.mxu0 %v2874
    %4120 = vmatpush.bf16.msra.mxu0 %v2870
    %4121 = vmatmul.bf16.gmra.mxu0 %v737
    %v4122 = vpop.f32.mrf.mxu0
    %v4123 = vadd.f32 %v4110, %v4122
    %v4124 = vpop.f32.mrf.mxu0
    %4125 = vdwg.mxu0
    %4126 = vmatpush.bf16.msra.mxu0 %v2930
    %4127 = vmatpush.bf16.msra.mxu0 %v2926
    %4128 = vmatpush.bf16.msra.mxu0 %v2922
    %4129 = vmatpush.bf16.msra.mxu0 %v2918
    %4130 = vmatpush.bf16.msra.mxu0 %v2914
    %4131 = vmatpush.bf16.msra.mxu0 %v2910
    %4132 = vmatpush.bf16.msra.mxu0 %v2906
    %4133 = vmatpush.bf16.msra.mxu0 %v2902
    %4134 = vmatmul.bf16.gmra.mxu0 %v738
    %v4135 = vpop.f32.mrf.mxu0
    %v4136 = vadd.f32 %v4123, %v4135
    %v4137 = vpop.f32.mrf.mxu0
    %4138 = vdwg.mxu0
    %4139 = vmatpush.bf16.msra.mxu0 %v2419
    %4140 = vmatpush.bf16.msra.mxu0 %v2415
    %4141 = vmatpush.bf16.msra.mxu0 %v2411
    %4142 = vmatpush.bf16.msra.mxu0 %v2407
    %4143 = vmatpush.bf16.msra.mxu0 %v2403
    %4144 = vmatpush.bf16.msra.mxu0 %v2399
    %4145 = vmatpush.bf16.msra.mxu0 %v2395
    %4146 = vmatpush.bf16.msra.mxu0 %v2391
    %4147 = vmatmul.bf16.gmra.mxu0 %v722
    %v4148 = vpop.f32.mrf.mxu0
    %v4149 = vadd.f32 0.0, %v4148
    %v4150 = vpop.f32.mrf.mxu0
    %4151 = vdwg.mxu0
    %4152 = vmatpush.bf16.msra.mxu0 %v2451
    %4153 = vmatpush.bf16.msra.mxu0 %v2447
    %4154 = vmatpush.bf16.msra.mxu0 %v2443
    %4155 = vmatpush.bf16.msra.mxu0 %v2439
    %4156 = vmatpush.bf16.msra.mxu0 %v2435
    %4157 = vmatpush.bf16.msra.mxu0 %v2431
    %4158 = vmatpush.bf16.msra.mxu0 %v2427
    %4159 = vmatpush.bf16.msra.mxu0 %v2423
    %4160 = vmatmul.bf16.gmra.mxu0 %v723
    %v4161 = vpop.f32.mrf.mxu0
    %v4162 = vadd.f32 %v4149, %v4161
    %v4163 = vpop.f32.mrf.mxu0
    %4164 = vdwg.mxu0
    %4165 = vmatpush.bf16.msra.mxu0 %v2483
    %4166 = vmatpush.bf16.msra.mxu0 %v2479
    %4167 = vmatpush.bf16.msra.mxu0 %v2475
    %4168 = vmatpush.bf16.msra.mxu0 %v2471
    %4169 = vmatpush.bf16.msra.mxu0 %v2467
    %4170 = vmatpush.bf16.msra.mxu0 %v2463
    %4171 = vmatpush.bf16.msra.mxu0 %v2459
    %4172 = vmatpush.bf16.msra.mxu0 %v2455
    %4173 = vmatmul.bf16.gmra.mxu0 %v724
    %v4174 = vpop.f32.mrf.mxu0
    %v4175 = vadd.f32 %v4162, %v4174
    %v4176 = vpop.f32.mrf.mxu0
    %4177 = vdwg.mxu0
    %4178 = vmatpush.bf16.msra.mxu0 %v2515
    %4179 = vmatpush.bf16.msra.mxu0 %v2511
    %4180 = vmatpush.bf16.msra.mxu0 %v2507
    %4181 = vmatpush.bf16.msra.mxu0 %v2503
    %4182 = vmatpush.bf16.msra.mxu0 %v2499
    %4183 = vmatpush.bf16.msra.mxu0 %v2495
    %4184 = vmatpush.bf16.msra.mxu0 %v2491
    %4185 = vmatpush.bf16.msra.mxu0 %v2487
    %4186 = vmatmul.bf16.gmra.mxu0 %v725
    %v4187 = vpop.f32.mrf.mxu0
    %v4188 = vadd.f32 %v4175, %v4187
    %v4189 = vpop.f32.mrf.mxu0
    %4190 = vdwg.mxu0
    %4191 = vmatpush.bf16.msra.mxu0 %v2547
    %4192 = vmatpush.bf16.msra.mxu0 %v2543
    %4193 = vmatpush.bf16.msra.mxu0 %v2539
    %4194 = vmatpush.bf16.msra.mxu0 %v2535
    %4195 = vmatpush.bf16.msra.mxu0 %v2531
    %4196 = vmatpush.bf16.msra.mxu0 %v2527
    %4197 = vmatpush.bf16.msra.mxu0 %v2523
    %4198 = vmatpush.bf16.msra.mxu0 %v2519
    %4199 = vmatmul.bf16.gmra.mxu0 %v726
    %v4200 = vpop.f32.mrf.mxu0
    %v4201 = vadd.f32 %v4188, %v4200
    %v4202 = vpop.f32.mrf.mxu0
    %4203 = vdwg.mxu0
    %4204 = vmatpush.bf16.msra.mxu0 %v2579
    %4205 = vmatpush.bf16.msra.mxu0 %v2575
    %4206 = vmatpush.bf16.msra.mxu0 %v2571
    %4207 = vmatpush.bf16.msra.mxu0 %v2567
    %4208 = vmatpush.bf16.msra.mxu0 %v2563
    %4209 = vmatpush.bf16.msra.mxu0 %v2559
    %4210 = vmatpush.bf16.msra.mxu0 %v2555
    %4211 = vmatpush.bf16.msra.mxu0 %v2551
    %4212 = vmatmul.bf16.gmra.mxu0 %v727
    %v4213 = vpop.f32.mrf.mxu0
    %v4214 = vadd.f32 %v4201, %v4213
    %v4215 = vpop.f32.mrf.mxu0
    %4216 = vdwg.mxu0
    %4217 = vmatpush.bf16.msra.mxu0 %v2611
    %4218 = vmatpush.bf16.msra.mxu0 %v2607
    %4219 = vmatpush.bf16.msra.mxu0 %v2603
    %4220 = vmatpush.bf16.msra.mxu0 %v2599
    %4221 = vmatpush.bf16.msra.mxu0 %v2595
    %4222 = vmatpush.bf16.msra.mxu0 %v2591
    %4223 = vmatpush.bf16.msra.mxu0 %v2587
    %4224 = vmatpush.bf16.msra.mxu0 %v2583
    %4225 = vmatmul.bf16.gmra.mxu0 %v728
    %v4226 = vpop.f32.mrf.mxu0
    %v4227 = vadd.f32 %v4214, %v4226
    %v4228 = vpop.f32.mrf.mxu0
    %4229 = vdwg.mxu0
    %4230 = vmatpush.bf16.msra.mxu0 %v2643
    %4231 = vmatpush.bf16.msra.mxu0 %v2639
    %4232 = vmatpush.bf16.msra.mxu0 %v2635
    %4233 = vmatpush.bf16.msra.mxu0 %v2631
    %4234 = vmatpush.bf16.msra.mxu0 %v2627
    %4235 = vmatpush.bf16.msra.mxu0 %v2623
    %4236 = vmatpush.bf16.msra.mxu0 %v2619
    %4237 = vmatpush.bf16.msra.mxu0 %v2615
    %4238 = vmatmul.bf16.gmra.mxu0 %v729
    %v4239 = vpop.f32.mrf.mxu0
    %v4240 = vadd.f32 %v4227, %v4239
    %v4241 = vpop.f32.mrf.mxu0
    %4242 = vdwg.mxu0
    %4243 = vmatpush.bf16.msra.mxu0 %v2675
    %4244 = vmatpush.bf16.msra.mxu0 %v2671
    %4245 = vmatpush.bf16.msra.mxu0 %v2667
    %4246 = vmatpush.bf16.msra.mxu0 %v2663
    %4247 = vmatpush.bf16.msra.mxu0 %v2659
    %4248 = vmatpush.bf16.msra.mxu0 %v2655
    %4249 = vmatpush.bf16.msra.mxu0 %v2651
    %4250 = vmatpush.bf16.msra.mxu0 %v2647
    %4251 = vmatmul.bf16.gmra.mxu0 %v730
    %v4252 = vpop.f32.mrf.mxu0
    %v4253 = vadd.f32 %v4240, %v4252
    %v4254 = vpop.f32.mrf.mxu0
    %4255 = vdwg.mxu0
    %4256 = vmatpush.bf16.msra.mxu0 %v2707
    %4257 = vmatpush.bf16.msra.mxu0 %v2703
    %4258 = vmatpush.bf16.msra.mxu0 %v2699
    %4259 = vmatpush.bf16.msra.mxu0 %v2695
    %4260 = vmatpush.bf16.msra.mxu0 %v2691
    %4261 = vmatpush.bf16.msra.mxu0 %v2687
    %4262 = vmatpush.bf16.msra.mxu0 %v2683
    %4263 = vmatpush.bf16.msra.mxu0 %v2679
    %4264 = vmatmul.bf16.gmra.mxu0 %v731
    %v4265 = vpop.f32.mrf.mxu0
    %v4266 = vadd.f32 %v4253, %v4265
    %v4267 = vpop.f32.mrf.mxu0
    %4268 = vdwg.mxu0
    %4269 = vmatpush.bf16.msra.mxu0 %v2739
    %4270 = vmatpush.bf16.msra.mxu0 %v2735
    %4271 = vmatpush.bf16.msra.mxu0 %v2731
    %4272 = vmatpush.bf16.msra.mxu0 %v2727
    %4273 = vmatpush.bf16.msra.mxu0 %v2723
    %4274 = vmatpush.bf16.msra.mxu0 %v2719
    %4275 = vmatpush.bf16.msra.mxu0 %v2715
    %4276 = vmatpush.bf16.msra.mxu0 %v2711
    %4277 = vmatmul.bf16.gmra.mxu0 %v732
    %v4278 = vpop.f32.mrf.mxu0
    %v4279 = vadd.f32 %v4266, %v4278
    %v4280 = vpop.f32.mrf.mxu0
    %4281 = vdwg.mxu0
    %4282 = vmatpush.bf16.msra.mxu0 %v2771
    %4283 = vmatpush.bf16.msra.mxu0 %v2767
    %4284 = vmatpush.bf16.msra.mxu0 %v2763
    %4285 = vmatpush.bf16.msra.mxu0 %v2759
    %4286 = vmatpush.bf16.msra.mxu0 %v2755
    %4287 = vmatpush.bf16.msra.mxu0 %v2751
    %4288 = vmatpush.bf16.msra.mxu0 %v2747
    %4289 = vmatpush.bf16.msra.mxu0 %v2743
    %4290 = vmatmul.bf16.gmra.mxu0 %v733
    %v4291 = vpop.f32.mrf.mxu0
    %v4292 = vadd.f32 %v4279, %v4291
    %v4293 = vpop.f32.mrf.mxu0
    %4294 = vdwg.mxu0
    %4295 = vmatpush.bf16.msra.mxu0 %v2803
    %4296 = vmatpush.bf16.msra.mxu0 %v2799
    %4297 = vmatpush.bf16.msra.mxu0 %v2795
    %4298 = vmatpush.bf16.msra.mxu0 %v2791
    %4299 = vmatpush.bf16.msra.mxu0 %v2787
    %4300 = vmatpush.bf16.msra.mxu0 %v2783
    %4301 = vmatpush.bf16.msra.mxu0 %v2779
    %4302 = vmatpush.bf16.msra.mxu0 %v2775
    %4303 = vmatmul.bf16.gmra.mxu0 %v734
    %v4304 = vpop.f32.mrf.mxu0
    %v4305 = vadd.f32 %v4292, %v4304
    %v4306 = vpop.f32.mrf.mxu0
    %4307 = vdwg.mxu0
    %4308 = vmatpush.bf16.msra.mxu0 %v2835
    %4309 = vmatpush.bf16.msra.mxu0 %v2831
    %4310 = vmatpush.bf16.msra.mxu0 %v2827
    %4311 = vmatpush.bf16.msra.mxu0 %v2823
    %4312 = vmatpush.bf16.msra.mxu0 %v2819
    %4313 = vmatpush.bf16.msra.mxu0 %v2815
    %4314 = vmatpush.bf16.msra.mxu0 %v2811
    %4315 = vmatpush.bf16.msra.mxu0 %v2807
    %4316 = vmatmul.bf16.gmra.mxu0 %v735
    %v4317 = vpop.f32.mrf.mxu0
    %v4318 = vadd.f32 %v4305, %v4317
    %v4319 = vpop.f32.mrf.mxu0
    %4320 = vdwg.mxu0
    %4321 = vmatpush.bf16.msra.mxu0 %v2867
    %4322 = vmatpush.bf16.msra.mxu0 %v2863
    %4323 = vmatpush.bf16.msra.mxu0 %v2859
    %4324 = vmatpush.bf16.msra.mxu0 %v2855
    %4325 = vmatpush.bf16.msra.mxu0 %v2851
    %4326 = vmatpush.bf16.msra.mxu0 %v2847
    %4327 = vmatpush.bf16.msra.mxu0 %v2843
    %4328 = vmatpush.bf16.msra.mxu0 %v2839
    %4329 = vmatmul.bf16.gmra.mxu0 %v736
    %v4330 = vpop.f32.mrf.mxu0
    %v4331 = vadd.f32 %v4318, %v4330
    %v4332 = vpop.f32.mrf.mxu0
    %4333 = vdwg.mxu0
    %4334 = vmatpush.bf16.msra.mxu0 %v2899
    %4335 = vmatpush.bf16.msra.mxu0 %v2895
    %4336 = vmatpush.bf16.msra.mxu0 %v2891
    %4337 = vmatpush.bf16.msra.mxu0 %v2887
    %4338 = vmatpush.bf16.msra.mxu0 %v2883
    %4339 = vmatpush.bf16.msra.mxu0 %v2879
    %4340 = vmatpush.bf16.msra.mxu0 %v2875
    %4341 = vmatpush.bf16.msra.mxu0 %v2871
    %4342 = vmatmul.bf16.gmra.mxu0 %v737
    %v4343 = vpop.f32.mrf.mxu0
    %v4344 = vadd.f32 %v4331, %v4343
    %v4345 = vpop.f32.mrf.mxu0
    %4346 = vdwg.mxu0
    %4347 = vmatpush.bf16.msra.mxu0 %v2931
    %4348 = vmatpush.bf16.msra.mxu0 %v2927
    %4349 = vmatpush.bf16.msra.mxu0 %v2923
    %4350 = vmatpush.bf16.msra.mxu0 %v2919
    %4351 = vmatpush.bf16.msra.mxu0 %v2915
    %4352 = vmatpush.bf16.msra.mxu0 %v2911
    %4353 = vmatpush.bf16.msra.mxu0 %v2907
    %4354 = vmatpush.bf16.msra.mxu0 %v2903
    %4355 = vmatmul.bf16.gmra.mxu0 %v738
    %v4356 = vpop.f32.mrf.mxu0
    %v4357 = vadd.f32 %v4344, %v4356
    %v4358 = vpop.f32.mrf.mxu0
    %4359 = vdwg.mxu0
    %v4360 = vld [vmem:[#allocation10] ss:$2 sm:$0xf]
    %s4361 = scalar_lea.vmem [#allocation10], 1
    %v4362 = vld [vmem:[%s4361] ss:$2 sm:$0xf]
    %v4363 = vrot.slane %v3694, 4
    %v4364 = vadd.f32 %v3694, %v4363
    %v4365 = vrot.slane %v4364, 2
    %v4366 = vadd.f32 %v4364, %v4365
    %v4367 = vrot.slane %v4366, 1
    %v4368 = vadd.f32 %v4366, %v4367
    %v4369 = vrot.slane %v3915, 4
    %v4370 = vadd.f32 %v3915, %v4369
    %v4371 = vrot.slane %v4370, 2
    %v4372 = vadd.f32 %v4370, %v4371
    %v4373 = vrot.slane %v4372, 1
    %v4374 = vadd.f32 %v4372, %v4373
    %v4375 = vrot.slane %v4136, 4
    %v4376 = vadd.f32 %v4136, %v4375
    %v4377 = vrot.slane %v4376, 2
    %v4378 = vadd.f32 %v4376, %v4377
    %v4379 = vrot.slane %v4378, 1
    %v4380 = vadd.f32 %v4378, %v4379
    %v4381 = vrot.slane %v4357, 4
    %v4382 = vadd.f32 %v4357, %v4381
    %v4383 = vrot.slane %v4382, 2
    %v4384 = vadd.f32 %v4382, %v4383
    %v4385 = vrot.slane %v4384, 1
    %v4386 = vadd.f32 %v4384, %v4385
    %v4387 = vrcp.pop 8.0
    %v4388 = vmul.f32 8.0, %v4387
    %v4389 = vsub.f32 1.0, %v4388
    %v4390 = vmul.f32 %v4387, %v4389
    %v4391 = vadd.f32 %v4387, %v4390
    %vm4392 = vweird.f32 %v4387
    %v4393 = vsel %vm4392, %v4387, %v4391
    %v4394 = vmul.f32 %v4368, %v4393
    %v4395 = vmul.f32 %v4374, %v4393
    %v4396 = vmul.f32 %v4380, %v4393
    %v4397 = vmul.f32 %v4386, %v4393
    %v4398 = vsub.f32 %v3694, %v4394
    %v4399 = vsub.f32 %v3915, %v4395
    %v4400 = vsub.f32 %v4136, %v4396
    %v4401 = vsub.f32 %v4357, %v4397
    %v4402 = vmul.f32 %v4398, %v4398
    %v4403 = vmul.f32 %v4399, %v4399
    %v4404 = vmul.f32 %v4400, %v4400
    %v4405 = vmul.f32 %v4401, %v4401
    %v4406 = vrot.slane %v4402, 4
    %v4407 = vadd.f32 %v4402, %v4406
    %v4408 = vrot.slane %v4407, 2
    %v4409 = vadd.f32 %v4407, %v4408
    %v4410 = vrot.slane %v4409, 1
    %v4411 = vadd.f32 %v4409, %v4410
    %v4412 = vrot.slane %v4403, 4
    %v4413 = vadd.f32 %v4403, %v4412
    %v4414 = vrot.slane %v4413, 2
    %v4415 = vadd.f32 %v4413, %v4414
    %v4416 = vrot.slane %v4415, 1
    %v4417 = vadd.f32 %v4415, %v4416
    %v4418 = vrot.slane %v4404, 4
    %v4419 = vadd.f32 %v4404, %v4418
    %v4420 = vrot.slane %v4419, 2
    %v4421 = vadd.f32 %v4419, %v4420
    %v4422 = vrot.slane %v4421, 1
    %v4423 = vadd.f32 %v4421, %v4422
    %v4424 = vrot.slane %v4405, 4
    %v4425 = vadd.f32 %v4405, %v4424
    %v4426 = vrot.slane %v4425, 2
    %v4427 = vadd.f32 %v4425, %v4426
    %v4428 = vrot.slane %v4427, 1
    %v4429 = vadd.f32 %v4427, %v4428
    %v4430 = vmul.f32 %v4411, %v4393
    %v4431 = vmul.f32 %v4417, %v4393
    %v4432 = vmul.f32 %v4423, %v4393
    %v4433 = vmul.f32 %v4429, %v4393
    %v4434 = vadd.f32 %v4430, 1e-05
    %v4435 = vadd.f32 %v4431, 1e-05
    %v4436 = vadd.f32 %v4432, 1e-05
    %v4437 = vadd.f32 %v4433, 1e-05
    %v4438 = vrsqrt.pop %v4434
    %v4439 = vmul.f32 %v4438, %v4434
    %v4440 = vmul.f32 %v4439, %v4438
    %v4441 = vmul.f32 0.5, %v4440
    %v4442 = vsub.f32 1.5, %v4441
    %v4443 = vmul.f32 %v4438, %v4442
    %vm4444 = vweird.f32 %v4434
    %vm4445 = vweird.f32 %v4438
    %vm4446 = vmor %vm4444, %vm4445
    %v4447 = vsel %vm4446, %v4438, %v4443
    %v4448 = vrsqrt.pop %v4435
    %v4449 = vmul.f32 %v4448, %v4435
    %v4450 = vmul.f32 %v4449, %v4448
    %v4451 = vmul.f32 0.5, %v4450
    %v4452 = vsub.f32 1.5, %v4451
    %v4453 = vmul.f32 %v4448, %v4452
    %vm4454 = vweird.f32 %v4435
    %vm4455 = vweird.f32 %v4448
    %vm4456 = vmor %vm4454, %vm4455
    %v4457 = vsel %vm4456, %v4448, %v4453
    %v4458 = vrsqrt.pop %v4436
    %v4459 = vmul.f32 %v4458, %v4436
    %v4460 = vmul.f32 %v4459, %v4458
    %v4461 = vmul.f32 0.5, %v4460
    %v4462 = vsub.f32 1.5, %v4461
    %v4463 = vmul.f32 %v4458, %v4462
    %vm4464 = vweird.f32 %v4436
    %vm4465 = vweird.f32 %v4458
    %vm4466 = vmor %vm4464, %vm4465
    %v4467 = vsel %vm4466, %v4458, %v4463
    %v4468 = vrsqrt.pop %v4437
    %v4469 = vmul.f32 %v4468, %v4437
    %v4470 = vmul.f32 %v4469, %v4468
    %v4471 = vmul.f32 0.5, %v4470
    %v4472 = vsub.f32 1.5, %v4471
    %v4473 = vmul.f32 %v4468, %v4472
    %vm4474 = vweird.f32 %v4437
    %vm4475 = vweird.f32 %v4468
    %vm4476 = vmor %vm4474, %vm4475
    %v4477 = vsel %vm4476, %v4468, %v4473
    %v4478 = vmul.f32 %v4398, %v4447
    %v4479 = vmul.f32 %v4399, %v4457
    %v4480 = vmul.f32 %v4400, %v4467
    %v4481 = vmul.f32 %v4401, %v4477
    %v4483 = vperm.slane %v4360, 0
    %v4484 = vperm.slane %v4360, 1
    %v4485 = vperm.slane %v4360, 2
    %v4486 = vperm.slane %v4360, 3
    %v4491 = vmul.f32 %v4478, %v4483
    %v4492 = vmul.f32 %v4479, %v4484
    %v4493 = vmul.f32 %v4480, %v4485
    %v4494 = vmul.f32 %v4481, %v4486
    %v4496 = vperm.slane %v4362, 0
    %v4497 = vperm.slane %v4362, 1
    %v4498 = vperm.slane %v4362, 2
    %v4499 = vperm.slane %v4362, 3
    %v4504 = vadd.f32 %v4491, %v4496
    %v4505 = vadd.f32 %v4492, %v4497
    %v4506 = vadd.f32 %v4493, %v4498
    %v4507 = vadd.f32 %v4494, %v4499
    %v4508 = vxor.u32 %v4504, 2147483648
    %v4509 = vxor.u32 %v4505, 2147483648
    %v4510 = vxor.u32 %v4506, 2147483648
    %v4511 = vxor.u32 %v4507, 2147483648
    %v4512 = vmul.f32 %v4508, 1.442695
    %v4513 = vpow.pop %v4512
    %v4514 = vmul.f32 %v4509, 1.442695
    %v4515 = vpow.pop %v4514
    %v4516 = vmul.f32 %v4510, 1.442695
    %v4517 = vpow.pop %v4516
    %v4518 = vmul.f32 %v4511, 1.442695
    %v4519 = vpow.pop %v4518
    %v4520 = vadd.f32 %v4513, 1.0
    %v4521 = vadd.f32 %v4515, 1.0
    %v4522 = vadd.f32 %v4517, 1.0
    %v4523 = vadd.f32 %v4519, 1.0
    %v4524 = vrcp.pop %v4520
    %v4525 = vmul.f32 %v4520, %v4524
    %v4526 = vsub.f32 1.0, %v4525
    %v4527 = vmul.f32 %v4524, %v4526
    %v4528 = vadd.f32 %v4524, %v4527
    %vm4529 = vweird.f32 %v4520
    %vm4530 = vweird.f32 %v4524
    %vm4531 = vmor %vm4529, %vm4530
    %v4532 = vsel %vm4531, %v4524, %v4528
    %v4533 = vand.u32 2147483647, %v4520
    %vm4534 = vcmp.eq.f32.partialorder %v4533, 8.507059e+37
    %v4535 = vand.u32 %v4520, 2147483648
    %v4536 = vor.u32 1.1754944e-38, %v4535
    %v4537 = vsel %vm4534, %v4536, %v4532
    %v4538 = vmul.f32 1.0, %v4537
    %v4539 = vrcp.pop %v4521
    %v4540 = vmul.f32 %v4521, %v4539
    %v4541 = vsub.f32 1.0, %v4540
    %v4542 = vmul.f32 %v4539, %v4541
    %v4543 = vadd.f32 %v4539, %v4542
    %vm4544 = vweird.f32 %v4521
    %vm4545 = vweird.f32 %v4539
    %vm4546 = vmor %vm4544, %vm4545
    %v4547 = vsel %vm4546, %v4539, %v4543
    %v4548 = vand.u32 2147483647, %v4521
    %vm4549 = vcmp.eq.f32.partialorder %v4548, 8.507059e+37
    %v4550 = vand.u32 %v4521, 2147483648
    %v4551 = vor.u32 1.1754944e-38, %v4550
    %v4552 = vsel %vm4549, %v4551, %v4547
    %v4553 = vmul.f32 1.0, %v4552
    %v4554 = vrcp.pop %v4522
    %v4555 = vmul.f32 %v4522, %v4554
    %v4556 = vsub.f32 1.0, %v4555
    %v4557 = vmul.f32 %v4554, %v4556
    %v4558 = vadd.f32 %v4554, %v4557
    %vm4559 = vweird.f32 %v4522
    %vm4560 = vweird.f32 %v4554
    %vm4561 = vmor %vm4559, %vm4560
    %v4562 = vsel %vm4561, %v4554, %v4558
    %v4563 = vand.u32 2147483647, %v4522
    %vm4564 = vcmp.eq.f32.partialorder %v4563, 8.507059e+37
    %v4565 = vand.u32 %v4522, 2147483648
    %v4566 = vor.u32 1.1754944e-38, %v4565
    %v4567 = vsel %vm4564, %v4566, %v4562
    %v4568 = vmul.f32 1.0, %v4567
    %v4569 = vrcp.pop %v4523
    %v4570 = vmul.f32 %v4523, %v4569
    %v4571 = vsub.f32 1.0, %v4570
    %v4572 = vmul.f32 %v4569, %v4571
    %v4573 = vadd.f32 %v4569, %v4572
    %vm4574 = vweird.f32 %v4523
    %vm4575 = vweird.f32 %v4569
    %vm4576 = vmor %vm4574, %vm4575
    %v4577 = vsel %vm4576, %v4569, %v4573
    %v4578 = vand.u32 2147483647, %v4523
    %vm4579 = vcmp.eq.f32.partialorder %v4578, 8.507059e+37
    %v4580 = vand.u32 %v4523, 2147483648
    %v4581 = vor.u32 1.1754944e-38, %v4580
    %v4582 = vsel %vm4579, %v4581, %v4577
    %v4583 = vmul.f32 1.0, %v4582
    %v4584 = vpack.c.bf16 %v4538, %v4538
    %v4585 = vpack.c.bf16 %v4553, %v4553
    %v4586 = vpack.c.bf16 %v4568, %v4568
    %v4587 = vpack.c.bf16 %v4583, %v4583
    %s4588 = smul.u32 4, 64
    %s4589 = smul.u32 %s4588, 2
    %s4590 = sshll.u32 %s4589, 4
    %4591 = dma.done %s64, %s4590
    %v4592 = vld [vmem:[#allocation3] sm:$0xff]
    %v4593 = vld [vmem:[#allocation3 + $0x8] sm:$0xff]
    %v4594 = vld [vmem:[#allocation3 + $0x10] sm:$0xff]
    %v4595 = vld [vmem:[#allocation3 + $0x18] sm:$0xff]
    %v4596 = vld [vmem:[#allocation3 + $0x20] sm:$0xff]
    %v4597 = vld [vmem:[#allocation3 + $0x28] sm:$0xff]
    %v4598 = vld [vmem:[#allocation3 + $0x30] sm:$0xff]
    %v4599 = vld [vmem:[#allocation3 + $0x38] sm:$0xff]
    %v4600 = vld [vmem:[#allocation3 + $0x40] sm:$0xff]
    %v4601 = vld [vmem:[#allocation3 + $0x48] sm:$0xff]
    %v4602 = vld [vmem:[#allocation3 + $0x50] sm:$0xff]
    %v4603 = vld [vmem:[#allocation3 + $0x58] sm:$0xff]
    %v4604 = vld [vmem:[#allocation3 + $0x60] sm:$0xff]
    %v4605 = vld [vmem:[#allocation3 + $0x68] sm:$0xff]
    %v4606 = vld [vmem:[#allocation3 + $0x70] sm:$0xff]
    %v4607 = vld [vmem:[#allocation3 + $0x78] sm:$0xff]
    %v4608 = vld [vmem:[#allocation3 + $0x80] sm:$0xff]
    %v4609 = vld [vmem:[#allocation3 + $0x88] sm:$0xff]
    %v4610 = vld [vmem:[#allocation3 + $0x90] sm:$0xff]
    %v4611 = vld [vmem:[#allocation3 + $0x98] sm:$0xff]
    %v4612 = vld [vmem:[#allocation3 + $0xa0] sm:$0xff]
    %v4613 = vld [vmem:[#allocation3 + $0xa8] sm:$0xff]
    %v4614 = vld [vmem:[#allocation3 + $0xb0] sm:$0xff]
    %v4615 = vld [vmem:[#allocation3 + $0xb8] sm:$0xff]
    %v4616 = vld [vmem:[#allocation3 + $0xc0] sm:$0xff]
    %v4617 = vld [vmem:[#allocation3 + $0xc8] sm:$0xff]
    %v4618 = vld [vmem:[#allocation3 + $0xd0] sm:$0xff]
    %v4619 = vld [vmem:[#allocation3 + $0xd8] sm:$0xff]
    %v4620 = vld [vmem:[#allocation3 + $0xe0] sm:$0xff]
    %v4621 = vld [vmem:[#allocation3 + $0xe8] sm:$0xff]
    %v4622 = vld [vmem:[#allocation3 + $0xf0] sm:$0xff]
    %v4623 = vld [vmem:[#allocation3 + $0xf8] sm:$0xff]
    %v4624 = vld [vmem:[#allocation3 + $0x100] sm:$0xff]
    %v4625 = vld [vmem:[#allocation3 + $0x108] sm:$0xff]
    %v4626 = vld [vmem:[#allocation3 + $0x110] sm:$0xff]
    %v4627 = vld [vmem:[#allocation3 + $0x118] sm:$0xff]
    %v4628 = vld [vmem:[#allocation3 + $0x120] sm:$0xff]
    %v4629 = vld [vmem:[#allocation3 + $0x128] sm:$0xff]
    %v4630 = vld [vmem:[#allocation3 + $0x130] sm:$0xff]
    %v4631 = vld [vmem:[#allocation3 + $0x138] sm:$0xff]
    %v4632 = vld [vmem:[#allocation3 + $0x140] sm:$0xff]
    %v4633 = vld [vmem:[#allocation3 + $0x148] sm:$0xff]
    %v4634 = vld [vmem:[#allocation3 + $0x150] sm:$0xff]
    %v4635 = vld [vmem:[#allocation3 + $0x158] sm:$0xff]
    %v4636 = vld [vmem:[#allocation3 + $0x160] sm:$0xff]
    %v4637 = vld [vmem:[#allocation3 + $0x168] sm:$0xff]
    %v4638 = vld [vmem:[#allocation3 + $0x170] sm:$0xff]
    %v4639 = vld [vmem:[#allocation3 + $0x178] sm:$0xff]
    %v4640 = vld [vmem:[#allocation3 + $0x180] sm:$0xff]
    %v4641 = vld [vmem:[#allocation3 + $0x188] sm:$0xff]
    %v4642 = vld [vmem:[#allocation3 + $0x190] sm:$0xff]
    %v4643 = vld [vmem:[#allocation3 + $0x198] sm:$0xff]
    %v4644 = vld [vmem:[#allocation3 + $0x1a0] sm:$0xff]
    %v4645 = vld [vmem:[#allocation3 + $0x1a8] sm:$0xff]
    %v4646 = vld [vmem:[#allocation3 + $0x1b0] sm:$0xff]
    %v4647 = vld [vmem:[#allocation3 + $0x1b8] sm:$0xff]
    %v4648 = vld [vmem:[#allocation3 + $0x1c0] sm:$0xff]
    %v4649 = vld [vmem:[#allocation3 + $0x1c8] sm:$0xff]
    %v4650 = vld [vmem:[#allocation3 + $0x1d0] sm:$0xff]
    %v4651 = vld [vmem:[#allocation3 + $0x1d8] sm:$0xff]
    %v4652 = vld [vmem:[#allocation3 + $0x1e0] sm:$0xff]
    %v4653 = vld [vmem:[#allocation3 + $0x1e8] sm:$0xff]
    %v4654 = vld [vmem:[#allocation3 + $0x1f0] sm:$0xff]
    %v4655 = vld [vmem:[#allocation3 + $0x1f8] sm:$0xff]
    %v4720 = vunpack.c.l.b16 %v4592
    %v4721 = vunpack.c.h.b16 %v4592
    %v4722 = vunpack.c.l.b16 %v4593
    %v4723 = vunpack.c.h.b16 %v4593
    %v4724 = vunpack.c.l.b16 %v4594
    %v4725 = vunpack.c.h.b16 %v4594
    %v4726 = vunpack.c.l.b16 %v4595
    %v4727 = vunpack.c.h.b16 %v4595
    %v4728 = vunpack.c.l.b16 %v4596
    %v4729 = vunpack.c.h.b16 %v4596
    %v4730 = vunpack.c.l.b16 %v4597
    %v4731 = vunpack.c.h.b16 %v4597
    %v4732 = vunpack.c.l.b16 %v4598
    %v4733 = vunpack.c.h.b16 %v4598
    %v4734 = vunpack.c.l.b16 %v4599
    %v4735 = vunpack.c.h.b16 %v4599
    %v4736 = vunpack.c.l.b16 %v4600
    %v4737 = vunpack.c.h.b16 %v4600
    %v4738 = vunpack.c.l.b16 %v4601
    %v4739 = vunpack.c.h.b16 %v4601
    %v4740 = vunpack.c.l.b16 %v4602
    %v4741 = vunpack.c.h.b16 %v4602
    %v4742 = vunpack.c.l.b16 %v4603
    %v4743 = vunpack.c.h.b16 %v4603
    %v4744 = vunpack.c.l.b16 %v4604
    %v4745 = vunpack.c.h.b16 %v4604
    %v4746 = vunpack.c.l.b16 %v4605
    %v4747 = vunpack.c.h.b16 %v4605
    %v4748 = vunpack.c.l.b16 %v4606
    %v4749 = vunpack.c.h.b16 %v4606
    %v4750 = vunpack.c.l.b16 %v4607
    %v4751 = vunpack.c.h.b16 %v4607
    %v4752 = vunpack.c.l.b16 %v4608
    %v4753 = vunpack.c.h.b16 %v4608
    %v4754 = vunpack.c.l.b16 %v4609
    %v4755 = vunpack.c.h.b16 %v4609
    %v4756 = vunpack.c.l.b16 %v4610
    %v4757 = vunpack.c.h.b16 %v4610
    %v4758 = vunpack.c.l.b16 %v4611
    %v4759 = vunpack.c.h.b16 %v4611
    %v4760 = vunpack.c.l.b16 %v4612
    %v4761 = vunpack.c.h.b16 %v4612
    %v4762 = vunpack.c.l.b16 %v4613
    %v4763 = vunpack.c.h.b16 %v4613
    %v4764 = vunpack.c.l.b16 %v4614
    %v4765 = vunpack.c.h.b16 %v4614
    %v4766 = vunpack.c.l.b16 %v4615
    %v4767 = vunpack.c.h.b16 %v4615
    %v4768 = vunpack.c.l.b16 %v4616
    %v4769 = vunpack.c.h.b16 %v4616
    %v4770 = vunpack.c.l.b16 %v4617
    %v4771 = vunpack.c.h.b16 %v4617
    %v4772 = vunpack.c.l.b16 %v4618
    %v4773 = vunpack.c.h.b16 %v4618
    %v4774 = vunpack.c.l.b16 %v4619
    %v4775 = vunpack.c.h.b16 %v4619
    %v4776 = vunpack.c.l.b16 %v4620
    %v4777 = vunpack.c.h.b16 %v4620
    %v4778 = vunpack.c.l.b16 %v4621
    %v4779 = vunpack.c.h.b16 %v4621
    %v4780 = vunpack.c.l.b16 %v4622
    %v4781 = vunpack.c.h.b16 %v4622
    %v4782 = vunpack.c.l.b16 %v4623
    %v4783 = vunpack.c.h.b16 %v4623
    %v4784 = vunpack.c.l.b16 %v4624
    %v4785 = vunpack.c.h.b16 %v4624
    %v4786 = vunpack.c.l.b16 %v4625
    %v4787 = vunpack.c.h.b16 %v4625
    %v4788 = vunpack.c.l.b16 %v4626
    %v4789 = vunpack.c.h.b16 %v4626
    %v4790 = vunpack.c.l.b16 %v4627
    %v4791 = vunpack.c.h.b16 %v4627
    %v4792 = vunpack.c.l.b16 %v4628
    %v4793 = vunpack.c.h.b16 %v4628
    %v4794 = vunpack.c.l.b16 %v4629
    %v4795 = vunpack.c.h.b16 %v4629
    %v4796 = vunpack.c.l.b16 %v4630
    %v4797 = vunpack.c.h.b16 %v4630
    %v4798 = vunpack.c.l.b16 %v4631
    %v4799 = vunpack.c.h.b16 %v4631
    %v4800 = vunpack.c.l.b16 %v4632
    %v4801 = vunpack.c.h.b16 %v4632
    %v4802 = vunpack.c.l.b16 %v4633
    %v4803 = vunpack.c.h.b16 %v4633
    %v4804 = vunpack.c.l.b16 %v4634
    %v4805 = vunpack.c.h.b16 %v4634
    %v4806 = vunpack.c.l.b16 %v4635
    %v4807 = vunpack.c.h.b16 %v4635
    %v4808 = vunpack.c.l.b16 %v4636
    %v4809 = vunpack.c.h.b16 %v4636
    %v4810 = vunpack.c.l.b16 %v4637
    %v4811 = vunpack.c.h.b16 %v4637
    %v4812 = vunpack.c.l.b16 %v4638
    %v4813 = vunpack.c.h.b16 %v4638
    %v4814 = vunpack.c.l.b16 %v4639
    %v4815 = vunpack.c.h.b16 %v4639
    %v4816 = vunpack.c.l.b16 %v4640
    %v4817 = vunpack.c.h.b16 %v4640
    %v4818 = vunpack.c.l.b16 %v4641
    %v4819 = vunpack.c.h.b16 %v4641
    %v4820 = vunpack.c.l.b16 %v4642
    %v4821 = vunpack.c.h.b16 %v4642
    %v4822 = vunpack.c.l.b16 %v4643
    %v4823 = vunpack.c.h.b16 %v4643
    %v4824 = vunpack.c.l.b16 %v4644
    %v4825 = vunpack.c.h.b16 %v4644
    %v4826 = vunpack.c.l.b16 %v4645
    %v4827 = vunpack.c.h.b16 %v4645
    %v4828 = vunpack.c.l.b16 %v4646
    %v4829 = vunpack.c.h.b16 %v4646
    %v4830 = vunpack.c.l.b16 %v4647
    %v4831 = vunpack.c.h.b16 %v4647
    %v4832 = vunpack.c.l.b16 %v4648
    %v4833 = vunpack.c.h.b16 %v4648
    %v4834 = vunpack.c.l.b16 %v4649
    %v4835 = vunpack.c.h.b16 %v4649
    %v4836 = vunpack.c.l.b16 %v4650
    %v4837 = vunpack.c.h.b16 %v4650
    %v4838 = vunpack.c.l.b16 %v4651
    %v4839 = vunpack.c.h.b16 %v4651
    %v4840 = vunpack.c.l.b16 %v4652
    %v4841 = vunpack.c.h.b16 %v4652
    %v4842 = vunpack.c.l.b16 %v4653
    %v4843 = vunpack.c.h.b16 %v4653
    %v4844 = vunpack.c.l.b16 %v4654
    %v4845 = vunpack.c.h.b16 %v4654
    %v4846 = vunpack.c.l.b16 %v4655
    %v4847 = vunpack.c.h.b16 %v4655
    %v4848 = vpack.c.b16 %v4722, %v4720
    %v4849 = vpack.c.b16 %v4723, %v4721
    %v4850 = vpack.c.b16 %v4726, %v4724
    %v4851 = vpack.c.b16 %v4727, %v4725
    %v4852 = vpack.c.b16 %v4730, %v4728
    %v4853 = vpack.c.b16 %v4731, %v4729
    %v4854 = vpack.c.b16 %v4734, %v4732
    %v4855 = vpack.c.b16 %v4735, %v4733
    %v4856 = vpack.c.b16 %v4738, %v4736
    %v4857 = vpack.c.b16 %v4739, %v4737
    %v4858 = vpack.c.b16 %v4742, %v4740
    %v4859 = vpack.c.b16 %v4743, %v4741
    %v4860 = vpack.c.b16 %v4746, %v4744
    %v4861 = vpack.c.b16 %v4747, %v4745
    %v4862 = vpack.c.b16 %v4750, %v4748
    %v4863 = vpack.c.b16 %v4751, %v4749
    %v4864 = vpack.c.b16 %v4754, %v4752
    %v4865 = vpack.c.b16 %v4755, %v4753
    %v4866 = vpack.c.b16 %v4758, %v4756
    %v4867 = vpack.c.b16 %v4759, %v4757
    %v4868 = vpack.c.b16 %v4762, %v4760
    %v4869 = vpack.c.b16 %v4763, %v4761
    %v4870 = vpack.c.b16 %v4766, %v4764
    %v4871 = vpack.c.b16 %v4767, %v4765
    %v4872 = vpack.c.b16 %v4770, %v4768
    %v4873 = vpack.c.b16 %v4771, %v4769
    %v4874 = vpack.c.b16 %v4774, %v4772
    %v4875 = vpack.c.b16 %v4775, %v4773
    %v4876 = vpack.c.b16 %v4778, %v4776
    %v4877 = vpack.c.b16 %v4779, %v4777
    %v4878 = vpack.c.b16 %v4782, %v4780
    %v4879 = vpack.c.b16 %v4783, %v4781
    %v4880 = vpack.c.b16 %v4786, %v4784
    %v4881 = vpack.c.b16 %v4787, %v4785
    %v4882 = vpack.c.b16 %v4790, %v4788
    %v4883 = vpack.c.b16 %v4791, %v4789
    %v4884 = vpack.c.b16 %v4794, %v4792
    %v4885 = vpack.c.b16 %v4795, %v4793
    %v4886 = vpack.c.b16 %v4798, %v4796
    %v4887 = vpack.c.b16 %v4799, %v4797
    %v4888 = vpack.c.b16 %v4802, %v4800
    %v4889 = vpack.c.b16 %v4803, %v4801
    %v4890 = vpack.c.b16 %v4806, %v4804
    %v4891 = vpack.c.b16 %v4807, %v4805
    %v4892 = vpack.c.b16 %v4810, %v4808
    %v4893 = vpack.c.b16 %v4811, %v4809
    %v4894 = vpack.c.b16 %v4814, %v4812
    %v4895 = vpack.c.b16 %v4815, %v4813
    %v4896 = vpack.c.b16 %v4818, %v4816
    %v4897 = vpack.c.b16 %v4819, %v4817
    %v4898 = vpack.c.b16 %v4822, %v4820
    %v4899 = vpack.c.b16 %v4823, %v4821
    %v4900 = vpack.c.b16 %v4826, %v4824
    %v4901 = vpack.c.b16 %v4827, %v4825
    %v4902 = vpack.c.b16 %v4830, %v4828
    %v4903 = vpack.c.b16 %v4831, %v4829
    %v4904 = vpack.c.b16 %v4834, %v4832
    %v4905 = vpack.c.b16 %v4835, %v4833
    %v4906 = vpack.c.b16 %v4838, %v4836
    %v4907 = vpack.c.b16 %v4839, %v4837
    %v4908 = vpack.c.b16 %v4842, %v4840
    %v4909 = vpack.c.b16 %v4843, %v4841
    %v4910 = vpack.c.b16 %v4846, %v4844
    %v4911 = vpack.c.b16 %v4847, %v4845
    %4976 = vmatpush.bf16.msra.mxu0 %v4862
    %4977 = vmatpush.bf16.msra.mxu0 %v4860
    %4978 = vmatpush.bf16.msra.mxu0 %v4858
    %4979 = vmatpush.bf16.msra.mxu0 %v4856
    %4980 = vmatpush.bf16.msra.mxu0 %v4854
    %4981 = vmatpush.bf16.msra.mxu0 %v4852
    %4982 = vmatpush.bf16.msra.mxu0 %v4850
    %4983 = vmatpush.bf16.msra.mxu0 %v4848
    %4984 = vmatmul.bf16.gmra.mxu0 %v4584
    %v4985 = vpop.f32.mrf.mxu0
    %v4986 = vadd.f32 0.0, %v4985
    %v4987 = vpop.f32.mrf.mxu0
    %4988 = vdwg.mxu0
    %4989 = vmatpush.bf16.msra.mxu0 %v4878
    %4990 = vmatpush.bf16.msra.mxu0 %v4876
    %4991 = vmatpush.bf16.msra.mxu0 %v4874
    %4992 = vmatpush.bf16.msra.mxu0 %v4872
    %4993 = vmatpush.bf16.msra.mxu0 %v4870
    %4994 = vmatpush.bf16.msra.mxu0 %v4868
    %4995 = vmatpush.bf16.msra.mxu0 %v4866
    %4996 = vmatpush.bf16.msra.mxu0 %v4864
    %4997 = vmatmul.bf16.gmra.mxu0 %v4585
    %v4998 = vpop.f32.mrf.mxu0
    %v4999 = vadd.f32 %v4986, %v4998
    %v5000 = vpop.f32.mrf.mxu0
    %5001 = vdwg.mxu0
    %5002 = vmatpush.bf16.msra.mxu0 %v4894
    %5003 = vmatpush.bf16.msra.mxu0 %v4892
    %5004 = vmatpush.bf16.msra.mxu0 %v4890
    %5005 = vmatpush.bf16.msra.mxu0 %v4888
    %5006 = vmatpush.bf16.msra.mxu0 %v4886
    %5007 = vmatpush.bf16.msra.mxu0 %v4884
    %5008 = vmatpush.bf16.msra.mxu0 %v4882
    %5009 = vmatpush.bf16.msra.mxu0 %v4880
    %5010 = vmatmul.bf16.gmra.mxu0 %v4586
    %v5011 = vpop.f32.mrf.mxu0
    %v5012 = vadd.f32 %v4999, %v5011
    %v5013 = vpop.f32.mrf.mxu0
    %5014 = vdwg.mxu0
    %5015 = vmatpush.bf16.msra.mxu0 %v4910
    %5016 = vmatpush.bf16.msra.mxu0 %v4908
    %5017 = vmatpush.bf16.msra.mxu0 %v4906
    %5018 = vmatpush.bf16.msra.mxu0 %v4904
    %5019 = vmatpush.bf16.msra.mxu0 %v4902
    %5020 = vmatpush.bf16.msra.mxu0 %v4900
    %5021 = vmatpush.bf16.msra.mxu0 %v4898
    %5022 = vmatpush.bf16.msra.mxu0 %v4896
    %5023 = vmatmul.bf16.gmra.mxu0 %v4587
    %v5024 = vpop.f32.mrf.mxu0
    %v5025 = vadd.f32 %v5012, %v5024
    %v5026 = vpop.f32.mrf.mxu0
    %5027 = vdwg.mxu0
    %5028 = vmatpush.bf16.msra.mxu0 %v4863
    %5029 = vmatpush.bf16.msra.mxu0 %v4861
    %5030 = vmatpush.bf16.msra.mxu0 %v4859
    %5031 = vmatpush.bf16.msra.mxu0 %v4857
    %5032 = vmatpush.bf16.msra.mxu0 %v4855
    %5033 = vmatpush.bf16.msra.mxu0 %v4853
    %5034 = vmatpush.bf16.msra.mxu0 %v4851
    %5035 = vmatpush.bf16.msra.mxu0 %v4849
    %5036 = vmatmul.bf16.gmra.mxu0 %v4584
    %v5037 = vpop.f32.mrf.mxu0
    %v5038 = vadd.f32 0.0, %v5037
    %v5039 = vpop.f32.mrf.mxu0
    %5040 = vdwg.mxu0
    %5041 = vmatpush.bf16.msra.mxu0 %v4879
    %5042 = vmatpush.bf16.msra.mxu0 %v4877
    %5043 = vmatpush.bf16.msra.mxu0 %v4875
    %5044 = vmatpush.bf16.msra.mxu0 %v4873
    %5045 = vmatpush.bf16.msra.mxu0 %v4871
    %5046 = vmatpush.bf16.msra.mxu0 %v4869
    %5047 = vmatpush.bf16.msra.mxu0 %v4867
    %5048 = vmatpush.bf16.msra.mxu0 %v4865
    %5049 = vmatmul.bf16.gmra.mxu0 %v4585
    %v5050 = vpop.f32.mrf.mxu0
    %v5051 = vadd.f32 %v5038, %v5050
    %v5052 = vpop.f32.mrf.mxu0
    %5053 = vdwg.mxu0
    %5054 = vmatpush.bf16.msra.mxu0 %v4895
    %5055 = vmatpush.bf16.msra.mxu0 %v4893
    %5056 = vmatpush.bf16.msra.mxu0 %v4891
    %5057 = vmatpush.bf16.msra.mxu0 %v4889
    %5058 = vmatpush.bf16.msra.mxu0 %v4887
    %5059 = vmatpush.bf16.msra.mxu0 %v4885
    %5060 = vmatpush.bf16.msra.mxu0 %v4883
    %5061 = vmatpush.bf16.msra.mxu0 %v4881
    %5062 = vmatmul.bf16.gmra.mxu0 %v4586
    %v5063 = vpop.f32.mrf.mxu0
    %v5064 = vadd.f32 %v5051, %v5063
    %v5065 = vpop.f32.mrf.mxu0
    %5066 = vdwg.mxu0
    %5067 = vmatpush.bf16.msra.mxu0 %v4911
    %5068 = vmatpush.bf16.msra.mxu0 %v4909
    %5069 = vmatpush.bf16.msra.mxu0 %v4907
    %5070 = vmatpush.bf16.msra.mxu0 %v4905
    %5071 = vmatpush.bf16.msra.mxu0 %v4903
    %5072 = vmatpush.bf16.msra.mxu0 %v4901
    %5073 = vmatpush.bf16.msra.mxu0 %v4899
    %5074 = vmatpush.bf16.msra.mxu0 %v4897
    %5075 = vmatmul.bf16.gmra.mxu0 %v4587
    %v5076 = vpop.f32.mrf.mxu0
    %v5077 = vadd.f32 %v5064, %v5076
    %v5078 = vpop.f32.mrf.mxu0
    %5079 = vdwg.mxu0
    %s5080 = scalar_lea.vmem [#allocation10], 8
    %v5081 = vld [vmem:[%s5080] ss:$2 sm:$0x3]
    %s5082 = scalar_lea.vmem [#allocation10], 9
    %v5083 = vld [vmem:[%s5082] ss:$2 sm:$0x3]
    %v5084 = vrot.slane %v5025, 4
    %v5085 = vadd.f32 %v5025, %v5084
    %v5086 = vrot.slane %v5085, 2
    %v5087 = vadd.f32 %v5085, %v5086
    %v5088 = vrot.slane %v5087, 1
    %v5089 = vadd.f32 %v5087, %v5088
    %v5090 = vrot.slane %v5077, 4
    %v5091 = vadd.f32 %v5077, %v5090
    %v5092 = vrot.slane %v5091, 2
    %v5093 = vadd.f32 %v5091, %v5092
    %v5094 = vrot.slane %v5093, 1
    %v5095 = vadd.f32 %v5093, %v5094
    %v5096 = vmul.f32 %v5089, %v4393
    %v5097 = vmul.f32 %v5095, %v4393
    %v5098 = vsub.f32 %v5025, %v5096
    %v5099 = vsub.f32 %v5077, %v5097
    %v5100 = vmul.f32 %v5098, %v5098
    %v5101 = vmul.f32 %v5099, %v5099
    %v5102 = vrot.slane %v5100, 4
    %v5103 = vadd.f32 %v5100, %v5102
    %v5104 = vrot.slane %v5103, 2
    %v5105 = vadd.f32 %v5103, %v5104
    %v5106 = vrot.slane %v5105, 1
    %v5107 = vadd.f32 %v5105, %v5106
    %v5108 = vrot.slane %v5101, 4
    %v5109 = vadd.f32 %v5101, %v5108
    %v5110 = vrot.slane %v5109, 2
    %v5111 = vadd.f32 %v5109, %v5110
    %v5112 = vrot.slane %v5111, 1
    %v5113 = vadd.f32 %v5111, %v5112
    %v5114 = vmul.f32 %v5107, %v4393
    %v5115 = vmul.f32 %v5113, %v4393
    %v5116 = vadd.f32 %v5114, 1e-05
    %v5117 = vadd.f32 %v5115, 1e-05
    %v5118 = vrsqrt.pop %v5116
    %v5119 = vmul.f32 %v5118, %v5116
    %v5120 = vmul.f32 %v5119, %v5118
    %v5121 = vmul.f32 0.5, %v5120
    %v5122 = vsub.f32 1.5, %v5121
    %v5123 = vmul.f32 %v5118, %v5122
    %vm5124 = vweird.f32 %v5116
    %vm5125 = vweird.f32 %v5118
    %vm5126 = vmor %vm5124, %vm5125
    %v5127 = vsel %vm5126, %v5118, %v5123
    %v5128 = vrsqrt.pop %v5117
    %v5129 = vmul.f32 %v5128, %v5117
    %v5130 = vmul.f32 %v5129, %v5128
    %v5131 = vmul.f32 0.5, %v5130
    %v5132 = vsub.f32 1.5, %v5131
    %v5133 = vmul.f32 %v5128, %v5132
    %vm5134 = vweird.f32 %v5117
    %vm5135 = vweird.f32 %v5128
    %vm5136 = vmor %vm5134, %vm5135
    %v5137 = vsel %vm5136, %v5128, %v5133
    %v5138 = vmul.f32 %v5098, %v5127
    %v5139 = vmul.f32 %v5099, %v5137
    %v5141 = vperm.slane %v5081, 0
    %v5142 = vperm.slane %v5081, 1
    %v5145 = vmul.f32 %v5138, %v5141
    %v5146 = vmul.f32 %v5139, %v5142
    %v5148 = vperm.slane %v5083, 0
    %v5149 = vperm.slane %v5083, 1
    %v5152 = vadd.f32 %v5145, %v5148
    %v5153 = vadd.f32 %v5146, %v5149
    %v5154 = vxor.u32 %v5152, 2147483648
    %v5155 = vxor.u32 %v5153, 2147483648
    %v5156 = vmul.f32 %v5154, 1.442695
    %v5157 = vpow.pop %v5156
    %v5158 = vmul.f32 %v5155, 1.442695
    %v5159 = vpow.pop %v5158
    %v5160 = vadd.f32 %v5157, 1.0
    %v5161 = vadd.f32 %v5159, 1.0
    %v5162 = vrcp.pop %v5160
    %v5163 = vmul.f32 %v5160, %v5162
    %v5164 = vsub.f32 1.0, %v5163
    %v5165 = vmul.f32 %v5162, %v5164
    %v5166 = vadd.f32 %v5162, %v5165
    %vm5167 = vweird.f32 %v5160
    %vm5168 = vweird.f32 %v5162
    %vm5169 = vmor %vm5167, %vm5168
    %v5170 = vsel %vm5169, %v5162, %v5166
    %v5171 = vand.u32 2147483647, %v5160
    %vm5172 = vcmp.eq.f32.partialorder %v5171, 8.507059e+37
    %v5173 = vand.u32 %v5160, 2147483648
    %v5174 = vor.u32 1.1754944e-38, %v5173
    %v5175 = vsel %vm5172, %v5174, %v5170
    %v5176 = vmul.f32 1.0, %v5175
    %v5177 = vrcp.pop %v5161
    %v5178 = vmul.f32 %v5161, %v5177
    %v5179 = vsub.f32 1.0, %v5178
    %v5180 = vmul.f32 %v5177, %v5179
    %v5181 = vadd.f32 %v5177, %v5180
    %vm5182 = vweird.f32 %v5161
    %vm5183 = vweird.f32 %v5177
    %vm5184 = vmor %vm5182, %vm5183
    %v5185 = vsel %vm5184, %v5177, %v5181
    %v5186 = vand.u32 2147483647, %v5161
    %vm5187 = vcmp.eq.f32.partialorder %v5186, 8.507059e+37
    %v5188 = vand.u32 %v5161, 2147483648
    %v5189 = vor.u32 1.1754944e-38, %v5188
    %v5190 = vsel %vm5187, %v5189, %v5185
    %v5191 = vmul.f32 1.0, %v5190
    %v5192 = vpack.c.bf16 %v5176, %v5176
    %v5193 = vpack.c.bf16 %v5191, %v5191
    %s5194 = smul.u32 4, 32
    %s5195 = smul.u32 %s5194, 1
    %s5196 = sshll.u32 %s5195, 4
    %5197 = dma.done %s78, %s5196
    %v5198 = vld [vmem:[#allocation4] sm:$0xf]
    %v5199 = vld [vmem:[#allocation4 + $0x4] sm:$0xf]
    %v5200 = vld [vmem:[#allocation4 + $0x8] sm:$0xf]
    %v5201 = vld [vmem:[#allocation4 + $0xc] sm:$0xf]
    %v5202 = vld [vmem:[#allocation4 + $0x10] sm:$0xf]
    %v5203 = vld [vmem:[#allocation4 + $0x14] sm:$0xf]
    %v5204 = vld [vmem:[#allocation4 + $0x18] sm:$0xf]
    %v5205 = vld [vmem:[#allocation4 + $0x1c] sm:$0xf]
    %v5206 = vld [vmem:[#allocation4 + $0x20] sm:$0xf]
    %v5207 = vld [vmem:[#allocation4 + $0x24] sm:$0xf]
    %v5208 = vld [vmem:[#allocation4 + $0x28] sm:$0xf]
    %v5209 = vld [vmem:[#allocation4 + $0x2c] sm:$0xf]
    %v5210 = vld [vmem:[#allocation4 + $0x30] sm:$0xf]
    %v5211 = vld [vmem:[#allocation4 + $0x34] sm:$0xf]
    %v5212 = vld [vmem:[#allocation4 + $0x38] sm:$0xf]
    %v5213 = vld [vmem:[#allocation4 + $0x3c] sm:$0xf]
    %v5214 = vld [vmem:[#allocation4 + $0x40] sm:$0xf]
    %v5215 = vld [vmem:[#allocation4 + $0x44] sm:$0xf]
    %v5216 = vld [vmem:[#allocation4 + $0x48] sm:$0xf]
    %v5217 = vld [vmem:[#allocation4 + $0x4c] sm:$0xf]
    %v5218 = vld [vmem:[#allocation4 + $0x50] sm:$0xf]
    %v5219 = vld [vmem:[#allocation4 + $0x54] sm:$0xf]
    %v5220 = vld [vmem:[#allocation4 + $0x58] sm:$0xf]
    %v5221 = vld [vmem:[#allocation4 + $0x5c] sm:$0xf]
    %v5222 = vld [vmem:[#allocation4 + $0x60] sm:$0xf]
    %v5223 = vld [vmem:[#allocation4 + $0x64] sm:$0xf]
    %v5224 = vld [vmem:[#allocation4 + $0x68] sm:$0xf]
    %v5225 = vld [vmem:[#allocation4 + $0x6c] sm:$0xf]
    %v5226 = vld [vmem:[#allocation4 + $0x70] sm:$0xf]
    %v5227 = vld [vmem:[#allocation4 + $0x74] sm:$0xf]
    %v5228 = vld [vmem:[#allocation4 + $0x78] sm:$0xf]
    %v5229 = vld [vmem:[#allocation4 + $0x7c] sm:$0xf]
    %v5262 = vunpack.c.l.b16 %v5198
    %v5263 = vunpack.c.l.b16 %v5199
    %v5264 = vunpack.c.l.b16 %v5200
    %v5265 = vunpack.c.l.b16 %v5201
    %v5266 = vunpack.c.l.b16 %v5202
    %v5267 = vunpack.c.l.b16 %v5203
    %v5268 = vunpack.c.l.b16 %v5204
    %v5269 = vunpack.c.l.b16 %v5205
    %v5270 = vunpack.c.l.b16 %v5206
    %v5271 = vunpack.c.l.b16 %v5207
    %v5272 = vunpack.c.l.b16 %v5208
    %v5273 = vunpack.c.l.b16 %v5209
    %v5274 = vunpack.c.l.b16 %v5210
    %v5275 = vunpack.c.l.b16 %v5211
    %v5276 = vunpack.c.l.b16 %v5212
    %v5277 = vunpack.c.l.b16 %v5213
    %v5278 = vunpack.c.l.b16 %v5214
    %v5279 = vunpack.c.l.b16 %v5215
    %v5280 = vunpack.c.l.b16 %v5216
    %v5281 = vunpack.c.l.b16 %v5217
    %v5282 = vunpack.c.l.b16 %v5218
    %v5283 = vunpack.c.l.b16 %v5219
    %v5284 = vunpack.c.l.b16 %v5220
    %v5285 = vunpack.c.l.b16 %v5221
    %v5286 = vunpack.c.l.b16 %v5222
    %v5287 = vunpack.c.l.b16 %v5223
    %v5288 = vunpack.c.l.b16 %v5224
    %v5289 = vunpack.c.l.b16 %v5225
    %v5290 = vunpack.c.l.b16 %v5226
    %v5291 = vunpack.c.l.b16 %v5227
    %v5292 = vunpack.c.l.b16 %v5228
    %v5293 = vunpack.c.l.b16 %v5229
    %v5294 = vpack.c.b16 %v5263, %v5262
    %v5295 = vpack.c.b16 %v5265, %v5264
    %v5296 = vpack.c.b16 %v5267, %v5266
    %v5297 = vpack.c.b16 %v5269, %v5268
    %v5298 = vpack.c.b16 %v5271, %v5270
    %v5299 = vpack.c.b16 %v5273, %v5272
    %v5300 = vpack.c.b16 %v5275, %v5274
    %v5301 = vpack.c.b16 %v5277, %v5276
    %v5302 = vpack.c.b16 %v5279, %v5278
    %v5303 = vpack.c.b16 %v5281, %v5280
    %v5304 = vpack.c.b16 %v5283, %v5282
    %v5305 = vpack.c.b16 %v5285, %v5284
    %v5306 = vpack.c.b16 %v5287, %v5286
    %v5307 = vpack.c.b16 %v5289, %v5288
    %v5308 = vpack.c.b16 %v5291, %v5290
    %v5309 = vpack.c.b16 %v5293, %v5292
    %5326 = vmatpush.bf16.msra.mxu0 %v5301
    %5327 = vmatpush.bf16.msra.mxu0 %v5300
    %5328 = vmatpush.bf16.msra.mxu0 %v5299
    %5329 = vmatpush.bf16.msra.mxu0 %v5298
    %5330 = vmatpush.bf16.msra.mxu0 %v5297
    %5331 = vmatpush.bf16.msra.mxu0 %v5296
    %5332 = vmatpush.bf16.msra.mxu0 %v5295
    %5333 = vmatpush.bf16.msra.mxu0 %v5294
    %5334 = vmatmul.bf16.gmra.mxu0 %v5192
    %v5335 = vpop.f32.mrf.mxu0
    %v5336 = vadd.f32 0.0, %v5335
    %v5337 = vpop.f32.mrf.mxu0
    %5338 = vdwg.mxu0
    %5339 = vmatpush.bf16.msra.mxu0 %v5309
    %5340 = vmatpush.bf16.msra.mxu0 %v5308
    %5341 = vmatpush.bf16.msra.mxu0 %v5307
    %5342 = vmatpush.bf16.msra.mxu0 %v5306
    %5343 = vmatpush.bf16.msra.mxu0 %v5305
    %5344 = vmatpush.bf16.msra.mxu0 %v5304
    %5345 = vmatpush.bf16.msra.mxu0 %v5303
    %5346 = vmatpush.bf16.msra.mxu0 %v5302
    %5347 = vmatmul.bf16.gmra.mxu0 %v5193
    %v5348 = vpop.f32.mrf.mxu0
    %v5349 = vadd.f32 %v5336, %v5348
    %v5350 = vpop.f32.mrf.mxu0
    %5351 = vdwg.mxu0
    %v5352 = vld [vmem:[#allocation10 + $0xc] sm:$0x1]
    %v5353 = vld [vmem:[#allocation10 + $0xd] sm:$0x1]
    %v5354 = vrot.slane %v5349, 4
    %v5355 = vadd.f32 %v5349, %v5354
    %v5356 = vrot.slane %v5355, 2
    %v5357 = vadd.f32 %v5355, %v5356
    %v5358 = vrot.slane %v5357, 1
    %v5359 = vadd.f32 %v5357, %v5358
    %v5360 = vmul.f32 %v5359, %v4393
    %v5361 = vsub.f32 %v5349, %v5360
    %v5362 = vmul.f32 %v5361, %v5361
    %v5363 = vrot.slane %v5362, 4
    %v5364 = vadd.f32 %v5362, %v5363
    %v5365 = vrot.slane %v5364, 2
    %v5366 = vadd.f32 %v5364, %v5365
    %v5367 = vrot.slane %v5366, 1
    %v5368 = vadd.f32 %v5366, %v5367
    %v5369 = vmul.f32 %v5368, %v4393
    %v5370 = vadd.f32 %v5369, 1e-05
    %v5371 = vrsqrt.pop %v5370
    %v5372 = vmul.f32 %v5371, %v5370
    %v5373 = vmul.f32 %v5372, %v5371
    %v5374 = vmul.f32 0.5, %v5373
    %v5375 = vsub.f32 1.5, %v5374
    %v5376 = vmul.f32 %v5371, %v5375
    %vm5377 = vweird.f32 %v5370
    %vm5378 = vweird.f32 %v5371
    %vm5379 = vmor %vm5377, %vm5378
    %v5380 = vsel %vm5379, %v5371, %v5376
    %v5381 = vmul.f32 %v5361, %v5380
    %v5382 = vperm.slane %v5352, 0
    %v5383 = vmul.f32 %v5381, %v5382
    %v5384 = vperm.slane %v5353, 0
    %v5385 = vadd.f32 %v5383, %v5384
    %v5386 = vxor.u32 %v5385, 2147483648
    %v5387 = vmul.f32 %v5386, 1.442695
    %v5388 = vpow.pop %v5387
    %v5389 = vadd.f32 %v5388, 1.0
    %v5390 = vrcp.pop %v5389
    %v5391 = vmul.f32 %v5389, %v5390
    %v5392 = vsub.f32 1.0, %v5391
    %v5393 = vmul.f32 %v5390, %v5392
    %v5394 = vadd.f32 %v5390, %v5393
    %vm5395 = vweird.f32 %v5389
    %vm5396 = vweird.f32 %v5390
    %vm5397 = vmor %vm5395, %vm5396
    %v5398 = vsel %vm5397, %v5390, %v5394
    %v5399 = vand.u32 2147483647, %v5389
    %vm5400 = vcmp.eq.f32.partialorder %v5399, 8.507059e+37
    %v5401 = vand.u32 %v5389, 2147483648
    %v5402 = vor.u32 1.1754944e-38, %v5401
    %v5403 = vsel %vm5400, %v5402, %v5398
    %v5404 = vmul.f32 1.0, %v5403
    %5405 = vst [vmem:[#allocation15] sm:$0xff] %v5404
    %v5406 = vpack.c.bf16 %v5404, %v5404
    %s5407 = smul.u32 4, 16
    %s5408 = smul.u32 %s5407, 2
    %s5409 = sshll.u32 %s5408, 4
    %5410 = dma.done %s92, %s5409
    %v5411 = vld [vmem:[#allocation5] sm:$0xff]
    %v5412 = vld [vmem:[#allocation5 + $0x8] sm:$0xff]
    %v5413 = vld [vmem:[#allocation5 + $0x10] sm:$0xff]
    %v5414 = vld [vmem:[#allocation5 + $0x18] sm:$0xff]
    %v5415 = vld [vmem:[#allocation5 + $0x20] sm:$0xff]
    %v5416 = vld [vmem:[#allocation5 + $0x28] sm:$0xff]
    %v5417 = vld [vmem:[#allocation5 + $0x30] sm:$0xff]
    %v5418 = vld [vmem:[#allocation5 + $0x38] sm:$0xff]
    %v5419 = vld [vmem:[#allocation5 + $0x40] sm:$0xff]
    %v5420 = vld [vmem:[#allocation5 + $0x48] sm:$0xff]
    %v5421 = vld [vmem:[#allocation5 + $0x50] sm:$0xff]
    %v5422 = vld [vmem:[#allocation5 + $0x58] sm:$0xff]
    %v5423 = vld [vmem:[#allocation5 + $0x60] sm:$0xff]
    %v5424 = vld [vmem:[#allocation5 + $0x68] sm:$0xff]
    %v5425 = vld [vmem:[#allocation5 + $0x70] sm:$0xff]
    %v5426 = vld [vmem:[#allocation5 + $0x78] sm:$0xff]
    %v5443 = vunpack.c.l.b16 %v5411
    %v5444 = vunpack.c.h.b16 %v5411
    %v5445 = vunpack.c.l.b16 %v5412
    %v5446 = vunpack.c.h.b16 %v5412
    %v5447 = vunpack.c.l.b16 %v5413
    %v5448 = vunpack.c.h.b16 %v5413
    %v5449 = vunpack.c.l.b16 %v5414
    %v5450 = vunpack.c.h.b16 %v5414
    %v5451 = vunpack.c.l.b16 %v5415
    %v5452 = vunpack.c.h.b16 %v5415
    %v5453 = vunpack.c.l.b16 %v5416
    %v5454 = vunpack.c.h.b16 %v5416
    %v5455 = vunpack.c.l.b16 %v5417
    %v5456 = vunpack.c.h.b16 %v5417
    %v5457 = vunpack.c.l.b16 %v5418
    %v5458 = vunpack.c.h.b16 %v5418
    %v5459 = vunpack.c.l.b16 %v5419
    %v5460 = vunpack.c.h.b16 %v5419
    %v5461 = vunpack.c.l.b16 %v5420
    %v5462 = vunpack.c.h.b16 %v5420
    %v5463 = vunpack.c.l.b16 %v5421
    %v5464 = vunpack.c.h.b16 %v5421
    %v5465 = vunpack.c.l.b16 %v5422
    %v5466 = vunpack.c.h.b16 %v5422
    %v5467 = vunpack.c.l.b16 %v5423
    %v5468 = vunpack.c.h.b16 %v5423
    %v5469 = vunpack.c.l.b16 %v5424
    %v5470 = vunpack.c.h.b16 %v5424
    %v5471 = vunpack.c.l.b16 %v5425
    %v5472 = vunpack.c.h.b16 %v5425
    %v5473 = vunpack.c.l.b16 %v5426
    %v5474 = vunpack.c.h.b16 %v5426
    %v5475 = vpack.c.b16 %v5445, %v5443
    %v5476 = vpack.c.b16 %v5446, %v5444
    %v5477 = vpack.c.b16 %v5449, %v5447
    %v5478 = vpack.c.b16 %v5450, %v5448
    %v5479 = vpack.c.b16 %v5453, %v5451
    %v5480 = vpack.c.b16 %v5454, %v5452
    %v5481 = vpack.c.b16 %v5457, %v5455
    %v5482 = vpack.c.b16 %v5458, %v5456
    %v5483 = vpack.c.b16 %v5461, %v5459
    %v5484 = vpack.c.b16 %v5462, %v5460
    %v5485 = vpack.c.b16 %v5465, %v5463
    %v5486 = vpack.c.b16 %v5466, %v5464
    %v5487 = vpack.c.b16 %v5469, %v5467
    %v5488 = vpack.c.b16 %v5470, %v5468
    %v5489 = vpack.c.b16 %v5473, %v5471
    %v5490 = vpack.c.b16 %v5474, %v5472
    %5507 = vmatpush.bf16.msra.mxu0 %v5489
    %5508 = vmatpush.bf16.msra.mxu0 %v5487
    %5509 = vmatpush.bf16.msra.mxu0 %v5485
    %5510 = vmatpush.bf16.msra.mxu0 %v5483
    %5511 = vmatpush.bf16.msra.mxu0 %v5481
    %5512 = vmatpush.bf16.msra.mxu0 %v5479
    %5513 = vmatpush.bf16.msra.mxu0 %v5477
    %5514 = vmatpush.bf16.msra.mxu0 %v5475
    %5515 = vmatmul.bf16.gmra.mxu0 %v5406
    %v5516 = vpop.f32.mrf.mxu0
    %v5517 = vadd.f32 0.0, %v5516
    %v5518 = vpop.f32.mrf.mxu0
    %5519 = vdwg.mxu0
    %5520 = vmatpush.bf16.msra.mxu0 %v5490
    %5521 = vmatpush.bf16.msra.mxu0 %v5488
    %5522 = vmatpush.bf16.msra.mxu0 %v5486
    %5523 = vmatpush.bf16.msra.mxu0 %v5484
    %5524 = vmatpush.bf16.msra.mxu0 %v5482
    %5525 = vmatpush.bf16.msra.mxu0 %v5480
    %5526 = vmatpush.bf16.msra.mxu0 %v5478
    %5527 = vmatpush.bf16.msra.mxu0 %v5476
    %5528 = vmatmul.bf16.gmra.mxu0 %v5406
    %v5529 = vpop.f32.mrf.mxu0
    %v5530 = vadd.f32 0.0, %v5529
    %v5531 = vpop.f32.mrf.mxu0
    %5532 = vdwg.mxu0
    %s5533 = scalar_lea.vmem [#allocation10], 14
    %v5534 = vld [vmem:[%s5533] ss:$2 sm:$0x3]
    %s5535 = scalar_lea.vmem [#allocation10], 15
    %v5536 = vld [vmem:[%s5535] ss:$2 sm:$0x3]
    %v5537 = vrot.slane %v5517, 4
    %v5538 = vadd.f32 %v5517, %v5537
    %v5539 = vrot.slane %v5538, 2
    %v5540 = vadd.f32 %v5538, %v5539
    %v5541 = vrot.slane %v5540, 1
    %v5542 = vadd.f32 %v5540, %v5541
    %v5543 = vrot.slane %v5530, 4
    %v5544 = vadd.f32 %v5530, %v5543
    %v5545 = vrot.slane %v5544, 2
    %v5546 = vadd.f32 %v5544, %v5545
    %v5547 = vrot.slane %v5546, 1
    %v5548 = vadd.f32 %v5546, %v5547
    %v5549 = vmul.f32 %v5542, %v4393
    %v5550 = vmul.f32 %v5548, %v4393
    %v5551 = vsub.f32 %v5517, %v5549
    %v5552 = vsub.f32 %v5530, %v5550
    %v5553 = vmul.f32 %v5551, %v5551
    %v5554 = vmul.f32 %v5552, %v5552
    %v5555 = vrot.slane %v5553, 4
    %v5556 = vadd.f32 %v5553, %v5555
    %v5557 = vrot.slane %v5556, 2
    %v5558 = vadd.f32 %v5556, %v5557
    %v5559 = vrot.slane %v5558, 1
    %v5560 = vadd.f32 %v5558, %v5559
    %v5561 = vrot.slane %v5554, 4
    %v5562 = vadd.f32 %v5554, %v5561
    %v5563 = vrot.slane %v5562, 2
    %v5564 = vadd.f32 %v5562, %v5563
    %v5565 = vrot.slane %v5564, 1
    %v5566 = vadd.f32 %v5564, %v5565
    %v5567 = vmul.f32 %v5560, %v4393
    %v5568 = vmul.f32 %v5566, %v4393
    %v5569 = vadd.f32 %v5567, 1e-05
    %v5570 = vadd.f32 %v5568, 1e-05
    %v5571 = vrsqrt.pop %v5569
    %v5572 = vmul.f32 %v5571, %v5569
    %v5573 = vmul.f32 %v5572, %v5571
    %v5574 = vmul.f32 0.5, %v5573
    %v5575 = vsub.f32 1.5, %v5574
    %v5576 = vmul.f32 %v5571, %v5575
    %vm5577 = vweird.f32 %v5569
    %vm5578 = vweird.f32 %v5571
    %vm5579 = vmor %vm5577, %vm5578
    %v5580 = vsel %vm5579, %v5571, %v5576
    %v5581 = vrsqrt.pop %v5570
    %v5582 = vmul.f32 %v5581, %v5570
    %v5583 = vmul.f32 %v5582, %v5581
    %v5584 = vmul.f32 0.5, %v5583
    %v5585 = vsub.f32 1.5, %v5584
    %v5586 = vmul.f32 %v5581, %v5585
    %vm5587 = vweird.f32 %v5570
    %vm5588 = vweird.f32 %v5581
    %vm5589 = vmor %vm5587, %vm5588
    %v5590 = vsel %vm5589, %v5581, %v5586
    %v5591 = vmul.f32 %v5551, %v5580
    %v5592 = vmul.f32 %v5552, %v5590
    %v5594 = vperm.slane %v5534, 0
    %v5595 = vperm.slane %v5534, 1
    %v5598 = vmul.f32 %v5591, %v5594
    %v5599 = vmul.f32 %v5592, %v5595
    %v5601 = vperm.slane %v5536, 0
    %v5602 = vperm.slane %v5536, 1
    %v5605 = vadd.f32 %v5598, %v5601
    %v5606 = vadd.f32 %v5599, %v5602
    %vm5607 = vcmp.ge.f32.partialorder %v5605, 0.0
    %vm5608 = vcmp.ge.f32.partialorder %v5606, 0.0
    %s5609 = sld [smem:[#allocation14]]
    %v5610 = vstv %s5609
    %v5611 = vmul.f32 %v5610, %v5605
    %v5612 = vmul.f32 %v5610, %v5606
    %v5613 = vsel %vm5607, %v5605, %v5611
    %v5614 = vsel %vm5608, %v5606, %v5612
    %v5615 = vpack.c.bf16 %v5613, %v5613
    %v5616 = vpack.c.bf16 %v5614, %v5614
    %s5617 = smul.u32 %s5194, 4
    %s5618 = sshll.u32 %s5617, 4
    %5619 = dma.done %s106, %s5618
    %v5620 = vld [vmem:[#allocation6] sm:$0xff]
    %v5621 = vld [vmem:[#allocation6 + $0x8] sm:$0xff]
    %v5622 = vld [vmem:[#allocation6 + $0x10] sm:$0xff]
    %v5623 = vld [vmem:[#allocation6 + $0x18] sm:$0xff]
    %v5624 = vld [vmem:[#allocation6 + $0x20] sm:$0xff]
    %v5625 = vld [vmem:[#allocation6 + $0x28] sm:$0xff]
    %v5626 = vld [vmem:[#allocation6 + $0x30] sm:$0xff]
    %v5627 = vld [vmem:[#allocation6 + $0x38] sm:$0xff]
    %v5628 = vld [vmem:[#allocation6 + $0x40] sm:$0xff]
    %v5629 = vld [vmem:[#allocation6 + $0x48] sm:$0xff]
    %v5630 = vld [vmem:[#allocation6 + $0x50] sm:$0xff]
    %v5631 = vld [vmem:[#allocation6 + $0x58] sm:$0xff]
    %v5632 = vld [vmem:[#allocation6 + $0x60] sm:$0xff]
    %v5633 = vld [vmem:[#allocation6 + $0x68] sm:$0xff]
    %v5634 = vld [vmem:[#allocation6 + $0x70] sm:$0xff]
    %v5635 = vld [vmem:[#allocation6 + $0x78] sm:$0xff]
    %v5636 = vld [vmem:[#allocation6 + $0x80] sm:$0xff]
    %v5637 = vld [vmem:[#allocation6 + $0x88] sm:$0xff]
    %v5638 = vld [vmem:[#allocation6 + $0x90] sm:$0xff]
    %v5639 = vld [vmem:[#allocation6 + $0x98] sm:$0xff]
    %v5640 = vld [vmem:[#allocation6 + $0xa0] sm:$0xff]
    %v5641 = vld [vmem:[#allocation6 + $0xa8] sm:$0xff]
    %v5642 = vld [vmem:[#allocation6 + $0xb0] sm:$0xff]
    %v5643 = vld [vmem:[#allocation6 + $0xb8] sm:$0xff]
    %v5644 = vld [vmem:[#allocation6 + $0xc0] sm:$0xff]
    %v5645 = vld [vmem:[#allocation6 + $0xc8] sm:$0xff]
    %v5646 = vld [vmem:[#allocation6 + $0xd0] sm:$0xff]
    %v5647 = vld [vmem:[#allocation6 + $0xd8] sm:$0xff]
    %v5648 = vld [vmem:[#allocation6 + $0xe0] sm:$0xff]
    %v5649 = vld [vmem:[#allocation6 + $0xe8] sm:$0xff]
    %v5650 = vld [vmem:[#allocation6 + $0xf0] sm:$0xff]
    %v5651 = vld [vmem:[#allocation6 + $0xf8] sm:$0xff]
    %v5652 = vld [vmem:[#allocation6 + $0x100] sm:$0xff]
    %v5653 = vld [vmem:[#allocation6 + $0x108] sm:$0xff]
    %v5654 = vld [vmem:[#allocation6 + $0x110] sm:$0xff]
    %v5655 = vld [vmem:[#allocation6 + $0x118] sm:$0xff]
    %v5656 = vld [vmem:[#allocation6 + $0x120] sm:$0xff]
    %v5657 = vld [vmem:[#allocation6 + $0x128] sm:$0xff]
    %v5658 = vld [vmem:[#allocation6 + $0x130] sm:$0xff]
    %v5659 = vld [vmem:[#allocation6 + $0x138] sm:$0xff]
    %v5660 = vld [vmem:[#allocation6 + $0x140] sm:$0xff]
    %v5661 = vld [vmem:[#allocation6 + $0x148] sm:$0xff]
    %v5662 = vld [vmem:[#allocation6 + $0x150] sm:$0xff]
    %v5663 = vld [vmem:[#allocation6 + $0x158] sm:$0xff]
    %v5664 = vld [vmem:[#allocation6 + $0x160] sm:$0xff]
    %v5665 = vld [vmem:[#allocation6 + $0x168] sm:$0xff]
    %v5666 = vld [vmem:[#allocation6 + $0x170] sm:$0xff]
    %v5667 = vld [vmem:[#allocation6 + $0x178] sm:$0xff]
    %v5668 = vld [vmem:[#allocation6 + $0x180] sm:$0xff]
    %v5669 = vld [vmem:[#allocation6 + $0x188] sm:$0xff]
    %v5670 = vld [vmem:[#allocation6 + $0x190] sm:$0xff]
    %v5671 = vld [vmem:[#allocation6 + $0x198] sm:$0xff]
    %v5672 = vld [vmem:[#allocation6 + $0x1a0] sm:$0xff]
    %v5673 = vld [vmem:[#allocation6 + $0x1a8] sm:$0xff]
    %v5674 = vld [vmem:[#allocation6 + $0x1b0] sm:$0xff]
    %v5675 = vld [vmem:[#allocation6 + $0x1b8] sm:$0xff]
    %v5676 = vld [vmem:[#allocation6 + $0x1c0] sm:$0xff]
    %v5677 = vld [vmem:[#allocation6 + $0x1c8] sm:$0xff]
    %v5678 = vld [vmem:[#allocation6 + $0x1d0] sm:$0xff]
    %v5679 = vld [vmem:[#allocation6 + $0x1d8] sm:$0xff]
    %v5680 = vld [vmem:[#allocation6 + $0x1e0] sm:$0xff]
    %v5681 = vld [vmem:[#allocation6 + $0x1e8] sm:$0xff]
    %v5682 = vld [vmem:[#allocation6 + $0x1f0] sm:$0xff]
    %v5683 = vld [vmem:[#allocation6 + $0x1f8] sm:$0xff]
    %v5748 = vunpack.c.l.b16 %v5620
    %v5749 = vunpack.c.h.b16 %v5620
    %v5750 = vunpack.c.l.b16 %v5621
    %v5751 = vunpack.c.h.b16 %v5621
    %v5752 = vunpack.c.l.b16 %v5622
    %v5753 = vunpack.c.h.b16 %v5622
    %v5754 = vunpack.c.l.b16 %v5623
    %v5755 = vunpack.c.h.b16 %v5623
    %v5756 = vunpack.c.l.b16 %v5624
    %v5757 = vunpack.c.h.b16 %v5624
    %v5758 = vunpack.c.l.b16 %v5625
    %v5759 = vunpack.c.h.b16 %v5625
    %v5760 = vunpack.c.l.b16 %v5626
    %v5761 = vunpack.c.h.b16 %v5626
    %v5762 = vunpack.c.l.b16 %v5627
    %v5763 = vunpack.c.h.b16 %v5627
    %v5764 = vunpack.c.l.b16 %v5628
    %v5765 = vunpack.c.h.b16 %v5628
    %v5766 = vunpack.c.l.b16 %v5629
    %v5767 = vunpack.c.h.b16 %v5629
    %v5768 = vunpack.c.l.b16 %v5630
    %v5769 = vunpack.c.h.b16 %v5630
    %v5770 = vunpack.c.l.b16 %v5631
    %v5771 = vunpack.c.h.b16 %v5631
    %v5772 = vunpack.c.l.b16 %v5632
    %v5773 = vunpack.c.h.b16 %v5632
    %v5774 = vunpack.c.l.b16 %v5633
    %v5775 = vunpack.c.h.b16 %v5633
    %v5776 = vunpack.c.l.b16 %v5634
    %v5777 = vunpack.c.h.b16 %v5634
    %v5778 = vunpack.c.l.b16 %v5635
    %v5779 = vunpack.c.h.b16 %v5635
    %v5780 = vunpack.c.l.b16 %v5636
    %v5781 = vunpack.c.h.b16 %v5636
    %v5782 = vunpack.c.l.b16 %v5637
    %v5783 = vunpack.c.h.b16 %v5637
    %v5784 = vunpack.c.l.b16 %v5638
    %v5785 = vunpack.c.h.b16 %v5638
    %v5786 = vunpack.c.l.b16 %v5639
    %v5787 = vunpack.c.h.b16 %v5639
    %v5788 = vunpack.c.l.b16 %v5640
    %v5789 = vunpack.c.h.b16 %v5640
    %v5790 = vunpack.c.l.b16 %v5641
    %v5791 = vunpack.c.h.b16 %v5641
    %v5792 = vunpack.c.l.b16 %v5642
    %v5793 = vunpack.c.h.b16 %v5642
    %v5794 = vunpack.c.l.b16 %v5643
    %v5795 = vunpack.c.h.b16 %v5643
    %v5796 = vunpack.c.l.b16 %v5644
    %v5797 = vunpack.c.h.b16 %v5644
    %v5798 = vunpack.c.l.b16 %v5645
    %v5799 = vunpack.c.h.b16 %v5645
    %v5800 = vunpack.c.l.b16 %v5646
    %v5801 = vunpack.c.h.b16 %v5646
    %v5802 = vunpack.c.l.b16 %v5647
    %v5803 = vunpack.c.h.b16 %v5647
    %v5804 = vunpack.c.l.b16 %v5648
    %v5805 = vunpack.c.h.b16 %v5648
    %v5806 = vunpack.c.l.b16 %v5649
    %v5807 = vunpack.c.h.b16 %v5649
    %v5808 = vunpack.c.l.b16 %v5650
    %v5809 = vunpack.c.h.b16 %v5650
    %v5810 = vunpack.c.l.b16 %v5651
    %v5811 = vunpack.c.h.b16 %v5651
    %v5812 = vunpack.c.l.b16 %v5652
    %v5813 = vunpack.c.h.b16 %v5652
    %v5814 = vunpack.c.l.b16 %v5653
    %v5815 = vunpack.c.h.b16 %v5653
    %v5816 = vunpack.c.l.b16 %v5654
    %v5817 = vunpack.c.h.b16 %v5654
    %v5818 = vunpack.c.l.b16 %v5655
    %v5819 = vunpack.c.h.b16 %v5655
    %v5820 = vunpack.c.l.b16 %v5656
    %v5821 = vunpack.c.h.b16 %v5656
    %v5822 = vunpack.c.l.b16 %v5657
    %v5823 = vunpack.c.h.b16 %v5657
    %v5824 = vunpack.c.l.b16 %v5658
    %v5825 = vunpack.c.h.b16 %v5658
    %v5826 = vunpack.c.l.b16 %v5659
    %v5827 = vunpack.c.h.b16 %v5659
    %v5828 = vunpack.c.l.b16 %v5660
    %v5829 = vunpack.c.h.b16 %v5660
    %v5830 = vunpack.c.l.b16 %v5661
    %v5831 = vunpack.c.h.b16 %v5661
    %v5832 = vunpack.c.l.b16 %v5662
    %v5833 = vunpack.c.h.b16 %v5662
    %v5834 = vunpack.c.l.b16 %v5663
    %v5835 = vunpack.c.h.b16 %v5663
    %v5836 = vunpack.c.l.b16 %v5664
    %v5837 = vunpack.c.h.b16 %v5664
    %v5838 = vunpack.c.l.b16 %v5665
    %v5839 = vunpack.c.h.b16 %v5665
    %v5840 = vunpack.c.l.b16 %v5666
    %v5841 = vunpack.c.h.b16 %v5666
    %v5842 = vunpack.c.l.b16 %v5667
    %v5843 = vunpack.c.h.b16 %v5667
    %v5844 = vunpack.c.l.b16 %v5668
    %v5845 = vunpack.c.h.b16 %v5668
    %v5846 = vunpack.c.l.b16 %v5669
    %v5847 = vunpack.c.h.b16 %v5669
    %v5848 = vunpack.c.l.b16 %v5670
    %v5849 = vunpack.c.h.b16 %v5670
    %v5850 = vunpack.c.l.b16 %v5671
    %v5851 = vunpack.c.h.b16 %v5671
    %v5852 = vunpack.c.l.b16 %v5672
    %v5853 = vunpack.c.h.b16 %v5672
    %v5854 = vunpack.c.l.b16 %v5673
    %v5855 = vunpack.c.h.b16 %v5673
    %v5856 = vunpack.c.l.b16 %v5674
    %v5857 = vunpack.c.h.b16 %v5674
    %v5858 = vunpack.c.l.b16 %v5675
    %v5859 = vunpack.c.h.b16 %v5675
    %v5860 = vunpack.c.l.b16 %v5676
    %v5861 = vunpack.c.h.b16 %v5676
    %v5862 = vunpack.c.l.b16 %v5677
    %v5863 = vunpack.c.h.b16 %v5677
    %v5864 = vunpack.c.l.b16 %v5678
    %v5865 = vunpack.c.h.b16 %v5678
    %v5866 = vunpack.c.l.b16 %v5679
    %v5867 = vunpack.c.h.b16 %v5679
    %v5868 = vunpack.c.l.b16 %v5680
    %v5869 = vunpack.c.h.b16 %v5680
    %v5870 = vunpack.c.l.b16 %v5681
    %v5871 = vunpack.c.h.b16 %v5681
    %v5872 = vunpack.c.l.b16 %v5682
    %v5873 = vunpack.c.h.b16 %v5682
    %v5874 = vunpack.c.l.b16 %v5683
    %v5875 = vunpack.c.h.b16 %v5683
    %v5876 = vpack.c.b16 %v5752, %v5748
    %v5877 = vpack.c.b16 %v5753, %v5749
    %v5878 = vpack.c.b16 %v5754, %v5750
    %v5879 = vpack.c.b16 %v5755, %v5751
    %v5880 = vpack.c.b16 %v5760, %v5756
    %v5881 = vpack.c.b16 %v5761, %v5757
    %v5882 = vpack.c.b16 %v5762, %v5758
    %v5883 = vpack.c.b16 %v5763, %v5759
    %v5884 = vpack.c.b16 %v5768, %v5764
    %v5885 = vpack.c.b16 %v5769, %v5765
    %v5886 = vpack.c.b16 %v5770, %v5766
    %v5887 = vpack.c.b16 %v5771, %v5767
    %v5888 = vpack.c.b16 %v5776, %v5772
    %v5889 = vpack.c.b16 %v5777, %v5773
    %v5890 = vpack.c.b16 %v5778, %v5774
    %v5891 = vpack.c.b16 %v5779, %v5775
    %v5892 = vpack.c.b16 %v5784, %v5780
    %v5893 = vpack.c.b16 %v5785, %v5781
    %v5894 = vpack.c.b16 %v5786, %v5782
    %v5895 = vpack.c.b16 %v5787, %v5783
    %v5896 = vpack.c.b16 %v5792, %v5788
    %v5897 = vpack.c.b16 %v5793, %v5789
    %v5898 = vpack.c.b16 %v5794, %v5790
    %v5899 = vpack.c.b16 %v5795, %v5791
    %v5900 = vpack.c.b16 %v5800, %v5796
    %v5901 = vpack.c.b16 %v5801, %v5797
    %v5902 = vpack.c.b16 %v5802, %v5798
    %v5903 = vpack.c.b16 %v5803, %v5799
    %v5904 = vpack.c.b16 %v5808, %v5804
    %v5905 = vpack.c.b16 %v5809, %v5805
    %v5906 = vpack.c.b16 %v5810, %v5806
    %v5907 = vpack.c.b16 %v5811, %v5807
    %v5908 = vpack.c.b16 %v5816, %v5812
    %v5909 = vpack.c.b16 %v5817, %v5813
    %v5910 = vpack.c.b16 %v5818, %v5814
    %v5911 = vpack.c.b16 %v5819, %v5815
    %v5912 = vpack.c.b16 %v5824, %v5820
    %v5913 = vpack.c.b16 %v5825, %v5821
    %v5914 = vpack.c.b16 %v5826, %v5822
    %v5915 = vpack.c.b16 %v5827, %v5823
    %v5916 = vpack.c.b16 %v5832, %v5828
    %v5917 = vpack.c.b16 %v5833, %v5829
    %v5918 = vpack.c.b16 %v5834, %v5830
    %v5919 = vpack.c.b16 %v5835, %v5831
    %v5920 = vpack.c.b16 %v5840, %v5836
    %v5921 = vpack.c.b16 %v5841, %v5837
    %v5922 = vpack.c.b16 %v5842, %v5838
    %v5923 = vpack.c.b16 %v5843, %v5839
    %v5924 = vpack.c.b16 %v5848, %v5844
    %v5925 = vpack.c.b16 %v5849, %v5845
    %v5926 = vpack.c.b16 %v5850, %v5846
    %v5927 = vpack.c.b16 %v5851, %v5847
    %v5928 = vpack.c.b16 %v5856, %v5852
    %v5929 = vpack.c.b16 %v5857, %v5853
    %v5930 = vpack.c.b16 %v5858, %v5854
    %v5931 = vpack.c.b16 %v5859, %v5855
    %v5932 = vpack.c.b16 %v5864, %v5860
    %v5933 = vpack.c.b16 %v5865, %v5861
    %v5934 = vpack.c.b16 %v5866, %v5862
    %v5935 = vpack.c.b16 %v5867, %v5863
    %v5936 = vpack.c.b16 %v5872, %v5868
    %v5937 = vpack.c.b16 %v5873, %v5869
    %v5938 = vpack.c.b16 %v5874, %v5870
    %v5939 = vpack.c.b16 %v5875, %v5871
    %6004 = vmatpush.bf16.msra.mxu0 %v5904
    %6005 = vmatpush.bf16.msra.mxu0 %v5900
    %6006 = vmatpush.bf16.msra.mxu0 %v5896
    %6007 = vmatpush.bf16.msra.mxu0 %v5892
    %6008 = vmatpush.bf16.msra.mxu0 %v5888
    %6009 = vmatpush.bf16.msra.mxu0 %v5884
    %6010 = vmatpush.bf16.msra.mxu0 %v5880
    %6011 = vmatpush.bf16.msra.mxu0 %v5876
    %6012 = vmatmul.bf16.gmra.mxu0 %v5615
    %v6013 = vpop.f32.mrf.mxu0
    %v6014 = vadd.f32 0.0, %v6013
    %v6015 = vpop.f32.mrf.mxu0
    %6016 = vdwg.mxu0
    %6017 = vmatpush.bf16.msra.mxu0 %v5936
    %6018 = vmatpush.bf16.msra.mxu0 %v5932
    %6019 = vmatpush.bf16.msra.mxu0 %v5928
    %6020 = vmatpush.bf16.msra.mxu0 %v5924
    %6021 = vmatpush.bf16.msra.mxu0 %v5920
    %6022 = vmatpush.bf16.msra.mxu0 %v5916
    %6023 = vmatpush.bf16.msra.mxu0 %v5912
    %6024 = vmatpush.bf16.msra.mxu0 %v5908
    %6025 = vmatmul.bf16.gmra.mxu0 %v5616
    %v6026 = vpop.f32.mrf.mxu0
    %v6027 = vadd.f32 %v6014, %v6026
    %v6028 = vpop.f32.mrf.mxu0
    %6029 = vdwg.mxu0
    %6030 = vmatpush.bf16.msra.mxu0 %v5905
    %6031 = vmatpush.bf16.msra.mxu0 %v5901
    %6032 = vmatpush.bf16.msra.mxu0 %v5897
    %6033 = vmatpush.bf16.msra.mxu0 %v5893
    %6034 = vmatpush.bf16.msra.mxu0 %v5889
    %6035 = vmatpush.bf16.msra.mxu0 %v5885
    %6036 = vmatpush.bf16.msra.mxu0 %v5881
    %6037 = vmatpush.bf16.msra.mxu0 %v5877
    %6038 = vmatmul.bf16.gmra.mxu0 %v5615
    %v6039 = vpop.f32.mrf.mxu0
    %v6040 = vadd.f32 0.0, %v6039
    %v6041 = vpop.f32.mrf.mxu0
    %6042 = vdwg.mxu0
    %6043 = vmatpush.bf16.msra.mxu0 %v5937
    %6044 = vmatpush.bf16.msra.mxu0 %v5933
    %6045 = vmatpush.bf16.msra.mxu0 %v5929
    %6046 = vmatpush.bf16.msra.mxu0 %v5925
    %6047 = vmatpush.bf16.msra.mxu0 %v5921
    %6048 = vmatpush.bf16.msra.mxu0 %v5917
    %6049 = vmatpush.bf16.msra.mxu0 %v5913
    %6050 = vmatpush.bf16.msra.mxu0 %v5909
    %6051 = vmatmul.bf16.gmra.mxu0 %v5616
    %v6052 = vpop.f32.mrf.mxu0
    %v6053 = vadd.f32 %v6040, %v6052
    %v6054 = vpop.f32.mrf.mxu0
    %6055 = vdwg.mxu0
    %6056 = vmatpush.bf16.msra.mxu0 %v5906
    %6057 = vmatpush.bf16.msra.mxu0 %v5902
    %6058 = vmatpush.bf16.msra.mxu0 %v5898
    %6059 = vmatpush.bf16.msra.mxu0 %v5894
    %6060 = vmatpush.bf16.msra.mxu0 %v5890
    %6061 = vmatpush.bf16.msra.mxu0 %v5886
    %6062 = vmatpush.bf16.msra.mxu0 %v5882
    %6063 = vmatpush.bf16.msra.mxu0 %v5878
    %6064 = vmatmul.bf16.gmra.mxu0 %v5615
    %v6065 = vpop.f32.mrf.mxu0
    %v6066 = vadd.f32 0.0, %v6065
    %v6067 = vpop.f32.mrf.mxu0
    %6068 = vdwg.mxu0
    %6069 = vmatpush.bf16.msra.mxu0 %v5938
    %6070 = vmatpush.bf16.msra.mxu0 %v5934
    %6071 = vmatpush.bf16.msra.mxu0 %v5930
    %6072 = vmatpush.bf16.msra.mxu0 %v5926
    %6073 = vmatpush.bf16.msra.mxu0 %v5922
    %6074 = vmatpush.bf16.msra.mxu0 %v5918
    %6075 = vmatpush.bf16.msra.mxu0 %v5914
    %6076 = vmatpush.bf16.msra.mxu0 %v5910
    %6077 = vmatmul.bf16.gmra.mxu0 %v5616
    %v6078 = vpop.f32.mrf.mxu0
    %v6079 = vadd.f32 %v6066, %v6078
    %v6080 = vpop.f32.mrf.mxu0
    %6081 = vdwg.mxu0
    %6082 = vmatpush.bf16.msra.mxu0 %v5907
    %6083 = vmatpush.bf16.msra.mxu0 %v5903
    %6084 = vmatpush.bf16.msra.mxu0 %v5899
    %6085 = vmatpush.bf16.msra.mxu0 %v5895
    %6086 = vmatpush.bf16.msra.mxu0 %v5891
    %6087 = vmatpush.bf16.msra.mxu0 %v5887
    %6088 = vmatpush.bf16.msra.mxu0 %v5883
    %6089 = vmatpush.bf16.msra.mxu0 %v5879
    %6090 = vmatmul.bf16.gmra.mxu0 %v5615
    %v6091 = vpop.f32.mrf.mxu0
    %v6092 = vadd.f32 0.0, %v6091
    %v6093 = vpop.f32.mrf.mxu0
    %6094 = vdwg.mxu0
    %6095 = vmatpush.bf16.msra.mxu0 %v5939
    %6096 = vmatpush.bf16.msra.mxu0 %v5935
    %6097 = vmatpush.bf16.msra.mxu0 %v5931
    %6098 = vmatpush.bf16.msra.mxu0 %v5927
    %6099 = vmatpush.bf16.msra.mxu0 %v5923
    %6100 = vmatpush.bf16.msra.mxu0 %v5919
    %6101 = vmatpush.bf16.msra.mxu0 %v5915
    %6102 = vmatpush.bf16.msra.mxu0 %v5911
    %6103 = vmatmul.bf16.gmra.mxu0 %v5616
    %v6104 = vpop.f32.mrf.mxu0
    %v6105 = vadd.f32 %v6092, %v6104
    %v6106 = vpop.f32.mrf.mxu0
    %6107 = vdwg.mxu0
    %s6108 = scalar_lea.vmem [#allocation10], 18
    %v6109 = vld [vmem:[%s6108] ss:$2 sm:$0xf]
    %s6110 = scalar_lea.vmem [#allocation10], 19
    %v6111 = vld [vmem:[%s6110] ss:$2 sm:$0xf]
    %v6112 = vrot.slane %v6027, 4
    %v6113 = vadd.f32 %v6027, %v6112
    %v6114 = vrot.slane %v6113, 2
    %v6115 = vadd.f32 %v6113, %v6114
    %v6116 = vrot.slane %v6115, 1
    %v6117 = vadd.f32 %v6115, %v6116
    %v6118 = vrot.slane %v6053, 4
    %v6119 = vadd.f32 %v6053, %v6118
    %v6120 = vrot.slane %v6119, 2
    %v6121 = vadd.f32 %v6119, %v6120
    %v6122 = vrot.slane %v6121, 1
    %v6123 = vadd.f32 %v6121, %v6122
    %v6124 = vrot.slane %v6079, 4
    %v6125 = vadd.f32 %v6079, %v6124
    %v6126 = vrot.slane %v6125, 2
    %v6127 = vadd.f32 %v6125, %v6126
    %v6128 = vrot.slane %v6127, 1
    %v6129 = vadd.f32 %v6127, %v6128
    %v6130 = vrot.slane %v6105, 4
    %v6131 = vadd.f32 %v6105, %v6130
    %v6132 = vrot.slane %v6131, 2
    %v6133 = vadd.f32 %v6131, %v6132
    %v6134 = vrot.slane %v6133, 1
    %v6135 = vadd.f32 %v6133, %v6134
    %v6136 = vmul.f32 %v6117, %v4393
    %v6137 = vmul.f32 %v6123, %v4393
    %v6138 = vmul.f32 %v6129, %v4393
    %v6139 = vmul.f32 %v6135, %v4393
    %v6140 = vsub.f32 %v6027, %v6136
    %v6141 = vsub.f32 %v6053, %v6137
    %v6142 = vsub.f32 %v6079, %v6138
    %v6143 = vsub.f32 %v6105, %v6139
    %v6144 = vmul.f32 %v6140, %v6140
    %v6145 = vmul.f32 %v6141, %v6141
    %v6146 = vmul.f32 %v6142, %v6142
    %v6147 = vmul.f32 %v6143, %v6143
    %v6148 = vrot.slane %v6144, 4
    %v6149 = vadd.f32 %v6144, %v6148
    %v6150 = vrot.slane %v6149, 2
    %v6151 = vadd.f32 %v6149, %v6150
    %v6152 = vrot.slane %v6151, 1
    %v6153 = vadd.f32 %v6151, %v6152
    %v6154 = vrot.slane %v6145, 4
    %v6155 = vadd.f32 %v6145, %v6154
    %v6156 = vrot.slane %v6155, 2
    %v6157 = vadd.f32 %v6155, %v6156
    %v6158 = vrot.slane %v6157, 1
    %v6159 = vadd.f32 %v6157, %v6158
    %v6160 = vrot.slane %v6146, 4
    %v6161 = vadd.f32 %v6146, %v6160
    %v6162 = vrot.slane %v6161, 2
    %v6163 = vadd.f32 %v6161, %v6162
    %v6164 = vrot.slane %v6163, 1
    %v6165 = vadd.f32 %v6163, %v6164
    %v6166 = vrot.slane %v6147, 4
    %v6167 = vadd.f32 %v6147, %v6166
    %v6168 = vrot.slane %v6167, 2
    %v6169 = vadd.f32 %v6167, %v6168
    %v6170 = vrot.slane %v6169, 1
    %v6171 = vadd.f32 %v6169, %v6170
    %v6172 = vmul.f32 %v6153, %v4393
    %v6173 = vmul.f32 %v6159, %v4393
    %v6174 = vmul.f32 %v6165, %v4393
    %v6175 = vmul.f32 %v6171, %v4393
    %v6176 = vadd.f32 %v6172, 1e-05
    %v6177 = vadd.f32 %v6173, 1e-05
    %v6178 = vadd.f32 %v6174, 1e-05
    %v6179 = vadd.f32 %v6175, 1e-05
    %v6180 = vrsqrt.pop %v6176
    %v6181 = vmul.f32 %v6180, %v6176
    %v6182 = vmul.f32 %v6181, %v6180
    %v6183 = vmul.f32 0.5, %v6182
    %v6184 = vsub.f32 1.5, %v6183
    %v6185 = vmul.f32 %v6180, %v6184
    %vm6186 = vweird.f32 %v6176
    %vm6187 = vweird.f32 %v6180
    %vm6188 = vmor %vm6186, %vm6187
    %v6189 = vsel %vm6188, %v6180, %v6185
    %v6190 = vrsqrt.pop %v6177
    %v6191 = vmul.f32 %v6190, %v6177
    %v6192 = vmul.f32 %v6191, %v6190
    %v6193 = vmul.f32 0.5, %v6192
    %v6194 = vsub.f32 1.5, %v6193
    %v6195 = vmul.f32 %v6190, %v6194
    %vm6196 = vweird.f32 %v6177
    %vm6197 = vweird.f32 %v6190
    %vm6198 = vmor %vm6196, %vm6197
    %v6199 = vsel %vm6198, %v6190, %v6195
    %v6200 = vrsqrt.pop %v6178
    %v6201 = vmul.f32 %v6200, %v6178
    %v6202 = vmul.f32 %v6201, %v6200
    %v6203 = vmul.f32 0.5, %v6202
    %v6204 = vsub.f32 1.5, %v6203
    %v6205 = vmul.f32 %v6200, %v6204
    %vm6206 = vweird.f32 %v6178
    %vm6207 = vweird.f32 %v6200
    %vm6208 = vmor %vm6206, %vm6207
    %v6209 = vsel %vm6208, %v6200, %v6205
    %v6210 = vrsqrt.pop %v6179
    %v6211 = vmul.f32 %v6210, %v6179
    %v6212 = vmul.f32 %v6211, %v6210
    %v6213 = vmul.f32 0.5, %v6212
    %v6214 = vsub.f32 1.5, %v6213
    %v6215 = vmul.f32 %v6210, %v6214
    %vm6216 = vweird.f32 %v6179
    %vm6217 = vweird.f32 %v6210
    %vm6218 = vmor %vm6216, %vm6217
    %v6219 = vsel %vm6218, %v6210, %v6215
    %v6220 = vmul.f32 %v6140, %v6189
    %v6221 = vmul.f32 %v6141, %v6199
    %v6222 = vmul.f32 %v6142, %v6209
    %v6223 = vmul.f32 %v6143, %v6219
    %v6225 = vperm.slane %v6109, 0
    %v6226 = vperm.slane %v6109, 1
    %v6227 = vperm.slane %v6109, 2
    %v6228 = vperm.slane %v6109, 3
    %v6233 = vmul.f32 %v6220, %v6225
    %v6234 = vmul.f32 %v6221, %v6226
    %v6235 = vmul.f32 %v6222, %v6227
    %v6236 = vmul.f32 %v6223, %v6228
    %v6238 = vperm.slane %v6111, 0
    %v6239 = vperm.slane %v6111, 1
    %v6240 = vperm.slane %v6111, 2
    %v6241 = vperm.slane %v6111, 3
    %v6246 = vadd.f32 %v6233, %v6238
    %v6247 = vadd.f32 %v6234, %v6239
    %v6248 = vadd.f32 %v6235, %v6240
    %v6249 = vadd.f32 %v6236, %v6241
    %vm6250 = vcmp.ge.f32.partialorder %v6246, 0.0
    %vm6251 = vcmp.ge.f32.partialorder %v6247, 0.0
    %vm6252 = vcmp.ge.f32.partialorder %v6248, 0.0
    %vm6253 = vcmp.ge.f32.partialorder %v6249, 0.0
    %s6254 = sld [smem:[#allocation14 + $0x1]]
    %v6255 = vstv %s6254
    %v6256 = vmul.f32 %v6255, %v6246
    %v6257 = vmul.f32 %v6255, %v6247
    %v6258 = vmul.f32 %v6255, %v6248
    %v6259 = vmul.f32 %v6255, %v6249
    %v6260 = vsel %vm6250, %v6246, %v6256
    %v6261 = vsel %vm6251, %v6247, %v6257
    %v6262 = vsel %vm6252, %v6248, %v6258
    %v6263 = vsel %vm6253, %v6249, %v6259
    %v6264 = vpack.c.bf16 %v6260, %v6260
    %v6265 = vpack.c.bf16 %v6261, %v6261
    %v6266 = vpack.c.bf16 %v6262, %v6262
    %v6267 = vpack.c.bf16 %v6263, %v6263
    %s6268 = smul.u32 %s4588, 9
    %s6269 = sshll.u32 %s6268, 4
    %6270 = dma.done %s120, %s6269
    %v6271 = vld [vmem:[#allocation7] sm:$0xff]
    %v6272 = vld [vmem:[#allocation7 + $0x8] sm:$0xff]
    %v6273 = vld [vmem:[#allocation7 + $0x10] sm:$0xff]
    %v6274 = vld [vmem:[#allocation7 + $0x18] sm:$0xff]
    %v6275 = vld [vmem:[#allocation7 + $0x20] sm:$0xf]
    %v6276 = vld [vmem:[#allocation7 + $0x24] sm:$0xff]
    %v6277 = vld [vmem:[#allocation7 + $0x2c] sm:$0xff]
    %v6278 = vld [vmem:[#allocation7 + $0x34] sm:$0xff]
    %v6279 = vld [vmem:[#allocation7 + $0x3c] sm:$0xff]
    %v6280 = vld [vmem:[#allocation7 + $0x44] sm:$0xf]
    %v6281 = vld [vmem:[#allocation7 + $0x48] sm:$0xff]
    %v6282 = vld [vmem:[#allocation7 + $0x50] sm:$0xff]
    %v6283 = vld [vmem:[#allocation7 + $0x58] sm:$0xff]
    %v6284 = vld [vmem:[#allocation7 + $0x60] sm:$0xff]
    %v6285 = vld [vmem:[#allocation7 + $0x68] sm:$0xf]
    %v6286 = vld [vmem:[#allocation7 + $0x6c] sm:$0xff]
    %v6287 = vld [vmem:[#allocation7 + $0x74] sm:$0xff]
    %v6288 = vld [vmem:[#allocation7 + $0x7c] sm:$0xff]
    %v6289 = vld [vmem:[#allocation7 + $0x84] sm:$0xff]
    %v6290 = vld [vmem:[#allocation7 + $0x8c] sm:$0xf]
    %v6291 = vld [vmem:[#allocation7 + $0x90] sm:$0xff]
    %v6292 = vld [vmem:[#allocation7 + $0x98] sm:$0xff]
    %v6293 = vld [vmem:[#allocation7 + $0xa0] sm:$0xff]
    %v6294 = vld [vmem:[#allocation7 + $0xa8] sm:$0xff]
    %v6295 = vld [vmem:[#allocation7 + $0xb0] sm:$0xf]
    %v6296 = vld [vmem:[#allocation7 + $0xb4] sm:$0xff]
    %v6297 = vld [vmem:[#allocation7 + $0xbc] sm:$0xff]
    %v6298 = vld [vmem:[#allocation7 + $0xc4] sm:$0xff]
    %v6299 = vld [vmem:[#allocation7 + $0xcc] sm:$0xff]
    %v6300 = vld [vmem:[#allocation7 + $0xd4] sm:$0xf]
    %v6301 = vld [vmem:[#allocation7 + $0xd8] sm:$0xff]
    %v6302 = vld [vmem:[#allocation7 + $0xe0] sm:$0xff]
    %v6303 = vld [vmem:[#allocation7 + $0xe8] sm:$0xff]
    %v6304 = vld [vmem:[#allocation7 + $0xf0] sm:$0xff]
    %v6305 = vld [vmem:[#allocation7 + $0xf8] sm:$0xf]
    %v6306 = vld [vmem:[#allocation7 + $0xfc] sm:$0xff]
    %v6307 = vld [vmem:[#allocation7 + $0x104] sm:$0xff]
    %v6308 = vld [vmem:[#allocation7 + $0x10c] sm:$0xff]
    %v6309 = vld [vmem:[#allocation7 + $0x114] sm:$0xff]
    %v6310 = vld [vmem:[#allocation7 + $0x11c] sm:$0xf]
    %v6311 = vld [vmem:[#allocation7 + $0x120] sm:$0xff]
    %v6312 = vld [vmem:[#allocation7 + $0x128] sm:$0xff]
    %v6313 = vld [vmem:[#allocation7 + $0x130] sm:$0xff]
    %v6314 = vld [vmem:[#allocation7 + $0x138] sm:$0xff]
    %v6315 = vld [vmem:[#allocation7 + $0x140] sm:$0xf]
    %v6316 = vld [vmem:[#allocation7 + $0x144] sm:$0xff]
    %v6317 = vld [vmem:[#allocation7 + $0x14c] sm:$0xff]
    %v6318 = vld [vmem:[#allocation7 + $0x154] sm:$0xff]
    %v6319 = vld [vmem:[#allocation7 + $0x15c] sm:$0xff]
    %v6320 = vld [vmem:[#allocation7 + $0x164] sm:$0xf]
    %v6321 = vld [vmem:[#allocation7 + $0x168] sm:$0xff]
    %v6322 = vld [vmem:[#allocation7 + $0x170] sm:$0xff]
    %v6323 = vld [vmem:[#allocation7 + $0x178] sm:$0xff]
    %v6324 = vld [vmem:[#allocation7 + $0x180] sm:$0xff]
    %v6325 = vld [vmem:[#allocation7 + $0x188] sm:$0xf]
    %v6326 = vld [vmem:[#allocation7 + $0x18c] sm:$0xff]
    %v6327 = vld [vmem:[#allocation7 + $0x194] sm:$0xff]
    %v6328 = vld [vmem:[#allocation7 + $0x19c] sm:$0xff]
    %v6329 = vld [vmem:[#allocation7 + $0x1a4] sm:$0xff]
    %v6330 = vld [vmem:[#allocation7 + $0x1ac] sm:$0xf]
    %v6331 = vld [vmem:[#allocation7 + $0x1b0] sm:$0xff]
    %v6332 = vld [vmem:[#allocation7 + $0x1b8] sm:$0xff]
    %v6333 = vld [vmem:[#allocation7 + $0x1c0] sm:$0xff]
    %v6334 = vld [vmem:[#allocation7 + $0x1c8] sm:$0xff]
    %v6335 = vld [vmem:[#allocation7 + $0x1d0] sm:$0xf]
    %v6336 = vld [vmem:[#allocation7 + $0x1d4] sm:$0xff]
    %v6337 = vld [vmem:[#allocation7 + $0x1dc] sm:$0xff]
    %v6338 = vld [vmem:[#allocation7 + $0x1e4] sm:$0xff]
    %v6339 = vld [vmem:[#allocation7 + $0x1ec] sm:$0xff]
    %v6340 = vld [vmem:[#allocation7 + $0x1f4] sm:$0xf]
    %v6341 = vld [vmem:[#allocation7 + $0x1f8] sm:$0xff]
    %v6342 = vld [vmem:[#allocation7 + $0x200] sm:$0xff]
    %v6343 = vld [vmem:[#allocation7 + $0x208] sm:$0xff]
    %v6344 = vld [vmem:[#allocation7 + $0x210] sm:$0xff]
    %v6345 = vld [vmem:[#allocation7 + $0x218] sm:$0xf]
    %v6346 = vld [vmem:[#allocation7 + $0x21c] sm:$0xff]
    %v6347 = vld [vmem:[#allocation7 + $0x224] sm:$0xff]
    %v6348 = vld [vmem:[#allocation7 + $0x22c] sm:$0xff]
    %v6349 = vld [vmem:[#allocation7 + $0x234] sm:$0xff]
    %v6350 = vld [vmem:[#allocation7 + $0x23c] sm:$0xf]
    %v6351 = vld [vmem:[#allocation7 + $0x240] sm:$0xff]
    %v6352 = vld [vmem:[#allocation7 + $0x248] sm:$0xff]
    %v6353 = vld [vmem:[#allocation7 + $0x250] sm:$0xff]
    %v6354 = vld [vmem:[#allocation7 + $0x258] sm:$0xff]
    %v6355 = vld [vmem:[#allocation7 + $0x260] sm:$0xf]
    %v6356 = vld [vmem:[#allocation7 + $0x264] sm:$0xff]
    %v6357 = vld [vmem:[#allocation7 + $0x26c] sm:$0xff]
    %v6358 = vld [vmem:[#allocation7 + $0x274] sm:$0xff]
    %v6359 = vld [vmem:[#allocation7 + $0x27c] sm:$0xff]
    %v6360 = vld [vmem:[#allocation7 + $0x284] sm:$0xf]
    %v6361 = vld [vmem:[#allocation7 + $0x288] sm:$0xff]
    %v6362 = vld [vmem:[#allocation7 + $0x290] sm:$0xff]
    %v6363 = vld [vmem:[#allocation7 + $0x298] sm:$0xff]
    %v6364 = vld [vmem:[#allocation7 + $0x2a0] sm:$0xff]
    %v6365 = vld [vmem:[#allocation7 + $0x2a8] sm:$0xf]
    %v6366 = vld [vmem:[#allocation7 + $0x2ac] sm:$0xff]
    %v6367 = vld [vmem:[#allocation7 + $0x2b4] sm:$0xff]
    %v6368 = vld [vmem:[#allocation7 + $0x2bc] sm:$0xff]
    %v6369 = vld [vmem:[#allocation7 + $0x2c4] sm:$0xff]
    %v6370 = vld [vmem:[#allocation7 + $0x2cc] sm:$0xf]
    %v6371 = vld [vmem:[#allocation7 + $0x2d0] sm:$0xff]
    %v6372 = vld [vmem:[#allocation7 + $0x2d8] sm:$0xff]
    %v6373 = vld [vmem:[#allocation7 + $0x2e0] sm:$0xff]
    %v6374 = vld [vmem:[#allocation7 + $0x2e8] sm:$0xff]
    %v6375 = vld [vmem:[#allocation7 + $0x2f0] sm:$0xf]
    %v6376 = vld [vmem:[#allocation7 + $0x2f4] sm:$0xff]
    %v6377 = vld [vmem:[#allocation7 + $0x2fc] sm:$0xff]
    %v6378 = vld [vmem:[#allocation7 + $0x304] sm:$0xff]
    %v6379 = vld [vmem:[#allocation7 + $0x30c] sm:$0xff]
    %v6380 = vld [vmem:[#allocation7 + $0x314] sm:$0xf]
    %v6381 = vld [vmem:[#allocation7 + $0x318] sm:$0xff]
    %v6382 = vld [vmem:[#allocation7 + $0x320] sm:$0xff]
    %v6383 = vld [vmem:[#allocation7 + $0x328] sm:$0xff]
    %v6384 = vld [vmem:[#allocation7 + $0x330] sm:$0xff]
    %v6385 = vld [vmem:[#allocation7 + $0x338] sm:$0xf]
    %v6386 = vld [vmem:[#allocation7 + $0x33c] sm:$0xff]
    %v6387 = vld [vmem:[#allocation7 + $0x344] sm:$0xff]
    %v6388 = vld [vmem:[#allocation7 + $0x34c] sm:$0xff]
    %v6389 = vld [vmem:[#allocation7 + $0x354] sm:$0xff]
    %v6390 = vld [vmem:[#allocation7 + $0x35c] sm:$0xf]
    %v6391 = vld [vmem:[#allocation7 + $0x360] sm:$0xff]
    %v6392 = vld [vmem:[#allocation7 + $0x368] sm:$0xff]
    %v6393 = vld [vmem:[#allocation7 + $0x370] sm:$0xff]
    %v6394 = vld [vmem:[#allocation7 + $0x378] sm:$0xff]
    %v6395 = vld [vmem:[#allocation7 + $0x380] sm:$0xf]
    %v6396 = vld [vmem:[#allocation7 + $0x384] sm:$0xff]
    %v6397 = vld [vmem:[#allocation7 + $0x38c] sm:$0xff]
    %v6398 = vld [vmem:[#allocation7 + $0x394] sm:$0xff]
    %v6399 = vld [vmem:[#allocation7 + $0x39c] sm:$0xff]
    %v6400 = vld [vmem:[#allocation7 + $0x3a4] sm:$0xf]
    %v6401 = vld [vmem:[#allocation7 + $0x3a8] sm:$0xff]
    %v6402 = vld [vmem:[#allocation7 + $0x3b0] sm:$0xff]
    %v6403 = vld [vmem:[#allocation7 + $0x3b8] sm:$0xff]
    %v6404 = vld [vmem:[#allocation7 + $0x3c0] sm:$0xff]
    %v6405 = vld [vmem:[#allocation7 + $0x3c8] sm:$0xf]
    %v6406 = vld [vmem:[#allocation7 + $0x3cc] sm:$0xff]
    %v6407 = vld [vmem:[#allocation7 + $0x3d4] sm:$0xff]
    %v6408 = vld [vmem:[#allocation7 + $0x3dc] sm:$0xff]
    %v6409 = vld [vmem:[#allocation7 + $0x3e4] sm:$0xff]
    %v6410 = vld [vmem:[#allocation7 + $0x3ec] sm:$0xf]
    %v6411 = vld [vmem:[#allocation7 + $0x3f0] sm:$0xff]
    %v6412 = vld [vmem:[#allocation7 + $0x3f8] sm:$0xff]
    %v6413 = vld [vmem:[#allocation7 + $0x400] sm:$0xff]
    %v6414 = vld [vmem:[#allocation7 + $0x408] sm:$0xff]
    %v6415 = vld [vmem:[#allocation7 + $0x410] sm:$0xf]
    %v6416 = vld [vmem:[#allocation7 + $0x414] sm:$0xff]
    %v6417 = vld [vmem:[#allocation7 + $0x41c] sm:$0xff]
    %v6418 = vld [vmem:[#allocation7 + $0x424] sm:$0xff]
    %v6419 = vld [vmem:[#allocation7 + $0x42c] sm:$0xff]
    %v6420 = vld [vmem:[#allocation7 + $0x434] sm:$0xf]
    %v6421 = vld [vmem:[#allocation7 + $0x438] sm:$0xff]
    %v6422 = vld [vmem:[#allocation7 + $0x440] sm:$0xff]
    %v6423 = vld [vmem:[#allocation7 + $0x448] sm:$0xff]
    %v6424 = vld [vmem:[#allocation7 + $0x450] sm:$0xff]
    %v6425 = vld [vmem:[#allocation7 + $0x458] sm:$0xf]
    %v6426 = vld [vmem:[#allocation7 + $0x45c] sm:$0xff]
    %v6427 = vld [vmem:[#allocation7 + $0x464] sm:$0xff]
    %v6428 = vld [vmem:[#allocation7 + $0x46c] sm:$0xff]
    %v6429 = vld [vmem:[#allocation7 + $0x474] sm:$0xff]
    %v6430 = vld [vmem:[#allocation7 + $0x47c] sm:$0xf]
    %v6431 = vld [vmem:[#allocation7 + $0x480] sm:$0xff]
    %v6432 = vld [vmem:[#allocation7 + $0x488] sm:$0xff]
    %v6433 = vld [vmem:[#allocation7 + $0x490] sm:$0xff]
    %v6434 = vld [vmem:[#allocation7 + $0x498] sm:$0xff]
    %v6435 = vld [vmem:[#allocation7 + $0x4a0] sm:$0xf]
    %v6436 = vld [vmem:[#allocation7 + $0x4a4] sm:$0xff]
    %v6437 = vld [vmem:[#allocation7 + $0x4ac] sm:$0xff]
    %v6438 = vld [vmem:[#allocation7 + $0x4b4] sm:$0xff]
    %v6439 = vld [vmem:[#allocation7 + $0x4bc] sm:$0xff]
    %v6440 = vld [vmem:[#allocation7 + $0x4c4] sm:$0xf]
    %v6441 = vld [vmem:[#allocation7 + $0x4c8] sm:$0xff]
    %v6442 = vld [vmem:[#allocation7 + $0x4d0] sm:$0xff]
    %v6443 = vld [vmem:[#allocation7 + $0x4d8] sm:$0xff]
    %v6444 = vld [vmem:[#allocation7 + $0x4e0] sm:$0xff]
    %v6445 = vld [vmem:[#allocation7 + $0x4e8] sm:$0xf]
    %v6446 = vld [vmem:[#allocation7 + $0x4ec] sm:$0xff]
    %v6447 = vld [vmem:[#allocation7 + $0x4f4] sm:$0xff]
    %v6448 = vld [vmem:[#allocation7 + $0x4fc] sm:$0xff]
    %v6449 = vld [vmem:[#allocation7 + $0x504] sm:$0xff]
    %v6450 = vld [vmem:[#allocation7 + $0x50c] sm:$0xf]
    %v6451 = vld [vmem:[#allocation7 + $0x510] sm:$0xff]
    %v6452 = vld [vmem:[#allocation7 + $0x518] sm:$0xff]
    %v6453 = vld [vmem:[#allocation7 + $0x520] sm:$0xff]
    %v6454 = vld [vmem:[#allocation7 + $0x528] sm:$0xff]
    %v6455 = vld [vmem:[#allocation7 + $0x530] sm:$0xf]
    %v6456 = vld [vmem:[#allocation7 + $0x534] sm:$0xff]
    %v6457 = vld [vmem:[#allocation7 + $0x53c] sm:$0xff]
    %v6458 = vld [vmem:[#allocation7 + $0x544] sm:$0xff]
    %v6459 = vld [vmem:[#allocation7 + $0x54c] sm:$0xff]
    %v6460 = vld [vmem:[#allocation7 + $0x554] sm:$0xf]
    %v6461 = vld [vmem:[#allocation7 + $0x558] sm:$0xff]
    %v6462 = vld [vmem:[#allocation7 + $0x560] sm:$0xff]
    %v6463 = vld [vmem:[#allocation7 + $0x568] sm:$0xff]
    %v6464 = vld [vmem:[#allocation7 + $0x570] sm:$0xff]
    %v6465 = vld [vmem:[#allocation7 + $0x578] sm:$0xf]
    %v6466 = vld [vmem:[#allocation7 + $0x57c] sm:$0xff]
    %v6467 = vld [vmem:[#allocation7 + $0x584] sm:$0xff]
    %v6468 = vld [vmem:[#allocation7 + $0x58c] sm:$0xff]
    %v6469 = vld [vmem:[#allocation7 + $0x594] sm:$0xff]
    %v6470 = vld [vmem:[#allocation7 + $0x59c] sm:$0xf]
    %v6471 = vld [vmem:[#allocation7 + $0x5a0] sm:$0xff]
    %v6472 = vld [vmem:[#allocation7 + $0x5a8] sm:$0xff]
    %v6473 = vld [vmem:[#allocation7 + $0x5b0] sm:$0xff]
    %v6474 = vld [vmem:[#allocation7 + $0x5b8] sm:$0xff]
    %v6475 = vld [vmem:[#allocation7 + $0x5c0] sm:$0xf]
    %v6476 = vld [vmem:[#allocation7 + $0x5c4] sm:$0xff]
    %v6477 = vld [vmem:[#allocation7 + $0x5cc] sm:$0xff]
    %v6478 = vld [vmem:[#allocation7 + $0x5d4] sm:$0xff]
    %v6479 = vld [vmem:[#allocation7 + $0x5dc] sm:$0xff]
    %v6480 = vld [vmem:[#allocation7 + $0x5e4] sm:$0xf]
    %v6481 = vld [vmem:[#allocation7 + $0x5e8] sm:$0xff]
    %v6482 = vld [vmem:[#allocation7 + $0x5f0] sm:$0xff]
    %v6483 = vld [vmem:[#allocation7 + $0x5f8] sm:$0xff]
    %v6484 = vld [vmem:[#allocation7 + $0x600] sm:$0xff]
    %v6485 = vld [vmem:[#allocation7 + $0x608] sm:$0xf]
    %v6486 = vld [vmem:[#allocation7 + $0x60c] sm:$0xff]
    %v6487 = vld [vmem:[#allocation7 + $0x614] sm:$0xff]
    %v6488 = vld [vmem:[#allocation7 + $0x61c] sm:$0xff]
    %v6489 = vld [vmem:[#allocation7 + $0x624] sm:$0xff]
    %v6490 = vld [vmem:[#allocation7 + $0x62c] sm:$0xf]
    %v6491 = vld [vmem:[#allocation7 + $0x630] sm:$0xff]
    %v6492 = vld [vmem:[#allocation7 + $0x638] sm:$0xff]
    %v6493 = vld [vmem:[#allocation7 + $0x640] sm:$0xff]
    %v6494 = vld [vmem:[#allocation7 + $0x648] sm:$0xff]
    %v6495 = vld [vmem:[#allocation7 + $0x650] sm:$0xf]
    %v6496 = vld [vmem:[#allocation7 + $0x654] sm:$0xff]
    %v6497 = vld [vmem:[#allocation7 + $0x65c] sm:$0xff]
    %v6498 = vld [vmem:[#allocation7 + $0x664] sm:$0xff]
    %v6499 = vld [vmem:[#allocation7 + $0x66c] sm:$0xff]
    %v6500 = vld [vmem:[#allocation7 + $0x674] sm:$0xf]
    %v6501 = vld [vmem:[#allocation7 + $0x678] sm:$0xff]
    %v6502 = vld [vmem:[#allocation7 + $0x680] sm:$0xff]
    %v6503 = vld [vmem:[#allocation7 + $0x688] sm:$0xff]
    %v6504 = vld [vmem:[#allocation7 + $0x690] sm:$0xff]
    %v6505 = vld [vmem:[#allocation7 + $0x698] sm:$0xf]
    %v6506 = vld [vmem:[#allocation7 + $0x69c] sm:$0xff]
    %v6507 = vld [vmem:[#allocation7 + $0x6a4] sm:$0xff]
    %v6508 = vld [vmem:[#allocation7 + $0x6ac] sm:$0xff]
    %v6509 = vld [vmem:[#allocation7 + $0x6b4] sm:$0xff]
    %v6510 = vld [vmem:[#allocation7 + $0x6bc] sm:$0xf]
    %v6511 = vld [vmem:[#allocation7 + $0x6c0] sm:$0xff]
    %v6512 = vld [vmem:[#allocation7 + $0x6c8] sm:$0xff]
    %v6513 = vld [vmem:[#allocation7 + $0x6d0] sm:$0xff]
    %v6514 = vld [vmem:[#allocation7 + $0x6d8] sm:$0xff]
    %v6515 = vld [vmem:[#allocation7 + $0x6e0] sm:$0xf]
    %v6516 = vld [vmem:[#allocation7 + $0x6e4] sm:$0xff]
    %v6517 = vld [vmem:[#allocation7 + $0x6ec] sm:$0xff]
    %v6518 = vld [vmem:[#allocation7 + $0x6f4] sm:$0xff]
    %v6519 = vld [vmem:[#allocation7 + $0x6fc] sm:$0xff]
    %v6520 = vld [vmem:[#allocation7 + $0x704] sm:$0xf]
    %v6521 = vld [vmem:[#allocation7 + $0x708] sm:$0xff]
    %v6522 = vld [vmem:[#allocation7 + $0x710] sm:$0xff]
    %v6523 = vld [vmem:[#allocation7 + $0x718] sm:$0xff]
    %v6524 = vld [vmem:[#allocation7 + $0x720] sm:$0xff]
    %v6525 = vld [vmem:[#allocation7 + $0x728] sm:$0xf]
    %v6526 = vld [vmem:[#allocation7 + $0x72c] sm:$0xff]
    %v6527 = vld [vmem:[#allocation7 + $0x734] sm:$0xff]
    %v6528 = vld [vmem:[#allocation7 + $0x73c] sm:$0xff]
    %v6529 = vld [vmem:[#allocation7 + $0x744] sm:$0xff]
    %v6530 = vld [vmem:[#allocation7 + $0x74c] sm:$0xf]
    %v6531 = vld [vmem:[#allocation7 + $0x750] sm:$0xff]
    %v6532 = vld [vmem:[#allocation7 + $0x758] sm:$0xff]
    %v6533 = vld [vmem:[#allocation7 + $0x760] sm:$0xff]
    %v6534 = vld [vmem:[#allocation7 + $0x768] sm:$0xff]
    %v6535 = vld [vmem:[#allocation7 + $0x770] sm:$0xf]
    %v6536 = vld [vmem:[#allocation7 + $0x774] sm:$0xff]
    %v6537 = vld [vmem:[#allocation7 + $0x77c] sm:$0xff]
    %v6538 = vld [vmem:[#allocation7 + $0x784] sm:$0xff]
    %v6539 = vld [vmem:[#allocation7 + $0x78c] sm:$0xff]
    %v6540 = vld [vmem:[#allocation7 + $0x794] sm:$0xf]
    %v6541 = vld [vmem:[#allocation7 + $0x798] sm:$0xff]
    %v6542 = vld [vmem:[#allocation7 + $0x7a0] sm:$0xff]
    %v6543 = vld [vmem:[#allocation7 + $0x7a8] sm:$0xff]
    %v6544 = vld [vmem:[#allocation7 + $0x7b0] sm:$0xff]
    %v6545 = vld [vmem:[#allocation7 + $0x7b8] sm:$0xf]
    %v6546 = vld [vmem:[#allocation7 + $0x7bc] sm:$0xff]
    %v6547 = vld [vmem:[#allocation7 + $0x7c4] sm:$0xff]
    %v6548 = vld [vmem:[#allocation7 + $0x7cc] sm:$0xff]
    %v6549 = vld [vmem:[#allocation7 + $0x7d4] sm:$0xff]
    %v6550 = vld [vmem:[#allocation7 + $0x7dc] sm:$0xf]
    %v6551 = vld [vmem:[#allocation7 + $0x7e0] sm:$0xff]
    %v6552 = vld [vmem:[#allocation7 + $0x7e8] sm:$0xff]
    %v6553 = vld [vmem:[#allocation7 + $0x7f0] sm:$0xff]
    %v6554 = vld [vmem:[#allocation7 + $0x7f8] sm:$0xff]
    %v6555 = vld [vmem:[#allocation7 + $0x800] sm:$0xf]
    %v6556 = vld [vmem:[#allocation7 + $0x804] sm:$0xff]
    %v6557 = vld [vmem:[#allocation7 + $0x80c] sm:$0xff]
    %v6558 = vld [vmem:[#allocation7 + $0x814] sm:$0xff]
    %v6559 = vld [vmem:[#allocation7 + $0x81c] sm:$0xff]
    %v6560 = vld [vmem:[#allocation7 + $0x824] sm:$0xf]
    %v6561 = vld [vmem:[#allocation7 + $0x828] sm:$0xff]
    %v6562 = vld [vmem:[#allocation7 + $0x830] sm:$0xff]
    %v6563 = vld [vmem:[#allocation7 + $0x838] sm:$0xff]
    %v6564 = vld [vmem:[#allocation7 + $0x840] sm:$0xff]
    %v6565 = vld [vmem:[#allocation7 + $0x848] sm:$0xf]
    %v6566 = vld [vmem:[#allocation7 + $0x84c] sm:$0xff]
    %v6567 = vld [vmem:[#allocation7 + $0x854] sm:$0xff]
    %v6568 = vld [vmem:[#allocation7 + $0x85c] sm:$0xff]
    %v6569 = vld [vmem:[#allocation7 + $0x864] sm:$0xff]
    %v6570 = vld [vmem:[#allocation7 + $0x86c] sm:$0xf]
    %v6571 = vld [vmem:[#allocation7 + $0x870] sm:$0xff]
    %v6572 = vld [vmem:[#allocation7 + $0x878] sm:$0xff]
    %v6573 = vld [vmem:[#allocation7 + $0x880] sm:$0xff]
    %v6574 = vld [vmem:[#allocation7 + $0x888] sm:$0xff]
    %v6575 = vld [vmem:[#allocation7 + $0x890] sm:$0xf]
    %v6576 = vld [vmem:[#allocation7 + $0x894] sm:$0xff]
    %v6577 = vld [vmem:[#allocation7 + $0x89c] sm:$0xff]
    %v6578 = vld [vmem:[#allocation7 + $0x8a4] sm:$0xff]
    %v6579 = vld [vmem:[#allocation7 + $0x8ac] sm:$0xff]
    %v6580 = vld [vmem:[#allocation7 + $0x8b4] sm:$0xf]
    %v6581 = vld [vmem:[#allocation7 + $0x8b8] sm:$0xff]
    %v6582 = vld [vmem:[#allocation7 + $0x8c0] sm:$0xff]
    %v6583 = vld [vmem:[#allocation7 + $0x8c8] sm:$0xff]
    %v6584 = vld [vmem:[#allocation7 + $0x8d0] sm:$0xff]
    %v6585 = vld [vmem:[#allocation7 + $0x8d8] sm:$0xf]
    %v6586 = vld [vmem:[#allocation7 + $0x8dc] sm:$0xff]
    %v6587 = vld [vmem:[#allocation7 + $0x8e4] sm:$0xff]
    %v6588 = vld [vmem:[#allocation7 + $0x8ec] sm:$0xff]
    %v6589 = vld [vmem:[#allocation7 + $0x8f4] sm:$0xff]
    %v6590 = vld [vmem:[#allocation7 + $0x8fc] sm:$0xf]
    %v6911 = vunpack.c.l.b16 %v6271
    %v6912 = vunpack.c.h.b16 %v6271
    %v6913 = vunpack.c.l.b16 %v6272
    %v6914 = vunpack.c.h.b16 %v6272
    %v6915 = vunpack.c.l.b16 %v6273
    %v6916 = vunpack.c.h.b16 %v6273
    %v6917 = vunpack.c.l.b16 %v6274
    %v6918 = vunpack.c.h.b16 %v6274
    %v6919 = vunpack.c.l.b16 %v6275
    %v6920 = vunpack.c.l.b16 %v6276
    %v6921 = vunpack.c.h.b16 %v6276
    %v6922 = vunpack.c.l.b16 %v6277
    %v6923 = vunpack.c.h.b16 %v6277
    %v6924 = vunpack.c.l.b16 %v6278
    %v6925 = vunpack.c.h.b16 %v6278
    %v6926 = vunpack.c.l.b16 %v6279
    %v6927 = vunpack.c.h.b16 %v6279
    %v6928 = vunpack.c.l.b16 %v6280
    %v6929 = vunpack.c.l.b16 %v6281
    %v6930 = vunpack.c.h.b16 %v6281
    %v6931 = vunpack.c.l.b16 %v6282
    %v6932 = vunpack.c.h.b16 %v6282
    %v6933 = vunpack.c.l.b16 %v6283
    %v6934 = vunpack.c.h.b16 %v6283
    %v6935 = vunpack.c.l.b16 %v6284
    %v6936 = vunpack.c.h.b16 %v6284
    %v6937 = vunpack.c.l.b16 %v6285
    %v6938 = vunpack.c.l.b16 %v6286
    %v6939 = vunpack.c.h.b16 %v6286
    %v6940 = vunpack.c.l.b16 %v6287
    %v6941 = vunpack.c.h.b16 %v6287
    %v6942 = vunpack.c.l.b16 %v6288
    %v6943 = vunpack.c.h.b16 %v6288
    %v6944 = vunpack.c.l.b16 %v6289
    %v6945 = vunpack.c.h.b16 %v6289
    %v6946 = vunpack.c.l.b16 %v6290
    %v6947 = vunpack.c.l.b16 %v6291
    %v6948 = vunpack.c.h.b16 %v6291
    %v6949 = vunpack.c.l.b16 %v6292
    %v6950 = vunpack.c.h.b16 %v6292
    %v6951 = vunpack.c.l.b16 %v6293
    %v6952 = vunpack.c.h.b16 %v6293
    %v6953 = vunpack.c.l.b16 %v6294
    %v6954 = vunpack.c.h.b16 %v6294
    %v6955 = vunpack.c.l.b16 %v6295
    %v6956 = vunpack.c.l.b16 %v6296
    %v6957 = vunpack.c.h.b16 %v6296
    %v6958 = vunpack.c.l.b16 %v6297
    %v6959 = vunpack.c.h.b16 %v6297
    %v6960 = vunpack.c.l.b16 %v6298
    %v6961 = vunpack.c.h.b16 %v6298
    %v6962 = vunpack.c.l.b16 %v6299
    %v6963 = vunpack.c.h.b16 %v6299
    %v6964 = vunpack.c.l.b16 %v6300
    %v6965 = vunpack.c.l.b16 %v6301
    %v6966 = vunpack.c.h.b16 %v6301
    %v6967 = vunpack.c.l.b16 %v6302
    %v6968 = vunpack.c.h.b16 %v6302
    %v6969 = vunpack.c.l.b16 %v6303
    %v6970 = vunpack.c.h.b16 %v6303
    %v6971 = vunpack.c.l.b16 %v6304
    %v6972 = vunpack.c.h.b16 %v6304
    %v6973 = vunpack.c.l.b16 %v6305
    %v6974 = vunpack.c.l.b16 %v6306
    %v6975 = vunpack.c.h.b16 %v6306
    %v6976 = vunpack.c.l.b16 %v6307
    %v6977 = vunpack.c.h.b16 %v6307
    %v6978 = vunpack.c.l.b16 %v6308
    %v6979 = vunpack.c.h.b16 %v6308
    %v6980 = vunpack.c.l.b16 %v6309
    %v6981 = vunpack.c.h.b16 %v6309
    %v6982 = vunpack.c.l.b16 %v6310
    %v6983 = vunpack.c.l.b16 %v6311
    %v6984 = vunpack.c.h.b16 %v6311
    %v6985 = vunpack.c.l.b16 %v6312
    %v6986 = vunpack.c.h.b16 %v6312
    %v6987 = vunpack.c.l.b16 %v6313
    %v6988 = vunpack.c.h.b16 %v6313
    %v6989 = vunpack.c.l.b16 %v6314
    %v6990 = vunpack.c.h.b16 %v6314
    %v6991 = vunpack.c.l.b16 %v6315
    %v6992 = vunpack.c.l.b16 %v6316
    %v6993 = vunpack.c.h.b16 %v6316
    %v6994 = vunpack.c.l.b16 %v6317
    %v6995 = vunpack.c.h.b16 %v6317
    %v6996 = vunpack.c.l.b16 %v6318
    %v6997 = vunpack.c.h.b16 %v6318
    %v6998 = vunpack.c.l.b16 %v6319
    %v6999 = vunpack.c.h.b16 %v6319
    %v7000 = vunpack.c.l.b16 %v6320
    %v7001 = vunpack.c.l.b16 %v6321
    %v7002 = vunpack.c.h.b16 %v6321
    %v7003 = vunpack.c.l.b16 %v6322
    %v7004 = vunpack.c.h.b16 %v6322
    %v7005 = vunpack.c.l.b16 %v6323
    %v7006 = vunpack.c.h.b16 %v6323
    %v7007 = vunpack.c.l.b16 %v6324
    %v7008 = vunpack.c.h.b16 %v6324
    %v7009 = vunpack.c.l.b16 %v6325
    %v7010 = vunpack.c.l.b16 %v6326
    %v7011 = vunpack.c.h.b16 %v6326
    %v7012 = vunpack.c.l.b16 %v6327
    %v7013 = vunpack.c.h.b16 %v6327
    %v7014 = vunpack.c.l.b16 %v6328
    %v7015 = vunpack.c.h.b16 %v6328
    %v7016 = vunpack.c.l.b16 %v6329
    %v7017 = vunpack.c.h.b16 %v6329
    %v7018 = vunpack.c.l.b16 %v6330
    %v7019 = vunpack.c.l.b16 %v6331
    %v7020 = vunpack.c.h.b16 %v6331
    %v7021 = vunpack.c.l.b16 %v6332
    %v7022 = vunpack.c.h.b16 %v6332
    %v7023 = vunpack.c.l.b16 %v6333
    %v7024 = vunpack.c.h.b16 %v6333
    %v7025 = vunpack.c.l.b16 %v6334
    %v7026 = vunpack.c.h.b16 %v6334
    %v7027 = vunpack.c.l.b16 %v6335
    %v7028 = vunpack.c.l.b16 %v6336
    %v7029 = vunpack.c.h.b16 %v6336
    %v7030 = vunpack.c.l.b16 %v6337
    %v7031 = vunpack.c.h.b16 %v6337
    %v7032 = vunpack.c.l.b16 %v6338
    %v7033 = vunpack.c.h.b16 %v6338
    %v7034 = vunpack.c.l.b16 %v6339
    %v7035 = vunpack.c.h.b16 %v6339
    %v7036 = vunpack.c.l.b16 %v6340
    %v7037 = vunpack.c.l.b16 %v6341
    %v7038 = vunpack.c.h.b16 %v6341
    %v7039 = vunpack.c.l.b16 %v6342
    %v7040 = vunpack.c.h.b16 %v6342
    %v7041 = vunpack.c.l.b16 %v6343
    %v7042 = vunpack.c.h.b16 %v6343
    %v7043 = vunpack.c.l.b16 %v6344
    %v7044 = vunpack.c.h.b16 %v6344
    %v7045 = vunpack.c.l.b16 %v6345
    %v7046 = vunpack.c.l.b16 %v6346
    %v7047 = vunpack.c.h.b16 %v6346
    %v7048 = vunpack.c.l.b16 %v6347
    %v7049 = vunpack.c.h.b16 %v6347
    %v7050 = vunpack.c.l.b16 %v6348
    %v7051 = vunpack.c.h.b16 %v6348
    %v7052 = vunpack.c.l.b16 %v6349
    %v7053 = vunpack.c.h.b16 %v6349
    %v7054 = vunpack.c.l.b16 %v6350
    %v7055 = vunpack.c.l.b16 %v6351
    %v7056 = vunpack.c.h.b16 %v6351
    %v7057 = vunpack.c.l.b16 %v6352
    %v7058 = vunpack.c.h.b16 %v6352
    %v7059 = vunpack.c.l.b16 %v6353
    %v7060 = vunpack.c.h.b16 %v6353
    %v7061 = vunpack.c.l.b16 %v6354
    %v7062 = vunpack.c.h.b16 %v6354
    %v7063 = vunpack.c.l.b16 %v6355
    %v7064 = vunpack.c.l.b16 %v6356
    %v7065 = vunpack.c.h.b16 %v6356
    %v7066 = vunpack.c.l.b16 %v6357
    %v7067 = vunpack.c.h.b16 %v6357
    %v7068 = vunpack.c.l.b16 %v6358
    %v7069 = vunpack.c.h.b16 %v6358
    %v7070 = vunpack.c.l.b16 %v6359
    %v7071 = vunpack.c.h.b16 %v6359
    %v7072 = vunpack.c.l.b16 %v6360
    %v7073 = vunpack.c.l.b16 %v6361
    %v7074 = vunpack.c.h.b16 %v6361
    %v7075 = vunpack.c.l.b16 %v6362
    %v7076 = vunpack.c.h.b16 %v6362
    %v7077 = vunpack.c.l.b16 %v6363
    %v7078 = vunpack.c.h.b16 %v6363
    %v7079 = vunpack.c.l.b16 %v6364
    %v7080 = vunpack.c.h.b16 %v6364
    %v7081 = vunpack.c.l.b16 %v6365
    %v7082 = vunpack.c.l.b16 %v6366
    %v7083 = vunpack.c.h.b16 %v6366
    %v7084 = vunpack.c.l.b16 %v6367
    %v7085 = vunpack.c.h.b16 %v6367
    %v7086 = vunpack.c.l.b16 %v6368
    %v7087 = vunpack.c.h.b16 %v6368
    %v7088 = vunpack.c.l.b16 %v6369
    %v7089 = vunpack.c.h.b16 %v6369
    %v7090 = vunpack.c.l.b16 %v6370
    %v7091 = vunpack.c.l.b16 %v6371
    %v7092 = vunpack.c.h.b16 %v6371
    %v7093 = vunpack.c.l.b16 %v6372
    %v7094 = vunpack.c.h.b16 %v6372
    %v7095 = vunpack.c.l.b16 %v6373
    %v7096 = vunpack.c.h.b16 %v6373
    %v7097 = vunpack.c.l.b16 %v6374
    %v7098 = vunpack.c.h.b16 %v6374
    %v7099 = vunpack.c.l.b16 %v6375
    %v7100 = vunpack.c.l.b16 %v6376
    %v7101 = vunpack.c.h.b16 %v6376
    %v7102 = vunpack.c.l.b16 %v6377
    %v7103 = vunpack.c.h.b16 %v6377
    %v7104 = vunpack.c.l.b16 %v6378
    %v7105 = vunpack.c.h.b16 %v6378
    %v7106 = vunpack.c.l.b16 %v6379
    %v7107 = vunpack.c.h.b16 %v6379
    %v7108 = vunpack.c.l.b16 %v6380
    %v7109 = vunpack.c.l.b16 %v6381
    %v7110 = vunpack.c.h.b16 %v6381
    %v7111 = vunpack.c.l.b16 %v6382
    %v7112 = vunpack.c.h.b16 %v6382
    %v7113 = vunpack.c.l.b16 %v6383
    %v7114 = vunpack.c.h.b16 %v6383
    %v7115 = vunpack.c.l.b16 %v6384
    %v7116 = vunpack.c.h.b16 %v6384
    %v7117 = vunpack.c.l.b16 %v6385
    %v7118 = vunpack.c.l.b16 %v6386
    %v7119 = vunpack.c.h.b16 %v6386
    %v7120 = vunpack.c.l.b16 %v6387
    %v7121 = vunpack.c.h.b16 %v6387
    %v7122 = vunpack.c.l.b16 %v6388
    %v7123 = vunpack.c.h.b16 %v6388
    %v7124 = vunpack.c.l.b16 %v6389
    %v7125 = vunpack.c.h.b16 %v6389
    %v7126 = vunpack.c.l.b16 %v6390
    %v7127 = vunpack.c.l.b16 %v6391
    %v7128 = vunpack.c.h.b16 %v6391
    %v7129 = vunpack.c.l.b16 %v6392
    %v7130 = vunpack.c.h.b16 %v6392
    %v7131 = vunpack.c.l.b16 %v6393
    %v7132 = vunpack.c.h.b16 %v6393
    %v7133 = vunpack.c.l.b16 %v6394
    %v7134 = vunpack.c.h.b16 %v6394
    %v7135 = vunpack.c.l.b16 %v6395
    %v7136 = vunpack.c.l.b16 %v6396
    %v7137 = vunpack.c.h.b16 %v6396
    %v7138 = vunpack.c.l.b16 %v6397
    %v7139 = vunpack.c.h.b16 %v6397
    %v7140 = vunpack.c.l.b16 %v6398
    %v7141 = vunpack.c.h.b16 %v6398
    %v7142 = vunpack.c.l.b16 %v6399
    %v7143 = vunpack.c.h.b16 %v6399
    %v7144 = vunpack.c.l.b16 %v6400
    %v7145 = vunpack.c.l.b16 %v6401
    %v7146 = vunpack.c.h.b16 %v6401
    %v7147 = vunpack.c.l.b16 %v6402
    %v7148 = vunpack.c.h.b16 %v6402
    %v7149 = vunpack.c.l.b16 %v6403
    %v7150 = vunpack.c.h.b16 %v6403
    %v7151 = vunpack.c.l.b16 %v6404
    %v7152 = vunpack.c.h.b16 %v6404
    %v7153 = vunpack.c.l.b16 %v6405
    %v7154 = vunpack.c.l.b16 %v6406
    %v7155 = vunpack.c.h.b16 %v6406
    %v7156 = vunpack.c.l.b16 %v6407
    %v7157 = vunpack.c.h.b16 %v6407
    %v7158 = vunpack.c.l.b16 %v6408
    %v7159 = vunpack.c.h.b16 %v6408
    %v7160 = vunpack.c.l.b16 %v6409
    %v7161 = vunpack.c.h.b16 %v6409
    %v7162 = vunpack.c.l.b16 %v6410
    %v7163 = vunpack.c.l.b16 %v6411
    %v7164 = vunpack.c.h.b16 %v6411
    %v7165 = vunpack.c.l.b16 %v6412
    %v7166 = vunpack.c.h.b16 %v6412
    %v7167 = vunpack.c.l.b16 %v6413
    %v7168 = vunpack.c.h.b16 %v6413
    %v7169 = vunpack.c.l.b16 %v6414
    %v7170 = vunpack.c.h.b16 %v6414
    %v7171 = vunpack.c.l.b16 %v6415
    %v7172 = vunpack.c.l.b16 %v6416
    %v7173 = vunpack.c.h.b16 %v6416
    %v7174 = vunpack.c.l.b16 %v6417
    %v7175 = vunpack.c.h.b16 %v6417
    %v7176 = vunpack.c.l.b16 %v6418
    %v7177 = vunpack.c.h.b16 %v6418
    %v7178 = vunpack.c.l.b16 %v6419
    %v7179 = vunpack.c.h.b16 %v6419
    %v7180 = vunpack.c.l.b16 %v6420
    %v7181 = vunpack.c.l.b16 %v6421
    %v7182 = vunpack.c.h.b16 %v6421
    %v7183 = vunpack.c.l.b16 %v6422
    %v7184 = vunpack.c.h.b16 %v6422
    %v7185 = vunpack.c.l.b16 %v6423
    %v7186 = vunpack.c.h.b16 %v6423
    %v7187 = vunpack.c.l.b16 %v6424
    %v7188 = vunpack.c.h.b16 %v6424
    %v7189 = vunpack.c.l.b16 %v6425
    %v7190 = vunpack.c.l.b16 %v6426
    %v7191 = vunpack.c.h.b16 %v6426
    %v7192 = vunpack.c.l.b16 %v6427
    %v7193 = vunpack.c.h.b16 %v6427
    %v7194 = vunpack.c.l.b16 %v6428
    %v7195 = vunpack.c.h.b16 %v6428
    %v7196 = vunpack.c.l.b16 %v6429
    %v7197 = vunpack.c.h.b16 %v6429
    %v7198 = vunpack.c.l.b16 %v6430
    %v7199 = vunpack.c.l.b16 %v6431
    %v7200 = vunpack.c.h.b16 %v6431
    %v7201 = vunpack.c.l.b16 %v6432
    %v7202 = vunpack.c.h.b16 %v6432
    %v7203 = vunpack.c.l.b16 %v6433
    %v7204 = vunpack.c.h.b16 %v6433
    %v7205 = vunpack.c.l.b16 %v6434
    %v7206 = vunpack.c.h.b16 %v6434
    %v7207 = vunpack.c.l.b16 %v6435
    %v7208 = vunpack.c.l.b16 %v6436
    %v7209 = vunpack.c.h.b16 %v6436
    %v7210 = vunpack.c.l.b16 %v6437
    %v7211 = vunpack.c.h.b16 %v6437
    %v7212 = vunpack.c.l.b16 %v6438
    %v7213 = vunpack.c.h.b16 %v6438
    %v7214 = vunpack.c.l.b16 %v6439
    %v7215 = vunpack.c.h.b16 %v6439
    %v7216 = vunpack.c.l.b16 %v6440
    %v7217 = vunpack.c.l.b16 %v6441
    %v7218 = vunpack.c.h.b16 %v6441
    %v7219 = vunpack.c.l.b16 %v6442
    %v7220 = vunpack.c.h.b16 %v6442
    %v7221 = vunpack.c.l.b16 %v6443
    %v7222 = vunpack.c.h.b16 %v6443
    %v7223 = vunpack.c.l.b16 %v6444
    %v7224 = vunpack.c.h.b16 %v6444
    %v7225 = vunpack.c.l.b16 %v6445
    %v7226 = vunpack.c.l.b16 %v6446
    %v7227 = vunpack.c.h.b16 %v6446
    %v7228 = vunpack.c.l.b16 %v6447
    %v7229 = vunpack.c.h.b16 %v6447
    %v7230 = vunpack.c.l.b16 %v6448
    %v7231 = vunpack.c.h.b16 %v6448
    %v7232 = vunpack.c.l.b16 %v6449
    %v7233 = vunpack.c.h.b16 %v6449
    %v7234 = vunpack.c.l.b16 %v6450
    %v7235 = vunpack.c.l.b16 %v6451
    %v7236 = vunpack.c.h.b16 %v6451
    %v7237 = vunpack.c.l.b16 %v6452
    %v7238 = vunpack.c.h.b16 %v6452
    %v7239 = vunpack.c.l.b16 %v6453
    %v7240 = vunpack.c.h.b16 %v6453
    %v7241 = vunpack.c.l.b16 %v6454
    %v7242 = vunpack.c.h.b16 %v6454
    %v7243 = vunpack.c.l.b16 %v6455
    %v7244 = vunpack.c.l.b16 %v6456
    %v7245 = vunpack.c.h.b16 %v6456
    %v7246 = vunpack.c.l.b16 %v6457
    %v7247 = vunpack.c.h.b16 %v6457
    %v7248 = vunpack.c.l.b16 %v6458
    %v7249 = vunpack.c.h.b16 %v6458
    %v7250 = vunpack.c.l.b16 %v6459
    %v7251 = vunpack.c.h.b16 %v6459
    %v7252 = vunpack.c.l.b16 %v6460
    %v7253 = vunpack.c.l.b16 %v6461
    %v7254 = vunpack.c.h.b16 %v6461
    %v7255 = vunpack.c.l.b16 %v6462
    %v7256 = vunpack.c.h.b16 %v6462
    %v7257 = vunpack.c.l.b16 %v6463
    %v7258 = vunpack.c.h.b16 %v6463
    %v7259 = vunpack.c.l.b16 %v6464
    %v7260 = vunpack.c.h.b16 %v6464
    %v7261 = vunpack.c.l.b16 %v6465
    %v7262 = vunpack.c.l.b16 %v6466
    %v7263 = vunpack.c.h.b16 %v6466
    %v7264 = vunpack.c.l.b16 %v6467
    %v7265 = vunpack.c.h.b16 %v6467
    %v7266 = vunpack.c.l.b16 %v6468
    %v7267 = vunpack.c.h.b16 %v6468
    %v7268 = vunpack.c.l.b16 %v6469
    %v7269 = vunpack.c.h.b16 %v6469
    %v7270 = vunpack.c.l.b16 %v6470
    %v7271 = vunpack.c.l.b16 %v6471
    %v7272 = vunpack.c.h.b16 %v6471
    %v7273 = vunpack.c.l.b16 %v6472
    %v7274 = vunpack.c.h.b16 %v6472
    %v7275 = vunpack.c.l.b16 %v6473
    %v7276 = vunpack.c.h.b16 %v6473
    %v7277 = vunpack.c.l.b16 %v6474
    %v7278 = vunpack.c.h.b16 %v6474
    %v7279 = vunpack.c.l.b16 %v6475
    %v7280 = vunpack.c.l.b16 %v6476
    %v7281 = vunpack.c.h.b16 %v6476
    %v7282 = vunpack.c.l.b16 %v6477
    %v7283 = vunpack.c.h.b16 %v6477
    %v7284 = vunpack.c.l.b16 %v6478
    %v7285 = vunpack.c.h.b16 %v6478
    %v7286 = vunpack.c.l.b16 %v6479
    %v7287 = vunpack.c.h.b16 %v6479
    %v7288 = vunpack.c.l.b16 %v6480
    %v7289 = vunpack.c.l.b16 %v6481
    %v7290 = vunpack.c.h.b16 %v6481
    %v7291 = vunpack.c.l.b16 %v6482
    %v7292 = vunpack.c.h.b16 %v6482
    %v7293 = vunpack.c.l.b16 %v6483
    %v7294 = vunpack.c.h.b16 %v6483
    %v7295 = vunpack.c.l.b16 %v6484
    %v7296 = vunpack.c.h.b16 %v6484
    %v7297 = vunpack.c.l.b16 %v6485
    %v7298 = vunpack.c.l.b16 %v6486
    %v7299 = vunpack.c.h.b16 %v6486
    %v7300 = vunpack.c.l.b16 %v6487
    %v7301 = vunpack.c.h.b16 %v6487
    %v7302 = vunpack.c.l.b16 %v6488
    %v7303 = vunpack.c.h.b16 %v6488
    %v7304 = vunpack.c.l.b16 %v6489
    %v7305 = vunpack.c.h.b16 %v6489
    %v7306 = vunpack.c.l.b16 %v6490
    %v7307 = vunpack.c.l.b16 %v6491
    %v7308 = vunpack.c.h.b16 %v6491
    %v7309 = vunpack.c.l.b16 %v6492
    %v7310 = vunpack.c.h.b16 %v6492
    %v7311 = vunpack.c.l.b16 %v6493
    %v7312 = vunpack.c.h.b16 %v6493
    %v7313 = vunpack.c.l.b16 %v6494
    %v7314 = vunpack.c.h.b16 %v6494
    %v7315 = vunpack.c.l.b16 %v6495
    %v7316 = vunpack.c.l.b16 %v6496
    %v7317 = vunpack.c.h.b16 %v6496
    %v7318 = vunpack.c.l.b16 %v6497
    %v7319 = vunpack.c.h.b16 %v6497
    %v7320 = vunpack.c.l.b16 %v6498
    %v7321 = vunpack.c.h.b16 %v6498
    %v7322 = vunpack.c.l.b16 %v6499
    %v7323 = vunpack.c.h.b16 %v6499
    %v7324 = vunpack.c.l.b16 %v6500
    %v7325 = vunpack.c.l.b16 %v6501
    %v7326 = vunpack.c.h.b16 %v6501
    %v7327 = vunpack.c.l.b16 %v6502
    %v7328 = vunpack.c.h.b16 %v6502
    %v7329 = vunpack.c.l.b16 %v6503
    %v7330 = vunpack.c.h.b16 %v6503
    %v7331 = vunpack.c.l.b16 %v6504
    %v7332 = vunpack.c.h.b16 %v6504
    %v7333 = vunpack.c.l.b16 %v6505
    %v7334 = vunpack.c.l.b16 %v6506
    %v7335 = vunpack.c.h.b16 %v6506
    %v7336 = vunpack.c.l.b16 %v6507
    %v7337 = vunpack.c.h.b16 %v6507
    %v7338 = vunpack.c.l.b16 %v6508
    %v7339 = vunpack.c.h.b16 %v6508
    %v7340 = vunpack.c.l.b16 %v6509
    %v7341 = vunpack.c.h.b16 %v6509
    %v7342 = vunpack.c.l.b16 %v6510
    %v7343 = vunpack.c.l.b16 %v6511
    %v7344 = vunpack.c.h.b16 %v6511
    %v7345 = vunpack.c.l.b16 %v6512
    %v7346 = vunpack.c.h.b16 %v6512
    %v7347 = vunpack.c.l.b16 %v6513
    %v7348 = vunpack.c.h.b16 %v6513
    %v7349 = vunpack.c.l.b16 %v6514
    %v7350 = vunpack.c.h.b16 %v6514
    %v7351 = vunpack.c.l.b16 %v6515
    %v7352 = vunpack.c.l.b16 %v6516
    %v7353 = vunpack.c.h.b16 %v6516
    %v7354 = vunpack.c.l.b16 %v6517
    %v7355 = vunpack.c.h.b16 %v6517
    %v7356 = vunpack.c.l.b16 %v6518
    %v7357 = vunpack.c.h.b16 %v6518
    %v7358 = vunpack.c.l.b16 %v6519
    %v7359 = vunpack.c.h.b16 %v6519
    %v7360 = vunpack.c.l.b16 %v6520
    %v7361 = vunpack.c.l.b16 %v6521
    %v7362 = vunpack.c.h.b16 %v6521
    %v7363 = vunpack.c.l.b16 %v6522
    %v7364 = vunpack.c.h.b16 %v6522
    %v7365 = vunpack.c.l.b16 %v6523
    %v7366 = vunpack.c.h.b16 %v6523
    %v7367 = vunpack.c.l.b16 %v6524
    %v7368 = vunpack.c.h.b16 %v6524
    %v7369 = vunpack.c.l.b16 %v6525
    %v7370 = vunpack.c.l.b16 %v6526
    %v7371 = vunpack.c.h.b16 %v6526
    %v7372 = vunpack.c.l.b16 %v6527
    %v7373 = vunpack.c.h.b16 %v6527
    %v7374 = vunpack.c.l.b16 %v6528
    %v7375 = vunpack.c.h.b16 %v6528
    %v7376 = vunpack.c.l.b16 %v6529
    %v7377 = vunpack.c.h.b16 %v6529
    %v7378 = vunpack.c.l.b16 %v6530
    %v7379 = vunpack.c.l.b16 %v6531
    %v7380 = vunpack.c.h.b16 %v6531
    %v7381 = vunpack.c.l.b16 %v6532
    %v7382 = vunpack.c.h.b16 %v6532
    %v7383 = vunpack.c.l.b16 %v6533
    %v7384 = vunpack.c.h.b16 %v6533
    %v7385 = vunpack.c.l.b16 %v6534
    %v7386 = vunpack.c.h.b16 %v6534
    %v7387 = vunpack.c.l.b16 %v6535
    %v7388 = vunpack.c.l.b16 %v6536
    %v7389 = vunpack.c.h.b16 %v6536
    %v7390 = vunpack.c.l.b16 %v6537
    %v7391 = vunpack.c.h.b16 %v6537
    %v7392 = vunpack.c.l.b16 %v6538
    %v7393 = vunpack.c.h.b16 %v6538
    %v7394 = vunpack.c.l.b16 %v6539
    %v7395 = vunpack.c.h.b16 %v6539
    %v7396 = vunpack.c.l.b16 %v6540
    %v7397 = vunpack.c.l.b16 %v6541
    %v7398 = vunpack.c.h.b16 %v6541
    %v7399 = vunpack.c.l.b16 %v6542
    %v7400 = vunpack.c.h.b16 %v6542
    %v7401 = vunpack.c.l.b16 %v6543
    %v7402 = vunpack.c.h.b16 %v6543
    %v7403 = vunpack.c.l.b16 %v6544
    %v7404 = vunpack.c.h.b16 %v6544
    %v7405 = vunpack.c.l.b16 %v6545
    %v7406 = vunpack.c.l.b16 %v6546
    %v7407 = vunpack.c.h.b16 %v6546
    %v7408 = vunpack.c.l.b16 %v6547
    %v7409 = vunpack.c.h.b16 %v6547
    %v7410 = vunpack.c.l.b16 %v6548
    %v7411 = vunpack.c.h.b16 %v6548
    %v7412 = vunpack.c.l.b16 %v6549
    %v7413 = vunpack.c.h.b16 %v6549
    %v7414 = vunpack.c.l.b16 %v6550
    %v7415 = vunpack.c.l.b16 %v6551
    %v7416 = vunpack.c.h.b16 %v6551
    %v7417 = vunpack.c.l.b16 %v6552
    %v7418 = vunpack.c.h.b16 %v6552
    %v7419 = vunpack.c.l.b16 %v6553
    %v7420 = vunpack.c.h.b16 %v6553
    %v7421 = vunpack.c.l.b16 %v6554
    %v7422 = vunpack.c.h.b16 %v6554
    %v7423 = vunpack.c.l.b16 %v6555
    %v7424 = vunpack.c.l.b16 %v6556
    %v7425 = vunpack.c.h.b16 %v6556
    %v7426 = vunpack.c.l.b16 %v6557
    %v7427 = vunpack.c.h.b16 %v6557
    %v7428 = vunpack.c.l.b16 %v6558
    %v7429 = vunpack.c.h.b16 %v6558
    %v7430 = vunpack.c.l.b16 %v6559
    %v7431 = vunpack.c.h.b16 %v6559
    %v7432 = vunpack.c.l.b16 %v6560
    %v7433 = vunpack.c.l.b16 %v6561
    %v7434 = vunpack.c.h.b16 %v6561
    %v7435 = vunpack.c.l.b16 %v6562
    %v7436 = vunpack.c.h.b16 %v6562
    %v7437 = vunpack.c.l.b16 %v6563
    %v7438 = vunpack.c.h.b16 %v6563
    %v7439 = vunpack.c.l.b16 %v6564
    %v7440 = vunpack.c.h.b16 %v6564
    %v7441 = vunpack.c.l.b16 %v6565
    %v7442 = vunpack.c.l.b16 %v6566
    %v7443 = vunpack.c.h.b16 %v6566
    %v7444 = vunpack.c.l.b16 %v6567
    %v7445 = vunpack.c.h.b16 %v6567
    %v7446 = vunpack.c.l.b16 %v6568
    %v7447 = vunpack.c.h.b16 %v6568
    %v7448 = vunpack.c.l.b16 %v6569
    %v7449 = vunpack.c.h.b16 %v6569
    %v7450 = vunpack.c.l.b16 %v6570
    %v7451 = vunpack.c.l.b16 %v6571
    %v7452 = vunpack.c.h.b16 %v6571
    %v7453 = vunpack.c.l.b16 %v6572
    %v7454 = vunpack.c.h.b16 %v6572
    %v7455 = vunpack.c.l.b16 %v6573
    %v7456 = vunpack.c.h.b16 %v6573
    %v7457 = vunpack.c.l.b16 %v6574
    %v7458 = vunpack.c.h.b16 %v6574
    %v7459 = vunpack.c.l.b16 %v6575
    %v7460 = vunpack.c.l.b16 %v6576
    %v7461 = vunpack.c.h.b16 %v6576
    %v7462 = vunpack.c.l.b16 %v6577
    %v7463 = vunpack.c.h.b16 %v6577
    %v7464 = vunpack.c.l.b16 %v6578
    %v7465 = vunpack.c.h.b16 %v6578
    %v7466 = vunpack.c.l.b16 %v6579
    %v7467 = vunpack.c.h.b16 %v6579
    %v7468 = vunpack.c.l.b16 %v6580
    %v7469 = vunpack.c.l.b16 %v6581
    %v7470 = vunpack.c.h.b16 %v6581
    %v7471 = vunpack.c.l.b16 %v6582
    %v7472 = vunpack.c.h.b16 %v6582
    %v7473 = vunpack.c.l.b16 %v6583
    %v7474 = vunpack.c.h.b16 %v6583
    %v7475 = vunpack.c.l.b16 %v6584
    %v7476 = vunpack.c.h.b16 %v6584
    %v7477 = vunpack.c.l.b16 %v6585
    %v7478 = vunpack.c.l.b16 %v6586
    %v7479 = vunpack.c.h.b16 %v6586
    %v7480 = vunpack.c.l.b16 %v6587
    %v7481 = vunpack.c.h.b16 %v6587
    %v7482 = vunpack.c.l.b16 %v6588
    %v7483 = vunpack.c.h.b16 %v6588
    %v7484 = vunpack.c.l.b16 %v6589
    %v7485 = vunpack.c.h.b16 %v6589
    %v7486 = vunpack.c.l.b16 %v6590
    %v7487 = vpack.c.b16 %v6920, %v6911
    %v7488 = vpack.c.b16 %v6921, %v6912
    %v7489 = vpack.c.b16 %v6922, %v6913
    %v7490 = vpack.c.b16 %v6923, %v6914
    %v7491 = vpack.c.b16 %v6924, %v6915
    %v7492 = vpack.c.b16 %v6925, %v6916
    %v7493 = vpack.c.b16 %v6926, %v6917
    %v7494 = vpack.c.b16 %v6927, %v6918
    %v7495 = vpack.c.b16 %v6928, %v6919
    %v7496 = vpack.c.b16 %v6938, %v6929
    %v7497 = vpack.c.b16 %v6939, %v6930
    %v7498 = vpack.c.b16 %v6940, %v6931
    %v7499 = vpack.c.b16 %v6941, %v6932
    %v7500 = vpack.c.b16 %v6942, %v6933
    %v7501 = vpack.c.b16 %v6943, %v6934
    %v7502 = vpack.c.b16 %v6944, %v6935
    %v7503 = vpack.c.b16 %v6945, %v6936
    %v7504 = vpack.c.b16 %v6946, %v6937
    %v7505 = vpack.c.b16 %v6956, %v6947
    %v7506 = vpack.c.b16 %v6957, %v6948
    %v7507 = vpack.c.b16 %v6958, %v6949
    %v7508 = vpack.c.b16 %v6959, %v6950
    %v7509 = vpack.c.b16 %v6960, %v6951
    %v7510 = vpack.c.b16 %v6961, %v6952
    %v7511 = vpack.c.b16 %v6962, %v6953
    %v7512 = vpack.c.b16 %v6963, %v6954
    %v7513 = vpack.c.b16 %v6964, %v6955
    %v7514 = vpack.c.b16 %v6974, %v6965
    %v7515 = vpack.c.b16 %v6975, %v6966
    %v7516 = vpack.c.b16 %v6976, %v6967
    %v7517 = vpack.c.b16 %v6977, %v6968
    %v7518 = vpack.c.b16 %v6978, %v6969
    %v7519 = vpack.c.b16 %v6979, %v6970
    %v7520 = vpack.c.b16 %v6980, %v6971
    %v7521 = vpack.c.b16 %v6981, %v6972
    %v7522 = vpack.c.b16 %v6982, %v6973
    %v7523 = vpack.c.b16 %v6992, %v6983
    %v7524 = vpack.c.b16 %v6993, %v6984
    %v7525 = vpack.c.b16 %v6994, %v6985
    %v7526 = vpack.c.b16 %v6995, %v6986
    %v7527 = vpack.c.b16 %v6996, %v6987
    %v7528 = vpack.c.b16 %v6997, %v6988
    %v7529 = vpack.c.b16 %v6998, %v6989
    %v7530 = vpack.c.b16 %v6999, %v6990
    %v7531 = vpack.c.b16 %v7000, %v6991
    %v7532 = vpack.c.b16 %v7010, %v7001
    %v7533 = vpack.c.b16 %v7011, %v7002
    %v7534 = vpack.c.b16 %v7012, %v7003
    %v7535 = vpack.c.b16 %v7013, %v7004
    %v7536 = vpack.c.b16 %v7014, %v7005
    %v7537 = vpack.c.b16 %v7015, %v7006
    %v7538 = vpack.c.b16 %v7016, %v7007
    %v7539 = vpack.c.b16 %v7017, %v7008
    %v7540 = vpack.c.b16 %v7018, %v7009
    %v7541 = vpack.c.b16 %v7028, %v7019
    %v7542 = vpack.c.b16 %v7029, %v7020
    %v7543 = vpack.c.b16 %v7030, %v7021
    %v7544 = vpack.c.b16 %v7031, %v7022
    %v7545 = vpack.c.b16 %v7032, %v7023
    %v7546 = vpack.c.b16 %v7033, %v7024
    %v7547 = vpack.c.b16 %v7034, %v7025
    %v7548 = vpack.c.b16 %v7035, %v7026
    %v7549 = vpack.c.b16 %v7036, %v7027
    %v7550 = vpack.c.b16 %v7046, %v7037
    %v7551 = vpack.c.b16 %v7047, %v7038
    %v7552 = vpack.c.b16 %v7048, %v7039
    %v7553 = vpack.c.b16 %v7049, %v7040
    %v7554 = vpack.c.b16 %v7050, %v7041
    %v7555 = vpack.c.b16 %v7051, %v7042
    %v7556 = vpack.c.b16 %v7052, %v7043
    %v7557 = vpack.c.b16 %v7053, %v7044
    %v7558 = vpack.c.b16 %v7054, %v7045
    %v7559 = vpack.c.b16 %v7064, %v7055
    %v7560 = vpack.c.b16 %v7065, %v7056
    %v7561 = vpack.c.b16 %v7066, %v7057
    %v7562 = vpack.c.b16 %v7067, %v7058
    %v7563 = vpack.c.b16 %v7068, %v7059
    %v7564 = vpack.c.b16 %v7069, %v7060
    %v7565 = vpack.c.b16 %v7070, %v7061
    %v7566 = vpack.c.b16 %v7071, %v7062
    %v7567 = vpack.c.b16 %v7072, %v7063
    %v7568 = vpack.c.b16 %v7082, %v7073
    %v7569 = vpack.c.b16 %v7083, %v7074
    %v7570 = vpack.c.b16 %v7084, %v7075
    %v7571 = vpack.c.b16 %v7085, %v7076
    %v7572 = vpack.c.b16 %v7086, %v7077
    %v7573 = vpack.c.b16 %v7087, %v7078
    %v7574 = vpack.c.b16 %v7088, %v7079
    %v7575 = vpack.c.b16 %v7089, %v7080
    %v7576 = vpack.c.b16 %v7090, %v7081
    %v7577 = vpack.c.b16 %v7100, %v7091
    %v7578 = vpack.c.b16 %v7101, %v7092
    %v7579 = vpack.c.b16 %v7102, %v7093
    %v7580 = vpack.c.b16 %v7103, %v7094
    %v7581 = vpack.c.b16 %v7104, %v7095
    %v7582 = vpack.c.b16 %v7105, %v7096
    %v7583 = vpack.c.b16 %v7106, %v7097
    %v7584 = vpack.c.b16 %v7107, %v7098
    %v7585 = vpack.c.b16 %v7108, %v7099
    %v7586 = vpack.c.b16 %v7118, %v7109
    %v7587 = vpack.c.b16 %v7119, %v7110
    %v7588 = vpack.c.b16 %v7120, %v7111
    %v7589 = vpack.c.b16 %v7121, %v7112
    %v7590 = vpack.c.b16 %v7122, %v7113
    %v7591 = vpack.c.b16 %v7123, %v7114
    %v7592 = vpack.c.b16 %v7124, %v7115
    %v7593 = vpack.c.b16 %v7125, %v7116
    %v7594 = vpack.c.b16 %v7126, %v7117
    %v7595 = vpack.c.b16 %v7136, %v7127
    %v7596 = vpack.c.b16 %v7137, %v7128
    %v7597 = vpack.c.b16 %v7138, %v7129
    %v7598 = vpack.c.b16 %v7139, %v7130
    %v7599 = vpack.c.b16 %v7140, %v7131
    %v7600 = vpack.c.b16 %v7141, %v7132
    %v7601 = vpack.c.b16 %v7142, %v7133
    %v7602 = vpack.c.b16 %v7143, %v7134
    %v7603 = vpack.c.b16 %v7144, %v7135
    %v7604 = vpack.c.b16 %v7154, %v7145
    %v7605 = vpack.c.b16 %v7155, %v7146
    %v7606 = vpack.c.b16 %v7156, %v7147
    %v7607 = vpack.c.b16 %v7157, %v7148
    %v7608 = vpack.c.b16 %v7158, %v7149
    %v7609 = vpack.c.b16 %v7159, %v7150
    %v7610 = vpack.c.b16 %v7160, %v7151
    %v7611 = vpack.c.b16 %v7161, %v7152
    %v7612 = vpack.c.b16 %v7162, %v7153
    %v7613 = vpack.c.b16 %v7172, %v7163
    %v7614 = vpack.c.b16 %v7173, %v7164
    %v7615 = vpack.c.b16 %v7174, %v7165
    %v7616 = vpack.c.b16 %v7175, %v7166
    %v7617 = vpack.c.b16 %v7176, %v7167
    %v7618 = vpack.c.b16 %v7177, %v7168
    %v7619 = vpack.c.b16 %v7178, %v7169
    %v7620 = vpack.c.b16 %v7179, %v7170
    %v7621 = vpack.c.b16 %v7180, %v7171
    %v7622 = vpack.c.b16 %v7190, %v7181
    %v7623 = vpack.c.b16 %v7191, %v7182
    %v7624 = vpack.c.b16 %v7192, %v7183
    %v7625 = vpack.c.b16 %v7193, %v7184
    %v7626 = vpack.c.b16 %v7194, %v7185
    %v7627 = vpack.c.b16 %v7195, %v7186
    %v7628 = vpack.c.b16 %v7196, %v7187
    %v7629 = vpack.c.b16 %v7197, %v7188
    %v7630 = vpack.c.b16 %v7198, %v7189
    %v7631 = vpack.c.b16 %v7208, %v7199
    %v7632 = vpack.c.b16 %v7209, %v7200
    %v7633 = vpack.c.b16 %v7210, %v7201
    %v7634 = vpack.c.b16 %v7211, %v7202
    %v7635 = vpack.c.b16 %v7212, %v7203
    %v7636 = vpack.c.b16 %v7213, %v7204
    %v7637 = vpack.c.b16 %v7214, %v7205
    %v7638 = vpack.c.b16 %v7215, %v7206
    %v7639 = vpack.c.b16 %v7216, %v7207
    %v7640 = vpack.c.b16 %v7226, %v7217
    %v7641 = vpack.c.b16 %v7227, %v7218
    %v7642 = vpack.c.b16 %v7228, %v7219
    %v7643 = vpack.c.b16 %v7229, %v7220
    %v7644 = vpack.c.b16 %v7230, %v7221
    %v7645 = vpack.c.b16 %v7231, %v7222
    %v7646 = vpack.c.b16 %v7232, %v7223
    %v7647 = vpack.c.b16 %v7233, %v7224
    %v7648 = vpack.c.b16 %v7234, %v7225
    %v7649 = vpack.c.b16 %v7244, %v7235
    %v7650 = vpack.c.b16 %v7245, %v7236
    %v7651 = vpack.c.b16 %v7246, %v7237
    %v7652 = vpack.c.b16 %v7247, %v7238
    %v7653 = vpack.c.b16 %v7248, %v7239
    %v7654 = vpack.c.b16 %v7249, %v7240
    %v7655 = vpack.c.b16 %v7250, %v7241
    %v7656 = vpack.c.b16 %v7251, %v7242
    %v7657 = vpack.c.b16 %v7252, %v7243
    %v7658 = vpack.c.b16 %v7262, %v7253
    %v7659 = vpack.c.b16 %v7263, %v7254
    %v7660 = vpack.c.b16 %v7264, %v7255
    %v7661 = vpack.c.b16 %v7265, %v7256
    %v7662 = vpack.c.b16 %v7266, %v7257
    %v7663 = vpack.c.b16 %v7267, %v7258
    %v7664 = vpack.c.b16 %v7268, %v7259
    %v7665 = vpack.c.b16 %v7269, %v7260
    %v7666 = vpack.c.b16 %v7270, %v7261
    %v7667 = vpack.c.b16 %v7280, %v7271
    %v7668 = vpack.c.b16 %v7281, %v7272
    %v7669 = vpack.c.b16 %v7282, %v7273
    %v7670 = vpack.c.b16 %v7283, %v7274
    %v7671 = vpack.c.b16 %v7284, %v7275
    %v7672 = vpack.c.b16 %v7285, %v7276
    %v7673 = vpack.c.b16 %v7286, %v7277
    %v7674 = vpack.c.b16 %v7287, %v7278
    %v7675 = vpack.c.b16 %v7288, %v7279
    %v7676 = vpack.c.b16 %v7298, %v7289
    %v7677 = vpack.c.b16 %v7299, %v7290
    %v7678 = vpack.c.b16 %v7300, %v7291
    %v7679 = vpack.c.b16 %v7301, %v7292
    %v7680 = vpack.c.b16 %v7302, %v7293
    %v7681 = vpack.c.b16 %v7303, %v7294
    %v7682 = vpack.c.b16 %v7304, %v7295
    %v7683 = vpack.c.b16 %v7305, %v7296
    %v7684 = vpack.c.b16 %v7306, %v7297
    %v7685 = vpack.c.b16 %v7316, %v7307
    %v7686 = vpack.c.b16 %v7317, %v7308
    %v7687 = vpack.c.b16 %v7318, %v7309
    %v7688 = vpack.c.b16 %v7319, %v7310
    %v7689 = vpack.c.b16 %v7320, %v7311
    %v7690 = vpack.c.b16 %v7321, %v7312
    %v7691 = vpack.c.b16 %v7322, %v7313
    %v7692 = vpack.c.b16 %v7323, %v7314
    %v7693 = vpack.c.b16 %v7324, %v7315
    %v7694 = vpack.c.b16 %v7334, %v7325
    %v7695 = vpack.c.b16 %v7335, %v7326
    %v7696 = vpack.c.b16 %v7336, %v7327
    %v7697 = vpack.c.b16 %v7337, %v7328
    %v7698 = vpack.c.b16 %v7338, %v7329
    %v7699 = vpack.c.b16 %v7339, %v7330
    %v7700 = vpack.c.b16 %v7340, %v7331
    %v7701 = vpack.c.b16 %v7341, %v7332
    %v7702 = vpack.c.b16 %v7342, %v7333
    %v7703 = vpack.c.b16 %v7352, %v7343
    %v7704 = vpack.c.b16 %v7353, %v7344
    %v7705 = vpack.c.b16 %v7354, %v7345
    %v7706 = vpack.c.b16 %v7355, %v7346
    %v7707 = vpack.c.b16 %v7356, %v7347
    %v7708 = vpack.c.b16 %v7357, %v7348
    %v7709 = vpack.c.b16 %v7358, %v7349
    %v7710 = vpack.c.b16 %v7359, %v7350
    %v7711 = vpack.c.b16 %v7360, %v7351
    %v7712 = vpack.c.b16 %v7370, %v7361
    %v7713 = vpack.c.b16 %v7371, %v7362
    %v7714 = vpack.c.b16 %v7372, %v7363
    %v7715 = vpack.c.b16 %v7373, %v7364
    %v7716 = vpack.c.b16 %v7374, %v7365
    %v7717 = vpack.c.b16 %v7375, %v7366
    %v7718 = vpack.c.b16 %v7376, %v7367
    %v7719 = vpack.c.b16 %v7377, %v7368
    %v7720 = vpack.c.b16 %v7378, %v7369
    %v7721 = vpack.c.b16 %v7388, %v7379
    %v7722 = vpack.c.b16 %v7389, %v7380
    %v7723 = vpack.c.b16 %v7390, %v7381
    %v7724 = vpack.c.b16 %v7391, %v7382
    %v7725 = vpack.c.b16 %v7392, %v7383
    %v7726 = vpack.c.b16 %v7393, %v7384
    %v7727 = vpack.c.b16 %v7394, %v7385
    %v7728 = vpack.c.b16 %v7395, %v7386
    %v7729 = vpack.c.b16 %v7396, %v7387
    %v7730 = vpack.c.b16 %v7406, %v7397
    %v7731 = vpack.c.b16 %v7407, %v7398
    %v7732 = vpack.c.b16 %v7408, %v7399
    %v7733 = vpack.c.b16 %v7409, %v7400
    %v7734 = vpack.c.b16 %v7410, %v7401
    %v7735 = vpack.c.b16 %v7411, %v7402
    %v7736 = vpack.c.b16 %v7412, %v7403
    %v7737 = vpack.c.b16 %v7413, %v7404
    %v7738 = vpack.c.b16 %v7414, %v7405
    %v7739 = vpack.c.b16 %v7424, %v7415
    %v7740 = vpack.c.b16 %v7425, %v7416
    %v7741 = vpack.c.b16 %v7426, %v7417
    %v7742 = vpack.c.b16 %v7427, %v7418
    %v7743 = vpack.c.b16 %v7428, %v7419
    %v7744 = vpack.c.b16 %v7429, %v7420
    %v7745 = vpack.c.b16 %v7430, %v7421
    %v7746 = vpack.c.b16 %v7431, %v7422
    %v7747 = vpack.c.b16 %v7432, %v7423
    %v7748 = vpack.c.b16 %v7442, %v7433
    %v7749 = vpack.c.b16 %v7443, %v7434
    %v7750 = vpack.c.b16 %v7444, %v7435
    %v7751 = vpack.c.b16 %v7445, %v7436
    %v7752 = vpack.c.b16 %v7446, %v7437
    %v7753 = vpack.c.b16 %v7447, %v7438
    %v7754 = vpack.c.b16 %v7448, %v7439
    %v7755 = vpack.c.b16 %v7449, %v7440
    %v7756 = vpack.c.b16 %v7450, %v7441
    %v7757 = vpack.c.b16 %v7460, %v7451
    %v7758 = vpack.c.b16 %v7461, %v7452
    %v7759 = vpack.c.b16 %v7462, %v7453
    %v7760 = vpack.c.b16 %v7463, %v7454
    %v7761 = vpack.c.b16 %v7464, %v7455
    %v7762 = vpack.c.b16 %v7465, %v7456
    %v7763 = vpack.c.b16 %v7466, %v7457
    %v7764 = vpack.c.b16 %v7467, %v7458
    %v7765 = vpack.c.b16 %v7468, %v7459
    %v7766 = vpack.c.b16 %v7478, %v7469
    %v7767 = vpack.c.b16 %v7479, %v7470
    %v7768 = vpack.c.b16 %v7480, %v7471
    %v7769 = vpack.c.b16 %v7481, %v7472
    %v7770 = vpack.c.b16 %v7482, %v7473
    %v7771 = vpack.c.b16 %v7483, %v7474
    %v7772 = vpack.c.b16 %v7484, %v7475
    %v7773 = vpack.c.b16 %v7485, %v7476
    %v7774 = vpack.c.b16 %v7486, %v7477
    %8063 = vmatpush.bf16.msra.mxu0 %v7550
    %8064 = vmatpush.bf16.msra.mxu0 %v7541
    %8065 = vmatpush.bf16.msra.mxu0 %v7532
    %8066 = vmatpush.bf16.msra.mxu0 %v7523
    %8067 = vmatpush.bf16.msra.mxu0 %v7514
    %8068 = vmatpush.bf16.msra.mxu0 %v7505
    %8069 = vmatpush.bf16.msra.mxu0 %v7496
    %8070 = vmatpush.bf16.msra.mxu0 %v7487
    %8071 = vmatmul.bf16.gmra.mxu0 %v6264
    %v8072 = vpop.f32.mrf.mxu0
    %v8073 = vadd.f32 0.0, %v8072
    %v8074 = vpop.f32.mrf.mxu0
    %8075 = vdwg.mxu0
    %8076 = vmatpush.bf16.msra.mxu0 %v7622
    %8077 = vmatpush.bf16.msra.mxu0 %v7613
    %8078 = vmatpush.bf16.msra.mxu0 %v7604
    %8079 = vmatpush.bf16.msra.mxu0 %v7595
    %8080 = vmatpush.bf16.msra.mxu0 %v7586
    %8081 = vmatpush.bf16.msra.mxu0 %v7577
    %8082 = vmatpush.bf16.msra.mxu0 %v7568
    %8083 = vmatpush.bf16.msra.mxu0 %v7559
    %8084 = vmatmul.bf16.gmra.mxu0 %v6265
    %v8085 = vpop.f32.mrf.mxu0
    %v8086 = vadd.f32 %v8073, %v8085
    %v8087 = vpop.f32.mrf.mxu0
    %8088 = vdwg.mxu0
    %8089 = vmatpush.bf16.msra.mxu0 %v7694
    %8090 = vmatpush.bf16.msra.mxu0 %v7685
    %8091 = vmatpush.bf16.msra.mxu0 %v7676
    %8092 = vmatpush.bf16.msra.mxu0 %v7667
    %8093 = vmatpush.bf16.msra.mxu0 %v7658
    %8094 = vmatpush.bf16.msra.mxu0 %v7649
    %8095 = vmatpush.bf16.msra.mxu0 %v7640
    %8096 = vmatpush.bf16.msra.mxu0 %v7631
    %8097 = vmatmul.bf16.gmra.mxu0 %v6266
    %v8098 = vpop.f32.mrf.mxu0
    %v8099 = vadd.f32 %v8086, %v8098
    %v8100 = vpop.f32.mrf.mxu0
    %8101 = vdwg.mxu0
    %8102 = vmatpush.bf16.msra.mxu0 %v7766
    %8103 = vmatpush.bf16.msra.mxu0 %v7757
    %8104 = vmatpush.bf16.msra.mxu0 %v7748
    %8105 = vmatpush.bf16.msra.mxu0 %v7739
    %8106 = vmatpush.bf16.msra.mxu0 %v7730
    %8107 = vmatpush.bf16.msra.mxu0 %v7721
    %8108 = vmatpush.bf16.msra.mxu0 %v7712
    %8109 = vmatpush.bf16.msra.mxu0 %v7703
    %8110 = vmatmul.bf16.gmra.mxu0 %v6267
    %v8111 = vpop.f32.mrf.mxu0
    %v8112 = vadd.f32 %v8099, %v8111
    %v8113 = vpop.f32.mrf.mxu0
    %8114 = vdwg.mxu0
    %8115 = vmatpush.bf16.msra.mxu0 %v7551
    %8116 = vmatpush.bf16.msra.mxu0 %v7542
    %8117 = vmatpush.bf16.msra.mxu0 %v7533
    %8118 = vmatpush.bf16.msra.mxu0 %v7524
    %8119 = vmatpush.bf16.msra.mxu0 %v7515
    %8120 = vmatpush.bf16.msra.mxu0 %v7506
    %8121 = vmatpush.bf16.msra.mxu0 %v7497
    %8122 = vmatpush.bf16.msra.mxu0 %v7488
    %8123 = vmatmul.bf16.gmra.mxu0 %v6264
    %v8124 = vpop.f32.mrf.mxu0
    %v8125 = vadd.f32 0.0, %v8124
    %v8126 = vpop.f32.mrf.mxu0
    %8127 = vdwg.mxu0
    %8128 = vmatpush.bf16.msra.mxu0 %v7623
    %8129 = vmatpush.bf16.msra.mxu0 %v7614
    %8130 = vmatpush.bf16.msra.mxu0 %v7605
    %8131 = vmatpush.bf16.msra.mxu0 %v7596
    %8132 = vmatpush.bf16.msra.mxu0 %v7587
    %8133 = vmatpush.bf16.msra.mxu0 %v7578
    %8134 = vmatpush.bf16.msra.mxu0 %v7569
    %8135 = vmatpush.bf16.msra.mxu0 %v7560
    %8136 = vmatmul.bf16.gmra.mxu0 %v6265
    %v8137 = vpop.f32.mrf.mxu0
    %v8138 = vadd.f32 %v8125, %v8137
    %v8139 = vpop.f32.mrf.mxu0
    %8140 = vdwg.mxu0
    %8141 = vmatpush.bf16.msra.mxu0 %v7695
    %8142 = vmatpush.bf16.msra.mxu0 %v7686
    %8143 = vmatpush.bf16.msra.mxu0 %v7677
    %8144 = vmatpush.bf16.msra.mxu0 %v7668
    %8145 = vmatpush.bf16.msra.mxu0 %v7659
    %8146 = vmatpush.bf16.msra.mxu0 %v7650
    %8147 = vmatpush.bf16.msra.mxu0 %v7641
    %8148 = vmatpush.bf16.msra.mxu0 %v7632
    %8149 = vmatmul.bf16.gmra.mxu0 %v6266
    %v8150 = vpop.f32.mrf.mxu0
    %v8151 = vadd.f32 %v8138, %v8150
    %v8152 = vpop.f32.mrf.mxu0
    %8153 = vdwg.mxu0
    %8154 = vmatpush.bf16.msra.mxu0 %v7767
    %8155 = vmatpush.bf16.msra.mxu0 %v7758
    %8156 = vmatpush.bf16.msra.mxu0 %v7749
    %8157 = vmatpush.bf16.msra.mxu0 %v7740
    %8158 = vmatpush.bf16.msra.mxu0 %v7731
    %8159 = vmatpush.bf16.msra.mxu0 %v7722
    %8160 = vmatpush.bf16.msra.mxu0 %v7713
    %8161 = vmatpush.bf16.msra.mxu0 %v7704
    %8162 = vmatmul.bf16.gmra.mxu0 %v6267
    %v8163 = vpop.f32.mrf.mxu0
    %v8164 = vadd.f32 %v8151, %v8163
    %v8165 = vpop.f32.mrf.mxu0
    %8166 = vdwg.mxu0
    %8167 = vmatpush.bf16.msra.mxu0 %v7552
    %8168 = vmatpush.bf16.msra.mxu0 %v7543
    %8169 = vmatpush.bf16.msra.mxu0 %v7534
    %8170 = vmatpush.bf16.msra.mxu0 %v7525
    %8171 = vmatpush.bf16.msra.mxu0 %v7516
    %8172 = vmatpush.bf16.msra.mxu0 %v7507
    %8173 = vmatpush.bf16.msra.mxu0 %v7498
    %8174 = vmatpush.bf16.msra.mxu0 %v7489
    %8175 = vmatmul.bf16.gmra.mxu0 %v6264
    %v8176 = vpop.f32.mrf.mxu0
    %v8177 = vadd.f32 0.0, %v8176
    %v8178 = vpop.f32.mrf.mxu0
    %8179 = vdwg.mxu0
    %8180 = vmatpush.bf16.msra.mxu0 %v7624
    %8181 = vmatpush.bf16.msra.mxu0 %v7615
    %8182 = vmatpush.bf16.msra.mxu0 %v7606
    %8183 = vmatpush.bf16.msra.mxu0 %v7597
    %8184 = vmatpush.bf16.msra.mxu0 %v7588
    %8185 = vmatpush.bf16.msra.mxu0 %v7579
    %8186 = vmatpush.bf16.msra.mxu0 %v7570
    %8187 = vmatpush.bf16.msra.mxu0 %v7561
    %8188 = vmatmul.bf16.gmra.mxu0 %v6265
    %v8189 = vpop.f32.mrf.mxu0
    %v8190 = vadd.f32 %v8177, %v8189
    %v8191 = vpop.f32.mrf.mxu0
    %8192 = vdwg.mxu0
    %8193 = vmatpush.bf16.msra.mxu0 %v7696
    %8194 = vmatpush.bf16.msra.mxu0 %v7687
    %8195 = vmatpush.bf16.msra.mxu0 %v7678
    %8196 = vmatpush.bf16.msra.mxu0 %v7669
    %8197 = vmatpush.bf16.msra.mxu0 %v7660
    %8198 = vmatpush.bf16.msra.mxu0 %v7651
    %8199 = vmatpush.bf16.msra.mxu0 %v7642
    %8200 = vmatpush.bf16.msra.mxu0 %v7633
    %8201 = vmatmul.bf16.gmra.mxu0 %v6266
    %v8202 = vpop.f32.mrf.mxu0
    %v8203 = vadd.f32 %v8190, %v8202
    %v8204 = vpop.f32.mrf.mxu0
    %8205 = vdwg.mxu0
    %8206 = vmatpush.bf16.msra.mxu0 %v7768
    %8207 = vmatpush.bf16.msra.mxu0 %v7759
    %8208 = vmatpush.bf16.msra.mxu0 %v7750
    %8209 = vmatpush.bf16.msra.mxu0 %v7741
    %8210 = vmatpush.bf16.msra.mxu0 %v7732
    %8211 = vmatpush.bf16.msra.mxu0 %v7723
    %8212 = vmatpush.bf16.msra.mxu0 %v7714
    %8213 = vmatpush.bf16.msra.mxu0 %v7705
    %8214 = vmatmul.bf16.gmra.mxu0 %v6267
    %v8215 = vpop.f32.mrf.mxu0
    %v8216 = vadd.f32 %v8203, %v8215
    %v8217 = vpop.f32.mrf.mxu0
    %8218 = vdwg.mxu0
    %8219 = vmatpush.bf16.msra.mxu0 %v7553
    %8220 = vmatpush.bf16.msra.mxu0 %v7544
    %8221 = vmatpush.bf16.msra.mxu0 %v7535
    %8222 = vmatpush.bf16.msra.mxu0 %v7526
    %8223 = vmatpush.bf16.msra.mxu0 %v7517
    %8224 = vmatpush.bf16.msra.mxu0 %v7508
    %8225 = vmatpush.bf16.msra.mxu0 %v7499
    %8226 = vmatpush.bf16.msra.mxu0 %v7490
    %8227 = vmatmul.bf16.gmra.mxu0 %v6264
    %v8228 = vpop.f32.mrf.mxu0
    %v8229 = vadd.f32 0.0, %v8228
    %v8230 = vpop.f32.mrf.mxu0
    %8231 = vdwg.mxu0
    %8232 = vmatpush.bf16.msra.mxu0 %v7625
    %8233 = vmatpush.bf16.msra.mxu0 %v7616
    %8234 = vmatpush.bf16.msra.mxu0 %v7607
    %8235 = vmatpush.bf16.msra.mxu0 %v7598
    %8236 = vmatpush.bf16.msra.mxu0 %v7589
    %8237 = vmatpush.bf16.msra.mxu0 %v7580
    %8238 = vmatpush.bf16.msra.mxu0 %v7571
    %8239 = vmatpush.bf16.msra.mxu0 %v7562
    %8240 = vmatmul.bf16.gmra.mxu0 %v6265
    %v8241 = vpop.f32.mrf.mxu0
    %v8242 = vadd.f32 %v8229, %v8241
    %v8243 = vpop.f32.mrf.mxu0
    %8244 = vdwg.mxu0
    %8245 = vmatpush.bf16.msra.mxu0 %v7697
    %8246 = vmatpush.bf16.msra.mxu0 %v7688
    %8247 = vmatpush.bf16.msra.mxu0 %v7679
    %8248 = vmatpush.bf16.msra.mxu0 %v7670
    %8249 = vmatpush.bf16.msra.mxu0 %v7661
    %8250 = vmatpush.bf16.msra.mxu0 %v7652
    %8251 = vmatpush.bf16.msra.mxu0 %v7643
    %8252 = vmatpush.bf16.msra.mxu0 %v7634
    %8253 = vmatmul.bf16.gmra.mxu0 %v6266
    %v8254 = vpop.f32.mrf.mxu0
    %v8255 = vadd.f32 %v8242, %v8254
    %v8256 = vpop.f32.mrf.mxu0
    %8257 = vdwg.mxu0
    %8258 = vmatpush.bf16.msra.mxu0 %v7769
    %8259 = vmatpush.bf16.msra.mxu0 %v7760
    %8260 = vmatpush.bf16.msra.mxu0 %v7751
    %8261 = vmatpush.bf16.msra.mxu0 %v7742
    %8262 = vmatpush.bf16.msra.mxu0 %v7733
    %8263 = vmatpush.bf16.msra.mxu0 %v7724
    %8264 = vmatpush.bf16.msra.mxu0 %v7715
    %8265 = vmatpush.bf16.msra.mxu0 %v7706
    %8266 = vmatmul.bf16.gmra.mxu0 %v6267
    %v8267 = vpop.f32.mrf.mxu0
    %v8268 = vadd.f32 %v8255, %v8267
    %v8269 = vpop.f32.mrf.mxu0
    %8270 = vdwg.mxu0
    %8271 = vmatpush.bf16.msra.mxu0 %v7554
    %8272 = vmatpush.bf16.msra.mxu0 %v7545
    %8273 = vmatpush.bf16.msra.mxu0 %v7536
    %8274 = vmatpush.bf16.msra.mxu0 %v7527
    %8275 = vmatpush.bf16.msra.mxu0 %v7518
    %8276 = vmatpush.bf16.msra.mxu0 %v7509
    %8277 = vmatpush.bf16.msra.mxu0 %v7500
    %8278 = vmatpush.bf16.msra.mxu0 %v7491
    %8279 = vmatmul.bf16.gmra.mxu0 %v6264
    %v8280 = vpop.f32.mrf.mxu0
    %v8281 = vadd.f32 0.0, %v8280
    %v8282 = vpop.f32.mrf.mxu0
    %8283 = vdwg.mxu0
    %8284 = vmatpush.bf16.msra.mxu0 %v7626
    %8285 = vmatpush.bf16.msra.mxu0 %v7617
    %8286 = vmatpush.bf16.msra.mxu0 %v7608
    %8287 = vmatpush.bf16.msra.mxu0 %v7599
    %8288 = vmatpush.bf16.msra.mxu0 %v7590
    %8289 = vmatpush.bf16.msra.mxu0 %v7581
    %8290 = vmatpush.bf16.msra.mxu0 %v7572
    %8291 = vmatpush.bf16.msra.mxu0 %v7563
    %8292 = vmatmul.bf16.gmra.mxu0 %v6265
    %v8293 = vpop.f32.mrf.mxu0
    %v8294 = vadd.f32 %v8281, %v8293
    %v8295 = vpop.f32.mrf.mxu0
    %8296 = vdwg.mxu0
    %8297 = vmatpush.bf16.msra.mxu0 %v7698
    %8298 = vmatpush.bf16.msra.mxu0 %v7689
    %8299 = vmatpush.bf16.msra.mxu0 %v7680
    %8300 = vmatpush.bf16.msra.mxu0 %v7671
    %8301 = vmatpush.bf16.msra.mxu0 %v7662
    %8302 = vmatpush.bf16.msra.mxu0 %v7653
    %8303 = vmatpush.bf16.msra.mxu0 %v7644
    %8304 = vmatpush.bf16.msra.mxu0 %v7635
    %8305 = vmatmul.bf16.gmra.mxu0 %v6266
    %v8306 = vpop.f32.mrf.mxu0
    %v8307 = vadd.f32 %v8294, %v8306
    %v8308 = vpop.f32.mrf.mxu0
    %8309 = vdwg.mxu0
    %8310 = vmatpush.bf16.msra.mxu0 %v7770
    %8311 = vmatpush.bf16.msra.mxu0 %v7761
    %8312 = vmatpush.bf16.msra.mxu0 %v7752
    %8313 = vmatpush.bf16.msra.mxu0 %v7743
    %8314 = vmatpush.bf16.msra.mxu0 %v7734
    %8315 = vmatpush.bf16.msra.mxu0 %v7725
    %8316 = vmatpush.bf16.msra.mxu0 %v7716
    %8317 = vmatpush.bf16.msra.mxu0 %v7707
    %8318 = vmatmul.bf16.gmra.mxu0 %v6267
    %v8319 = vpop.f32.mrf.mxu0
    %v8320 = vadd.f32 %v8307, %v8319
    %v8321 = vpop.f32.mrf.mxu0
    %8322 = vdwg.mxu0
    %8323 = vmatpush.bf16.msra.mxu0 %v7555
    %8324 = vmatpush.bf16.msra.mxu0 %v7546
    %8325 = vmatpush.bf16.msra.mxu0 %v7537
    %8326 = vmatpush.bf16.msra.mxu0 %v7528
    %8327 = vmatpush.bf16.msra.mxu0 %v7519
    %8328 = vmatpush.bf16.msra.mxu0 %v7510
    %8329 = vmatpush.bf16.msra.mxu0 %v7501
    %8330 = vmatpush.bf16.msra.mxu0 %v7492
    %8331 = vmatmul.bf16.gmra.mxu0 %v6264
    %v8332 = vpop.f32.mrf.mxu0
    %v8333 = vadd.f32 0.0, %v8332
    %v8334 = vpop.f32.mrf.mxu0
    %8335 = vdwg.mxu0
    %8336 = vmatpush.bf16.msra.mxu0 %v7627
    %8337 = vmatpush.bf16.msra.mxu0 %v7618
    %8338 = vmatpush.bf16.msra.mxu0 %v7609
    %8339 = vmatpush.bf16.msra.mxu0 %v7600
    %8340 = vmatpush.bf16.msra.mxu0 %v7591
    %8341 = vmatpush.bf16.msra.mxu0 %v7582
    %8342 = vmatpush.bf16.msra.mxu0 %v7573
    %8343 = vmatpush.bf16.msra.mxu0 %v7564
    %8344 = vmatmul.bf16.gmra.mxu0 %v6265
    %v8345 = vpop.f32.mrf.mxu0
    %v8346 = vadd.f32 %v8333, %v8345
    %v8347 = vpop.f32.mrf.mxu0
    %8348 = vdwg.mxu0
    %8349 = vmatpush.bf16.msra.mxu0 %v7699
    %8350 = vmatpush.bf16.msra.mxu0 %v7690
    %8351 = vmatpush.bf16.msra.mxu0 %v7681
    %8352 = vmatpush.bf16.msra.mxu0 %v7672
    %8353 = vmatpush.bf16.msra.mxu0 %v7663
    %8354 = vmatpush.bf16.msra.mxu0 %v7654
    %8355 = vmatpush.bf16.msra.mxu0 %v7645
    %8356 = vmatpush.bf16.msra.mxu0 %v7636
    %8357 = vmatmul.bf16.gmra.mxu0 %v6266
    %v8358 = vpop.f32.mrf.mxu0
    %v8359 = vadd.f32 %v8346, %v8358
    %v8360 = vpop.f32.mrf.mxu0
    %8361 = vdwg.mxu0
    %8362 = vmatpush.bf16.msra.mxu0 %v7771
    %8363 = vmatpush.bf16.msra.mxu0 %v7762
    %8364 = vmatpush.bf16.msra.mxu0 %v7753
    %8365 = vmatpush.bf16.msra.mxu0 %v7744
    %8366 = vmatpush.bf16.msra.mxu0 %v7735
    %8367 = vmatpush.bf16.msra.mxu0 %v7726
    %8368 = vmatpush.bf16.msra.mxu0 %v7717
    %8369 = vmatpush.bf16.msra.mxu0 %v7708
    %8370 = vmatmul.bf16.gmra.mxu0 %v6267
    %v8371 = vpop.f32.mrf.mxu0
    %v8372 = vadd.f32 %v8359, %v8371
    %v8373 = vpop.f32.mrf.mxu0
    %8374 = vdwg.mxu0
    %8375 = vmatpush.bf16.msra.mxu0 %v7556
    %8376 = vmatpush.bf16.msra.mxu0 %v7547
    %8377 = vmatpush.bf16.msra.mxu0 %v7538
    %8378 = vmatpush.bf16.msra.mxu0 %v7529
    %8379 = vmatpush.bf16.msra.mxu0 %v7520
    %8380 = vmatpush.bf16.msra.mxu0 %v7511
    %8381 = vmatpush.bf16.msra.mxu0 %v7502
    %8382 = vmatpush.bf16.msra.mxu0 %v7493
    %8383 = vmatmul.bf16.gmra.mxu0 %v6264
    %v8384 = vpop.f32.mrf.mxu0
    %v8385 = vadd.f32 0.0, %v8384
    %v8386 = vpop.f32.mrf.mxu0
    %8387 = vdwg.mxu0
    %8388 = vmatpush.bf16.msra.mxu0 %v7628
    %8389 = vmatpush.bf16.msra.mxu0 %v7619
    %8390 = vmatpush.bf16.msra.mxu0 %v7610
    %8391 = vmatpush.bf16.msra.mxu0 %v7601
    %8392 = vmatpush.bf16.msra.mxu0 %v7592
    %8393 = vmatpush.bf16.msra.mxu0 %v7583
    %8394 = vmatpush.bf16.msra.mxu0 %v7574
    %8395 = vmatpush.bf16.msra.mxu0 %v7565
    %8396 = vmatmul.bf16.gmra.mxu0 %v6265
    %v8397 = vpop.f32.mrf.mxu0
    %v8398 = vadd.f32 %v8385, %v8397
    %v8399 = vpop.f32.mrf.mxu0
    %8400 = vdwg.mxu0
    %8401 = vmatpush.bf16.msra.mxu0 %v7700
    %8402 = vmatpush.bf16.msra.mxu0 %v7691
    %8403 = vmatpush.bf16.msra.mxu0 %v7682
    %8404 = vmatpush.bf16.msra.mxu0 %v7673
    %8405 = vmatpush.bf16.msra.mxu0 %v7664
    %8406 = vmatpush.bf16.msra.mxu0 %v7655
    %8407 = vmatpush.bf16.msra.mxu0 %v7646
    %8408 = vmatpush.bf16.msra.mxu0 %v7637
    %8409 = vmatmul.bf16.gmra.mxu0 %v6266
    %v8410 = vpop.f32.mrf.mxu0
    %v8411 = vadd.f32 %v8398, %v8410
    %v8412 = vpop.f32.mrf.mxu0
    %8413 = vdwg.mxu0
    %8414 = vmatpush.bf16.msra.mxu0 %v7772
    %8415 = vmatpush.bf16.msra.mxu0 %v7763
    %8416 = vmatpush.bf16.msra.mxu0 %v7754
    %8417 = vmatpush.bf16.msra.mxu0 %v7745
    %8418 = vmatpush.bf16.msra.mxu0 %v7736
    %8419 = vmatpush.bf16.msra.mxu0 %v7727
    %8420 = vmatpush.bf16.msra.mxu0 %v7718
    %8421 = vmatpush.bf16.msra.mxu0 %v7709
    %8422 = vmatmul.bf16.gmra.mxu0 %v6267
    %v8423 = vpop.f32.mrf.mxu0
    %v8424 = vadd.f32 %v8411, %v8423
    %v8425 = vpop.f32.mrf.mxu0
    %8426 = vdwg.mxu0
    %8427 = vmatpush.bf16.msra.mxu0 %v7557
    %8428 = vmatpush.bf16.msra.mxu0 %v7548
    %8429 = vmatpush.bf16.msra.mxu0 %v7539
    %8430 = vmatpush.bf16.msra.mxu0 %v7530
    %8431 = vmatpush.bf16.msra.mxu0 %v7521
    %8432 = vmatpush.bf16.msra.mxu0 %v7512
    %8433 = vmatpush.bf16.msra.mxu0 %v7503
    %8434 = vmatpush.bf16.msra.mxu0 %v7494
    %8435 = vmatmul.bf16.gmra.mxu0 %v6264
    %v8436 = vpop.f32.mrf.mxu0
    %v8437 = vadd.f32 0.0, %v8436
    %v8438 = vpop.f32.mrf.mxu0
    %8439 = vdwg.mxu0
    %8440 = vmatpush.bf16.msra.mxu0 %v7629
    %8441 = vmatpush.bf16.msra.mxu0 %v7620
    %8442 = vmatpush.bf16.msra.mxu0 %v7611
    %8443 = vmatpush.bf16.msra.mxu0 %v7602
    %8444 = vmatpush.bf16.msra.mxu0 %v7593
    %8445 = vmatpush.bf16.msra.mxu0 %v7584
    %8446 = vmatpush.bf16.msra.mxu0 %v7575
    %8447 = vmatpush.bf16.msra.mxu0 %v7566
    %8448 = vmatmul.bf16.gmra.mxu0 %v6265
    %v8449 = vpop.f32.mrf.mxu0
    %v8450 = vadd.f32 %v8437, %v8449
    %v8451 = vpop.f32.mrf.mxu0
    %8452 = vdwg.mxu0
    %8453 = vmatpush.bf16.msra.mxu0 %v7701
    %8454 = vmatpush.bf16.msra.mxu0 %v7692
    %8455 = vmatpush.bf16.msra.mxu0 %v7683
    %8456 = vmatpush.bf16.msra.mxu0 %v7674
    %8457 = vmatpush.bf16.msra.mxu0 %v7665
    %8458 = vmatpush.bf16.msra.mxu0 %v7656
    %8459 = vmatpush.bf16.msra.mxu0 %v7647
    %8460 = vmatpush.bf16.msra.mxu0 %v7638
    %8461 = vmatmul.bf16.gmra.mxu0 %v6266
    %v8462 = vpop.f32.mrf.mxu0
    %v8463 = vadd.f32 %v8450, %v8462
    %v8464 = vpop.f32.mrf.mxu0
    %8465 = vdwg.mxu0
    %8466 = vmatpush.bf16.msra.mxu0 %v7773
    %8467 = vmatpush.bf16.msra.mxu0 %v7764
    %8468 = vmatpush.bf16.msra.mxu0 %v7755
    %8469 = vmatpush.bf16.msra.mxu0 %v7746
    %8470 = vmatpush.bf16.msra.mxu0 %v7737
    %8471 = vmatpush.bf16.msra.mxu0 %v7728
    %8472 = vmatpush.bf16.msra.mxu0 %v7719
    %8473 = vmatpush.bf16.msra.mxu0 %v7710
    %8474 = vmatmul.bf16.gmra.mxu0 %v6267
    %v8475 = vpop.f32.mrf.mxu0
    %v8476 = vadd.f32 %v8463, %v8475
    %v8477 = vpop.f32.mrf.mxu0
    %8478 = vdwg.mxu0
    %8479 = vmatpush.bf16.msra.mxu0 %v7558
    %8480 = vmatpush.bf16.msra.mxu0 %v7549
    %8481 = vmatpush.bf16.msra.mxu0 %v7540
    %8482 = vmatpush.bf16.msra.mxu0 %v7531
    %8483 = vmatpush.bf16.msra.mxu0 %v7522
    %8484 = vmatpush.bf16.msra.mxu0 %v7513
    %8485 = vmatpush.bf16.msra.mxu0 %v7504
    %8486 = vmatpush.bf16.msra.mxu0 %v7495
    %8487 = vmatmul.bf16.gmra.mxu0 %v6264
    %v8488 = vpop.f32.mrf.mxu0
    %v8489 = vadd.f32 0.0, %v8488
    %v8490 = vpop.f32.mrf.mxu0
    %8491 = vdwg.mxu0
    %8492 = vmatpush.bf16.msra.mxu0 %v7630
    %8493 = vmatpush.bf16.msra.mxu0 %v7621
    %8494 = vmatpush.bf16.msra.mxu0 %v7612
    %8495 = vmatpush.bf16.msra.mxu0 %v7603
    %8496 = vmatpush.bf16.msra.mxu0 %v7594
    %8497 = vmatpush.bf16.msra.mxu0 %v7585
    %8498 = vmatpush.bf16.msra.mxu0 %v7576
    %8499 = vmatpush.bf16.msra.mxu0 %v7567
    %8500 = vmatmul.bf16.gmra.mxu0 %v6265
    %v8501 = vpop.f32.mrf.mxu0
    %v8502 = vadd.f32 %v8489, %v8501
    %v8503 = vpop.f32.mrf.mxu0
    %8504 = vdwg.mxu0
    %8505 = vmatpush.bf16.msra.mxu0 %v7702
    %8506 = vmatpush.bf16.msra.mxu0 %v7693
    %8507 = vmatpush.bf16.msra.mxu0 %v7684
    %8508 = vmatpush.bf16.msra.mxu0 %v7675
    %8509 = vmatpush.bf16.msra.mxu0 %v7666
    %8510 = vmatpush.bf16.msra.mxu0 %v7657
    %8511 = vmatpush.bf16.msra.mxu0 %v7648
    %8512 = vmatpush.bf16.msra.mxu0 %v7639
    %8513 = vmatmul.bf16.gmra.mxu0 %v6266
    %v8514 = vpop.f32.mrf.mxu0
    %v8515 = vadd.f32 %v8502, %v8514
    %v8516 = vpop.f32.mrf.mxu0
    %8517 = vdwg.mxu0
    %8518 = vmatpush.bf16.msra.mxu0 %v7774
    %8519 = vmatpush.bf16.msra.mxu0 %v7765
    %8520 = vmatpush.bf16.msra.mxu0 %v7756
    %8521 = vmatpush.bf16.msra.mxu0 %v7747
    %8522 = vmatpush.bf16.msra.mxu0 %v7738
    %8523 = vmatpush.bf16.msra.mxu0 %v7729
    %8524 = vmatpush.bf16.msra.mxu0 %v7720
    %8525 = vmatpush.bf16.msra.mxu0 %v7711
    %8526 = vmatmul.bf16.gmra.mxu0 %v6267
    %v8527 = vpop.f32.mrf.mxu0
    %v8528 = vadd.f32 %v8515, %v8527
    %v8529 = vpop.f32.mrf.mxu0
    %8530 = vdwg.mxu0
    %s8531 = scalar_lea.vmem [#allocation10], 26
    %v8532 = vld [vmem:[%s8531] ss:$2 sm:$0xff]
    %s8533 = scalar_lea.vmem [#allocation10], 42
    %v8534 = vld [vmem:[%s8533] ss:$2 sm:$0x1]
    %s8535 = scalar_lea.vmem [#allocation10], 27
    %v8536 = vld [vmem:[%s8535] ss:$2 sm:$0xff]
    %s8537 = scalar_lea.vmem [#allocation10], 43
    %v8538 = vld [vmem:[%s8537] ss:$2 sm:$0x1]
    %v8539 = vrot.slane %v8112, 4
    %v8540 = vadd.f32 %v8112, %v8539
    %v8541 = vrot.slane %v8540, 2
    %v8542 = vadd.f32 %v8540, %v8541
    %v8543 = vrot.slane %v8542, 1
    %v8544 = vadd.f32 %v8542, %v8543
    %v8545 = vrot.slane %v8164, 4
    %v8546 = vadd.f32 %v8164, %v8545
    %v8547 = vrot.slane %v8546, 2
    %v8548 = vadd.f32 %v8546, %v8547
    %v8549 = vrot.slane %v8548, 1
    %v8550 = vadd.f32 %v8548, %v8549
    %v8551 = vrot.slane %v8216, 4
    %v8552 = vadd.f32 %v8216, %v8551
    %v8553 = vrot.slane %v8552, 2
    %v8554 = vadd.f32 %v8552, %v8553
    %v8555 = vrot.slane %v8554, 1
    %v8556 = vadd.f32 %v8554, %v8555
    %v8557 = vrot.slane %v8268, 4
    %v8558 = vadd.f32 %v8268, %v8557
    %v8559 = vrot.slane %v8558, 2
    %v8560 = vadd.f32 %v8558, %v8559
    %v8561 = vrot.slane %v8560, 1
    %v8562 = vadd.f32 %v8560, %v8561
    %v8563 = vrot.slane %v8320, 4
    %v8564 = vadd.f32 %v8320, %v8563
    %v8565 = vrot.slane %v8564, 2
    %v8566 = vadd.f32 %v8564, %v8565
    %v8567 = vrot.slane %v8566, 1
    %v8568 = vadd.f32 %v8566, %v8567
    %v8569 = vrot.slane %v8372, 4
    %v8570 = vadd.f32 %v8372, %v8569
    %v8571 = vrot.slane %v8570, 2
    %v8572 = vadd.f32 %v8570, %v8571
    %v8573 = vrot.slane %v8572, 1
    %v8574 = vadd.f32 %v8572, %v8573
    %v8575 = vrot.slane %v8424, 4
    %v8576 = vadd.f32 %v8424, %v8575
    %v8577 = vrot.slane %v8576, 2
    %v8578 = vadd.f32 %v8576, %v8577
    %v8579 = vrot.slane %v8578, 1
    %v8580 = vadd.f32 %v8578, %v8579
    %v8581 = vrot.slane %v8476, 4
    %v8582 = vadd.f32 %v8476, %v8581
    %v8583 = vrot.slane %v8582, 2
    %v8584 = vadd.f32 %v8582, %v8583
    %v8585 = vrot.slane %v8584, 1
    %v8586 = vadd.f32 %v8584, %v8585
    %v8587 = vrot.slane %v8528, 4
    %v8588 = vadd.f32 %v8528, %v8587
    %v8589 = vrot.slane %v8588, 2
    %v8590 = vadd.f32 %v8588, %v8589
    %v8591 = vrot.slane %v8590, 1
    %v8592 = vadd.f32 %v8590, %v8591
    %v8593 = vmul.f32 %v8544, %v4393
    %v8594 = vmul.f32 %v8550, %v4393
    %v8595 = vmul.f32 %v8556, %v4393
    %v8596 = vmul.f32 %v8562, %v4393
    %v8597 = vmul.f32 %v8568, %v4393
    %v8598 = vmul.f32 %v8574, %v4393
    %v8599 = vmul.f32 %v8580, %v4393
    %v8600 = vmul.f32 %v8586, %v4393
    %v8601 = vmul.f32 %v8592, %v4393
    %v8602 = vsub.f32 %v8112, %v8593
    %v8603 = vsub.f32 %v8164, %v8594
    %v8604 = vsub.f32 %v8216, %v8595
    %v8605 = vsub.f32 %v8268, %v8596
    %v8606 = vsub.f32 %v8320, %v8597
    %v8607 = vsub.f32 %v8372, %v8598
    %v8608 = vsub.f32 %v8424, %v8599
    %v8609 = vsub.f32 %v8476, %v8600
    %v8610 = vsub.f32 %v8528, %v8601
    %v8611 = vmul.f32 %v8602, %v8602
    %v8612 = vmul.f32 %v8603, %v8603
    %v8613 = vmul.f32 %v8604, %v8604
    %v8614 = vmul.f32 %v8605, %v8605
    %v8615 = vmul.f32 %v8606, %v8606
    %v8616 = vmul.f32 %v8607, %v8607
    %v8617 = vmul.f32 %v8608, %v8608
    %v8618 = vmul.f32 %v8609, %v8609
    %v8619 = vmul.f32 %v8610, %v8610
    %v8620 = vrot.slane %v8611, 4
    %v8621 = vadd.f32 %v8611, %v8620
    %v8622 = vrot.slane %v8621, 2
    %v8623 = vadd.f32 %v8621, %v8622
    %v8624 = vrot.slane %v8623, 1
    %v8625 = vadd.f32 %v8623, %v8624
    %v8626 = vrot.slane %v8612, 4
    %v8627 = vadd.f32 %v8612, %v8626
    %v8628 = vrot.slane %v8627, 2
    %v8629 = vadd.f32 %v8627, %v8628
    %v8630 = vrot.slane %v8629, 1
    %v8631 = vadd.f32 %v8629, %v8630
    %v8632 = vrot.slane %v8613, 4
    %v8633 = vadd.f32 %v8613, %v8632
    %v8634 = vrot.slane %v8633, 2
    %v8635 = vadd.f32 %v8633, %v8634
    %v8636 = vrot.slane %v8635, 1
    %v8637 = vadd.f32 %v8635, %v8636
    %v8638 = vrot.slane %v8614, 4
    %v8639 = vadd.f32 %v8614, %v8638
    %v8640 = vrot.slane %v8639, 2
    %v8641 = vadd.f32 %v8639, %v8640
    %v8642 = vrot.slane %v8641, 1
    %v8643 = vadd.f32 %v8641, %v8642
    %v8644 = vrot.slane %v8615, 4
    %v8645 = vadd.f32 %v8615, %v8644
    %v8646 = vrot.slane %v8645, 2
    %v8647 = vadd.f32 %v8645, %v8646
    %v8648 = vrot.slane %v8647, 1
    %v8649 = vadd.f32 %v8647, %v8648
    %v8650 = vrot.slane %v8616, 4
    %v8651 = vadd.f32 %v8616, %v8650
    %v8652 = vrot.slane %v8651, 2
    %v8653 = vadd.f32 %v8651, %v8652
    %v8654 = vrot.slane %v8653, 1
    %v8655 = vadd.f32 %v8653, %v8654
    %v8656 = vrot.slane %v8617, 4
    %v8657 = vadd.f32 %v8617, %v8656
    %v8658 = vrot.slane %v8657, 2
    %v8659 = vadd.f32 %v8657, %v8658
    %v8660 = vrot.slane %v8659, 1
    %v8661 = vadd.f32 %v8659, %v8660
    %v8662 = vrot.slane %v8618, 4
    %v8663 = vadd.f32 %v8618, %v8662
    %v8664 = vrot.slane %v8663, 2
    %v8665 = vadd.f32 %v8663, %v8664
    %v8666 = vrot.slane %v8665, 1
    %v8667 = vadd.f32 %v8665, %v8666
    %v8668 = vrot.slane %v8619, 4
    %v8669 = vadd.f32 %v8619, %v8668
    %v8670 = vrot.slane %v8669, 2
    %v8671 = vadd.f32 %v8669, %v8670
    %v8672 = vrot.slane %v8671, 1
    %v8673 = vadd.f32 %v8671, %v8672
    %v8674 = vmul.f32 %v8625, %v4393
    %v8675 = vmul.f32 %v8631, %v4393
    %v8676 = vmul.f32 %v8637, %v4393
    %v8677 = vmul.f32 %v8643, %v4393
    %v8678 = vmul.f32 %v8649, %v4393
    %v8679 = vmul.f32 %v8655, %v4393
    %v8680 = vmul.f32 %v8661, %v4393
    %v8681 = vmul.f32 %v8667, %v4393
    %v8682 = vmul.f32 %v8673, %v4393
    %v8683 = vadd.f32 %v8674, 1e-05
    %v8684 = vadd.f32 %v8675, 1e-05
    %v8685 = vadd.f32 %v8676, 1e-05
    %v8686 = vadd.f32 %v8677, 1e-05
    %v8687 = vadd.f32 %v8678, 1e-05
    %v8688 = vadd.f32 %v8679, 1e-05
    %v8689 = vadd.f32 %v8680, 1e-05
    %v8690 = vadd.f32 %v8681, 1e-05
    %v8691 = vadd.f32 %v8682, 1e-05
    %v8692 = vrsqrt.pop %v8683
    %v8693 = vmul.f32 %v8692, %v8683
    %v8694 = vmul.f32 %v8693, %v8692
    %v8695 = vmul.f32 0.5, %v8694
    %v8696 = vsub.f32 1.5, %v8695
    %v8697 = vmul.f32 %v8692, %v8696
    %vm8698 = vweird.f32 %v8683
    %vm8699 = vweird.f32 %v8692
    %vm8700 = vmor %vm8698, %vm8699
    %v8701 = vsel %vm8700, %v8692, %v8697
    %v8702 = vrsqrt.pop %v8684
    %v8703 = vmul.f32 %v8702, %v8684
    %v8704 = vmul.f32 %v8703, %v8702
    %v8705 = vmul.f32 0.5, %v8704
    %v8706 = vsub.f32 1.5, %v8705
    %v8707 = vmul.f32 %v8702, %v8706
    %vm8708 = vweird.f32 %v8684
    %vm8709 = vweird.f32 %v8702
    %vm8710 = vmor %vm8708, %vm8709
    %v8711 = vsel %vm8710, %v8702, %v8707
    %v8712 = vrsqrt.pop %v8685
    %v8713 = vmul.f32 %v8712, %v8685
    %v8714 = vmul.f32 %v8713, %v8712
    %v8715 = vmul.f32 0.5, %v8714
    %v8716 = vsub.f32 1.5, %v8715
    %v8717 = vmul.f32 %v8712, %v8716
    %vm8718 = vweird.f32 %v8685
    %vm8719 = vweird.f32 %v8712
    %vm8720 = vmor %vm8718, %vm8719
    %v8721 = vsel %vm8720, %v8712, %v8717
    %v8722 = vrsqrt.pop %v8686
    %v8723 = vmul.f32 %v8722, %v8686
    %v8724 = vmul.f32 %v8723, %v8722
    %v8725 = vmul.f32 0.5, %v8724
    %v8726 = vsub.f32 1.5, %v8725
    %v8727 = vmul.f32 %v8722, %v8726
    %vm8728 = vweird.f32 %v8686
    %vm8729 = vweird.f32 %v8722
    %vm8730 = vmor %vm8728, %vm8729
    %v8731 = vsel %vm8730, %v8722, %v8727
    %v8732 = vrsqrt.pop %v8687
    %v8733 = vmul.f32 %v8732, %v8687
    %v8734 = vmul.f32 %v8733, %v8732
    %v8735 = vmul.f32 0.5, %v8734
    %v8736 = vsub.f32 1.5, %v8735
    %v8737 = vmul.f32 %v8732, %v8736
    %vm8738 = vweird.f32 %v8687
    %vm8739 = vweird.f32 %v8732
    %vm8740 = vmor %vm8738, %vm8739
    %v8741 = vsel %vm8740, %v8732, %v8737
    %v8742 = vrsqrt.pop %v8688
    %v8743 = vmul.f32 %v8742, %v8688
    %v8744 = vmul.f32 %v8743, %v8742
    %v8745 = vmul.f32 0.5, %v8744
    %v8746 = vsub.f32 1.5, %v8745
    %v8747 = vmul.f32 %v8742, %v8746
    %vm8748 = vweird.f32 %v8688
    %vm8749 = vweird.f32 %v8742
    %vm8750 = vmor %vm8748, %vm8749
    %v8751 = vsel %vm8750, %v8742, %v8747
    %v8752 = vrsqrt.pop %v8689
    %v8753 = vmul.f32 %v8752, %v8689
    %v8754 = vmul.f32 %v8753, %v8752
    %v8755 = vmul.f32 0.5, %v8754
    %v8756 = vsub.f32 1.5, %v8755
    %v8757 = vmul.f32 %v8752, %v8756
    %vm8758 = vweird.f32 %v8689
    %vm8759 = vweird.f32 %v8752
    %vm8760 = vmor %vm8758, %vm8759
    %v8761 = vsel %vm8760, %v8752, %v8757
    %v8762 = vrsqrt.pop %v8690
    %v8763 = vmul.f32 %v8762, %v8690
    %v8764 = vmul.f32 %v8763, %v8762
    %v8765 = vmul.f32 0.5, %v8764
    %v8766 = vsub.f32 1.5, %v8765
    %v8767 = vmul.f32 %v8762, %v8766
    %vm8768 = vweird.f32 %v8690
    %vm8769 = vweird.f32 %v8762
    %vm8770 = vmor %vm8768, %vm8769
    %v8771 = vsel %vm8770, %v8762, %v8767
    %v8772 = vrsqrt.pop %v8691
    %v8773 = vmul.f32 %v8772, %v8691
    %v8774 = vmul.f32 %v8773, %v8772
    %v8775 = vmul.f32 0.5, %v8774
    %v8776 = vsub.f32 1.5, %v8775
    %v8777 = vmul.f32 %v8772, %v8776
    %vm8778 = vweird.f32 %v8691
    %vm8779 = vweird.f32 %v8772
    %vm8780 = vmor %vm8778, %vm8779
    %v8781 = vsel %vm8780, %v8772, %v8777
    %v8782 = vmul.f32 %v8602, %v8701
    %v8783 = vmul.f32 %v8603, %v8711
    %v8784 = vmul.f32 %v8604, %v8721
    %v8785 = vmul.f32 %v8605, %v8731
    %v8786 = vmul.f32 %v8606, %v8741
    %v8787 = vmul.f32 %v8607, %v8751
    %v8788 = vmul.f32 %v8608, %v8761
    %v8789 = vmul.f32 %v8609, %v8771
    %v8790 = vmul.f32 %v8610, %v8781
    %v8793 = vperm.slane %v8532, 0
    %v8794 = vperm.slane %v8532, 1
    %v8795 = vperm.slane %v8532, 2
    %v8796 = vperm.slane %v8532, 3
    %v8797 = vperm.slane %v8532, 4
    %v8798 = vperm.slane %v8532, 5
    %v8799 = vperm.slane %v8532, 6
    %v8800 = vperm.slane %v8532, 7
    %v8801 = vperm.slane %v8534, 0
    %v8811 = vmul.f32 %v8782, %v8793
    %v8812 = vmul.f32 %v8783, %v8794
    %v8813 = vmul.f32 %v8784, %v8795
    %v8814 = vmul.f32 %v8785, %v8796
    %v8815 = vmul.f32 %v8786, %v8797
    %v8816 = vmul.f32 %v8787, %v8798
    %v8817 = vmul.f32 %v8788, %v8799
    %v8818 = vmul.f32 %v8789, %v8800
    %v8819 = vmul.f32 %v8790, %v8801
    %v8822 = vperm.slane %v8536, 0
    %v8823 = vperm.slane %v8536, 1
    %v8824 = vperm.slane %v8536, 2
    %v8825 = vperm.slane %v8536, 3
    %v8826 = vperm.slane %v8536, 4
    %v8827 = vperm.slane %v8536, 5
    %v8828 = vperm.slane %v8536, 6
    %v8829 = vperm.slane %v8536, 7
    %v8830 = vperm.slane %v8538, 0
    %v8840 = vadd.f32 %v8811, %v8822
    %v8841 = vadd.f32 %v8812, %v8823
    %v8842 = vadd.f32 %v8813, %v8824
    %v8843 = vadd.f32 %v8814, %v8825
    %v8844 = vadd.f32 %v8815, %v8826
    %v8845 = vadd.f32 %v8816, %v8827
    %v8846 = vadd.f32 %v8817, %v8828
    %v8847 = vadd.f32 %v8818, %v8829
    %v8848 = vadd.f32 %v8819, %v8830
    %vm8849 = vcmp.ge.f32.partialorder %v8840, 0.0
    %vm8850 = vcmp.ge.f32.partialorder %v8841, 0.0
    %vm8851 = vcmp.ge.f32.partialorder %v8842, 0.0
    %vm8852 = vcmp.ge.f32.partialorder %v8843, 0.0
    %vm8853 = vcmp.ge.f32.partialorder %v8844, 0.0
    %vm8854 = vcmp.ge.f32.partialorder %v8845, 0.0
    %vm8855 = vcmp.ge.f32.partialorder %v8846, 0.0
    %vm8856 = vcmp.ge.f32.partialorder %v8847, 0.0
    %vm8857 = vcmp.ge.f32.partialorder %v8848, 0.0
    %s8858 = sld [smem:[#allocation14 + $0x2]]
    %v8859 = vstv %s8858
    %v8860 = vmul.f32 %v8859, %v8840
    %v8861 = vmul.f32 %v8859, %v8841
    %v8862 = vmul.f32 %v8859, %v8842
    %v8863 = vmul.f32 %v8859, %v8843
    %v8864 = vmul.f32 %v8859, %v8844
    %v8865 = vmul.f32 %v8859, %v8845
    %v8866 = vmul.f32 %v8859, %v8846
    %v8867 = vmul.f32 %v8859, %v8847
    %v8868 = vmul.f32 %v8859, %v8848
    %v8869 = vsel %vm8849, %v8840, %v8860
    %v8870 = vsel %vm8850, %v8841, %v8861
    %v8871 = vsel %vm8851, %v8842, %v8862
    %v8872 = vsel %vm8852, %v8843, %v8863
    %v8873 = vsel %vm8853, %v8844, %v8864
    %v8874 = vsel %vm8854, %v8845, %v8865
    %v8875 = vsel %vm8855, %v8846, %v8866
    %v8876 = vsel %vm8856, %v8847, %v8867
    %v8877 = vsel %vm8857, %v8848, %v8868
    %8878 = vst [vmem:[#allocation16] sm:$0xff] %v8869
    %8879 = vst [vmem:[#allocation16 + $0x8] sm:$0xff] %v8870
    %8880 = vst [vmem:[#allocation16 + $0x10] sm:$0xff] %v8871
    %8881 = vst [vmem:[#allocation16 + $0x18] sm:$0xff] %v8872
    %8882 = vst [vmem:[#allocation16 + $0x20] sm:$0xff] %v8873
    %8883 = vst [vmem:[#allocation16 + $0x28] sm:$0xff] %v8874
    %8884 = vst [vmem:[#allocation16 + $0x30] sm:$0xff] %v8875
    %8885 = vst [vmem:[#allocation16 + $0x38] sm:$0xff] %v8876
    %8886 = vst [vmem:[#allocation16 + $0x40] sm:$0xff] %v8877
    %s8887 = smul.u32 %s4588, 8
    %s8888 = sshll.u32 %s8887, 4
    %8889 = dma.done %s130, %s8888
    %v8890 = vld [vmem:[#allocation8] sm:$0xff]
    %v8891 = vld [vmem:[#allocation8 + $0x8] sm:$0xff]
    %v8892 = vld [vmem:[#allocation8 + $0x10] sm:$0xff]
    %v8893 = vld [vmem:[#allocation8 + $0x18] sm:$0xff]
    %v8894 = vld [vmem:[#allocation8 + $0x20] sm:$0xff]
    %v8895 = vld [vmem:[#allocation8 + $0x28] sm:$0xff]
    %v8896 = vld [vmem:[#allocation8 + $0x30] sm:$0xff]
    %v8897 = vld [vmem:[#allocation8 + $0x38] sm:$0xff]
    %v8898 = vld [vmem:[#allocation8 + $0x40] sm:$0xff]
    %v8899 = vld [vmem:[#allocation8 + $0x48] sm:$0xff]
    %v8900 = vld [vmem:[#allocation8 + $0x50] sm:$0xff]
    %v8901 = vld [vmem:[#allocation8 + $0x58] sm:$0xff]
    %v8902 = vld [vmem:[#allocation8 + $0x60] sm:$0xff]
    %v8903 = vld [vmem:[#allocation8 + $0x68] sm:$0xff]
    %v8904 = vld [vmem:[#allocation8 + $0x70] sm:$0xff]
    %v8905 = vld [vmem:[#allocation8 + $0x78] sm:$0xff]
    %v8906 = vld [vmem:[#allocation8 + $0x80] sm:$0xff]
    %v8907 = vld [vmem:[#allocation8 + $0x88] sm:$0xff]
    %v8908 = vld [vmem:[#allocation8 + $0x90] sm:$0xff]
    %v8909 = vld [vmem:[#allocation8 + $0x98] sm:$0xff]
    %v8910 = vld [vmem:[#allocation8 + $0xa0] sm:$0xff]
    %v8911 = vld [vmem:[#allocation8 + $0xa8] sm:$0xff]
    %v8912 = vld [vmem:[#allocation8 + $0xb0] sm:$0xff]
    %v8913 = vld [vmem:[#allocation8 + $0xb8] sm:$0xff]
    %v8914 = vld [vmem:[#allocation8 + $0xc0] sm:$0xff]
    %v8915 = vld [vmem:[#allocation8 + $0xc8] sm:$0xff]
    %v8916 = vld [vmem:[#allocation8 + $0xd0] sm:$0xff]
    %v8917 = vld [vmem:[#allocation8 + $0xd8] sm:$0xff]
    %v8918 = vld [vmem:[#allocation8 + $0xe0] sm:$0xff]
    %v8919 = vld [vmem:[#allocation8 + $0xe8] sm:$0xff]
    %v8920 = vld [vmem:[#allocation8 + $0xf0] sm:$0xff]
    %v8921 = vld [vmem:[#allocation8 + $0xf8] sm:$0xff]
    %v8922 = vld [vmem:[#allocation8 + $0x100] sm:$0xff]
    %v8923 = vld [vmem:[#allocation8 + $0x108] sm:$0xff]
    %v8924 = vld [vmem:[#allocation8 + $0x110] sm:$0xff]
    %v8925 = vld [vmem:[#allocation8 + $0x118] sm:$0xff]
    %v8926 = vld [vmem:[#allocation8 + $0x120] sm:$0xff]
    %v8927 = vld [vmem:[#allocation8 + $0x128] sm:$0xff]
    %v8928 = vld [vmem:[#allocation8 + $0x130] sm:$0xff]
    %v8929 = vld [vmem:[#allocation8 + $0x138] sm:$0xff]
    %v8930 = vld [vmem:[#allocation8 + $0x140] sm:$0xff]
    %v8931 = vld [vmem:[#allocation8 + $0x148] sm:$0xff]
    %v8932 = vld [vmem:[#allocation8 + $0x150] sm:$0xff]
    %v8933 = vld [vmem:[#allocation8 + $0x158] sm:$0xff]
    %v8934 = vld [vmem:[#allocation8 + $0x160] sm:$0xff]
    %v8935 = vld [vmem:[#allocation8 + $0x168] sm:$0xff]
    %v8936 = vld [vmem:[#allocation8 + $0x170] sm:$0xff]
    %v8937 = vld [vmem:[#allocation8 + $0x178] sm:$0xff]
    %v8938 = vld [vmem:[#allocation8 + $0x180] sm:$0xff]
    %v8939 = vld [vmem:[#allocation8 + $0x188] sm:$0xff]
    %v8940 = vld [vmem:[#allocation8 + $0x190] sm:$0xff]
    %v8941 = vld [vmem:[#allocation8 + $0x198] sm:$0xff]
    %v8942 = vld [vmem:[#allocation8 + $0x1a0] sm:$0xff]
    %v8943 = vld [vmem:[#allocation8 + $0x1a8] sm:$0xff]
    %v8944 = vld [vmem:[#allocation8 + $0x1b0] sm:$0xff]
    %v8945 = vld [vmem:[#allocation8 + $0x1b8] sm:$0xff]
    %v8946 = vld [vmem:[#allocation8 + $0x1c0] sm:$0xff]
    %v8947 = vld [vmem:[#allocation8 + $0x1c8] sm:$0xff]
    %v8948 = vld [vmem:[#allocation8 + $0x1d0] sm:$0xff]
    %v8949 = vld [vmem:[#allocation8 + $0x1d8] sm:$0xff]
    %v8950 = vld [vmem:[#allocation8 + $0x1e0] sm:$0xff]
    %v8951 = vld [vmem:[#allocation8 + $0x1e8] sm:$0xff]
    %v8952 = vld [vmem:[#allocation8 + $0x1f0] sm:$0xff]
    %v8953 = vld [vmem:[#allocation8 + $0x1f8] sm:$0xff]
    %v8954 = vld [vmem:[#allocation8 + $0x200] sm:$0xff]
    %v8955 = vld [vmem:[#allocation8 + $0x208] sm:$0xff]
    %v8956 = vld [vmem:[#allocation8 + $0x210] sm:$0xff]
    %v8957 = vld [vmem:[#allocation8 + $0x218] sm:$0xff]
    %v8958 = vld [vmem:[#allocation8 + $0x220] sm:$0xff]
    %v8959 = vld [vmem:[#allocation8 + $0x228] sm:$0xff]
    %v8960 = vld [vmem:[#allocation8 + $0x230] sm:$0xff]
    %v8961 = vld [vmem:[#allocation8 + $0x238] sm:$0xff]
    %v8962 = vld [vmem:[#allocation8 + $0x240] sm:$0xff]
    %v8963 = vld [vmem:[#allocation8 + $0x248] sm:$0xff]
    %v8964 = vld [vmem:[#allocation8 + $0x250] sm:$0xff]
    %v8965 = vld [vmem:[#allocation8 + $0x258] sm:$0xff]
    %v8966 = vld [vmem:[#allocation8 + $0x260] sm:$0xff]
    %v8967 = vld [vmem:[#allocation8 + $0x268] sm:$0xff]
    %v8968 = vld [vmem:[#allocation8 + $0x270] sm:$0xff]
    %v8969 = vld [vmem:[#allocation8 + $0x278] sm:$0xff]
    %v8970 = vld [vmem:[#allocation8 + $0x280] sm:$0xff]
    %v8971 = vld [vmem:[#allocation8 + $0x288] sm:$0xff]
    %v8972 = vld [vmem:[#allocation8 + $0x290] sm:$0xff]
    %v8973 = vld [vmem:[#allocation8 + $0x298] sm:$0xff]
    %v8974 = vld [vmem:[#allocation8 + $0x2a0] sm:$0xff]
    %v8975 = vld [vmem:[#allocation8 + $0x2a8] sm:$0xff]
    %v8976 = vld [vmem:[#allocation8 + $0x2b0] sm:$0xff]
    %v8977 = vld [vmem:[#allocation8 + $0x2b8] sm:$0xff]
    %v8978 = vld [vmem:[#allocation8 + $0x2c0] sm:$0xff]
    %v8979 = vld [vmem:[#allocation8 + $0x2c8] sm:$0xff]
    %v8980 = vld [vmem:[#allocation8 + $0x2d0] sm:$0xff]
    %v8981 = vld [vmem:[#allocation8 + $0x2d8] sm:$0xff]
    %v8982 = vld [vmem:[#allocation8 + $0x2e0] sm:$0xff]
    %v8983 = vld [vmem:[#allocation8 + $0x2e8] sm:$0xff]
    %v8984 = vld [vmem:[#allocation8 + $0x2f0] sm:$0xff]
    %v8985 = vld [vmem:[#allocation8 + $0x2f8] sm:$0xff]
    %v8986 = vld [vmem:[#allocation8 + $0x300] sm:$0xff]
    %v8987 = vld [vmem:[#allocation8 + $0x308] sm:$0xff]
    %v8988 = vld [vmem:[#allocation8 + $0x310] sm:$0xff]
    %v8989 = vld [vmem:[#allocation8 + $0x318] sm:$0xff]
    %v8990 = vld [vmem:[#allocation8 + $0x320] sm:$0xff]
    %v8991 = vld [vmem:[#allocation8 + $0x328] sm:$0xff]
    %v8992 = vld [vmem:[#allocation8 + $0x330] sm:$0xff]
    %v8993 = vld [vmem:[#allocation8 + $0x338] sm:$0xff]
    %v8994 = vld [vmem:[#allocation8 + $0x340] sm:$0xff]
    %v8995 = vld [vmem:[#allocation8 + $0x348] sm:$0xff]
    %v8996 = vld [vmem:[#allocation8 + $0x350] sm:$0xff]
    %v8997 = vld [vmem:[#allocation8 + $0x358] sm:$0xff]
    %v8998 = vld [vmem:[#allocation8 + $0x360] sm:$0xff]
    %v8999 = vld [vmem:[#allocation8 + $0x368] sm:$0xff]
    %v9000 = vld [vmem:[#allocation8 + $0x370] sm:$0xff]
    %v9001 = vld [vmem:[#allocation8 + $0x378] sm:$0xff]
    %v9002 = vld [vmem:[#allocation8 + $0x380] sm:$0xff]
    %v9003 = vld [vmem:[#allocation8 + $0x388] sm:$0xff]
    %v9004 = vld [vmem:[#allocation8 + $0x390] sm:$0xff]
    %v9005 = vld [vmem:[#allocation8 + $0x398] sm:$0xff]
    %v9006 = vld [vmem:[#allocation8 + $0x3a0] sm:$0xff]
    %v9007 = vld [vmem:[#allocation8 + $0x3a8] sm:$0xff]
    %v9008 = vld [vmem:[#allocation8 + $0x3b0] sm:$0xff]
    %v9009 = vld [vmem:[#allocation8 + $0x3b8] sm:$0xff]
    %v9010 = vld [vmem:[#allocation8 + $0x3c0] sm:$0xff]
    %v9011 = vld [vmem:[#allocation8 + $0x3c8] sm:$0xff]
    %v9012 = vld [vmem:[#allocation8 + $0x3d0] sm:$0xff]
    %v9013 = vld [vmem:[#allocation8 + $0x3d8] sm:$0xff]
    %v9014 = vld [vmem:[#allocation8 + $0x3e0] sm:$0xff]
    %v9015 = vld [vmem:[#allocation8 + $0x3e8] sm:$0xff]
    %v9016 = vld [vmem:[#allocation8 + $0x3f0] sm:$0xff]
    %v9017 = vld [vmem:[#allocation8 + $0x3f8] sm:$0xff]
    %v9018 = vld [vmem:[#allocation8 + $0x400] sm:$0xff]
    %v9019 = vld [vmem:[#allocation8 + $0x408] sm:$0xff]
    %v9020 = vld [vmem:[#allocation8 + $0x410] sm:$0xff]
    %v9021 = vld [vmem:[#allocation8 + $0x418] sm:$0xff]
    %v9022 = vld [vmem:[#allocation8 + $0x420] sm:$0xff]
    %v9023 = vld [vmem:[#allocation8 + $0x428] sm:$0xff]
    %v9024 = vld [vmem:[#allocation8 + $0x430] sm:$0xff]
    %v9025 = vld [vmem:[#allocation8 + $0x438] sm:$0xff]
    %v9026 = vld [vmem:[#allocation8 + $0x440] sm:$0xff]
    %v9027 = vld [vmem:[#allocation8 + $0x448] sm:$0xff]
    %v9028 = vld [vmem:[#allocation8 + $0x450] sm:$0xff]
    %v9029 = vld [vmem:[#allocation8 + $0x458] sm:$0xff]
    %v9030 = vld [vmem:[#allocation8 + $0x460] sm:$0xff]
    %v9031 = vld [vmem:[#allocation8 + $0x468] sm:$0xff]
    %v9032 = vld [vmem:[#allocation8 + $0x470] sm:$0xff]
    %v9033 = vld [vmem:[#allocation8 + $0x478] sm:$0xff]
    %v9034 = vld [vmem:[#allocation8 + $0x480] sm:$0xff]
    %v9035 = vld [vmem:[#allocation8 + $0x488] sm:$0xff]
    %v9036 = vld [vmem:[#allocation8 + $0x490] sm:$0xff]
    %v9037 = vld [vmem:[#allocation8 + $0x498] sm:$0xff]
    %v9038 = vld [vmem:[#allocation8 + $0x4a0] sm:$0xff]
    %v9039 = vld [vmem:[#allocation8 + $0x4a8] sm:$0xff]
    %v9040 = vld [vmem:[#allocation8 + $0x4b0] sm:$0xff]
    %v9041 = vld [vmem:[#allocation8 + $0x4b8] sm:$0xff]
    %v9042 = vld [vmem:[#allocation8 + $0x4c0] sm:$0xff]
    %v9043 = vld [vmem:[#allocation8 + $0x4c8] sm:$0xff]
    %v9044 = vld [vmem:[#allocation8 + $0x4d0] sm:$0xff]
    %v9045 = vld [vmem:[#allocation8 + $0x4d8] sm:$0xff]
    %v9046 = vld [vmem:[#allocation8 + $0x4e0] sm:$0xff]
    %v9047 = vld [vmem:[#allocation8 + $0x4e8] sm:$0xff]
    %v9048 = vld [vmem:[#allocation8 + $0x4f0] sm:$0xff]
    %v9049 = vld [vmem:[#allocation8 + $0x4f8] sm:$0xff]
    %v9050 = vld [vmem:[#allocation8 + $0x500] sm:$0xff]
    %v9051 = vld [vmem:[#allocation8 + $0x508] sm:$0xff]
    %v9052 = vld [vmem:[#allocation8 + $0x510] sm:$0xff]
    %v9053 = vld [vmem:[#allocation8 + $0x518] sm:$0xff]
    %v9054 = vld [vmem:[#allocation8 + $0x520] sm:$0xff]
    %v9055 = vld [vmem:[#allocation8 + $0x528] sm:$0xff]
    %v9056 = vld [vmem:[#allocation8 + $0x530] sm:$0xff]
    %v9057 = vld [vmem:[#allocation8 + $0x538] sm:$0xff]
    %v9058 = vld [vmem:[#allocation8 + $0x540] sm:$0xff]
    %v9059 = vld [vmem:[#allocation8 + $0x548] sm:$0xff]
    %v9060 = vld [vmem:[#allocation8 + $0x550] sm:$0xff]
    %v9061 = vld [vmem:[#allocation8 + $0x558] sm:$0xff]
    %v9062 = vld [vmem:[#allocation8 + $0x560] sm:$0xff]
    %v9063 = vld [vmem:[#allocation8 + $0x568] sm:$0xff]
    %v9064 = vld [vmem:[#allocation8 + $0x570] sm:$0xff]
    %v9065 = vld [vmem:[#allocation8 + $0x578] sm:$0xff]
    %v9066 = vld [vmem:[#allocation8 + $0x580] sm:$0xff]
    %v9067 = vld [vmem:[#allocation8 + $0x588] sm:$0xff]
    %v9068 = vld [vmem:[#allocation8 + $0x590] sm:$0xff]
    %v9069 = vld [vmem:[#allocation8 + $0x598] sm:$0xff]
    %v9070 = vld [vmem:[#allocation8 + $0x5a0] sm:$0xff]
    %v9071 = vld [vmem:[#allocation8 + $0x5a8] sm:$0xff]
    %v9072 = vld [vmem:[#allocation8 + $0x5b0] sm:$0xff]
    %v9073 = vld [vmem:[#allocation8 + $0x5b8] sm:$0xff]
    %v9074 = vld [vmem:[#allocation8 + $0x5c0] sm:$0xff]
    %v9075 = vld [vmem:[#allocation8 + $0x5c8] sm:$0xff]
    %v9076 = vld [vmem:[#allocation8 + $0x5d0] sm:$0xff]
    %v9077 = vld [vmem:[#allocation8 + $0x5d8] sm:$0xff]
    %v9078 = vld [vmem:[#allocation8 + $0x5e0] sm:$0xff]
    %v9079 = vld [vmem:[#allocation8 + $0x5e8] sm:$0xff]
    %v9080 = vld [vmem:[#allocation8 + $0x5f0] sm:$0xff]
    %v9081 = vld [vmem:[#allocation8 + $0x5f8] sm:$0xff]
    %v9082 = vld [vmem:[#allocation8 + $0x600] sm:$0xff]
    %v9083 = vld [vmem:[#allocation8 + $0x608] sm:$0xff]
    %v9084 = vld [vmem:[#allocation8 + $0x610] sm:$0xff]
    %v9085 = vld [vmem:[#allocation8 + $0x618] sm:$0xff]
    %v9086 = vld [vmem:[#allocation8 + $0x620] sm:$0xff]
    %v9087 = vld [vmem:[#allocation8 + $0x628] sm:$0xff]
    %v9088 = vld [vmem:[#allocation8 + $0x630] sm:$0xff]
    %v9089 = vld [vmem:[#allocation8 + $0x638] sm:$0xff]
    %v9090 = vld [vmem:[#allocation8 + $0x640] sm:$0xff]
    %v9091 = vld [vmem:[#allocation8 + $0x648] sm:$0xff]
    %v9092 = vld [vmem:[#allocation8 + $0x650] sm:$0xff]
    %v9093 = vld [vmem:[#allocation8 + $0x658] sm:$0xff]
    %v9094 = vld [vmem:[#allocation8 + $0x660] sm:$0xff]
    %v9095 = vld [vmem:[#allocation8 + $0x668] sm:$0xff]
    %v9096 = vld [vmem:[#allocation8 + $0x670] sm:$0xff]
    %v9097 = vld [vmem:[#allocation8 + $0x678] sm:$0xff]
    %v9098 = vld [vmem:[#allocation8 + $0x680] sm:$0xff]
    %v9099 = vld [vmem:[#allocation8 + $0x688] sm:$0xff]
    %v9100 = vld [vmem:[#allocation8 + $0x690] sm:$0xff]
    %v9101 = vld [vmem:[#allocation8 + $0x698] sm:$0xff]
    %v9102 = vld [vmem:[#allocation8 + $0x6a0] sm:$0xff]
    %v9103 = vld [vmem:[#allocation8 + $0x6a8] sm:$0xff]
    %v9104 = vld [vmem:[#allocation8 + $0x6b0] sm:$0xff]
    %v9105 = vld [vmem:[#allocation8 + $0x6b8] sm:$0xff]
    %v9106 = vld [vmem:[#allocation8 + $0x6c0] sm:$0xff]
    %v9107 = vld [vmem:[#allocation8 + $0x6c8] sm:$0xff]
    %v9108 = vld [vmem:[#allocation8 + $0x6d0] sm:$0xff]
    %v9109 = vld [vmem:[#allocation8 + $0x6d8] sm:$0xff]
    %v9110 = vld [vmem:[#allocation8 + $0x6e0] sm:$0xff]
    %v9111 = vld [vmem:[#allocation8 + $0x6e8] sm:$0xff]
    %v9112 = vld [vmem:[#allocation8 + $0x6f0] sm:$0xff]
    %v9113 = vld [vmem:[#allocation8 + $0x6f8] sm:$0xff]
    %v9114 = vld [vmem:[#allocation8 + $0x700] sm:$0xff]
    %v9115 = vld [vmem:[#allocation8 + $0x708] sm:$0xff]
    %v9116 = vld [vmem:[#allocation8 + $0x710] sm:$0xff]
    %v9117 = vld [vmem:[#allocation8 + $0x718] sm:$0xff]
    %v9118 = vld [vmem:[#allocation8 + $0x720] sm:$0xff]
    %v9119 = vld [vmem:[#allocation8 + $0x728] sm:$0xff]
    %v9120 = vld [vmem:[#allocation8 + $0x730] sm:$0xff]
    %v9121 = vld [vmem:[#allocation8 + $0x738] sm:$0xff]
    %v9122 = vld [vmem:[#allocation8 + $0x740] sm:$0xff]
    %v9123 = vld [vmem:[#allocation8 + $0x748] sm:$0xff]
    %v9124 = vld [vmem:[#allocation8 + $0x750] sm:$0xff]
    %v9125 = vld [vmem:[#allocation8 + $0x758] sm:$0xff]
    %v9126 = vld [vmem:[#allocation8 + $0x760] sm:$0xff]
    %v9127 = vld [vmem:[#allocation8 + $0x768] sm:$0xff]
    %v9128 = vld [vmem:[#allocation8 + $0x770] sm:$0xff]
    %v9129 = vld [vmem:[#allocation8 + $0x778] sm:$0xff]
    %v9130 = vld [vmem:[#allocation8 + $0x780] sm:$0xff]
    %v9131 = vld [vmem:[#allocation8 + $0x788] sm:$0xff]
    %v9132 = vld [vmem:[#allocation8 + $0x790] sm:$0xff]
    %v9133 = vld [vmem:[#allocation8 + $0x798] sm:$0xff]
    %v9134 = vld [vmem:[#allocation8 + $0x7a0] sm:$0xff]
    %v9135 = vld [vmem:[#allocation8 + $0x7a8] sm:$0xff]
    %v9136 = vld [vmem:[#allocation8 + $0x7b0] sm:$0xff]
    %v9137 = vld [vmem:[#allocation8 + $0x7b8] sm:$0xff]
    %v9138 = vld [vmem:[#allocation8 + $0x7c0] sm:$0xff]
    %v9139 = vld [vmem:[#allocation8 + $0x7c8] sm:$0xff]
    %v9140 = vld [vmem:[#allocation8 + $0x7d0] sm:$0xff]
    %v9141 = vld [vmem:[#allocation8 + $0x7d8] sm:$0xff]
    %v9142 = vld [vmem:[#allocation8 + $0x7e0] sm:$0xff]
    %v9143 = vld [vmem:[#allocation8 + $0x7e8] sm:$0xff]
    %v9144 = vld [vmem:[#allocation8 + $0x7f0] sm:$0xff]
    %v9145 = vld [vmem:[#allocation8 + $0x7f8] sm:$0xff]
    %v9402 = vunpack.c.l.b16 %v8890
    %v9403 = vunpack.c.h.b16 %v8890
    %v9404 = vunpack.c.l.b16 %v8891
    %v9405 = vunpack.c.h.b16 %v8891
    %v9406 = vunpack.c.l.b16 %v8892
    %v9407 = vunpack.c.h.b16 %v8892
    %v9408 = vunpack.c.l.b16 %v8893
    %v9409 = vunpack.c.h.b16 %v8893
    %v9410 = vunpack.c.l.b16 %v8894
    %v9411 = vunpack.c.h.b16 %v8894
    %v9412 = vunpack.c.l.b16 %v8895
    %v9413 = vunpack.c.h.b16 %v8895
    %v9414 = vunpack.c.l.b16 %v8896
    %v9415 = vunpack.c.h.b16 %v8896
    %v9416 = vunpack.c.l.b16 %v8897
    %v9417 = vunpack.c.h.b16 %v8897
    %v9418 = vunpack.c.l.b16 %v8898
    %v9419 = vunpack.c.h.b16 %v8898
    %v9420 = vunpack.c.l.b16 %v8899
    %v9421 = vunpack.c.h.b16 %v8899
    %v9422 = vunpack.c.l.b16 %v8900
    %v9423 = vunpack.c.h.b16 %v8900
    %v9424 = vunpack.c.l.b16 %v8901
    %v9425 = vunpack.c.h.b16 %v8901
    %v9426 = vunpack.c.l.b16 %v8902
    %v9427 = vunpack.c.h.b16 %v8902
    %v9428 = vunpack.c.l.b16 %v8903
    %v9429 = vunpack.c.h.b16 %v8903
    %v9430 = vunpack.c.l.b16 %v8904
    %v9431 = vunpack.c.h.b16 %v8904
    %v9432 = vunpack.c.l.b16 %v8905
    %v9433 = vunpack.c.h.b16 %v8905
    %v9434 = vunpack.c.l.b16 %v8906
    %v9435 = vunpack.c.h.b16 %v8906
    %v9436 = vunpack.c.l.b16 %v8907
    %v9437 = vunpack.c.h.b16 %v8907
    %v9438 = vunpack.c.l.b16 %v8908
    %v9439 = vunpack.c.h.b16 %v8908
    %v9440 = vunpack.c.l.b16 %v8909
    %v9441 = vunpack.c.h.b16 %v8909
    %v9442 = vunpack.c.l.b16 %v8910
    %v9443 = vunpack.c.h.b16 %v8910
    %v9444 = vunpack.c.l.b16 %v8911
    %v9445 = vunpack.c.h.b16 %v8911
    %v9446 = vunpack.c.l.b16 %v8912
    %v9447 = vunpack.c.h.b16 %v8912
    %v9448 = vunpack.c.l.b16 %v8913
    %v9449 = vunpack.c.h.b16 %v8913
    %v9450 = vunpack.c.l.b16 %v8914
    %v9451 = vunpack.c.h.b16 %v8914
    %v9452 = vunpack.c.l.b16 %v8915
    %v9453 = vunpack.c.h.b16 %v8915
    %v9454 = vunpack.c.l.b16 %v8916
    %v9455 = vunpack.c.h.b16 %v8916
    %v9456 = vunpack.c.l.b16 %v8917
    %v9457 = vunpack.c.h.b16 %v8917
    %v9458 = vunpack.c.l.b16 %v8918
    %v9459 = vunpack.c.h.b16 %v8918
    %v9460 = vunpack.c.l.b16 %v8919
    %v9461 = vunpack.c.h.b16 %v8919
    %v9462 = vunpack.c.l.b16 %v8920
    %v9463 = vunpack.c.h.b16 %v8920
    %v9464 = vunpack.c.l.b16 %v8921
    %v9465 = vunpack.c.h.b16 %v8921
    %v9466 = vunpack.c.l.b16 %v8922
    %v9467 = vunpack.c.h.b16 %v8922
    %v9468 = vunpack.c.l.b16 %v8923
    %v9469 = vunpack.c.h.b16 %v8923
    %v9470 = vunpack.c.l.b16 %v8924
    %v9471 = vunpack.c.h.b16 %v8924
    %v9472 = vunpack.c.l.b16 %v8925
    %v9473 = vunpack.c.h.b16 %v8925
    %v9474 = vunpack.c.l.b16 %v8926
    %v9475 = vunpack.c.h.b16 %v8926
    %v9476 = vunpack.c.l.b16 %v8927
    %v9477 = vunpack.c.h.b16 %v8927
    %v9478 = vunpack.c.l.b16 %v8928
    %v9479 = vunpack.c.h.b16 %v8928
    %v9480 = vunpack.c.l.b16 %v8929
    %v9481 = vunpack.c.h.b16 %v8929
    %v9482 = vunpack.c.l.b16 %v8930
    %v9483 = vunpack.c.h.b16 %v8930
    %v9484 = vunpack.c.l.b16 %v8931
    %v9485 = vunpack.c.h.b16 %v8931
    %v9486 = vunpack.c.l.b16 %v8932
    %v9487 = vunpack.c.h.b16 %v8932
    %v9488 = vunpack.c.l.b16 %v8933
    %v9489 = vunpack.c.h.b16 %v8933
    %v9490 = vunpack.c.l.b16 %v8934
    %v9491 = vunpack.c.h.b16 %v8934
    %v9492 = vunpack.c.l.b16 %v8935
    %v9493 = vunpack.c.h.b16 %v8935
    %v9494 = vunpack.c.l.b16 %v8936
    %v9495 = vunpack.c.h.b16 %v8936
    %v9496 = vunpack.c.l.b16 %v8937
    %v9497 = vunpack.c.h.b16 %v8937
    %v9498 = vunpack.c.l.b16 %v8938
    %v9499 = vunpack.c.h.b16 %v8938
    %v9500 = vunpack.c.l.b16 %v8939
    %v9501 = vunpack.c.h.b16 %v8939
    %v9502 = vunpack.c.l.b16 %v8940
    %v9503 = vunpack.c.h.b16 %v8940
    %v9504 = vunpack.c.l.b16 %v8941
    %v9505 = vunpack.c.h.b16 %v8941
    %v9506 = vunpack.c.l.b16 %v8942
    %v9507 = vunpack.c.h.b16 %v8942
    %v9508 = vunpack.c.l.b16 %v8943
    %v9509 = vunpack.c.h.b16 %v8943
    %v9510 = vunpack.c.l.b16 %v8944
    %v9511 = vunpack.c.h.b16 %v8944
    %v9512 = vunpack.c.l.b16 %v8945
    %v9513 = vunpack.c.h.b16 %v8945
    %v9514 = vunpack.c.l.b16 %v8946
    %v9515 = vunpack.c.h.b16 %v8946
    %v9516 = vunpack.c.l.b16 %v8947
    %v9517 = vunpack.c.h.b16 %v8947
    %v9518 = vunpack.c.l.b16 %v8948
    %v9519 = vunpack.c.h.b16 %v8948
    %v9520 = vunpack.c.l.b16 %v8949
    %v9521 = vunpack.c.h.b16 %v8949
    %v9522 = vunpack.c.l.b16 %v8950
    %v9523 = vunpack.c.h.b16 %v8950
    %v9524 = vunpack.c.l.b16 %v8951
    %v9525 = vunpack.c.h.b16 %v8951
    %v9526 = vunpack.c.l.b16 %v8952
    %v9527 = vunpack.c.h.b16 %v8952
    %v9528 = vunpack.c.l.b16 %v8953
    %v9529 = vunpack.c.h.b16 %v8953
    %v9530 = vunpack.c.l.b16 %v8954
    %v9531 = vunpack.c.h.b16 %v8954
    %v9532 = vunpack.c.l.b16 %v8955
    %v9533 = vunpack.c.h.b16 %v8955
    %v9534 = vunpack.c.l.b16 %v8956
    %v9535 = vunpack.c.h.b16 %v8956
    %v9536 = vunpack.c.l.b16 %v8957
    %v9537 = vunpack.c.h.b16 %v8957
    %v9538 = vunpack.c.l.b16 %v8958
    %v9539 = vunpack.c.h.b16 %v8958
    %v9540 = vunpack.c.l.b16 %v8959
    %v9541 = vunpack.c.h.b16 %v8959
    %v9542 = vunpack.c.l.b16 %v8960
    %v9543 = vunpack.c.h.b16 %v8960
    %v9544 = vunpack.c.l.b16 %v8961
    %v9545 = vunpack.c.h.b16 %v8961
    %v9546 = vunpack.c.l.b16 %v8962
    %v9547 = vunpack.c.h.b16 %v8962
    %v9548 = vunpack.c.l.b16 %v8963
    %v9549 = vunpack.c.h.b16 %v8963
    %v9550 = vunpack.c.l.b16 %v8964
    %v9551 = vunpack.c.h.b16 %v8964
    %v9552 = vunpack.c.l.b16 %v8965
    %v9553 = vunpack.c.h.b16 %v8965
    %v9554 = vunpack.c.l.b16 %v8966
    %v9555 = vunpack.c.h.b16 %v8966
    %v9556 = vunpack.c.l.b16 %v8967
    %v9557 = vunpack.c.h.b16 %v8967
    %v9558 = vunpack.c.l.b16 %v8968
    %v9559 = vunpack.c.h.b16 %v8968
    %v9560 = vunpack.c.l.b16 %v8969
    %v9561 = vunpack.c.h.b16 %v8969
    %v9562 = vunpack.c.l.b16 %v8970
    %v9563 = vunpack.c.h.b16 %v8970
    %v9564 = vunpack.c.l.b16 %v8971
    %v9565 = vunpack.c.h.b16 %v8971
    %v9566 = vunpack.c.l.b16 %v8972
    %v9567 = vunpack.c.h.b16 %v8972
    %v9568 = vunpack.c.l.b16 %v8973
    %v9569 = vunpack.c.h.b16 %v8973
    %v9570 = vunpack.c.l.b16 %v8974
    %v9571 = vunpack.c.h.b16 %v8974
    %v9572 = vunpack.c.l.b16 %v8975
    %v9573 = vunpack.c.h.b16 %v8975
    %v9574 = vunpack.c.l.b16 %v8976
    %v9575 = vunpack.c.h.b16 %v8976
    %v9576 = vunpack.c.l.b16 %v8977
    %v9577 = vunpack.c.h.b16 %v8977
    %v9578 = vunpack.c.l.b16 %v8978
    %v9579 = vunpack.c.h.b16 %v8978
    %v9580 = vunpack.c.l.b16 %v8979
    %v9581 = vunpack.c.h.b16 %v8979
    %v9582 = vunpack.c.l.b16 %v8980
    %v9583 = vunpack.c.h.b16 %v8980
    %v9584 = vunpack.c.l.b16 %v8981
    %v9585 = vunpack.c.h.b16 %v8981
    %v9586 = vunpack.c.l.b16 %v8982
    %v9587 = vunpack.c.h.b16 %v8982
    %v9588 = vunpack.c.l.b16 %v8983
    %v9589 = vunpack.c.h.b16 %v8983
    %v9590 = vunpack.c.l.b16 %v8984
    %v9591 = vunpack.c.h.b16 %v8984
    %v9592 = vunpack.c.l.b16 %v8985
    %v9593 = vunpack.c.h.b16 %v8985
    %v9594 = vunpack.c.l.b16 %v8986
    %v9595 = vunpack.c.h.b16 %v8986
    %v9596 = vunpack.c.l.b16 %v8987
    %v9597 = vunpack.c.h.b16 %v8987
    %v9598 = vunpack.c.l.b16 %v8988
    %v9599 = vunpack.c.h.b16 %v8988
    %v9600 = vunpack.c.l.b16 %v8989
    %v9601 = vunpack.c.h.b16 %v8989
    %v9602 = vunpack.c.l.b16 %v8990
    %v9603 = vunpack.c.h.b16 %v8990
    %v9604 = vunpack.c.l.b16 %v8991
    %v9605 = vunpack.c.h.b16 %v8991
    %v9606 = vunpack.c.l.b16 %v8992
    %v9607 = vunpack.c.h.b16 %v8992
    %v9608 = vunpack.c.l.b16 %v8993
    %v9609 = vunpack.c.h.b16 %v8993
    %v9610 = vunpack.c.l.b16 %v8994
    %v9611 = vunpack.c.h.b16 %v8994
    %v9612 = vunpack.c.l.b16 %v8995
    %v9613 = vunpack.c.h.b16 %v8995
    %v9614 = vunpack.c.l.b16 %v8996
    %v9615 = vunpack.c.h.b16 %v8996
    %v9616 = vunpack.c.l.b16 %v8997
    %v9617 = vunpack.c.h.b16 %v8997
    %v9618 = vunpack.c.l.b16 %v8998
    %v9619 = vunpack.c.h.b16 %v8998
    %v9620 = vunpack.c.l.b16 %v8999
    %v9621 = vunpack.c.h.b16 %v8999
    %v9622 = vunpack.c.l.b16 %v9000
    %v9623 = vunpack.c.h.b16 %v9000
    %v9624 = vunpack.c.l.b16 %v9001
    %v9625 = vunpack.c.h.b16 %v9001
    %v9626 = vunpack.c.l.b16 %v9002
    %v9627 = vunpack.c.h.b16 %v9002
    %v9628 = vunpack.c.l.b16 %v9003
    %v9629 = vunpack.c.h.b16 %v9003
    %v9630 = vunpack.c.l.b16 %v9004
    %v9631 = vunpack.c.h.b16 %v9004
    %v9632 = vunpack.c.l.b16 %v9005
    %v9633 = vunpack.c.h.b16 %v9005
    %v9634 = vunpack.c.l.b16 %v9006
    %v9635 = vunpack.c.h.b16 %v9006
    %v9636 = vunpack.c.l.b16 %v9007
    %v9637 = vunpack.c.h.b16 %v9007
    %v9638 = vunpack.c.l.b16 %v9008
    %v9639 = vunpack.c.h.b16 %v9008
    %v9640 = vunpack.c.l.b16 %v9009
    %v9641 = vunpack.c.h.b16 %v9009
    %v9642 = vunpack.c.l.b16 %v9010
    %v9643 = vunpack.c.h.b16 %v9010
    %v9644 = vunpack.c.l.b16 %v9011
    %v9645 = vunpack.c.h.b16 %v9011
    %v9646 = vunpack.c.l.b16 %v9012
    %v9647 = vunpack.c.h.b16 %v9012
    %v9648 = vunpack.c.l.b16 %v9013
    %v9649 = vunpack.c.h.b16 %v9013
    %v9650 = vunpack.c.l.b16 %v9014
    %v9651 = vunpack.c.h.b16 %v9014
    %v9652 = vunpack.c.l.b16 %v9015
    %v9653 = vunpack.c.h.b16 %v9015
    %v9654 = vunpack.c.l.b16 %v9016
    %v9655 = vunpack.c.h.b16 %v9016
    %v9656 = vunpack.c.l.b16 %v9017
    %v9657 = vunpack.c.h.b16 %v9017
    %v9658 = vunpack.c.l.b16 %v9018
    %v9659 = vunpack.c.h.b16 %v9018
    %v9660 = vunpack.c.l.b16 %v9019
    %v9661 = vunpack.c.h.b16 %v9019
    %v9662 = vunpack.c.l.b16 %v9020
    %v9663 = vunpack.c.h.b16 %v9020
    %v9664 = vunpack.c.l.b16 %v9021
    %v9665 = vunpack.c.h.b16 %v9021
    %v9666 = vunpack.c.l.b16 %v9022
    %v9667 = vunpack.c.h.b16 %v9022
    %v9668 = vunpack.c.l.b16 %v9023
    %v9669 = vunpack.c.h.b16 %v9023
    %v9670 = vunpack.c.l.b16 %v9024
    %v9671 = vunpack.c.h.b16 %v9024
    %v9672 = vunpack.c.l.b16 %v9025
    %v9673 = vunpack.c.h.b16 %v9025
    %v9674 = vunpack.c.l.b16 %v9026
    %v9675 = vunpack.c.h.b16 %v9026
    %v9676 = vunpack.c.l.b16 %v9027
    %v9677 = vunpack.c.h.b16 %v9027
    %v9678 = vunpack.c.l.b16 %v9028
    %v9679 = vunpack.c.h.b16 %v9028
    %v9680 = vunpack.c.l.b16 %v9029
    %v9681 = vunpack.c.h.b16 %v9029
    %v9682 = vunpack.c.l.b16 %v9030
    %v9683 = vunpack.c.h.b16 %v9030
    %v9684 = vunpack.c.l.b16 %v9031
    %v9685 = vunpack.c.h.b16 %v9031
    %v9686 = vunpack.c.l.b16 %v9032
    %v9687 = vunpack.c.h.b16 %v9032
    %v9688 = vunpack.c.l.b16 %v9033
    %v9689 = vunpack.c.h.b16 %v9033
    %v9690 = vunpack.c.l.b16 %v9034
    %v9691 = vunpack.c.h.b16 %v9034
    %v9692 = vunpack.c.l.b16 %v9035
    %v9693 = vunpack.c.h.b16 %v9035
    %v9694 = vunpack.c.l.b16 %v9036
    %v9695 = vunpack.c.h.b16 %v9036
    %v9696 = vunpack.c.l.b16 %v9037
    %v9697 = vunpack.c.h.b16 %v9037
    %v9698 = vunpack.c.l.b16 %v9038
    %v9699 = vunpack.c.h.b16 %v9038
    %v9700 = vunpack.c.l.b16 %v9039
    %v9701 = vunpack.c.h.b16 %v9039
    %v9702 = vunpack.c.l.b16 %v9040
    %v9703 = vunpack.c.h.b16 %v9040
    %v9704 = vunpack.c.l.b16 %v9041
    %v9705 = vunpack.c.h.b16 %v9041
    %v9706 = vunpack.c.l.b16 %v9042
    %v9707 = vunpack.c.h.b16 %v9042
    %v9708 = vunpack.c.l.b16 %v9043
    %v9709 = vunpack.c.h.b16 %v9043
    %v9710 = vunpack.c.l.b16 %v9044
    %v9711 = vunpack.c.h.b16 %v9044
    %v9712 = vunpack.c.l.b16 %v9045
    %v9713 = vunpack.c.h.b16 %v9045
    %v9714 = vunpack.c.l.b16 %v9046
    %v9715 = vunpack.c.h.b16 %v9046
    %v9716 = vunpack.c.l.b16 %v9047
    %v9717 = vunpack.c.h.b16 %v9047
    %v9718 = vunpack.c.l.b16 %v9048
    %v9719 = vunpack.c.h.b16 %v9048
    %v9720 = vunpack.c.l.b16 %v9049
    %v9721 = vunpack.c.h.b16 %v9049
    %v9722 = vunpack.c.l.b16 %v9050
    %v9723 = vunpack.c.h.b16 %v9050
    %v9724 = vunpack.c.l.b16 %v9051
    %v9725 = vunpack.c.h.b16 %v9051
    %v9726 = vunpack.c.l.b16 %v9052
    %v9727 = vunpack.c.h.b16 %v9052
    %v9728 = vunpack.c.l.b16 %v9053
    %v9729 = vunpack.c.h.b16 %v9053
    %v9730 = vunpack.c.l.b16 %v9054
    %v9731 = vunpack.c.h.b16 %v9054
    %v9732 = vunpack.c.l.b16 %v9055
    %v9733 = vunpack.c.h.b16 %v9055
    %v9734 = vunpack.c.l.b16 %v9056
    %v9735 = vunpack.c.h.b16 %v9056
    %v9736 = vunpack.c.l.b16 %v9057
    %v9737 = vunpack.c.h.b16 %v9057
    %v9738 = vunpack.c.l.b16 %v9058
    %v9739 = vunpack.c.h.b16 %v9058
    %v9740 = vunpack.c.l.b16 %v9059
    %v9741 = vunpack.c.h.b16 %v9059
    %v9742 = vunpack.c.l.b16 %v9060
    %v9743 = vunpack.c.h.b16 %v9060
    %v9744 = vunpack.c.l.b16 %v9061
    %v9745 = vunpack.c.h.b16 %v9061
    %v9746 = vunpack.c.l.b16 %v9062
    %v9747 = vunpack.c.h.b16 %v9062
    %v9748 = vunpack.c.l.b16 %v9063
    %v9749 = vunpack.c.h.b16 %v9063
    %v9750 = vunpack.c.l.b16 %v9064
    %v9751 = vunpack.c.h.b16 %v9064
    %v9752 = vunpack.c.l.b16 %v9065
    %v9753 = vunpack.c.h.b16 %v9065
    %v9754 = vunpack.c.l.b16 %v9066
    %v9755 = vunpack.c.h.b16 %v9066
    %v9756 = vunpack.c.l.b16 %v9067
    %v9757 = vunpack.c.h.b16 %v9067
    %v9758 = vunpack.c.l.b16 %v9068
    %v9759 = vunpack.c.h.b16 %v9068
    %v9760 = vunpack.c.l.b16 %v9069
    %v9761 = vunpack.c.h.b16 %v9069
    %v9762 = vunpack.c.l.b16 %v9070
    %v9763 = vunpack.c.h.b16 %v9070
    %v9764 = vunpack.c.l.b16 %v9071
    %v9765 = vunpack.c.h.b16 %v9071
    %v9766 = vunpack.c.l.b16 %v9072
    %v9767 = vunpack.c.h.b16 %v9072
    %v9768 = vunpack.c.l.b16 %v9073
    %v9769 = vunpack.c.h.b16 %v9073
    %v9770 = vunpack.c.l.b16 %v9074
    %v9771 = vunpack.c.h.b16 %v9074
    %v9772 = vunpack.c.l.b16 %v9075
    %v9773 = vunpack.c.h.b16 %v9075
    %v9774 = vunpack.c.l.b16 %v9076
    %v9775 = vunpack.c.h.b16 %v9076
    %v9776 = vunpack.c.l.b16 %v9077
    %v9777 = vunpack.c.h.b16 %v9077
    %v9778 = vunpack.c.l.b16 %v9078
    %v9779 = vunpack.c.h.b16 %v9078
    %v9780 = vunpack.c.l.b16 %v9079
    %v9781 = vunpack.c.h.b16 %v9079
    %v9782 = vunpack.c.l.b16 %v9080
    %v9783 = vunpack.c.h.b16 %v9080
    %v9784 = vunpack.c.l.b16 %v9081
    %v9785 = vunpack.c.h.b16 %v9081
    %v9786 = vunpack.c.l.b16 %v9082
    %v9787 = vunpack.c.h.b16 %v9082
    %v9788 = vunpack.c.l.b16 %v9083
    %v9789 = vunpack.c.h.b16 %v9083
    %v9790 = vunpack.c.l.b16 %v9084
    %v9791 = vunpack.c.h.b16 %v9084
    %v9792 = vunpack.c.l.b16 %v9085
    %v9793 = vunpack.c.h.b16 %v9085
    %v9794 = vunpack.c.l.b16 %v9086
    %v9795 = vunpack.c.h.b16 %v9086
    %v9796 = vunpack.c.l.b16 %v9087
    %v9797 = vunpack.c.h.b16 %v9087
    %v9798 = vunpack.c.l.b16 %v9088
    %v9799 = vunpack.c.h.b16 %v9088
    %v9800 = vunpack.c.l.b16 %v9089
    %v9801 = vunpack.c.h.b16 %v9089
    %v9802 = vunpack.c.l.b16 %v9090
    %v9803 = vunpack.c.h.b16 %v9090
    %v9804 = vunpack.c.l.b16 %v9091
    %v9805 = vunpack.c.h.b16 %v9091
    %v9806 = vunpack.c.l.b16 %v9092
    %v9807 = vunpack.c.h.b16 %v9092
    %v9808 = vunpack.c.l.b16 %v9093
    %v9809 = vunpack.c.h.b16 %v9093
    %v9810 = vunpack.c.l.b16 %v9094
    %v9811 = vunpack.c.h.b16 %v9094
    %v9812 = vunpack.c.l.b16 %v9095
    %v9813 = vunpack.c.h.b16 %v9095
    %v9814 = vunpack.c.l.b16 %v9096
    %v9815 = vunpack.c.h.b16 %v9096
    %v9816 = vunpack.c.l.b16 %v9097
    %v9817 = vunpack.c.h.b16 %v9097
    %v9818 = vunpack.c.l.b16 %v9098
    %v9819 = vunpack.c.h.b16 %v9098
    %v9820 = vunpack.c.l.b16 %v9099
    %v9821 = vunpack.c.h.b16 %v9099
    %v9822 = vunpack.c.l.b16 %v9100
    %v9823 = vunpack.c.h.b16 %v9100
    %v9824 = vunpack.c.l.b16 %v9101
    %v9825 = vunpack.c.h.b16 %v9101
    %v9826 = vunpack.c.l.b16 %v9102
    %v9827 = vunpack.c.h.b16 %v9102
    %v9828 = vunpack.c.l.b16 %v9103
    %v9829 = vunpack.c.h.b16 %v9103
    %v9830 = vunpack.c.l.b16 %v9104
    %v9831 = vunpack.c.h.b16 %v9104
    %v9832 = vunpack.c.l.b16 %v9105
    %v9833 = vunpack.c.h.b16 %v9105
    %v9834 = vunpack.c.l.b16 %v9106
    %v9835 = vunpack.c.h.b16 %v9106
    %v9836 = vunpack.c.l.b16 %v9107
    %v9837 = vunpack.c.h.b16 %v9107
    %v9838 = vunpack.c.l.b16 %v9108
    %v9839 = vunpack.c.h.b16 %v9108
    %v9840 = vunpack.c.l.b16 %v9109
    %v9841 = vunpack.c.h.b16 %v9109
    %v9842 = vunpack.c.l.b16 %v9110
    %v9843 = vunpack.c.h.b16 %v9110
    %v9844 = vunpack.c.l.b16 %v9111
    %v9845 = vunpack.c.h.b16 %v9111
    %v9846 = vunpack.c.l.b16 %v9112
    %v9847 = vunpack.c.h.b16 %v9112
    %v9848 = vunpack.c.l.b16 %v9113
    %v9849 = vunpack.c.h.b16 %v9113
    %v9850 = vunpack.c.l.b16 %v9114
    %v9851 = vunpack.c.h.b16 %v9114
    %v9852 = vunpack.c.l.b16 %v9115
    %v9853 = vunpack.c.h.b16 %v9115
    %v9854 = vunpack.c.l.b16 %v9116
    %v9855 = vunpack.c.h.b16 %v9116
    %v9856 = vunpack.c.l.b16 %v9117
    %v9857 = vunpack.c.h.b16 %v9117
    %v9858 = vunpack.c.l.b16 %v9118
    %v9859 = vunpack.c.h.b16 %v9118
    %v9860 = vunpack.c.l.b16 %v9119
    %v9861 = vunpack.c.h.b16 %v9119
    %v9862 = vunpack.c.l.b16 %v9120
    %v9863 = vunpack.c.h.b16 %v9120
    %v9864 = vunpack.c.l.b16 %v9121
    %v9865 = vunpack.c.h.b16 %v9121
    %v9866 = vunpack.c.l.b16 %v9122
    %v9867 = vunpack.c.h.b16 %v9122
    %v9868 = vunpack.c.l.b16 %v9123
    %v9869 = vunpack.c.h.b16 %v9123
    %v9870 = vunpack.c.l.b16 %v9124
    %v9871 = vunpack.c.h.b16 %v9124
    %v9872 = vunpack.c.l.b16 %v9125
    %v9873 = vunpack.c.h.b16 %v9125
    %v9874 = vunpack.c.l.b16 %v9126
    %v9875 = vunpack.c.h.b16 %v9126
    %v9876 = vunpack.c.l.b16 %v9127
    %v9877 = vunpack.c.h.b16 %v9127
    %v9878 = vunpack.c.l.b16 %v9128
    %v9879 = vunpack.c.h.b16 %v9128
    %v9880 = vunpack.c.l.b16 %v9129
    %v9881 = vunpack.c.h.b16 %v9129
    %v9882 = vunpack.c.l.b16 %v9130
    %v9883 = vunpack.c.h.b16 %v9130
    %v9884 = vunpack.c.l.b16 %v9131
    %v9885 = vunpack.c.h.b16 %v9131
    %v9886 = vunpack.c.l.b16 %v9132
    %v9887 = vunpack.c.h.b16 %v9132
    %v9888 = vunpack.c.l.b16 %v9133
    %v9889 = vunpack.c.h.b16 %v9133
    %v9890 = vunpack.c.l.b16 %v9134
    %v9891 = vunpack.c.h.b16 %v9134
    %v9892 = vunpack.c.l.b16 %v9135
    %v9893 = vunpack.c.h.b16 %v9135
    %v9894 = vunpack.c.l.b16 %v9136
    %v9895 = vunpack.c.h.b16 %v9136
    %v9896 = vunpack.c.l.b16 %v9137
    %v9897 = vunpack.c.h.b16 %v9137
    %v9898 = vunpack.c.l.b16 %v9138
    %v9899 = vunpack.c.h.b16 %v9138
    %v9900 = vunpack.c.l.b16 %v9139
    %v9901 = vunpack.c.h.b16 %v9139
    %v9902 = vunpack.c.l.b16 %v9140
    %v9903 = vunpack.c.h.b16 %v9140
    %v9904 = vunpack.c.l.b16 %v9141
    %v9905 = vunpack.c.h.b16 %v9141
    %v9906 = vunpack.c.l.b16 %v9142
    %v9907 = vunpack.c.h.b16 %v9142
    %v9908 = vunpack.c.l.b16 %v9143
    %v9909 = vunpack.c.h.b16 %v9143
    %v9910 = vunpack.c.l.b16 %v9144
    %v9911 = vunpack.c.h.b16 %v9144
    %v9912 = vunpack.c.l.b16 %v9145
    %v9913 = vunpack.c.h.b16 %v9145
    %v9914 = vpack.c.b16 %v9410, %v9402
    %v9915 = vpack.c.b16 %v9411, %v9403
    %v9916 = vpack.c.b16 %v9412, %v9404
    %v9917 = vpack.c.b16 %v9413, %v9405
    %v9918 = vpack.c.b16 %v9414, %v9406
    %v9919 = vpack.c.b16 %v9415, %v9407
    %v9920 = vpack.c.b16 %v9416, %v9408
    %v9921 = vpack.c.b16 %v9417, %v9409
    %v9922 = vpack.c.b16 %v9426, %v9418
    %v9923 = vpack.c.b16 %v9427, %v9419
    %v9924 = vpack.c.b16 %v9428, %v9420
    %v9925 = vpack.c.b16 %v9429, %v9421
    %v9926 = vpack.c.b16 %v9430, %v9422
    %v9927 = vpack.c.b16 %v9431, %v9423
    %v9928 = vpack.c.b16 %v9432, %v9424
    %v9929 = vpack.c.b16 %v9433, %v9425
    %v9930 = vpack.c.b16 %v9442, %v9434
    %v9931 = vpack.c.b16 %v9443, %v9435
    %v9932 = vpack.c.b16 %v9444, %v9436
    %v9933 = vpack.c.b16 %v9445, %v9437
    %v9934 = vpack.c.b16 %v9446, %v9438
    %v9935 = vpack.c.b16 %v9447, %v9439
    %v9936 = vpack.c.b16 %v9448, %v9440
    %v9937 = vpack.c.b16 %v9449, %v9441
    %v9938 = vpack.c.b16 %v9458, %v9450
    %v9939 = vpack.c.b16 %v9459, %v9451
    %v9940 = vpack.c.b16 %v9460, %v9452
    %v9941 = vpack.c.b16 %v9461, %v9453
    %v9942 = vpack.c.b16 %v9462, %v9454
    %v9943 = vpack.c.b16 %v9463, %v9455
    %v9944 = vpack.c.b16 %v9464, %v9456
    %v9945 = vpack.c.b16 %v9465, %v9457
    %v9946 = vpack.c.b16 %v9474, %v9466
    %v9947 = vpack.c.b16 %v9475, %v9467
    %v9948 = vpack.c.b16 %v9476, %v9468
    %v9949 = vpack.c.b16 %v9477, %v9469
    %v9950 = vpack.c.b16 %v9478, %v9470
    %v9951 = vpack.c.b16 %v9479, %v9471
    %v9952 = vpack.c.b16 %v9480, %v9472
    %v9953 = vpack.c.b16 %v9481, %v9473
    %v9954 = vpack.c.b16 %v9490, %v9482
    %v9955 = vpack.c.b16 %v9491, %v9483
    %v9956 = vpack.c.b16 %v9492, %v9484
    %v9957 = vpack.c.b16 %v9493, %v9485
    %v9958 = vpack.c.b16 %v9494, %v9486
    %v9959 = vpack.c.b16 %v9495, %v9487
    %v9960 = vpack.c.b16 %v9496, %v9488
    %v9961 = vpack.c.b16 %v9497, %v9489
    %v9962 = vpack.c.b16 %v9506, %v9498
    %v9963 = vpack.c.b16 %v9507, %v9499
    %v9964 = vpack.c.b16 %v9508, %v9500
    %v9965 = vpack.c.b16 %v9509, %v9501
    %v9966 = vpack.c.b16 %v9510, %v9502
    %v9967 = vpack.c.b16 %v9511, %v9503
    %v9968 = vpack.c.b16 %v9512, %v9504
    %v9969 = vpack.c.b16 %v9513, %v9505
    %v9970 = vpack.c.b16 %v9522, %v9514
    %v9971 = vpack.c.b16 %v9523, %v9515
    %v9972 = vpack.c.b16 %v9524, %v9516
    %v9973 = vpack.c.b16 %v9525, %v9517
    %v9974 = vpack.c.b16 %v9526, %v9518
    %v9975 = vpack.c.b16 %v9527, %v9519
    %v9976 = vpack.c.b16 %v9528, %v9520
    %v9977 = vpack.c.b16 %v9529, %v9521
    %v9978 = vpack.c.b16 %v9538, %v9530
    %v9979 = vpack.c.b16 %v9539, %v9531
    %v9980 = vpack.c.b16 %v9540, %v9532
    %v9981 = vpack.c.b16 %v9541, %v9533
    %v9982 = vpack.c.b16 %v9542, %v9534
    %v9983 = vpack.c.b16 %v9543, %v9535
    %v9984 = vpack.c.b16 %v9544, %v9536
    %v9985 = vpack.c.b16 %v9545, %v9537
    %v9986 = vpack.c.b16 %v9554, %v9546
    %v9987 = vpack.c.b16 %v9555, %v9547
    %v9988 = vpack.c.b16 %v9556, %v9548
    %v9989 = vpack.c.b16 %v9557, %v9549
    %v9990 = vpack.c.b16 %v9558, %v9550
    %v9991 = vpack.c.b16 %v9559, %v9551
    %v9992 = vpack.c.b16 %v9560, %v9552
    %v9993 = vpack.c.b16 %v9561, %v9553
    %v9994 = vpack.c.b16 %v9570, %v9562
    %v9995 = vpack.c.b16 %v9571, %v9563
    %v9996 = vpack.c.b16 %v9572, %v9564
    %v9997 = vpack.c.b16 %v9573, %v9565
    %v9998 = vpack.c.b16 %v9574, %v9566
    %v9999 = vpack.c.b16 %v9575, %v9567
    %v10000 = vpack.c.b16 %v9576, %v9568
    %v10001 = vpack.c.b16 %v9577, %v9569
    %v10002 = vpack.c.b16 %v9586, %v9578
    %v10003 = vpack.c.b16 %v9587, %v9579
    %v10004 = vpack.c.b16 %v9588, %v9580
    %v10005 = vpack.c.b16 %v9589, %v9581
    %v10006 = vpack.c.b16 %v9590, %v9582
    %v10007 = vpack.c.b16 %v9591, %v9583
    %v10008 = vpack.c.b16 %v9592, %v9584
    %v10009 = vpack.c.b16 %v9593, %v9585
    %v10010 = vpack.c.b16 %v9602, %v9594
    %v10011 = vpack.c.b16 %v9603, %v9595
    %v10012 = vpack.c.b16 %v9604, %v9596
    %v10013 = vpack.c.b16 %v9605, %v9597
    %v10014 = vpack.c.b16 %v9606, %v9598
    %v10015 = vpack.c.b16 %v9607, %v9599
    %v10016 = vpack.c.b16 %v9608, %v9600
    %v10017 = vpack.c.b16 %v9609, %v9601
    %v10018 = vpack.c.b16 %v9618, %v9610
    %v10019 = vpack.c.b16 %v9619, %v9611
    %v10020 = vpack.c.b16 %v9620, %v9612
    %v10021 = vpack.c.b16 %v9621, %v9613
    %v10022 = vpack.c.b16 %v9622, %v9614
    %v10023 = vpack.c.b16 %v9623, %v9615
    %v10024 = vpack.c.b16 %v9624, %v9616
    %v10025 = vpack.c.b16 %v9625, %v9617
    %v10026 = vpack.c.b16 %v9634, %v9626
    %v10027 = vpack.c.b16 %v9635, %v9627
    %v10028 = vpack.c.b16 %v9636, %v9628
    %v10029 = vpack.c.b16 %v9637, %v9629
    %v10030 = vpack.c.b16 %v9638, %v9630
    %v10031 = vpack.c.b16 %v9639, %v9631
    %v10032 = vpack.c.b16 %v9640, %v9632
    %v10033 = vpack.c.b16 %v9641, %v9633
    %v10034 = vpack.c.b16 %v9650, %v9642
    %v10035 = vpack.c.b16 %v9651, %v9643
    %v10036 = vpack.c.b16 %v9652, %v9644
    %v10037 = vpack.c.b16 %v9653, %v9645
    %v10038 = vpack.c.b16 %v9654, %v9646
    %v10039 = vpack.c.b16 %v9655, %v9647
    %v10040 = vpack.c.b16 %v9656, %v9648
    %v10041 = vpack.c.b16 %v9657, %v9649
    %v10042 = vpack.c.b16 %v9666, %v9658
    %v10043 = vpack.c.b16 %v9667, %v9659
    %v10044 = vpack.c.b16 %v9668, %v9660
    %v10045 = vpack.c.b16 %v9669, %v9661
    %v10046 = vpack.c.b16 %v9670, %v9662
    %v10047 = vpack.c.b16 %v9671, %v9663
    %v10048 = vpack.c.b16 %v9672, %v9664
    %v10049 = vpack.c.b16 %v9673, %v9665
    %v10050 = vpack.c.b16 %v9682, %v9674
    %v10051 = vpack.c.b16 %v9683, %v9675
    %v10052 = vpack.c.b16 %v9684, %v9676
    %v10053 = vpack.c.b16 %v9685, %v9677
    %v10054 = vpack.c.b16 %v9686, %v9678
    %v10055 = vpack.c.b16 %v9687, %v9679
    %v10056 = vpack.c.b16 %v9688, %v9680
    %v10057 = vpack.c.b16 %v9689, %v9681
    %v10058 = vpack.c.b16 %v9698, %v9690
    %v10059 = vpack.c.b16 %v9699, %v9691
    %v10060 = vpack.c.b16 %v9700, %v9692
    %v10061 = vpack.c.b16 %v9701, %v9693
    %v10062 = vpack.c.b16 %v9702, %v9694
    %v10063 = vpack.c.b16 %v9703, %v9695
    %v10064 = vpack.c.b16 %v9704, %v9696
    %v10065 = vpack.c.b16 %v9705, %v9697
    %v10066 = vpack.c.b16 %v9714, %v9706
    %v10067 = vpack.c.b16 %v9715, %v9707
    %v10068 = vpack.c.b16 %v9716, %v9708
    %v10069 = vpack.c.b16 %v9717, %v9709
    %v10070 = vpack.c.b16 %v9718, %v9710
    %v10071 = vpack.c.b16 %v9719, %v9711
    %v10072 = vpack.c.b16 %v9720, %v9712
    %v10073 = vpack.c.b16 %v9721, %v9713
    %v10074 = vpack.c.b16 %v9730, %v9722
    %v10075 = vpack.c.b16 %v9731, %v9723
    %v10076 = vpack.c.b16 %v9732, %v9724
    %v10077 = vpack.c.b16 %v9733, %v9725
    %v10078 = vpack.c.b16 %v9734, %v9726
    %v10079 = vpack.c.b16 %v9735, %v9727
    %v10080 = vpack.c.b16 %v9736, %v9728
    %v10081 = vpack.c.b16 %v9737, %v9729
    %v10082 = vpack.c.b16 %v9746, %v9738
    %v10083 = vpack.c.b16 %v9747, %v9739
    %v10084 = vpack.c.b16 %v9748, %v9740
    %v10085 = vpack.c.b16 %v9749, %v9741
    %v10086 = vpack.c.b16 %v9750, %v9742
    %v10087 = vpack.c.b16 %v9751, %v9743
    %v10088 = vpack.c.b16 %v9752, %v9744
    %v10089 = vpack.c.b16 %v9753, %v9745
    %v10090 = vpack.c.b16 %v9762, %v9754
    %v10091 = vpack.c.b16 %v9763, %v9755
    %v10092 = vpack.c.b16 %v9764, %v9756
    %v10093 = vpack.c.b16 %v9765, %v9757
    %v10094 = vpack.c.b16 %v9766, %v9758
    %v10095 = vpack.c.b16 %v9767, %v9759
    %v10096 = vpack.c.b16 %v9768, %v9760
    %v10097 = vpack.c.b16 %v9769, %v9761
    %v10098 = vpack.c.b16 %v9778, %v9770
    %v10099 = vpack.c.b16 %v9779, %v9771
    %v10100 = vpack.c.b16 %v9780, %v9772
    %v10101 = vpack.c.b16 %v9781, %v9773
    %v10102 = vpack.c.b16 %v9782, %v9774
    %v10103 = vpack.c.b16 %v9783, %v9775
    %v10104 = vpack.c.b16 %v9784, %v9776
    %v10105 = vpack.c.b16 %v9785, %v9777
    %v10106 = vpack.c.b16 %v9794, %v9786
    %v10107 = vpack.c.b16 %v9795, %v9787
    %v10108 = vpack.c.b16 %v9796, %v9788
    %v10109 = vpack.c.b16 %v9797, %v9789
    %v10110 = vpack.c.b16 %v9798, %v9790
    %v10111 = vpack.c.b16 %v9799, %v9791
    %v10112 = vpack.c.b16 %v9800, %v9792
    %v10113 = vpack.c.b16 %v9801, %v9793
    %v10114 = vpack.c.b16 %v9810, %v9802
    %v10115 = vpack.c.b16 %v9811, %v9803
    %v10116 = vpack.c.b16 %v9812, %v9804
    %v10117 = vpack.c.b16 %v9813, %v9805
    %v10118 = vpack.c.b16 %v9814, %v9806
    %v10119 = vpack.c.b16 %v9815, %v9807
    %v10120 = vpack.c.b16 %v9816, %v9808
    %v10121 = vpack.c.b16 %v9817, %v9809
    %v10122 = vpack.c.b16 %v9826, %v9818
    %v10123 = vpack.c.b16 %v9827, %v9819
    %v10124 = vpack.c.b16 %v9828, %v9820
    %v10125 = vpack.c.b16 %v9829, %v9821
    %v10126 = vpack.c.b16 %v9830, %v9822
    %v10127 = vpack.c.b16 %v9831, %v9823
    %v10128 = vpack.c.b16 %v9832, %v9824
    %v10129 = vpack.c.b16 %v9833, %v9825
    %v10130 = vpack.c.b16 %v9842, %v9834
    %v10131 = vpack.c.b16 %v9843, %v9835
    %v10132 = vpack.c.b16 %v9844, %v9836
    %v10133 = vpack.c.b16 %v9845, %v9837
    %v10134 = vpack.c.b16 %v9846, %v9838
    %v10135 = vpack.c.b16 %v9847, %v9839
    %v10136 = vpack.c.b16 %v9848, %v9840
    %v10137 = vpack.c.b16 %v9849, %v9841
    %v10138 = vpack.c.b16 %v9858, %v9850
    %v10139 = vpack.c.b16 %v9859, %v9851
    %v10140 = vpack.c.b16 %v9860, %v9852
    %v10141 = vpack.c.b16 %v9861, %v9853
    %v10142 = vpack.c.b16 %v9862, %v9854
    %v10143 = vpack.c.b16 %v9863, %v9855
    %v10144 = vpack.c.b16 %v9864, %v9856
    %v10145 = vpack.c.b16 %v9865, %v9857
    %v10146 = vpack.c.b16 %v9874, %v9866
    %v10147 = vpack.c.b16 %v9875, %v9867
    %v10148 = vpack.c.b16 %v9876, %v9868
    %v10149 = vpack.c.b16 %v9877, %v9869
    %v10150 = vpack.c.b16 %v9878, %v9870
    %v10151 = vpack.c.b16 %v9879, %v9871
    %v10152 = vpack.c.b16 %v9880, %v9872
    %v10153 = vpack.c.b16 %v9881, %v9873
    %v10154 = vpack.c.b16 %v9890, %v9882
    %v10155 = vpack.c.b16 %v9891, %v9883
    %v10156 = vpack.c.b16 %v9892, %v9884
    %v10157 = vpack.c.b16 %v9893, %v9885
    %v10158 = vpack.c.b16 %v9894, %v9886
    %v10159 = vpack.c.b16 %v9895, %v9887
    %v10160 = vpack.c.b16 %v9896, %v9888
    %v10161 = vpack.c.b16 %v9897, %v9889
    %v10162 = vpack.c.b16 %v9906, %v9898
    %v10163 = vpack.c.b16 %v9907, %v9899
    %v10164 = vpack.c.b16 %v9908, %v9900
    %v10165 = vpack.c.b16 %v9909, %v9901
    %v10166 = vpack.c.b16 %v9910, %v9902
    %v10167 = vpack.c.b16 %v9911, %v9903
    %v10168 = vpack.c.b16 %v9912, %v9904
    %v10169 = vpack.c.b16 %v9913, %v9905
    %10426 = vmatpush.bf16.msra.mxu0 %v9970
    %10427 = vmatpush.bf16.msra.mxu0 %v9962
    %10428 = vmatpush.bf16.msra.mxu0 %v9954
    %10429 = vmatpush.bf16.msra.mxu0 %v9946
    %10430 = vmatpush.bf16.msra.mxu0 %v9938
    %10431 = vmatpush.bf16.msra.mxu0 %v9930
    %10432 = vmatpush.bf16.msra.mxu0 %v9922
    %10433 = vmatpush.bf16.msra.mxu0 %v9914
    %10434 = vmatmul.bf16.gmra.mxu0 %v6264
    %v10435 = vpop.f32.mrf.mxu0
    %v10436 = vadd.f32 0.0, %v10435
    %v10437 = vpop.f32.mrf.mxu0
    %10438 = vdwg.mxu0
    %10439 = vmatpush.bf16.msra.mxu0 %v10034
    %10440 = vmatpush.bf16.msra.mxu0 %v10026
    %10441 = vmatpush.bf16.msra.mxu0 %v10018
    %10442 = vmatpush.bf16.msra.mxu0 %v10010
    %10443 = vmatpush.bf16.msra.mxu0 %v10002
    %10444 = vmatpush.bf16.msra.mxu0 %v9994
    %10445 = vmatpush.bf16.msra.mxu0 %v9986
    %10446 = vmatpush.bf16.msra.mxu0 %v9978
    %10447 = vmatmul.bf16.gmra.mxu0 %v6265
    %v10448 = vpop.f32.mrf.mxu0
    %v10449 = vadd.f32 %v10436, %v10448
    %v10450 = vpop.f32.mrf.mxu0
    %10451 = vdwg.mxu0
    %10452 = vmatpush.bf16.msra.mxu0 %v10098
    %10453 = vmatpush.bf16.msra.mxu0 %v10090
    %10454 = vmatpush.bf16.msra.mxu0 %v10082
    %10455 = vmatpush.bf16.msra.mxu0 %v10074
    %10456 = vmatpush.bf16.msra.mxu0 %v10066
    %10457 = vmatpush.bf16.msra.mxu0 %v10058
    %10458 = vmatpush.bf16.msra.mxu0 %v10050
    %10459 = vmatpush.bf16.msra.mxu0 %v10042
    %10460 = vmatmul.bf16.gmra.mxu0 %v6266
    %v10461 = vpop.f32.mrf.mxu0
    %v10462 = vadd.f32 %v10449, %v10461
    %v10463 = vpop.f32.mrf.mxu0
    %10464 = vdwg.mxu0
    %10465 = vmatpush.bf16.msra.mxu0 %v10162
    %10466 = vmatpush.bf16.msra.mxu0 %v10154
    %10467 = vmatpush.bf16.msra.mxu0 %v10146
    %10468 = vmatpush.bf16.msra.mxu0 %v10138
    %10469 = vmatpush.bf16.msra.mxu0 %v10130
    %10470 = vmatpush.bf16.msra.mxu0 %v10122
    %10471 = vmatpush.bf16.msra.mxu0 %v10114
    %10472 = vmatpush.bf16.msra.mxu0 %v10106
    %10473 = vmatmul.bf16.gmra.mxu0 %v6267
    %v10474 = vpop.f32.mrf.mxu0
    %v10475 = vadd.f32 %v10462, %v10474
    %v10476 = vpop.f32.mrf.mxu0
    %10477 = vdwg.mxu0
    %10478 = vmatpush.bf16.msra.mxu0 %v9971
    %10479 = vmatpush.bf16.msra.mxu0 %v9963
    %10480 = vmatpush.bf16.msra.mxu0 %v9955
    %10481 = vmatpush.bf16.msra.mxu0 %v9947
    %10482 = vmatpush.bf16.msra.mxu0 %v9939
    %10483 = vmatpush.bf16.msra.mxu0 %v9931
    %10484 = vmatpush.bf16.msra.mxu0 %v9923
    %10485 = vmatpush.bf16.msra.mxu0 %v9915
    %10486 = vmatmul.bf16.gmra.mxu0 %v6264
    %v10487 = vpop.f32.mrf.mxu0
    %v10488 = vadd.f32 0.0, %v10487
    %v10489 = vpop.f32.mrf.mxu0
    %10490 = vdwg.mxu0
    %10491 = vmatpush.bf16.msra.mxu0 %v10035
    %10492 = vmatpush.bf16.msra.mxu0 %v10027
    %10493 = vmatpush.bf16.msra.mxu0 %v10019
    %10494 = vmatpush.bf16.msra.mxu0 %v10011
    %10495 = vmatpush.bf16.msra.mxu0 %v10003
    %10496 = vmatpush.bf16.msra.mxu0 %v9995
    %10497 = vmatpush.bf16.msra.mxu0 %v9987
    %10498 = vmatpush.bf16.msra.mxu0 %v9979
    %10499 = vmatmul.bf16.gmra.mxu0 %v6265
    %v10500 = vpop.f32.mrf.mxu0
    %v10501 = vadd.f32 %v10488, %v10500
    %v10502 = vpop.f32.mrf.mxu0
    %10503 = vdwg.mxu0
    %10504 = vmatpush.bf16.msra.mxu0 %v10099
    %10505 = vmatpush.bf16.msra.mxu0 %v10091
    %10506 = vmatpush.bf16.msra.mxu0 %v10083
    %10507 = vmatpush.bf16.msra.mxu0 %v10075
    %10508 = vmatpush.bf16.msra.mxu0 %v10067
    %10509 = vmatpush.bf16.msra.mxu0 %v10059
    %10510 = vmatpush.bf16.msra.mxu0 %v10051
    %10511 = vmatpush.bf16.msra.mxu0 %v10043
    %10512 = vmatmul.bf16.gmra.mxu0 %v6266
    %v10513 = vpop.f32.mrf.mxu0
    %v10514 = vadd.f32 %v10501, %v10513
    %v10515 = vpop.f32.mrf.mxu0
    %10516 = vdwg.mxu0
    %10517 = vmatpush.bf16.msra.mxu0 %v10163
    %10518 = vmatpush.bf16.msra.mxu0 %v10155
    %10519 = vmatpush.bf16.msra.mxu0 %v10147
    %10520 = vmatpush.bf16.msra.mxu0 %v10139
    %10521 = vmatpush.bf16.msra.mxu0 %v10131
    %10522 = vmatpush.bf16.msra.mxu0 %v10123
    %10523 = vmatpush.bf16.msra.mxu0 %v10115
    %10524 = vmatpush.bf16.msra.mxu0 %v10107
    %10525 = vmatmul.bf16.gmra.mxu0 %v6267
    %v10526 = vpop.f32.mrf.mxu0
    %v10527 = vadd.f32 %v10514, %v10526
    %v10528 = vpop.f32.mrf.mxu0
    %10529 = vdwg.mxu0
    %10530 = vmatpush.bf16.msra.mxu0 %v9972
    %10531 = vmatpush.bf16.msra.mxu0 %v9964
    %10532 = vmatpush.bf16.msra.mxu0 %v9956
    %10533 = vmatpush.bf16.msra.mxu0 %v9948
    %10534 = vmatpush.bf16.msra.mxu0 %v9940
    %10535 = vmatpush.bf16.msra.mxu0 %v9932
    %10536 = vmatpush.bf16.msra.mxu0 %v9924
    %10537 = vmatpush.bf16.msra.mxu0 %v9916
    %10538 = vmatmul.bf16.gmra.mxu0 %v6264
    %v10539 = vpop.f32.mrf.mxu0
    %v10540 = vadd.f32 0.0, %v10539
    %v10541 = vpop.f32.mrf.mxu0
    %10542 = vdwg.mxu0
    %10543 = vmatpush.bf16.msra.mxu0 %v10036
    %10544 = vmatpush.bf16.msra.mxu0 %v10028
    %10545 = vmatpush.bf16.msra.mxu0 %v10020
    %10546 = vmatpush.bf16.msra.mxu0 %v10012
    %10547 = vmatpush.bf16.msra.mxu0 %v10004
    %10548 = vmatpush.bf16.msra.mxu0 %v9996
    %10549 = vmatpush.bf16.msra.mxu0 %v9988
    %10550 = vmatpush.bf16.msra.mxu0 %v9980
    %10551 = vmatmul.bf16.gmra.mxu0 %v6265
    %v10552 = vpop.f32.mrf.mxu0
    %v10553 = vadd.f32 %v10540, %v10552
    %v10554 = vpop.f32.mrf.mxu0
    %10555 = vdwg.mxu0
    %10556 = vmatpush.bf16.msra.mxu0 %v10100
    %10557 = vmatpush.bf16.msra.mxu0 %v10092
    %10558 = vmatpush.bf16.msra.mxu0 %v10084
    %10559 = vmatpush.bf16.msra.mxu0 %v10076
    %10560 = vmatpush.bf16.msra.mxu0 %v10068
    %10561 = vmatpush.bf16.msra.mxu0 %v10060
    %10562 = vmatpush.bf16.msra.mxu0 %v10052
    %10563 = vmatpush.bf16.msra.mxu0 %v10044
    %10564 = vmatmul.bf16.gmra.mxu0 %v6266
    %v10565 = vpop.f32.mrf.mxu0
    %v10566 = vadd.f32 %v10553, %v10565
    %v10567 = vpop.f32.mrf.mxu0
    %10568 = vdwg.mxu0
    %10569 = vmatpush.bf16.msra.mxu0 %v10164
    %10570 = vmatpush.bf16.msra.mxu0 %v10156
    %10571 = vmatpush.bf16.msra.mxu0 %v10148
    %10572 = vmatpush.bf16.msra.mxu0 %v10140
    %10573 = vmatpush.bf16.msra.mxu0 %v10132
    %10574 = vmatpush.bf16.msra.mxu0 %v10124
    %10575 = vmatpush.bf16.msra.mxu0 %v10116
    %10576 = vmatpush.bf16.msra.mxu0 %v10108
    %10577 = vmatmul.bf16.gmra.mxu0 %v6267
    %v10578 = vpop.f32.mrf.mxu0
    %v10579 = vadd.f32 %v10566, %v10578
    %v10580 = vpop.f32.mrf.mxu0
    %10581 = vdwg.mxu0
    %10582 = vmatpush.bf16.msra.mxu0 %v9973
    %10583 = vmatpush.bf16.msra.mxu0 %v9965
    %10584 = vmatpush.bf16.msra.mxu0 %v9957
    %10585 = vmatpush.bf16.msra.mxu0 %v9949
    %10586 = vmatpush.bf16.msra.mxu0 %v9941
    %10587 = vmatpush.bf16.msra.mxu0 %v9933
    %10588 = vmatpush.bf16.msra.mxu0 %v9925
    %10589 = vmatpush.bf16.msra.mxu0 %v9917
    %10590 = vmatmul.bf16.gmra.mxu0 %v6264
    %v10591 = vpop.f32.mrf.mxu0
    %v10592 = vadd.f32 0.0, %v10591
    %v10593 = vpop.f32.mrf.mxu0
    %10594 = vdwg.mxu0
    %10595 = vmatpush.bf16.msra.mxu0 %v10037
    %10596 = vmatpush.bf16.msra.mxu0 %v10029
    %10597 = vmatpush.bf16.msra.mxu0 %v10021
    %10598 = vmatpush.bf16.msra.mxu0 %v10013
    %10599 = vmatpush.bf16.msra.mxu0 %v10005
    %10600 = vmatpush.bf16.msra.mxu0 %v9997
    %10601 = vmatpush.bf16.msra.mxu0 %v9989
    %10602 = vmatpush.bf16.msra.mxu0 %v9981
    %10603 = vmatmul.bf16.gmra.mxu0 %v6265
    %v10604 = vpop.f32.mrf.mxu0
    %v10605 = vadd.f32 %v10592, %v10604
    %v10606 = vpop.f32.mrf.mxu0
    %10607 = vdwg.mxu0
    %10608 = vmatpush.bf16.msra.mxu0 %v10101
    %10609 = vmatpush.bf16.msra.mxu0 %v10093
    %10610 = vmatpush.bf16.msra.mxu0 %v10085
    %10611 = vmatpush.bf16.msra.mxu0 %v10077
    %10612 = vmatpush.bf16.msra.mxu0 %v10069
    %10613 = vmatpush.bf16.msra.mxu0 %v10061
    %10614 = vmatpush.bf16.msra.mxu0 %v10053
    %10615 = vmatpush.bf16.msra.mxu0 %v10045
    %10616 = vmatmul.bf16.gmra.mxu0 %v6266
    %v10617 = vpop.f32.mrf.mxu0
    %v10618 = vadd.f32 %v10605, %v10617
    %v10619 = vpop.f32.mrf.mxu0
    %10620 = vdwg.mxu0
    %10621 = vmatpush.bf16.msra.mxu0 %v10165
    %10622 = vmatpush.bf16.msra.mxu0 %v10157
    %10623 = vmatpush.bf16.msra.mxu0 %v10149
    %10624 = vmatpush.bf16.msra.mxu0 %v10141
    %10625 = vmatpush.bf16.msra.mxu0 %v10133
    %10626 = vmatpush.bf16.msra.mxu0 %v10125
    %10627 = vmatpush.bf16.msra.mxu0 %v10117
    %10628 = vmatpush.bf16.msra.mxu0 %v10109
    %10629 = vmatmul.bf16.gmra.mxu0 %v6267
    %v10630 = vpop.f32.mrf.mxu0
    %v10631 = vadd.f32 %v10618, %v10630
    %v10632 = vpop.f32.mrf.mxu0
    %10633 = vdwg.mxu0
    %10634 = vmatpush.bf16.msra.mxu0 %v9974
    %10635 = vmatpush.bf16.msra.mxu0 %v9966
    %10636 = vmatpush.bf16.msra.mxu0 %v9958
    %10637 = vmatpush.bf16.msra.mxu0 %v9950
    %10638 = vmatpush.bf16.msra.mxu0 %v9942
    %10639 = vmatpush.bf16.msra.mxu0 %v9934
    %10640 = vmatpush.bf16.msra.mxu0 %v9926
    %10641 = vmatpush.bf16.msra.mxu0 %v9918
    %10642 = vmatmul.bf16.gmra.mxu0 %v6264
    %v10643 = vpop.f32.mrf.mxu0
    %v10644 = vadd.f32 0.0, %v10643
    %v10645 = vpop.f32.mrf.mxu0
    %10646 = vdwg.mxu0
    %10647 = vmatpush.bf16.msra.mxu0 %v10038
    %10648 = vmatpush.bf16.msra.mxu0 %v10030
    %10649 = vmatpush.bf16.msra.mxu0 %v10022
    %10650 = vmatpush.bf16.msra.mxu0 %v10014
    %10651 = vmatpush.bf16.msra.mxu0 %v10006
    %10652 = vmatpush.bf16.msra.mxu0 %v9998
    %10653 = vmatpush.bf16.msra.mxu0 %v9990
    %10654 = vmatpush.bf16.msra.mxu0 %v9982
    %10655 = vmatmul.bf16.gmra.mxu0 %v6265
    %v10656 = vpop.f32.mrf.mxu0
    %v10657 = vadd.f32 %v10644, %v10656
    %v10658 = vpop.f32.mrf.mxu0
    %10659 = vdwg.mxu0
    %10660 = vmatpush.bf16.msra.mxu0 %v10102
    %10661 = vmatpush.bf16.msra.mxu0 %v10094
    %10662 = vmatpush.bf16.msra.mxu0 %v10086
    %10663 = vmatpush.bf16.msra.mxu0 %v10078
    %10664 = vmatpush.bf16.msra.mxu0 %v10070
    %10665 = vmatpush.bf16.msra.mxu0 %v10062
    %10666 = vmatpush.bf16.msra.mxu0 %v10054
    %10667 = vmatpush.bf16.msra.mxu0 %v10046
    %10668 = vmatmul.bf16.gmra.mxu0 %v6266
    %v10669 = vpop.f32.mrf.mxu0
    %v10670 = vadd.f32 %v10657, %v10669
    %v10671 = vpop.f32.mrf.mxu0
    %10672 = vdwg.mxu0
    %10673 = vmatpush.bf16.msra.mxu0 %v10166
    %10674 = vmatpush.bf16.msra.mxu0 %v10158
    %10675 = vmatpush.bf16.msra.mxu0 %v10150
    %10676 = vmatpush.bf16.msra.mxu0 %v10142
    %10677 = vmatpush.bf16.msra.mxu0 %v10134
    %10678 = vmatpush.bf16.msra.mxu0 %v10126
    %10679 = vmatpush.bf16.msra.mxu0 %v10118
    %10680 = vmatpush.bf16.msra.mxu0 %v10110
    %10681 = vmatmul.bf16.gmra.mxu0 %v6267
    %v10682 = vpop.f32.mrf.mxu0
    %v10683 = vadd.f32 %v10670, %v10682
    %v10684 = vpop.f32.mrf.mxu0
    %10685 = vdwg.mxu0
    %10686 = vmatpush.bf16.msra.mxu0 %v9975
    %10687 = vmatpush.bf16.msra.mxu0 %v9967
    %10688 = vmatpush.bf16.msra.mxu0 %v9959
    %10689 = vmatpush.bf16.msra.mxu0 %v9951
    %10690 = vmatpush.bf16.msra.mxu0 %v9943
    %10691 = vmatpush.bf16.msra.mxu0 %v9935
    %10692 = vmatpush.bf16.msra.mxu0 %v9927
    %10693 = vmatpush.bf16.msra.mxu0 %v9919
    %10694 = vmatmul.bf16.gmra.mxu0 %v6264
    %v10695 = vpop.f32.mrf.mxu0
    %v10696 = vadd.f32 0.0, %v10695
    %v10697 = vpop.f32.mrf.mxu0
    %10698 = vdwg.mxu0
    %10699 = vmatpush.bf16.msra.mxu0 %v10039
    %10700 = vmatpush.bf16.msra.mxu0 %v10031
    %10701 = vmatpush.bf16.msra.mxu0 %v10023
    %10702 = vmatpush.bf16.msra.mxu0 %v10015
    %10703 = vmatpush.bf16.msra.mxu0 %v10007
    %10704 = vmatpush.bf16.msra.mxu0 %v9999
    %10705 = vmatpush.bf16.msra.mxu0 %v9991
    %10706 = vmatpush.bf16.msra.mxu0 %v9983
    %10707 = vmatmul.bf16.gmra.mxu0 %v6265
    %v10708 = vpop.f32.mrf.mxu0
    %v10709 = vadd.f32 %v10696, %v10708
    %v10710 = vpop.f32.mrf.mxu0
    %10711 = vdwg.mxu0
    %10712 = vmatpush.bf16.msra.mxu0 %v10103
    %10713 = vmatpush.bf16.msra.mxu0 %v10095
    %10714 = vmatpush.bf16.msra.mxu0 %v10087
    %10715 = vmatpush.bf16.msra.mxu0 %v10079
    %10716 = vmatpush.bf16.msra.mxu0 %v10071
    %10717 = vmatpush.bf16.msra.mxu0 %v10063
    %10718 = vmatpush.bf16.msra.mxu0 %v10055
    %10719 = vmatpush.bf16.msra.mxu0 %v10047
    %10720 = vmatmul.bf16.gmra.mxu0 %v6266
    %v10721 = vpop.f32.mrf.mxu0
    %v10722 = vadd.f32 %v10709, %v10721
    %v10723 = vpop.f32.mrf.mxu0
    %10724 = vdwg.mxu0
    %10725 = vmatpush.bf16.msra.mxu0 %v10167
    %10726 = vmatpush.bf16.msra.mxu0 %v10159
    %10727 = vmatpush.bf16.msra.mxu0 %v10151
    %10728 = vmatpush.bf16.msra.mxu0 %v10143
    %10729 = vmatpush.bf16.msra.mxu0 %v10135
    %10730 = vmatpush.bf16.msra.mxu0 %v10127
    %10731 = vmatpush.bf16.msra.mxu0 %v10119
    %10732 = vmatpush.bf16.msra.mxu0 %v10111
    %10733 = vmatmul.bf16.gmra.mxu0 %v6267
    %v10734 = vpop.f32.mrf.mxu0
    %v10735 = vadd.f32 %v10722, %v10734
    %v10736 = vpop.f32.mrf.mxu0
    %10737 = vdwg.mxu0
    %10738 = vmatpush.bf16.msra.mxu0 %v9976
    %10739 = vmatpush.bf16.msra.mxu0 %v9968
    %10740 = vmatpush.bf16.msra.mxu0 %v9960
    %10741 = vmatpush.bf16.msra.mxu0 %v9952
    %10742 = vmatpush.bf16.msra.mxu0 %v9944
    %10743 = vmatpush.bf16.msra.mxu0 %v9936
    %10744 = vmatpush.bf16.msra.mxu0 %v9928
    %10745 = vmatpush.bf16.msra.mxu0 %v9920
    %10746 = vmatmul.bf16.gmra.mxu0 %v6264
    %v10747 = vpop.f32.mrf.mxu0
    %v10748 = vadd.f32 0.0, %v10747
    %v10749 = vpop.f32.mrf.mxu0
    %10750 = vdwg.mxu0
    %10751 = vmatpush.bf16.msra.mxu0 %v10040
    %10752 = vmatpush.bf16.msra.mxu0 %v10032
    %10753 = vmatpush.bf16.msra.mxu0 %v10024
    %10754 = vmatpush.bf16.msra.mxu0 %v10016
    %10755 = vmatpush.bf16.msra.mxu0 %v10008
    %10756 = vmatpush.bf16.msra.mxu0 %v10000
    %10757 = vmatpush.bf16.msra.mxu0 %v9992
    %10758 = vmatpush.bf16.msra.mxu0 %v9984
    %10759 = vmatmul.bf16.gmra.mxu0 %v6265
    %v10760 = vpop.f32.mrf.mxu0
    %v10761 = vadd.f32 %v10748, %v10760
    %v10762 = vpop.f32.mrf.mxu0
    %10763 = vdwg.mxu0
    %10764 = vmatpush.bf16.msra.mxu0 %v10104
    %10765 = vmatpush.bf16.msra.mxu0 %v10096
    %10766 = vmatpush.bf16.msra.mxu0 %v10088
    %10767 = vmatpush.bf16.msra.mxu0 %v10080
    %10768 = vmatpush.bf16.msra.mxu0 %v10072
    %10769 = vmatpush.bf16.msra.mxu0 %v10064
    %10770 = vmatpush.bf16.msra.mxu0 %v10056
    %10771 = vmatpush.bf16.msra.mxu0 %v10048
    %10772 = vmatmul.bf16.gmra.mxu0 %v6266
    %v10773 = vpop.f32.mrf.mxu0
    %v10774 = vadd.f32 %v10761, %v10773
    %v10775 = vpop.f32.mrf.mxu0
    %10776 = vdwg.mxu0
    %10777 = vmatpush.bf16.msra.mxu0 %v10168
    %10778 = vmatpush.bf16.msra.mxu0 %v10160
    %10779 = vmatpush.bf16.msra.mxu0 %v10152
    %10780 = vmatpush.bf16.msra.mxu0 %v10144
    %10781 = vmatpush.bf16.msra.mxu0 %v10136
    %10782 = vmatpush.bf16.msra.mxu0 %v10128
    %10783 = vmatpush.bf16.msra.mxu0 %v10120
    %10784 = vmatpush.bf16.msra.mxu0 %v10112
    %10785 = vmatmul.bf16.gmra.mxu0 %v6267
    %v10786 = vpop.f32.mrf.mxu0
    %v10787 = vadd.f32 %v10774, %v10786
    %v10788 = vpop.f32.mrf.mxu0
    %10789 = vdwg.mxu0
    %10790 = vmatpush.bf16.msra.mxu0 %v9977
    %10791 = vmatpush.bf16.msra.mxu0 %v9969
    %10792 = vmatpush.bf16.msra.mxu0 %v9961
    %10793 = vmatpush.bf16.msra.mxu0 %v9953
    %10794 = vmatpush.bf16.msra.mxu0 %v9945
    %10795 = vmatpush.bf16.msra.mxu0 %v9937
    %10796 = vmatpush.bf16.msra.mxu0 %v9929
    %10797 = vmatpush.bf16.msra.mxu0 %v9921
    %10798 = vmatmul.bf16.gmra.mxu0 %v6264
    %v10799 = vpop.f32.mrf.mxu0
    %v10800 = vadd.f32 0.0, %v10799
    %v10801 = vpop.f32.mrf.mxu0
    %10802 = vdwg.mxu0
    %10803 = vmatpush.bf16.msra.mxu0 %v10041
    %10804 = vmatpush.bf16.msra.mxu0 %v10033
    %10805 = vmatpush.bf16.msra.mxu0 %v10025
    %10806 = vmatpush.bf16.msra.mxu0 %v10017
    %10807 = vmatpush.bf16.msra.mxu0 %v10009
    %10808 = vmatpush.bf16.msra.mxu0 %v10001
    %10809 = vmatpush.bf16.msra.mxu0 %v9993
    %10810 = vmatpush.bf16.msra.mxu0 %v9985
    %10811 = vmatmul.bf16.gmra.mxu0 %v6265
    %v10812 = vpop.f32.mrf.mxu0
    %v10813 = vadd.f32 %v10800, %v10812
    %v10814 = vpop.f32.mrf.mxu0
    %10815 = vdwg.mxu0
    %10816 = vmatpush.bf16.msra.mxu0 %v10105
    %10817 = vmatpush.bf16.msra.mxu0 %v10097
    %10818 = vmatpush.bf16.msra.mxu0 %v10089
    %10819 = vmatpush.bf16.msra.mxu0 %v10081
    %10820 = vmatpush.bf16.msra.mxu0 %v10073
    %10821 = vmatpush.bf16.msra.mxu0 %v10065
    %10822 = vmatpush.bf16.msra.mxu0 %v10057
    %10823 = vmatpush.bf16.msra.mxu0 %v10049
    %10824 = vmatmul.bf16.gmra.mxu0 %v6266
    %v10825 = vpop.f32.mrf.mxu0
    %v10826 = vadd.f32 %v10813, %v10825
    %v10827 = vpop.f32.mrf.mxu0
    %10828 = vdwg.mxu0
    %10829 = vmatpush.bf16.msra.mxu0 %v10169
    %10830 = vmatpush.bf16.msra.mxu0 %v10161
    %10831 = vmatpush.bf16.msra.mxu0 %v10153
    %10832 = vmatpush.bf16.msra.mxu0 %v10145
    %10833 = vmatpush.bf16.msra.mxu0 %v10137
    %10834 = vmatpush.bf16.msra.mxu0 %v10129
    %10835 = vmatpush.bf16.msra.mxu0 %v10121
    %10836 = vmatpush.bf16.msra.mxu0 %v10113
    %10837 = vmatmul.bf16.gmra.mxu0 %v6267
    %v10838 = vpop.f32.mrf.mxu0
    %v10839 = vadd.f32 %v10826, %v10838
    %v10840 = vpop.f32.mrf.mxu0
    %10841 = vdwg.mxu0
    %s10842 = scalar_lea.vmem [#allocation10], 44
    %v10843 = vld [vmem:[%s10842] ss:$2 sm:$0xff]
    %s10844 = scalar_lea.vmem [#allocation10], 45
    %v10845 = vld [vmem:[%s10844] ss:$2 sm:$0xff]
    %v10846 = vrot.slane %v10475, 4
    %v10847 = vadd.f32 %v10475, %v10846
    %v10848 = vrot.slane %v10847, 2
    %v10849 = vadd.f32 %v10847, %v10848
    %v10850 = vrot.slane %v10849, 1
    %v10851 = vadd.f32 %v10849, %v10850
    %v10852 = vrot.slane %v10527, 4
    %v10853 = vadd.f32 %v10527, %v10852
    %v10854 = vrot.slane %v10853, 2
    %v10855 = vadd.f32 %v10853, %v10854
    %v10856 = vrot.slane %v10855, 1
    %v10857 = vadd.f32 %v10855, %v10856
    %v10858 = vrot.slane %v10579, 4
    %v10859 = vadd.f32 %v10579, %v10858
    %v10860 = vrot.slane %v10859, 2
    %v10861 = vadd.f32 %v10859, %v10860
    %v10862 = vrot.slane %v10861, 1
    %v10863 = vadd.f32 %v10861, %v10862
    %v10864 = vrot.slane %v10631, 4
    %v10865 = vadd.f32 %v10631, %v10864
    %v10866 = vrot.slane %v10865, 2
    %v10867 = vadd.f32 %v10865, %v10866
    %v10868 = vrot.slane %v10867, 1
    %v10869 = vadd.f32 %v10867, %v10868
    %v10870 = vrot.slane %v10683, 4
    %v10871 = vadd.f32 %v10683, %v10870
    %v10872 = vrot.slane %v10871, 2
    %v10873 = vadd.f32 %v10871, %v10872
    %v10874 = vrot.slane %v10873, 1
    %v10875 = vadd.f32 %v10873, %v10874
    %v10876 = vrot.slane %v10735, 4
    %v10877 = vadd.f32 %v10735, %v10876
    %v10878 = vrot.slane %v10877, 2
    %v10879 = vadd.f32 %v10877, %v10878
    %v10880 = vrot.slane %v10879, 1
    %v10881 = vadd.f32 %v10879, %v10880
    %v10882 = vrot.slane %v10787, 4
    %v10883 = vadd.f32 %v10787, %v10882
    %v10884 = vrot.slane %v10883, 2
    %v10885 = vadd.f32 %v10883, %v10884
    %v10886 = vrot.slane %v10885, 1
    %v10887 = vadd.f32 %v10885, %v10886
    %v10888 = vrot.slane %v10839, 4
    %v10889 = vadd.f32 %v10839, %v10888
    %v10890 = vrot.slane %v10889, 2
    %v10891 = vadd.f32 %v10889, %v10890
    %v10892 = vrot.slane %v10891, 1
    %v10893 = vadd.f32 %v10891, %v10892
    %v10894 = vmul.f32 %v10851, %v4393
    %v10895 = vmul.f32 %v10857, %v4393
    %v10896 = vmul.f32 %v10863, %v4393
    %v10897 = vmul.f32 %v10869, %v4393
    %v10898 = vmul.f32 %v10875, %v4393
    %v10899 = vmul.f32 %v10881, %v4393
    %v10900 = vmul.f32 %v10887, %v4393
    %v10901 = vmul.f32 %v10893, %v4393
    %v10902 = vsub.f32 %v10475, %v10894
    %v10903 = vsub.f32 %v10527, %v10895
    %v10904 = vsub.f32 %v10579, %v10896
    %v10905 = vsub.f32 %v10631, %v10897
    %v10906 = vsub.f32 %v10683, %v10898
    %v10907 = vsub.f32 %v10735, %v10899
    %v10908 = vsub.f32 %v10787, %v10900
    %v10909 = vsub.f32 %v10839, %v10901
    %v10910 = vmul.f32 %v10902, %v10902
    %v10911 = vmul.f32 %v10903, %v10903
    %v10912 = vmul.f32 %v10904, %v10904
    %v10913 = vmul.f32 %v10905, %v10905
    %v10914 = vmul.f32 %v10906, %v10906
    %v10915 = vmul.f32 %v10907, %v10907
    %v10916 = vmul.f32 %v10908, %v10908
    %v10917 = vmul.f32 %v10909, %v10909
    %v10918 = vrot.slane %v10910, 4
    %v10919 = vadd.f32 %v10910, %v10918
    %v10920 = vrot.slane %v10919, 2
    %v10921 = vadd.f32 %v10919, %v10920
    %v10922 = vrot.slane %v10921, 1
    %v10923 = vadd.f32 %v10921, %v10922
    %v10924 = vrot.slane %v10911, 4
    %v10925 = vadd.f32 %v10911, %v10924
    %v10926 = vrot.slane %v10925, 2
    %v10927 = vadd.f32 %v10925, %v10926
    %v10928 = vrot.slane %v10927, 1
    %v10929 = vadd.f32 %v10927, %v10928
    %v10930 = vrot.slane %v10912, 4
    %v10931 = vadd.f32 %v10912, %v10930
    %v10932 = vrot.slane %v10931, 2
    %v10933 = vadd.f32 %v10931, %v10932
    %v10934 = vrot.slane %v10933, 1
    %v10935 = vadd.f32 %v10933, %v10934
    %v10936 = vrot.slane %v10913, 4
    %v10937 = vadd.f32 %v10913, %v10936
    %v10938 = vrot.slane %v10937, 2
    %v10939 = vadd.f32 %v10937, %v10938
    %v10940 = vrot.slane %v10939, 1
    %v10941 = vadd.f32 %v10939, %v10940
    %v10942 = vrot.slane %v10914, 4
    %v10943 = vadd.f32 %v10914, %v10942
    %v10944 = vrot.slane %v10943, 2
    %v10945 = vadd.f32 %v10943, %v10944
    %v10946 = vrot.slane %v10945, 1
    %v10947 = vadd.f32 %v10945, %v10946
    %v10948 = vrot.slane %v10915, 4
    %v10949 = vadd.f32 %v10915, %v10948
    %v10950 = vrot.slane %v10949, 2
    %v10951 = vadd.f32 %v10949, %v10950
    %v10952 = vrot.slane %v10951, 1
    %v10953 = vadd.f32 %v10951, %v10952
    %v10954 = vrot.slane %v10916, 4
    %v10955 = vadd.f32 %v10916, %v10954
    %v10956 = vrot.slane %v10955, 2
    %v10957 = vadd.f32 %v10955, %v10956
    %v10958 = vrot.slane %v10957, 1
    %v10959 = vadd.f32 %v10957, %v10958
    %v10960 = vrot.slane %v10917, 4
    %v10961 = vadd.f32 %v10917, %v10960
    %v10962 = vrot.slane %v10961, 2
    %v10963 = vadd.f32 %v10961, %v10962
    %v10964 = vrot.slane %v10963, 1
    %v10965 = vadd.f32 %v10963, %v10964
    %v10966 = vmul.f32 %v10923, %v4393
    %v10967 = vmul.f32 %v10929, %v4393
    %v10968 = vmul.f32 %v10935, %v4393
    %v10969 = vmul.f32 %v10941, %v4393
    %v10970 = vmul.f32 %v10947, %v4393
    %v10971 = vmul.f32 %v10953, %v4393
    %v10972 = vmul.f32 %v10959, %v4393
    %v10973 = vmul.f32 %v10965, %v4393
    %v10974 = vadd.f32 %v10966, 1e-05
    %v10975 = vadd.f32 %v10967, 1e-05
    %v10976 = vadd.f32 %v10968, 1e-05
    %v10977 = vadd.f32 %v10969, 1e-05
    %v10978 = vadd.f32 %v10970, 1e-05
    %v10979 = vadd.f32 %v10971, 1e-05
    %v10980 = vadd.f32 %v10972, 1e-05
    %v10981 = vadd.f32 %v10973, 1e-05
    %v10982 = vrsqrt.pop %v10974
    %v10983 = vmul.f32 %v10982, %v10974
    %v10984 = vmul.f32 %v10983, %v10982
    %v10985 = vmul.f32 0.5, %v10984
    %v10986 = vsub.f32 1.5, %v10985
    %v10987 = vmul.f32 %v10982, %v10986
    %vm10988 = vweird.f32 %v10974
    %vm10989 = vweird.f32 %v10982
    %vm10990 = vmor %vm10988, %vm10989
    %v10991 = vsel %vm10990, %v10982, %v10987
    %v10992 = vrsqrt.pop %v10975
    %v10993 = vmul.f32 %v10992, %v10975
    %v10994 = vmul.f32 %v10993, %v10992
    %v10995 = vmul.f32 0.5, %v10994
    %v10996 = vsub.f32 1.5, %v10995
    %v10997 = vmul.f32 %v10992, %v10996
    %vm10998 = vweird.f32 %v10975
    %vm10999 = vweird.f32 %v10992
    %vm11000 = vmor %vm10998, %vm10999
    %v11001 = vsel %vm11000, %v10992, %v10997
    %v11002 = vrsqrt.pop %v10976
    %v11003 = vmul.f32 %v11002, %v10976
    %v11004 = vmul.f32 %v11003, %v11002
    %v11005 = vmul.f32 0.5, %v11004
    %v11006 = vsub.f32 1.5, %v11005
    %v11007 = vmul.f32 %v11002, %v11006
    %vm11008 = vweird.f32 %v10976
    %vm11009 = vweird.f32 %v11002
    %vm11010 = vmor %vm11008, %vm11009
    %v11011 = vsel %vm11010, %v11002, %v11007
    %v11012 = vrsqrt.pop %v10977
    %v11013 = vmul.f32 %v11012, %v10977
    %v11014 = vmul.f32 %v11013, %v11012
    %v11015 = vmul.f32 0.5, %v11014
    %v11016 = vsub.f32 1.5, %v11015
    %v11017 = vmul.f32 %v11012, %v11016
    %vm11018 = vweird.f32 %v10977
    %vm11019 = vweird.f32 %v11012
    %vm11020 = vmor %vm11018, %vm11019
    %v11021 = vsel %vm11020, %v11012, %v11017
    %v11022 = vrsqrt.pop %v10978
    %v11023 = vmul.f32 %v11022, %v10978
    %v11024 = vmul.f32 %v11023, %v11022
    %v11025 = vmul.f32 0.5, %v11024
    %v11026 = vsub.f32 1.5, %v11025
    %v11027 = vmul.f32 %v11022, %v11026
    %vm11028 = vweird.f32 %v10978
    %vm11029 = vweird.f32 %v11022
    %vm11030 = vmor %vm11028, %vm11029
    %v11031 = vsel %vm11030, %v11022, %v11027
    %v11032 = vrsqrt.pop %v10979
    %v11033 = vmul.f32 %v11032, %v10979
    %v11034 = vmul.f32 %v11033, %v11032
    %v11035 = vmul.f32 0.5, %v11034
    %v11036 = vsub.f32 1.5, %v11035
    %v11037 = vmul.f32 %v11032, %v11036
    %vm11038 = vweird.f32 %v10979
    %vm11039 = vweird.f32 %v11032
    %vm11040 = vmor %vm11038, %vm11039
    %v11041 = vsel %vm11040, %v11032, %v11037
    %v11042 = vrsqrt.pop %v10980
    %v11043 = vmul.f32 %v11042, %v10980
    %v11044 = vmul.f32 %v11043, %v11042
    %v11045 = vmul.f32 0.5, %v11044
    %v11046 = vsub.f32 1.5, %v11045
    %v11047 = vmul.f32 %v11042, %v11046
    %vm11048 = vweird.f32 %v10980
    %vm11049 = vweird.f32 %v11042
    %vm11050 = vmor %vm11048, %vm11049
    %v11051 = vsel %vm11050, %v11042, %v11047
    %v11052 = vrsqrt.pop %v10981
    %v11053 = vmul.f32 %v11052, %v10981
    %v11054 = vmul.f32 %v11053, %v11052
    %v11055 = vmul.f32 0.5, %v11054
    %v11056 = vsub.f32 1.5, %v11055
    %v11057 = vmul.f32 %v11052, %v11056
    %vm11058 = vweird.f32 %v10981
    %vm11059 = vweird.f32 %v11052
    %vm11060 = vmor %vm11058, %vm11059
    %v11061 = vsel %vm11060, %v11052, %v11057
    %v11062 = vmul.f32 %v10902, %v10991
    %v11063 = vmul.f32 %v10903, %v11001
    %v11064 = vmul.f32 %v10904, %v11011
    %v11065 = vmul.f32 %v10905, %v11021
    %v11066 = vmul.f32 %v10906, %v11031
    %v11067 = vmul.f32 %v10907, %v11041
    %v11068 = vmul.f32 %v10908, %v11051
    %v11069 = vmul.f32 %v10909, %v11061
    %v11071 = vperm.slane %v10843, 0
    %v11072 = vperm.slane %v10843, 1
    %v11073 = vperm.slane %v10843, 2
    %v11074 = vperm.slane %v10843, 3
    %v11075 = vperm.slane %v10843, 4
    %v11076 = vperm.slane %v10843, 5
    %v11077 = vperm.slane %v10843, 6
    %v11078 = vperm.slane %v10843, 7
    %v11087 = vmul.f32 %v11062, %v11071
    %v11088 = vmul.f32 %v11063, %v11072
    %v11089 = vmul.f32 %v11064, %v11073
    %v11090 = vmul.f32 %v11065, %v11074
    %v11091 = vmul.f32 %v11066, %v11075
    %v11092 = vmul.f32 %v11067, %v11076
    %v11093 = vmul.f32 %v11068, %v11077
    %v11094 = vmul.f32 %v11069, %v11078
    %v11096 = vperm.slane %v10845, 0
    %v11097 = vperm.slane %v10845, 1
    %v11098 = vperm.slane %v10845, 2
    %v11099 = vperm.slane %v10845, 3
    %v11100 = vperm.slane %v10845, 4
    %v11101 = vperm.slane %v10845, 5
    %v11102 = vperm.slane %v10845, 6
    %v11103 = vperm.slane %v10845, 7
    %v11112 = vadd.f32 %v11087, %v11096
    %v11113 = vadd.f32 %v11088, %v11097
    %v11114 = vadd.f32 %v11089, %v11098
    %v11115 = vadd.f32 %v11090, %v11099
    %v11116 = vadd.f32 %v11091, %v11100
    %v11117 = vadd.f32 %v11092, %v11101
    %v11118 = vadd.f32 %v11093, %v11102
    %v11119 = vadd.f32 %v11094, %v11103
    %vm11120 = vcmp.ge.f32.partialorder %v11112, 0.0
    %vm11121 = vcmp.ge.f32.partialorder %v11113, 0.0
    %vm11122 = vcmp.ge.f32.partialorder %v11114, 0.0
    %vm11123 = vcmp.ge.f32.partialorder %v11115, 0.0
    %vm11124 = vcmp.ge.f32.partialorder %v11116, 0.0
    %vm11125 = vcmp.ge.f32.partialorder %v11117, 0.0
    %vm11126 = vcmp.ge.f32.partialorder %v11118, 0.0
    %vm11127 = vcmp.ge.f32.partialorder %v11119, 0.0
    %s11128 = sld [smem:[#allocation14 + $0x2]]
    %v11129 = vstv %s11128
    %v11130 = vmul.f32 %v11129, %v11112
    %v11131 = vmul.f32 %v11129, %v11113
    %v11132 = vmul.f32 %v11129, %v11114
    %v11133 = vmul.f32 %v11129, %v11115
    %v11134 = vmul.f32 %v11129, %v11116
    %v11135 = vmul.f32 %v11129, %v11117
    %v11136 = vmul.f32 %v11129, %v11118
    %v11137 = vmul.f32 %v11129, %v11119
    %v11138 = vsel %vm11120, %v11112, %v11130
    %v11139 = vsel %vm11121, %v11113, %v11131
    %v11140 = vsel %vm11122, %v11114, %v11132
    %v11141 = vsel %vm11123, %v11115, %v11133
    %v11142 = vsel %vm11124, %v11116, %v11134
    %v11143 = vsel %vm11125, %v11117, %v11135
    %v11144 = vsel %vm11126, %v11118, %v11136
    %v11145 = vsel %vm11127, %v11119, %v11137
    %11146 = vst [vmem:[#allocation16 + $0x48] sm:$0xff] %v11138
    %11147 = vst [vmem:[#allocation16 + $0x50] sm:$0xff] %v11139
    %11148 = vst [vmem:[#allocation16 + $0x58] sm:$0xff] %v11140
    %11149 = vst [vmem:[#allocation16 + $0x60] sm:$0xff] %v11141
    %11150 = vst [vmem:[#allocation16 + $0x68] sm:$0xff] %v11142
    %11151 = vst [vmem:[#allocation16 + $0x70] sm:$0xff] %v11143
    %11152 = vst [vmem:[#allocation16 + $0x78] sm:$0xff] %v11144
    %11153 = vst [vmem:[#allocation16 + $0x80] sm:$0xff] %v11145
    // Predicated region
    $region42: #{autoencoder_forward.1} parent=1 // pred_check
      _
    $region43: #{autoencoder_forward.1} parent=1 // pred_check_branch
      %11155 = sbr.rel (0) target = $region45
    $region44: #{autoencoder_forward.1} parent=1 // pred_region
      %11157 = vsyncadd [#allocation12], 0
      %s11159 = sshll.u32 [#allocation15], 4
      %s11160 = int_to_ptr.vmem [resolvable:$true] %s11159
      %s11161 = sshll.u32 %s9, 4
      %s11162 = int_to_ptr.hbm [resolvable:$true] %s11161
      %11164 = dma.vmem_to_hbm [thread:$0]  %s11160, 128, %s11162, [#allocation12]
    $region45: #{autoencoder_forward.1} parent=1 // pred_fallthru
      _
    // Predicated region
    $region46: #{autoencoder_forward.1} parent=1 // pred_check
      _
    $region47: #{autoencoder_forward.1} parent=1 // pred_check_branch
      %11166 = sbr.rel (0) target = $region49
    $region48: #{autoencoder_forward.1} parent=1 // pred_region
      %11168 = vsyncadd [#allocation17], 0
      %s11170 = sshll.u32 [#allocation16], 4
      %s11171 = int_to_ptr.vmem [resolvable:$true] %s11170
      %s11172 = sshll.u32 %s10, 4
      %s11173 = int_to_ptr.hbm [resolvable:$true] %s11172
      %11175 = dma.vmem_to_hbm [thread:$0]  %s11171, 2176, %s11173, [#allocation17]
    $region49: #{autoencoder_forward.1} parent=1 // pred_fallthru
      _
    // Predicated region
    $region50: #{autoencoder_forward.1} parent=1 // pred_check
      _
    $region51: #{autoencoder_forward.1} parent=1 // pred_check_branch
      %11177 = sbr.rel (0) target = $region53
    $region52: #{autoencoder_forward.1} parent=1 // pred_region
      %11179 = dma.done [#allocation12], 128
    $region53: #{autoencoder_forward.1} parent=1 // pred_fallthru
      _
    // Predicated region
    $region54: #{autoencoder_forward.1} parent=1 // pred_check
      _
    $region55: #{autoencoder_forward.1} parent=1 // pred_check_branch
      %11181 = sbr.rel (0) target = $region57
    $region56: #{autoencoder_forward.1} parent=1 // pred_region
      %11183 = dma.done [#allocation17], 2176
    $region57: #{autoencoder_forward.1} parent=1 // pred_fallthru
      _
    %11184 = vsyncpa [#allocation11], 1
    %11185 = vsyncpa [#allocation12], 1
    %11186 = vsyncpa [#allocation17], 1
    %11187 = vsyncpa [#allocation13], 1
  %11188 = vsyncmov [#allocation9]
  %s11189 = vpop.sfrf %11188
  %p11190 = scmp.eq.s32.totalorder %s11189, 0
  %p11191 = pneg %p11190
  %11193 = shalt.err (%p11191)
  %s11194 = scalar_lea.sflag [#allocation9], 1
  %11195 = vsyncmov %s11194
  %s11196 = vpop.sfrf %11195
  %p11197 = scmp.eq.s32.totalorder %s11196, 0
  %p11198 = pneg %p11197
  %11200 = shalt.err (%p11198)
  %s11201 = scalar_lea.sflag [#allocation9], 2
  %11202 = vsyncmov %s11201
  %s11203 = vpop.sfrf %11202
  %p11204 = scmp.eq.s32.totalorder %s11203, 0
  %p11205 = pneg %p11204
  %11207 = shalt.err (%p11205)
  %s11208 = scalar_lea.sflag [#allocation9], 3
  %11209 = vsyncmov %s11208
  %s11210 = vpop.sfrf %11209
  %p11211 = scmp.eq.s32.totalorder %s11210, 0
  %p11212 = pneg %p11211
  %11214 = shalt.err (%p11212)
  %s11215 = scalar_lea.sflag [#allocation9], 4
  %11216 = vsyncmov %s11215
  %s11217 = vpop.sfrf %11216
  %p11218 = scmp.eq.s32.totalorder %s11217, 0
  %p11219 = pneg %p11218
  %11221 = shalt.err (%p11219)
  %s11222 = scalar_lea.sflag [#allocation9], 5
  %11223 = vsyncmov %s11222
  %s11224 = vpop.sfrf %11223
  %p11225 = scmp.eq.s32.totalorder %s11224, 0
  %p11226 = pneg %p11225
  %11228 = shalt.err (%p11226)
  %s11229 = scalar_lea.sflag [#allocation9], 6
  %11230 = vsyncmov %s11229
  %s11231 = vpop.sfrf %11230
  %p11232 = scmp.eq.s32.totalorder %s11231, 0
  %p11233 = pneg %p11232
  %11235 = shalt.err (%p11233)

</llo_original>
